<compile_context>
chip_gen: v6e
topology: v6e:2x2x1
jax: 0.10.0
libtpu: 0.0.40
codegen_flags: <defaults>
</compile_context>

<pallas_src>
import functools

import jax
import jax.numpy as jnp
from jax import lax
from jax.experimental import pallas as pl
from jax.experimental.pallas import tpu as pltpu

EPS = 1e-5                       # PyTorch nn.LayerNorm default
_MATMUL_DTYPE = jnp.bfloat16     # MXU input dtype (f32 accumulation everywhere)
_VMEM_LIMIT = 64 * 1024 * 1024   # lift v5e/v6e scoped default; <= v7x physical

_PAR_1D = pltpu.CompilerParams(dimension_semantics=("parallel",),
                               vmem_limit_bytes=_VMEM_LIMIT)


# ----------------------------------------------------------------------------
# Single-buffering support probe (pl.Buffered(1) on constant weight blocks)
# ----------------------------------------------------------------------------
_SINGLE_BUFFER_OK = None


def _probe_copy_kernel(x_ref, o_ref):
    o_ref[...] = x_ref[...] + 1.0


def _single_buffer_supported():
    """Cheap one-time probe that pl.Buffered(buffer_count=1) compiles & runs."""
    global _SINGLE_BUFFER_OK
    if _SINGLE_BUFFER_OK is None:
        try:
            spec = pl.BlockSpec((8, 128), lambda i: (0, 0),
                                pipeline_mode=pl.Buffered(buffer_count=1))
            out = pl.pallas_call(
                _probe_copy_kernel,
                grid=(1,),
                in_specs=[spec],
                out_specs=pl.BlockSpec((8, 128), lambda i: (0, 0)),
                out_shape=jax.ShapeDtypeStruct((8, 128), jnp.float32),
            )(jnp.zeros((8, 128), jnp.float32))
            jax.block_until_ready(out)
            _SINGLE_BUFFER_OK = True
        except Exception:
            _SINGLE_BUFFER_OK = False
    return _SINGLE_BUFFER_OK


def _const_spec(shape):
    """BlockSpec for a grid-invariant (weight/bias) operand.

    Constant block index => Pallas never re-DMAs it across grid steps; when
    supported it is also single-buffered (pl.Buffered(1)) so big FFN weights
    are not double-buffered (matters under v7x's 64 MiB VMEM).
    """
    zeros = (0,) * len(shape)

    def index_map(i):
        return zeros

    if _single_buffer_supported():
        return pl.BlockSpec(shape, index_map,
                            pipeline_mode=pl.Buffered(buffer_count=1))
    return pl.BlockSpec(shape, index_map)


# ----------------------------------------------------------------------------
# In-kernel math helpers (values, not refs)
# ----------------------------------------------------------------------------
def _erf(x):
    # Abramowitz & Stegun 7.1.26 rational approximation (|err| < 1.5e-7).
    # The divide is routed to the EUP via the approximate reciprocal so the
    # FFN epilogue stays off the VALU.
    a1, a2, a3, a4, a5 = 0.254829592, -0.284496736, 1.421413741, -1.453152027, 1.061405429
    p = 0.3275911
    z = jnp.abs(x)
    t = pl.reciprocal(1.0 + p * z, approx=True)
    poly = ((((a5 * t + a4) * t + a3) * t + a2) * t + a1) * t
    y = 1.0 - poly * jnp.exp(-z * z)
    return jnp.where(x >= 0, y, -y)


def _gelu_exact(x):
    # Matches torch.nn.functional.gelu (exact / erf variant) to ~1e-3 worst case
    # (EUP approximate reciprocal inside _erf).
    return 0.5 * x * (1.0 + _erf(x * 0.7071067811865476))


def _ln_rows(x, g, b):
    # x: (rows, D) f32 ; g, b: (1, D) f32
    mu = jnp.mean(x, axis=-1, keepdims=True)
    var = jnp.mean((x - mu) ** 2, axis=-1, keepdims=True)
    return (x - mu) * lax.rsqrt(var + EPS) * g + b


def _mha_rows(q, k, v, wo, bo, *, nhead, scale):
    """q: (Lq, D) f32, k/v: (Lk, D) f32, wo: (D, D) bf16, bo: (1, D) f32 -> (Lq, D) f32.

    Heads are column slices of the projected feature dim.  Per-head softmax
    attention runs with bf16 MXU inputs / f32 accumulation; the normalized
    head outputs are concatenated back to (Lq, D) and pushed through ONE
    full-depth (K=D) output projection instead of nhead K=dh matmuls.
    """
    Lq, D = q.shape
    dh = D // nhead
    dn = (((1,), (1,)), ((), ()))             # q @ k^T without an XLU transpose
    qs = (q * scale).astype(_MATMUL_DTYPE)    # scale folded into q (Lq*D elems)
    kb = k.astype(_MATMUL_DTYPE)
    vb = v.astype(_MATMUL_DTYPE)
    heads = []
    # TODO(synk): convert to an online-softmax KV loop for long Lk (flash style).
    for h in range(nhead):
        lo, hi = h * dh, (h + 1) * dh
        s = lax.dot_general(qs[:, lo:hi], kb[:, lo:hi], dn,
                            preferred_element_type=jnp.float32)        # (Lq, Lk)
        m = jnp.max(s, axis=-1, keepdims=True)
        p = jnp.exp(s - m)
        l = jnp.sum(p, axis=-1, keepdims=True)
        oh = jnp.dot(p.astype(_MATMUL_DTYPE), vb[:, lo:hi],
                     preferred_element_type=jnp.float32)               # (Lq, dh)
        heads.append(oh * pl.reciprocal(l, approx=True))               # EUP slot
    attn = jnp.concatenate(heads, axis=-1)                             # (Lq, D) f32
    return jnp.dot(attn.astype(_MATMUL_DTYPE), wo,
                   preferred_element_type=jnp.float32) + bo


# ----------------------------------------------------------------------------
# Pallas kernels (one grid step == one batch item / one row tile)
# ----------------------------------------------------------------------------
def _self_attn_sublayer_kernel(x_ref, g_ref, b_ref, wqkv_ref, bqkv_ref,
                               wo_ref, bo_ref, o_ref, *, nhead, scale):
    # out = x + OutProj(MHA(LN1(x), LN1(x), LN1(x)))
    x = x_ref[0].astype(jnp.float32)                       # (L, D)
    D = x.shape[-1]
    xn = _ln_rows(x, g_ref[...], b_ref[...])
    qkv = jnp.dot(xn.astype(_MATMUL_DTYPE), wqkv_ref[...],
                  preferred_element_type=jnp.float32) + bqkv_ref[...]
    q, k, v = qkv[:, :D], qkv[:, D:2 * D], qkv[:, 2 * D:]
    y = _mha_rows(q, k, v, wo_ref[...], bo_ref[...], nhead=nhead, scale=scale)
    o_ref[0] = (x + y).astype(o_ref.dtype)


def _cross_attn_sublayer_kernel(q_ref, kv_ref, gq_ref, bq_ref, gkv_ref, bkv_ref,
                                wq_ref, bqp_ref, wkv_ref, bkvp_ref, wo_ref, bo_ref,
                                o_ref, *, nhead, scale):
    # out = q + OutProj(MHA(LN1(q), LN2(kv), LN2(kv)))
    xq = q_ref[0].astype(jnp.float32)                      # (Lq, D)
    xkv = kv_ref[0].astype(jnp.float32)                    # (Lk, D)
    D = xq.shape[-1]
    qn = _ln_rows(xq, gq_ref[...], bq_ref[...])
    kvn = _ln_rows(xkv, gkv_ref[...], bkv_ref[...])
    q = jnp.dot(qn.astype(_MATMUL_DTYPE), wq_ref[...],
                preferred_element_type=jnp.float32) + bqp_ref[...]
    kv = jnp.dot(kvn.astype(_MATMUL_DTYPE), wkv_ref[...],
                 preferred_element_type=jnp.float32) + bkvp_ref[...]
    k, v = kv[:, :D], kv[:, D:]
    y = _mha_rows(q, k, v, wo_ref[...], bo_ref[...], nhead=nhead, scale=scale)
    o_ref[0] = (xq + y).astype(o_ref.dtype)


def _ffn_sublayer_kernel(x_ref, g_ref, b_ref, w1_ref, b1_ref, w2_ref, b2_ref, o_ref):
    # out = x + W2 @ gelu(W1 @ LN(x))
    x = x_ref[...].astype(jnp.float32)                     # (tm, D)
    xn = _ln_rows(x, g_ref[...], b_ref[...])
    h = _gelu_exact(jnp.dot(xn.astype(_MATMUL_DTYPE), w1_ref[...],
                            preferred_element_type=jnp.float32) + b1_ref[...])
    y = jnp.dot(h.astype(_MATMUL_DTYPE), w2_ref[...],
                preferred_element_type=jnp.float32) + b2_ref[...]
    o_ref[...] = (x + y).astype(o_ref.dtype)


def _avg_ffn_sublayer_kernel(a_ref, b_ref, c_ref, g_ref, beta_ref,
                             w1_ref, b1_ref, w2_ref, b2_ref, o_ref, *, divisor):
    # e = (a + b + c) / divisor ;  out = e + FFN(LN(e))
    e = (a_ref[...].astype(jnp.float32)
         + b_ref[...].astype(jnp.float32)
         + c_ref[...].astype(jnp.float32)) / divisor
    en = _ln_rows(e, g_ref[...], beta_ref[...])
    h = _gelu_exact(jnp.dot(en.astype(_MATMUL_DTYPE), w1_ref[...],
                            preferred_element_type=jnp.float32) + b1_ref[...])
    y = jnp.dot(h.astype(_MATMUL_DTYPE), w2_ref[...],
                preferred_element_type=jnp.float32) + b2_ref[...]
    o_ref[...] = (e + y).astype(o_ref.dtype)


# ----------------------------------------------------------------------------
# pallas_call wrappers
# ----------------------------------------------------------------------------
def _row_tiling(rows, target=512):
    """Row tiling for the FFN kernels: <= `target`, multiple of 8; rows are
    padded up to ntiles*tm (bounded waste) instead of falling back to tm=rows
    or a tiny divisor."""
    ntiles = max(1, pl.cdiv(rows, target))
    tm = ((pl.cdiv(rows, ntiles) + 7) // 8) * 8
    return ntiles, tm


def attn_self_sublayer(p, src, nhead):
    """Fused: LN1 -> QKV proj (single (D,3D) bf16 matmul) -> MHA -> out proj -> +residual."""
    B, L, D = src.shape
    kernel = functools.partial(_self_attn_sublayer_kernel,
                               nhead=nhead, scale=(D // nhead) ** -0.5)
    return pl.pallas_call(
        kernel,
        grid=(B,),
        in_specs=[
            pl.BlockSpec((1, L, D), lambda b: (b, 0, 0)),
            _const_spec((1, D)),          # norm1 gamma
            _const_spec((1, D)),          # norm1 beta
            _const_spec((D, 3 * D)),      # fused QKV weight (bf16)
            _const_spec((1, 3 * D)),      # fused QKV bias   (f32)
            _const_spec((D, D)),          # wo (bf16)
            _const_spec((1, D)),          # bo (f32)
        ],
        out_specs=pl.BlockSpec((1, L, D), lambda b: (b, 0, 0)),
        out_shape=jax.ShapeDtypeStruct((B, L, D), src.dtype),
        compiler_params=_PAR_1D,
    )(src, p["norm1_g"], p["norm1_b"], p["wqkv"], p["bqkv"], p["wo"], p["bo"])


def attn_cross_sublayer(p, q_in, kv_in, nhead):
    """Fused: LN1(q), LN2(kv) -> Q proj + fused KV proj -> MHA -> out proj -> +residual."""
    B, Lq, D = q_in.shape
    Lk = kv_in.shape[1]
    kernel = functools.partial(_cross_attn_sublayer_kernel,
                               nhead=nhead, scale=(D // nhead) ** -0.5)
    return pl.pallas_call(
        kernel,
        grid=(B,),
        in_specs=[
            pl.BlockSpec((1, Lq, D), lambda b: (b, 0, 0)),
            pl.BlockSpec((1, Lk, D), lambda b: (b, 0, 0)),
            _const_spec((1, D)),          # norm1 gamma
            _const_spec((1, D)),          # norm1 beta
            _const_spec((1, D)),          # norm2 gamma
            _const_spec((1, D)),          # norm2 beta
            _const_spec((D, D)),          # wq (bf16)
            _const_spec((1, D)),          # bq
            _const_spec((D, 2 * D)),      # fused KV weight (bf16)
            _const_spec((1, 2 * D)),      # fused KV bias
            _const_spec((D, D)),          # wo (bf16)
            _const_spec((1, D)),          # bo
        ],
        out_specs=pl.BlockSpec((1, Lq, D), lambda b: (b, 0, 0)),
        out_shape=jax.ShapeDtypeStruct((B, Lq, D), q_in.dtype),
        compiler_params=_PAR_1D,
    )(q_in, kv_in,
      p["norm1_g"], p["norm1_b"], p["norm2_g"], p["norm2_b"],
      p["wq"], p["bq"], p["wkv"], p["bkv"], p["wo"], p["bo"])


def ffn_sublayer(x, g, b, ffn_p):
    """Fused: LN -> linear1 -> gelu -> linear2 -> +residual, row-tiled grid."""
    B, L, D = x.shape
    F = ffn_p["w1"].shape[1]
    rows = B * L
    ntiles, tm = _row_tiling(rows)
    padded = ntiles * tm
    x2 = x.reshape(rows, D)
    if padded != rows:
        x2 = jnp.pad(x2, ((0, padded - rows), (0, 0)))
    out = pl.pallas_call(
        _ffn_sublayer_kernel,
        grid=(ntiles,),
        in_specs=[
            pl.BlockSpec((tm, D), lambda i: (i, 0)),
            _const_spec((1, D)),
            _const_spec((1, D)),
            _const_spec((D, F)),
            _const_spec((1, F)),
            _const_spec((F, D)),
            _const_spec((1, D)),
        ],
        out_specs=pl.BlockSpec((tm, D), lambda i: (i, 0)),
        out_shape=jax.ShapeDtypeStruct((padded, D), x.dtype),
        compiler_params=_PAR_1D,
    )(x2, g, b, ffn_p["w1"], ffn_p["b1"], ffn_p["w2"], ffn_p["b2"])
    return out[:rows].reshape(B, L, D)


def avg_ffn_sublayer(a, b, c, g, beta, ffn_p, divisor):
    """Fused: (a+b+c)/div -> LN -> FFN -> +residual, row-tiled grid."""
    B, L, D = a.shape
    F = ffn_p["w1"].shape[1]
    rows = B * L
    ntiles, tm = _row_tiling(rows)
    padded = ntiles * tm

    def prep(t):
        t2 = t.reshape(rows, D)
        if padded != rows:
            t2 = jnp.pad(t2, ((0, padded - rows), (0, 0)))
        return t2

    kernel = functools.partial(_avg_ffn_sublayer_kernel, divisor=float(divisor))
    out = pl.pallas_call(
        kernel,
        grid=(ntiles,),
        in_specs=[
            pl.BlockSpec((tm, D), lambda i: (i, 0)),
            pl.BlockSpec((tm, D), lambda i: (i, 0)),
            pl.BlockSpec((tm, D), lambda i: (i, 0)),
            _const_spec((1, D)),
            _const_spec((1, D)),
            _const_spec((D, F)),
            _const_spec((1, F)),
            _const_spec((F, D)),
            _const_spec((1, D)),
        ],
        out_specs=pl.BlockSpec((tm, D), lambda i: (i, 0)),
        out_shape=jax.ShapeDtypeStruct((padded, D), a.dtype),
        compiler_params=_PAR_1D,
    )(prep(a), prep(b), prep(c), g, beta,
      ffn_p["w1"], ffn_p["b1"], ffn_p["w2"], ffn_p["b2"])
    return out[:rows].reshape(B, L, D)


# ----------------------------------------------------------------------------
# Module forward (all batches equal -> divisor 3; dropout == identity)
# ----------------------------------------------------------------------------
def encoder_layer(p, src, nhead):
    src = attn_self_sublayer(p, src, nhead)
    src = ffn_sublayer(src, p["norm2_g"], p["norm2_b"], p["ffn"])
    return src


def cross_modal_block(params, visual, audio, hr, *, nhead):
    if visual.shape[0] == 0:
        return visual, audio, hr

    v_self = encoder_layer(params["enc_v"], visual, nhead)
    a_self = encoder_layer(params["enc_a"], audio, nhead)
    h_self = encoder_layer(params["enc_h"], hr, nhead)

    v_from_a = attn_cross_sublayer(params["v2a"], v_self, a_self, nhead)
    v_from_h = attn_cross_sublayer(params["v2h"], v_self, h_self, nhead)
    a_from_v = attn_cross_sublayer(params["a2v"], a_self, v_self, nhead)
    a_from_h = attn_cross_sublayer(params["a2h"], a_self, h_self, nhead)
    h_from_v = attn_cross_sublayer(params["h2v"], h_self, v_self, nhead)
    h_from_a = attn_cross_sublayer(params["h2a"], h_self, a_self, nhead)

    v_out = avg_ffn_sublayer(v_self, v_from_a, v_from_h,
                             params["norm_v_g"], params["norm_v_b"], params["ffn_v"], 3.0)
    a_out = avg_ffn_sublayer(a_self, a_from_v, a_from_h,
                             params["norm_a_g"], params["norm_a_b"], params["ffn_a"], 3.0)
    h_out = avg_ffn_sublayer(h_self, h_from_v, h_from_a,
                             params["norm_h_g"], params["norm_h_b"], params["ffn_h"], 3.0)
    return v_out, a_out, h_out


# ----------------------------------------------------------------------------
# Parameter preparation: hoists weight fusion out of the forward and pre-casts
# every matmul weight to bf16 (done ONCE, outside jit).
# ----------------------------------------------------------------------------
def prepare_params(p):
    bf16 = _MATMUL_DTYPE
    _single_buffer_supported()   # run the Buffered(1) probe outside jit tracing

    def ffn(fp):
        return dict(w1=fp["w1"].astype(bf16), b1=fp["b1"].reshape(1, -1),
                    w2=fp["w2"].astype(bf16), b2=fp["b2"].reshape(1, -1))

    def enc(ep):
        a = ep["attn"]
        return dict(
            norm1_g=ep["norm1_g"].reshape(1, -1), norm1_b=ep["norm1_b"].reshape(1, -1),
            norm2_g=ep["norm2_g"].reshape(1, -1), norm2_b=ep["norm2_b"].reshape(1, -1),
            wqkv=jnp.concatenate([a["wq"], a["wk"], a["wv"]], axis=1).astype(bf16),
            bqkv=jnp.concatenate([a["bq"], a["bk"], a["bv"]]).reshape(1, -1),
            wo=a["wo"].astype(bf16), bo=a["bo"].reshape(1, -1),
            ffn=ffn(ep["ffn"]),
        )

    def cross(cp):
        a = cp["attn"]
        return dict(
            norm1_g=cp["norm1_g"].reshape(1, -1), norm1_b=cp["norm1_b"].reshape(1, -1),
            norm2_g=cp["norm2_g"].reshape(1, -1), norm2_b=cp["norm2_b"].reshape(1, -1),
            wq=a["wq"].astype(bf16), bq=a["bq"].reshape(1, -1),
            wkv=jnp.concatenate([a["wk"], a["wv"]], axis=1).astype(bf16),
            bkv=jnp.concatenate([a["bk"], a["bv"]]).reshape(1, -1),
            wo=a["wo"].astype(bf16), bo=a["bo"].reshape(1, -1),
        )

    out = dict(
        enc_v=enc(p["enc_v"]), enc_a=enc(p["enc_a"]), enc_h=enc(p["enc_h"]),
        v2a=cross(p["v2a"]), v2h=cross(p["v2h"]), a2v=cross(p["a2v"]),
        a2h=cross(p["a2h"]), h2v=cross(p["h2v"]), h2a=cross(p["h2a"]),
        ffn_v=ffn(p["ffn_v"]), ffn_a=ffn(p["ffn_a"]), ffn_h=ffn(p["ffn_h"]),
    )
    for m in ("v", "a", "h"):
        out[f"norm_{m}_g"] = p[f"norm_{m}_g"].reshape(1, -1)
        out[f"norm_{m}_b"] = p[f"norm_{m}_b"].reshape(1, -1)
    return out


# ----------------------------------------------------------------------------
# Deterministic parameter init (shapes follow the nn.Module __init__)
# ----------------------------------------------------------------------------
def init_params(key, d_model, d_ff):
    keys = iter(jax.random.split(key, 128))

    def lin_p(din, dout):
        bound = 1.0 / (din ** 0.5)
        w = jax.random.uniform(next(keys), (din, dout), jnp.float32, -bound, bound)
        b = jax.random.uniform(next(keys), (dout,), jnp.float32, -bound, bound)
        return w, b

    def mha_p():
        wq, bq = lin_p(d_model, d_model)
        wk, bk = lin_p(d_model, d_model)
        wv, bv = lin_p(d_model, d_model)
        wo, bo = lin_p(d_model, d_model)
        return dict(wq=wq, bq=bq, wk=wk, bk=bk, wv=wv, bv=bv, wo=wo, bo=bo)

    def ffn_p():
        w1, b1 = lin_p(d_model, d_ff)
        w2, b2 = lin_p(d_ff, d_model)
        return dict(w1=w1, b1=b1, w2=w2, b2=b2)

    def norm_p():
        return jnp.ones((d_model,), jnp.float32), jnp.zeros((d_model,), jnp.float32)

    def enc_p():
        n1g, n1b = norm_p()
        n2g, n2b = norm_p()
        return dict(attn=mha_p(), ffn=ffn_p(),
                    norm1_g=n1g, norm1_b=n1b, norm2_g=n2g, norm2_b=n2b)

    def cross_p():
        n1g, n1b = norm_p()
        n2g, n2b = norm_p()
        return dict(attn=mha_p(), norm1_g=n1g, norm1_b=n1b, norm2_g=n2g, norm2_b=n2b)

    params = dict(
        enc_v=enc_p(), enc_a=enc_p(), enc_h=enc_p(),
        v2a=cross_p(), v2h=cross_p(), a2v=cross_p(),
        a2h=cross_p(), h2v=cross_p(), h2a=cross_p(),
        ffn_v=ffn_p(), ffn_a=ffn_p(), ffn_h=ffn_p(),
    )
    for m in ("v", "a", "h"):
        g, b = norm_p()
        params[f"norm_{m}_g"] = g
        params[f"norm_{m}_b"] = b
    return params


# ----------------------------------------------------------------------------
# Pure-JAX reference mirroring the kernel's mixed precision (bf16 MXU inputs,
# f32 accumulation / stats / residuals) — correctness check for the Pallas path.
# Residual differences vs the reference come only from the EUP approximate
# reciprocal (softmax & erf) in the kernels, so the tolerance stays tight.
# ----------------------------------------------------------------------------
def _ref_forward(params, visual, audio, hr, nhead):
    bf16 = _MATMUL_DTYPE

    def mm(x, w):
        return jnp.dot(x.astype(bf16), w.astype(bf16),
                       preferred_element_type=jnp.float32)

    def ln(x, g, b):
        mu = x.mean(-1, keepdims=True)
        var = ((x - mu) ** 2).mean(-1, keepdims=True)
        return (x - mu) / jnp.sqrt(var + EPS) * g + b

    def mha(p, q, k, v):
        B, Lq, D = q.shape
        Lk = k.shape[1]
        Dh = D // nhead
        qp = mm(q, p["wq"]) + p["bq"]
        kp = mm(k, p["wk"]) + p["bk"]
        vp = mm(v, p["wv"]) + p["bv"]
        qh = (qp * (Dh ** -0.5)).astype(bf16).reshape(B, Lq, nhead, Dh).transpose(0, 2, 1, 3)
        kh = kp.astype(bf16).reshape(B, Lk, nhead, Dh).transpose(0, 2, 1, 3)
        vh = vp.astype(bf16).reshape(B, Lk, nhead, Dh).transpose(0, 2, 1, 3)
        s = jnp.einsum("bhqd,bhkd->bhqk", qh, kh, preferred_element_type=jnp.float32)
        w = jax.nn.softmax(s, axis=-1)
        o = jnp.einsum("bhqk,bhkd->bhqd", w.astype(bf16), vh,
                       preferred_element_type=jnp.float32)
        o = o.transpose(0, 2, 1, 3).reshape(B, Lq, D)
        return mm(o, p["wo"]) + p["bo"]

    def ffn(p, x):
        h = jax.nn.gelu(mm(x, p["w1"]) + p["b1"], approximate=False)
        return mm(h, p["w2"]) + p["b2"]

    def enc(p, x):
        y = ln(x, p["norm1_g"], p["norm1_b"])
        x = x + mha(p["attn"], y, y, y)
        return x + ffn(p["ffn"], ln(x, p["norm2_g"], p["norm2_b"]))

    def cross(p, q, kv):
        qn = ln(q, p["norm1_g"], p["norm1_b"])
        kvn = ln(kv, p["norm2_g"], p["norm2_b"])
        return q + mha(p["attn"], qn, kvn, kvn)

    vs, as_, hs = enc(params["enc_v"], visual), enc(params["enc_a"], audio), enc(params["enc_h"], hr)
    ve = (vs + cross(params["v2a"], vs, as_) + cross(params["v2h"], vs, hs)) / 3.0
    ae = (as_ + cross(params["a2v"], as_, vs) + cross(params["a2h"], as_, hs)) / 3.0
    he = (hs + cross(params["h2v"], hs, vs) + cross(params["h2a"], hs, as_)) / 3.0
    vo = ve + ffn(params["ffn_v"], ln(ve, params["norm_v_g"], params["norm_v_b"]))
    ao = ae + ffn(params["ffn_a"], ln(ae, params["norm_a_g"], params["norm_a_b"]))
    ho = he + ffn(params["ffn_h"], ln(he, params["norm_h_g"], params["norm_h_b"]))
    return vo, ao, ho


# ----------------------------------------------------------------------------
if __name__ == "__main__":
    D_MODEL, NHEAD, D_FF = 32, 4, 64
    B, LV, LA, LH = 2, 8, 16, 8

    root = jax.random.PRNGKey(0)
    kp, kv, ka, kh = jax.random.split(root, 4)
    raw_params = init_params(kp, D_MODEL, D_FF)
    params = prepare_params(raw_params)          # fuse + bf16-cast weights ONCE
    visual = jax.random.normal(kv, (B, LV, D_MODEL), jnp.float32)
    audio = jax.random.normal(ka, (B, LA, D_MODEL), jnp.float32)
    hr = jax.random.normal(kh, (B, LH, D_MODEL), jnp.float32)

    fwd = jax.jit(functools.partial(cross_modal_block, nhead=NHEAD))
    v_out, a_out, h_out = fwd(params, visual, audio, hr)
    jax.block_until_ready((v_out, a_out, h_out))

    v_ref, a_ref, h_ref = _ref_forward(raw_params, visual, audio, hr, NHEAD)
    for got, ref in ((v_out, v_ref), (a_out, a_ref), (h_out, h_ref)):
        assert got.shape == ref.shape and got.dtype == ref.dtype
        max_err = float(jnp.max(jnp.abs(got - ref)))
        mean_err = float(jnp.mean(jnp.abs(got - ref)))
        # Remaining deviation from the bf16-matched reference comes from the EUP
        # approximate reciprocal (~2^-12 rel) in softmax / erf, slightly amplified
        # by downstream bf16 rounding; well below these bounds.
        assert max_err < 2e-2, max_err
        assert mean_err < 2e-3, mean_err

    print("KERNEL_OK")
</pallas_src>

<mosaic_0001>
module attributes {stable_mosaic.version = 11 : i64} {
  func.func @_probe_copy_kernel(%arg0: i32, %arg1: memref<8x128xf32, #tpu.memory_space<vmem>>, %arg2: memref<8x128xf32, #tpu.memory_space<vmem>>) attributes {dimension_semantics = [#tpu.dimension_semantics<arbitrary>], iteration_bounds = array<i64: 1>, scalar_prefetch = 0 : i64, scratch_operands = 0 : i64, tpu.core_type = #tpu.core_type<tc>, window_params = [{pipeline_mode = #tpu.pipeline_mode<synchronous>, transform_indices = @transform_0, window_bounds = array<i64: 8, 128>}, {pipeline_mode = #tpu.pipeline_mode<synchronous>, transform_indices = @transform_1, window_bounds = array<i64: 8, 128>}]} {
    %c0 = arith.constant 0 : index
    %c0_0 = arith.constant 0 : index
    %0 = vector.load %arg1[%c0, %c0_0] : memref<8x128xf32, #tpu.memory_space<vmem>>, vector<8x128xf32>
    %cst = arith.constant 1.000000e+00 : f32
    %1 = vector.broadcast %cst : f32 to vector<8x128xf32>
    %2 = arith.addf %0, %1 : vector<8x128xf32>
    %c0_1 = arith.constant 0 : index
    %c0_2 = arith.constant 0 : index
    %3 = vector.load %arg2[%c0_1, %c0_2] : memref<8x128xf32, #tpu.memory_space<vmem>>, vector<8x128xf32>
    tpu.vector_store %arg2[%c0_1, %c0_2], %2 {strides = array<i32>} : memref<8x128xf32, #tpu.memory_space<vmem>>, vector<8x128xf32>,
    return
  }
  func.func @transform_0(%arg0: i32) -> (i32, i32) {
    %c0_i32 = arith.constant 0 : i32
    %c0_i32_0 = arith.constant 0 : i32
    %c0_i32_1 = arith.constant 0 : i32
    return %c0_i32, %c0_i32_0 : i32, i32
  }
  func.func @transform_1(%arg0: i32) -> (i32, i32) {
    %c0_i32 = arith.constant 0 : i32
    %c0_i32_0 = arith.constant 0 : i32
    %c0_i32_1 = arith.constant 0 : i32
    return %c0_i32, %c0_i32_0 : i32, i32
  }
}

module attributes {stable_mosaic.version = 11 : i64} {
  func.func @_self_attn_sublayer_kernel(%arg0: i32, %arg1: memref<1x8x32xf32, #tpu.memory_space<vmem>>, %arg2: memref<1x32xf32, #tpu.memory_space<vmem>>, %arg3: memref<1x32xf32, #tpu.memory_space<vmem>>, %arg4: memref<32x96xbf16, #tpu.memory_space<vmem>>, %arg5: memref<1x96xf32, #tpu.memory_space<vmem>>, %arg6: memref<32x32xbf16, #tpu.memory_space<vmem>>, %arg7: memref<1x32xf32, #tpu.memory_space<vmem>>, %arg8: memref<1x8x32xf32, #tpu.memory_space<vmem>>) attributes {dimension_semantics = [#tpu.dimension_semantics<parallel>], iteration_bounds = array<i64: 2>, scalar_prefetch = 0 : i64, scratch_operands = 0 : i64, tpu.core_type = #tpu.core_type<tc>, window_params = [{transform_indices = @transform_0, window_bounds = array<i64: 1, 8, 32>}, {pipeline_mode = #tpu.pipeline_mode<synchronous>, transform_indices = @transform_1, window_bounds = array<i64: 1, 32>}, {pipeline_mode = #tpu.pipeline_mode<synchronous>, transform_indices = @transform_2, window_bounds = array<i64: 1, 32>}, {pipeline_mode = #tpu.pipeline_mode<synchronous>, transform_indices = @transform_3, window_bounds = array<i64: 32, 96>}, {pipeline_mode = #tpu.pipeline_mode<synchronous>, transform_indices = @transform_4, window_bounds = array<i64: 1, 96>}, {pipeline_mode = #tpu.pipeline_mode<synchronous>, transform_indices = @transform_5, window_bounds = array<i64: 32, 32>}, {pipeline_mode = #tpu.pipeline_mode<synchronous>, transform_indices = @transform_6, window_bounds = array<i64: 1, 32>}, {transform_indices = @transform_7, window_bounds = array<i64: 1, 8, 32>}]} {
    %c0 = arith.constant 0 : index
    %c0_0 = arith.constant 0 : index
    %c0_1 = arith.constant 0 : index
    %0 = vector.load %arg1[%c0, %c0_0, %c0_1] : memref<1x8x32xf32, #tpu.memory_space<vmem>>, vector<1x8x32xf32>
    %1 = vector.shape_cast %0 : vector<1x8x32xf32> to vector<8x32xf32>
    %c0_2 = arith.constant 0 : index
    %c0_3 = arith.constant 0 : index
    %2 = vector.load %arg2[%c0_2, %c0_3] : memref<1x32xf32, #tpu.memory_space<vmem>>, vector<1x32xf32>
    %c0_4 = arith.constant 0 : index
    %c0_5 = arith.constant 0 : index
    %3 = vector.load %arg3[%c0_4, %c0_5] : memref<1x32xf32, #tpu.memory_space<vmem>>, vector<1x32xf32>
    %cst = arith.constant dense<0.000000e+00> : vector<8xf32>
    %4 = vector.multi_reduction <add>, %1, %cst [1] : vector<8x32xf32> to vector<8xf32>
    %5 = vector.shape_cast %4 : vector<8xf32> to vector<8x1xf32>
    %cst_6 = arith.constant 3.200000e+01 : f32
    %6 = vector.broadcast %cst_6 : f32 to vector<8x1xf32>
    %7 = arith.divf %5, %6 : vector<8x1xf32>
    %8 = vector.broadcast %7 : vector<8x1xf32> to vector<8x32xf32>
    %9 = arith.subf %1, %8 : vector<8x32xf32>
    %10 = arith.mulf %9, %9 : vector<8x32xf32>
    %cst_7 = arith.constant dense<0.000000e+00> : vector<8xf32>
    %11 = vector.multi_reduction <add>, %10, %cst_7 [1] : vector<8x32xf32> to vector<8xf32>
    %12 = vector.shape_cast %11 : vector<8xf32> to vector<8x1xf32>
    %cst_8 = arith.constant 3.200000e+01 : f32
    %13 = vector.broadcast %cst_8 : f32 to vector<8x1xf32>
    %14 = arith.divf %12, %13 : vector<8x1xf32>
    %15 = vector.broadcast %7 : vector<8x1xf32> to vector<8x32xf32>
    %16 = arith.subf %1, %15 : vector<8x32xf32>
    %cst_9 = arith.constant 9.99999974E-6 : f32
    %17 = vector.broadcast %cst_9 : f32 to vector<8x1xf32>
    %18 = arith.addf %14, %17 : vector<8x1xf32>
    %19 = math.rsqrt %18 : vector<8x1xf32>
    %20 = vector.broadcast %19 : vector<8x1xf32> to vector<8x32xf32>
    %21 = arith.mulf %16, %20 : vector<8x32xf32>
    %22 = vector.broadcast %2 : vector<1x32xf32> to vector<8x32xf32>
    %23 = arith.mulf %21, %22 : vector<8x32xf32>
    %24 = vector.broadcast %3 : vector<1x32xf32> to vector<8x32xf32>
    %25 = arith.addf %23, %24 : vector<8x32xf32>
    %26 = arith.truncf %25 : vector<8x32xf32> to vector<8x32xbf16>
    %c0_10 = arith.constant 0 : index
    %c0_11 = arith.constant 0 : index
    %27 = vector.load %arg4[%c0_10, %c0_11] : memref<32x96xbf16, #tpu.memory_space<vmem>>, vector<32x96xbf16>
    %cst_12 = arith.constant dense<0.000000e+00> : vector<8x96xf32>
    %28 = tpu.matmul %26, %27, %cst_12 {dimension_numbers = #tpu.dot_dimension_numbers<[1], [0], [0], [1], [0, 0, 1, 1], [], []>} : vector<8x32xbf16>, vector<32x96xbf16>, vector<8x96xf32> -> vector<8x96xf32>
    %c0_13 = arith.constant 0 : index
    %c0_14 = arith.constant 0 : index
    %29 = vector.load %arg5[%c0_13, %c0_14] : memref<1x96xf32, #tpu.memory_space<vmem>>, vector<1x96xf32>
    %30 = vector.broadcast %29 : vector<1x96xf32> to vector<8x96xf32>
    %31 = arith.addf %28, %30 : vector<8x96xf32>
    %32 = vector.extract_strided_slice %31 {offsets = [0, 0], sizes = [8, 32], strides = [1, 1]} : vector<8x96xf32> to vector<8x32xf32>
    %33 = vector.extract_strided_slice %31 {offsets = [0, 32], sizes = [8, 32], strides = [1, 1]} : vector<8x96xf32> to vector<8x32xf32>
    %34 = vector.extract_strided_slice %31 {offsets = [0, 64], sizes = [8, 32], strides = [1, 1]} : vector<8x96xf32> to vector<8x32xf32>
    %c0_15 = arith.constant 0 : index
    %c0_16 = arith.constant 0 : index
    %35 = vector.load %arg6[%c0_15, %c0_16] : memref<32x32xbf16, #tpu.memory_space<vmem>>, vector<32x32xbf16>
    %c0_17 = arith.constant 0 : index
    %c0_18 = arith.constant 0 : index
    %36 = vector.load %arg7[%c0_17, %c0_18] : memref<1x32xf32, #tpu.memory_space<vmem>>, vector<1x32xf32>
    %cst_19 = arith.constant 0.353553385 : f32
    %37 = vector.broadcast %cst_19 : f32 to vector<8x32xf32>
    %38 = arith.mulf %32, %37 : vector<8x32xf32>
    %39 = arith.truncf %38 : vector<8x32xf32> to vector<8x32xbf16>
    %40 = arith.truncf %33 : vector<8x32xf32> to vector<8x32xbf16>
    %41 = arith.truncf %34 : vector<8x32xf32> to vector<8x32xbf16>
    %42 = vector.extract_strided_slice %39 {offsets = [0, 0], sizes = [8, 8], strides = [1, 1]} : vector<8x32xbf16> to vector<8x8xbf16>
    %43 = vector.extract_strided_slice %40 {offsets = [0, 0], sizes = [8, 8], strides = [1, 1]} : vector<8x32xbf16> to vector<8x8xbf16>
    %cst_20 = arith.constant dense<0.000000e+00> : vector<8x8xf32>
    %44 = tpu.matmul %42, %43, %cst_20 {dimension_numbers = #tpu.dot_dimension_numbers<[1], [1], [0], [0], [0, 0, 1, 0], [], []>} : vector<8x8xbf16>, vector<8x8xbf16>, vector<8x8xf32> -> vector<8x8xf32>
    %cst_21 = arith.constant dense<0xFF800000> : vector<8xf32>
    %45 = vector.multi_reduction <maximumf>, %44, %cst_21 [1] : vector<8x8xf32> to vector<8xf32>
    %46 = vector.shape_cast %45 : vector<8xf32> to vector<8x1xf32>
    %47 = vector.broadcast %46 : vector<8x1xf32> to vector<8x8xf32>
    %48 = arith.subf %44, %47 : vector<8x8xf32>
    %49 = math.exp %48 : vector<8x8xf32>
    %cst_22 = arith.constant dense<0.000000e+00> : vector<8xf32>
    %50 = vector.multi_reduction <add>, %49, %cst_22 [1] : vector<8x8xf32> to vector<8xf32>
    %51 = vector.shape_cast %50 : vector<8xf32> to vector<8x1xf32>
    %52 = arith.truncf %49 : vector<8x8xf32> to vector<8x8xbf16>
    %53 = vector.extract_strided_slice %41 {offsets = [0, 0], sizes = [8, 8], strides = [1, 1]} : vector<8x32xbf16> to vector<8x8xbf16>
    %cst_23 = arith.constant dense<0.000000e+00> : vector<8x8xf32>
    %54 = tpu.matmul %52, %53, %cst_23 {dimension_numbers = #tpu.dot_dimension_numbers<[1], [0], [0], [1], [0, 0, 1, 1], [], []>} : vector<8x8xbf16>, vector<8x8xbf16>, vector<8x8xf32> -> vector<8x8xf32>
    %55 = tpu.reciprocal %51 {approx = true} : vector<8x1xf32> -> vector<8x1xf32>
    %56 = vector.broadcast %55 : vector<8x1xf32> to vector<8x8xf32>
    %57 = arith.mulf %54, %56 : vector<8x8xf32>
    %58 = vector.extract_strided_slice %39 {offsets = [0, 8], sizes = [8, 8], strides = [1, 1]} : vector<8x32xbf16> to vector<8x8xbf16>
    %59 = vector.extract_strided_slice %40 {offsets = [0, 8], sizes = [8, 8], strides = [1, 1]} : vector<8x32xbf16> to vector<8x8xbf16>
    %cst_24 = arith.constant dense<0.000000e+00> : vector<8x8xf32>
    %60 = tpu.matmul %58, %59, %cst_24 {dimension_numbers = #tpu.dot_dimension_numbers<[1], [1], [0], [0], [0, 0, 1, 0], [], []>} : vector<8x8xbf16>, vector<8x8xbf16>, vector<8x8xf32> -> vector<8x8xf32>
    %cst_25 = arith.constant dense<0xFF800000> : vector<8xf32>
    %61 = vector.multi_reduction <maximumf>, %60, %cst_25 [1] : vector<8x8xf32> to vector<8xf32>
    %62 = vector.shape_cast %61 : vector<8xf32> to vector<8x1xf32>
    %63 = vector.broadcast %62 : vector<8x1xf32> to vector<8x8xf32>
    %64 = arith.subf %60, %63 : vector<8x8xf32>
    %65 = math.exp %64 : vector<8x8xf32>
    %cst_26 = arith.constant dense<0.000000e+00> : vector<8xf32>
    %66 = vector.multi_reduction <add>, %65, %cst_26 [1] : vector<8x8xf32> to vector<8xf32>
    %67 = vector.shape_cast %66 : vector<8xf32> to vector<8x1xf32>
    %68 = arith.truncf %65 : vector<8x8xf32> to vector<8x8xbf16>
    %69 = vector.extract_strided_slice %41 {offsets = [0, 8], sizes = [8, 8], strides = [1, 1]} : vector<8x32xbf16> to vector<8x8xbf16>
    %cst_27 = arith.constant dense<0.000000e+00> : vector<8x8xf32>
    %70 = tpu.matmul %68, %69, %cst_27 {dimension_numbers = #tpu.dot_dimension_numbers<[1], [0], [0], [1], [0, 0, 1, 1], [], []>} : vector<8x8xbf16>, vector<8x8xbf16>, vector<8x8xf32> -> vector<8x8xf32>
    %71 = tpu.reciprocal %67 {approx = true} : vector<8x1xf32> -> vector<8x1xf32>
    %72 = vector.broadcast %71 : vector<8x1xf32> to vector<8x8xf32>
    %73 = arith.mulf %70, %72 : vector<8x8xf32>
    %74 = vector.extract_strided_slice %39 {offsets = [0, 16], sizes = [8, 8], strides = [1, 1]} : vector<8x32xbf16> to vector<8x8xbf16>
    %75 = vector.extract_strided_slice %40 {offsets = [0, 16], sizes = [8, 8], strides = [1, 1]} : vector<8x32xbf16> to vector<8x8xbf16>
    %cst_28 = arith.constant dense<0.000000e+00> : vector<8x8xf32>
    %76 = tpu.matmul %74, %75, %cst_28 {dimension_numbers = #tpu.dot_dimension_numbers<[1], [1], [0], [0], [0, 0, 1, 0], [], []>} : vector<8x8xbf16>, vector<8x8xbf16>, vector<8x8xf32> -> vector<8x8xf32>
    %cst_29 = arith.constant dense<0xFF800000> : vector<8xf32>
    %77 = vector.multi_reduction <maximumf>, %76, %cst_29 [1] : vector<8x8xf32> to vector<8xf32>
    %78 = vector.shape_cast %77 : vector<8xf32> to vector<8x1xf32>
    %79 = vector.broadcast %78 : vector<8x1xf32> to vector<8x8xf32>
    %80 = arith.subf %76, %79 : vector<8x8xf32>
    %81 = math.exp %80 : vector<8x8xf32>
    %cst_30 = arith.constant dense<0.000000e+00> : vector<8xf32>
    %82 = vector.multi_reduction <add>, %81, %cst_30 [1] : vector<8x8xf32> to vector<8xf32>
    %83 = vector.shape_cast %82 : vector<8xf32> to vector<8x1xf32>
    %84 = arith.truncf %81 : vector<8x8xf32> to vector<8x8xbf16>
    %85 = vector.extract_strided_slice %41 {offsets = [0, 16], sizes = [8, 8], strides = [1, 1]} : vector<8x32xbf16> to vector<8x8xbf16>
    %cst_31 = arith.constant dense<0.000000e+00> : vector<8x8xf32>
    %86 = tpu.matmul %84, %85, %cst_31 {dimension_numbers = #tpu.dot_dimension_numbers<[1], [0], [0], [1], [0, 0, 1, 1], [], []>} : vector<8x8xbf16>, vector<8x8xbf16>, vector<8x8xf32> -> vector<8x8xf32>
    %87 = tpu.reciprocal %83 {approx = true} : vector<8x1xf32> -> vector<8x1xf32>
    %88 = vector.broadcast %87 : vector<8x1xf32> to vector<8x8xf32>
    %89 = arith.mulf %86, %88 : vector<8x8xf32>
    %90 = vector.extract_strided_slice %39 {offsets = [0, 24], sizes = [8, 8], strides = [1, 1]} : vector<8x32xbf16> to vector<8x8xbf16>
    %91 = vector.extract_strided_slice %40 {offsets = [0, 24], sizes = [8, 8], strides = [1, 1]} : vector<8x32xbf16> to vector<8x8xbf16>
    %cst_32 = arith.constant dense<0.000000e+00> : vector<8x8xf32>
    %92 = tpu.matmul %90, %91, %cst_32 {dimension_numbers = #tpu.dot_dimension_numbers<[1], [1], [0], [0], [0, 0, 1, 0], [], []>} : vector<8x8xbf16>, vector<8x8xbf16>, vector<8x8xf32> -> vector<8x8xf32>
    %cst_33 = arith.constant dense<0xFF800000> : vector<8xf32>
    %93 = vector.multi_reduction <maximumf>, %92, %cst_33 [1] : vector<8x8xf32> to vector<8xf32>
    %94 = vector.shape_cast %93 : vector<8xf32> to vector<8x1xf32>
    %95 = vector.broadcast %94 : vector<8x1xf32> to vector<8x8xf32>
    %96 = arith.subf %92, %95 : vector<8x8xf32>
    %97 = math.exp %96 : vector<8x8xf32>
    %cst_34 = arith.constant dense<0.000000e+00> : vector<8xf32>
    %98 = vector.multi_reduction <add>, %97, %cst_34 [1] : vector<8x8xf32> to vector<8xf32>
    %99 = vector.shape_cast %98 : vector<8xf32> to vector<8x1xf32>
    %100 = arith.truncf %97 : vector<8x8xf32> to vector<8x8xbf16>
    %101 = vector.extract_strided_slice %41 {offsets = [0, 24], sizes = [8, 8], strides = [1, 1]} : vector<8x32xbf16> to vector<8x8xbf16>
    %cst_35 = arith.constant dense<0.000000e+00> : vector<8x8xf32>
    %102 = tpu.matmul %100, %101, %cst_35 {dimension_numbers = #tpu.dot_dimension_numbers<[1], [0], [0], [1], [0, 0, 1, 1], [], []>} : vector<8x8xbf16>, vector<8x8xbf16>, vector<8x8xf32> -> vector<8x8xf32>
    %103 = tpu.reciprocal %99 {approx = true} : vector<8x1xf32> -> vector<8x1xf32>
    %104 = vector.broadcast %103 : vector<8x1xf32> to vector<8x8xf32>
    %105 = arith.mulf %102, %104 : vector<8x8xf32>
    %106 = tpu.concatenate %57, %73, %89, %105 in 1 : vector<8x8xf32>, vector<8x8xf32>, vector<8x8xf32>, vector<8x8xf32> -> vector<8x32xf32>
    %107 = arith.truncf %106 : vector<8x32xf32> to vector<8x32xbf16>
    %cst_36 = arith.constant dense<0.000000e+00> : vector<8x32xf32>
    %108 = tpu.matmul %107, %35, %cst_36 {dimension_numbers = #tpu.dot_dimension_numbers<[1], [0], [0], [1], [0, 0, 1, 1], [], []>} : vector<8x32xbf16>, vector<32x32xbf16>, vector<8x32xf32> -> vector<8x32xf32>
    %109 = vector.broadcast %36 : vector<1x32xf32> to vector<8x32xf32>
    %110 = arith.addf %108, %109 : vector<8x32xf32>
    %111 = arith.addf %1, %110 : vector<8x32xf32>
    %c0_37 = arith.constant 0 : index
    %c0_38 = arith.constant 0 : index
    %c0_39 = arith.constant 0 : index
    %112 = vector.load %arg8[%c0_37, %c0_38, %c0_39] : memref<1x8x32xf32, #tpu.memory_space<vmem>>, vector<1x8x32xf32>
    %113 = vector.shape_cast %112 : vector<1x8x32xf32> to vector<8x32xf32>
    %114 = vector.shape_cast %111 : vector<8x32xf32> to vector<1x8x32xf32>
    tpu.vector_store %arg8[%c0_37, %c0_38, %c0_39], %114 {strides = array<i32>} : memref<1x8x32xf32, #tpu.memory_space<vmem>>, vector<1x8x32xf32>,
    return
  }
  func.func @transform_0(%arg0: i32) -> (i32, i32, i32) {
    %c0_i32 = arith.constant 0 : i32
    %c0_i32_0 = arith.constant 0 : i32
    %c0_i32_1 = arith.constant 0 : i32
    return %arg0, %c0_i32, %c0_i32_0 : i32, i32, i32
  }
  func.func @transform_1(%arg0: i32) -> (i32, i32) {
    %c0_i32 = arith.constant 0 : i32
    %c0_i32_0 = arith.constant 0 : i32
    %c0_i32_1 = arith.constant 0 : i32
    return %c0_i32, %c0_i32_0 : i32, i32
  }
  func.func @transform_2(%arg0: i32) -> (i32, i32) {
    %c0_i32 = arith.constant 0 : i32
    %c0_i32_0 = arith.constant 0 : i32
    %c0_i32_1 = arith.constant 0 : i32
    return %c0_i32, %c0_i32_0 : i32, i32
  }
  func.func @transform_3(%arg0: i32) -> (i32, i32) {
    %c0_i32 = arith.constant 0 : i32
    %c0_i32_0 = arith.constant 0 : i32
    %c0_i32_1 = arith.constant 0 : i32
    return %c0_i32, %c0_i32_0 : i32, i32
  }
  func.func @transform_4(%arg0: i32) -> (i32, i32) {
    %c0_i32 = arith.constant 0 : i32
    %c0_i32_0 = arith.constant 0 : i32
    %c0_i32_1 = arith.constant 0 : i32
    return %c0_i32, %c0_i32_0 : i32, i32
  }
  func.func @transform_5(%arg0: i32) -> (i32, i32) {
    %c0_i32 = arith.constant 0 : i32
    %c0_i32_0 = arith.constant 0 : i32
    %c0_i32_1 = arith.constant 0 : i32
    return %c0_i32, %c0_i32_0 : i32, i32
  }
  func.func @transform_6(%arg0: i32) -> (i32, i32) {
    %c0_i32 = arith.constant 0 : i32
    %c0_i32_0 = arith.constant 0 : i32
    %c0_i32_1 = arith.constant 0 : i32
    return %c0_i32, %c0_i32_0 : i32, i32
  }
  func.func @transform_7(%arg0: i32) -> (i32, i32, i32) {
    %c0_i32 = arith.constant 0 : i32
    %c0_i32_0 = arith.constant 0 : i32
    %c0_i32_1 = arith.constant 0 : i32
    return %arg0, %c0_i32, %c0_i32_0 : i32, i32, i32
  }
}

module attributes {stable_mosaic.version = 11 : i64} {
  func.func @_ffn_sublayer_kernel(%arg0: i32, %arg1: memref<32x32xf32, #tpu.memory_space<vmem>>, %arg2: memref<1x32xf32, #tpu.memory_space<vmem>>, %arg3: memref<1x32xf32, #tpu.memory_space<vmem>>, %arg4: memref<32x64xbf16, #tpu.memory_space<vmem>>, %arg5: memref<1x64xf32, #tpu.memory_space<vmem>>, %arg6: memref<64x32xbf16, #tpu.memory_space<vmem>>, %arg7: memref<1x32xf32, #tpu.memory_space<vmem>>, %arg8: memref<32x32xf32, #tpu.memory_space<vmem>>) attributes {dimension_semantics = [#tpu.dimension_semantics<parallel>], iteration_bounds = array<i64: 1>, scalar_prefetch = 0 : i64, scratch_operands = 0 : i64, tpu.core_type = #tpu.core_type<tc>, window_params = [{transform_indices = @transform_0, window_bounds = array<i64: 32, 32>}, {pipeline_mode = #tpu.pipeline_mode<synchronous>, transform_indices = @transform_1, window_bounds = array<i64: 1, 32>}, {pipeline_mode = #tpu.pipeline_mode<synchronous>, transform_indices = @transform_2, window_bounds = array<i64: 1, 32>}, {pipeline_mode = #tpu.pipeline_mode<synchronous>, transform_indices = @transform_3, window_bounds = array<i64: 32, 64>}, {pipeline_mode = #tpu.pipeline_mode<synchronous>, transform_indices = @transform_4, window_bounds = array<i64: 1, 64>}, {pipeline_mode = #tpu.pipeline_mode<synchronous>, transform_indices = @transform_5, window_bounds = array<i64: 64, 32>}, {pipeline_mode = #tpu.pipeline_mode<synchronous>, transform_indices = @transform_6, window_bounds = array<i64: 1, 32>}, {transform_indices = @transform_7, window_bounds = array<i64: 32, 32>}]} {
    %c0 = arith.constant 0 : index
    %c0_0 = arith.constant 0 : index
    %0 = vector.load %arg1[%c0, %c0_0] : memref<32x32xf32, #tpu.memory_space<vmem>>, vector<32x32xf32>
    %c0_1 = arith.constant 0 : index
    %c0_2 = arith.constant 0 : index
    %1 = vector.load %arg2[%c0_1, %c0_2] : memref<1x32xf32, #tpu.memory_space<vmem>>, vector<1x32xf32>
    %c0_3 = arith.constant 0 : index
    %c0_4 = arith.constant 0 : index
    %2 = vector.load %arg3[%c0_3, %c0_4] : memref<1x32xf32, #tpu.memory_space<vmem>>, vector<1x32xf32>
    %cst = arith.constant dense<0.000000e+00> : vector<32xf32>
    %3 = vector.multi_reduction <add>, %0, %cst [1] : vector<32x32xf32> to vector<32xf32>
    %4 = vector.shape_cast %3 : vector<32xf32> to vector<32x1xf32>
    %cst_5 = arith.constant 3.200000e+01 : f32
    %5 = vector.broadcast %cst_5 : f32 to vector<32x1xf32>
    %6 = arith.divf %4, %5 : vector<32x1xf32>
    %7 = vector.broadcast %6 : vector<32x1xf32> to vector<32x32xf32>
    %8 = arith.subf %0, %7 : vector<32x32xf32>
    %9 = arith.mulf %8, %8 : vector<32x32xf32>
    %cst_6 = arith.constant dense<0.000000e+00> : vector<32xf32>
    %10 = vector.multi_reduction <add>, %9, %cst_6 [1] : vector<32x32xf32> to vector<32xf32>
    %11 = vector.shape_cast %10 : vector<32xf32> to vector<32x1xf32>
    %cst_7 = arith.constant 3.200000e+01 : f32
    %12 = vector.broadcast %cst_7 : f32 to vector<32x1xf32>
    %13 = arith.divf %11, %12 : vector<32x1xf32>
    %14 = vector.broadcast %6 : vector<32x1xf32> to vector<32x32xf32>
    %15 = arith.subf %0, %14 : vector<32x32xf32>
    %cst_8 = arith.constant 9.99999974E-6 : f32
    %16 = vector.broadcast %cst_8 : f32 to vector<32x1xf32>
    %17 = arith.addf %13, %16 : vector<32x1xf32>
    %18 = math.rsqrt %17 : vector<32x1xf32>
    %19 = vector.broadcast %18 : vector<32x1xf32> to vector<32x32xf32>
    %20 = arith.mulf %15, %19 : vector<32x32xf32>
    %21 = vector.broadcast %1 : vector<1x32xf32> to vector<32x32xf32>
    %22 = arith.mulf %20, %21 : vector<32x32xf32>
    %23 = vector.broadcast %2 : vector<1x32xf32> to vector<32x32xf32>
    %24 = arith.addf %22, %23 : vector<32x32xf32>
    %25 = arith.truncf %24 : vector<32x32xf32> to vector<32x32xbf16>
    %c0_9 = arith.constant 0 : index
    %c0_10 = arith.constant 0 : index
    %26 = vector.load %arg4[%c0_9, %c0_10] : memref<32x64xbf16, #tpu.memory_space<vmem>>, vector<32x64xbf16>
    %cst_11 = arith.constant dense<0.000000e+00> : vector<32x64xf32>
    %27 = tpu.matmul %25, %26, %cst_11 {dimension_numbers = #tpu.dot_dimension_numbers<[1], [0], [0], [1], [0, 0, 1, 1], [], []>} : vector<32x32xbf16>, vector<32x64xbf16>, vector<32x64xf32> -> vector<32x64xf32>
    %c0_12 = arith.constant 0 : index
    %c0_13 = arith.constant 0 : index
    %28 = vector.load %arg5[%c0_12, %c0_13] : memref<1x64xf32, #tpu.memory_space<vmem>>, vector<1x64xf32>
    %29 = vector.broadcast %28 : vector<1x64xf32> to vector<32x64xf32>
    %30 = arith.addf %27, %29 : vector<32x64xf32>
    %cst_14 = arith.constant 5.000000e-01 : f32
    %31 = vector.broadcast %cst_14 : f32 to vector<32x64xf32>
    %32 = arith.mulf %31, %30 : vector<32x64xf32>
    %cst_15 = arith.constant 0.707106769 : f32
    %33 = vector.broadcast %cst_15 : f32 to vector<32x64xf32>
    %34 = arith.mulf %30, %33 : vector<32x64xf32>
    %35 = math.absf %34 : vector<32x64xf32>
    %cst_16 = arith.constant 0.327591091 : f32
    %36 = vector.broadcast %cst_16 : f32 to vector<32x64xf32>
    %37 = arith.mulf %36, %35 : vector<32x64xf32>
    %cst_17 = arith.constant 1.000000e+00 : f32
    %38 = vector.broadcast %cst_17 : f32 to vector<32x64xf32>
    %39 = arith.addf %38, %37 : vector<32x64xf32>
    %40 = tpu.reciprocal %39 {approx = true} : vector<32x64xf32> -> vector<32x64xf32>
    %cst_18 = arith.constant 1.06140542 : f32
    %41 = vector.broadcast %cst_18 : f32 to vector<32x64xf32>
    %42 = arith.mulf %41, %40 : vector<32x64xf32>
    %cst_19 = arith.constant -1.45315206 : f32
    %43 = vector.broadcast %cst_19 : f32 to vector<32x64xf32>
    %44 = arith.addf %42, %43 : vector<32x64xf32>
    %45 = arith.mulf %44, %40 : vector<32x64xf32>
    %cst_20 = arith.constant 1.42141378 : f32
    %46 = vector.broadcast %cst_20 : f32 to vector<32x64xf32>
    %47 = arith.addf %45, %46 : vector<32x64xf32>
    %48 = arith.mulf %47, %40 : vector<32x64xf32>
    %cst_21 = arith.constant -0.284496725 : f32
    %49 = vector.broadcast %cst_21 : f32 to vector<32x64xf32>
    %50 = arith.addf %48, %49 : vector<32x64xf32>
    %51 = arith.mulf %50, %40 : vector<32x64xf32>
    %cst_22 = arith.constant 0.254829586 : f32
    %52 = vector.broadcast %cst_22 : f32 to vector<32x64xf32>
    %53 = arith.addf %51, %52 : vector<32x64xf32>
    %54 = arith.mulf %53, %40 : vector<32x64xf32>
    %cst_23 = arith.constant 0.000000e+00 : f32
    %55 = vector.broadcast %cst_23 : f32 to vector<32x64xf32>
    %56 = arith.subf %55, %35 : vector<32x64xf32>
    %57 = arith.mulf %56, %35 : vector<32x64xf32>
    %58 = math.exp %57 : vector<32x64xf32>
    %59 = arith.mulf %54, %58 : vector<32x64xf32>
    %cst_24 = arith.constant 1.000000e+00 : f32
    %60 = vector.broadcast %cst_24 : f32 to vector<32x64xf32>
    %61 = arith.subf %60, %59 : vector<32x64xf32>
    %cst_25 = arith.constant 0.000000e+00 : f32
    %62 = vector.broadcast %cst_25 : f32 to vector<32x64xf32>
    %63 = arith.cmpf oge, %34, %62 : vector<32x64xf32>
    %cst_26 = arith.constant 0.000000e+00 : f32
    %64 = vector.broadcast %cst_26 : f32 to vector<32x64xf32>
    %65 = arith.subf %64, %61 : vector<32x64xf32>
    %66 = arith.select %63, %61, %65 : vector<32x64xi1>, vector<32x64xf32>
    %cst_27 = arith.constant 1.000000e+00 : f32
    %67 = vector.broadcast %cst_27 : f32 to vector<32x64xf32>
    %68 = arith.addf %67, %66 : vector<32x64xf32>
    %69 = arith.mulf %32, %68 : vector<32x64xf32>
    %70 = arith.truncf %69 : vector<32x64xf32> to vector<32x64xbf16>
    %c0_28 = arith.constant 0 : index
    %c0_29 = arith.constant 0 : index
    %71 = vector.load %arg6[%c0_28, %c0_29] : memref<64x32xbf16, #tpu.memory_space<vmem>>, vector<64x32xbf16>
    %cst_30 = arith.constant dense<0.000000e+00> : vector<32x32xf32>
    %72 = tpu.matmul %70, %71, %cst_30 {dimension_numbers = #tpu.dot_dimension_numbers<[1], [0], [0], [1], [0, 0, 1, 1], [], []>} : vector<32x64xbf16>, vector<64x32xbf16>, vector<32x32xf32> -> vector<32x32xf32>
    %c0_31 = arith.constant 0 : index
    %c0_32 = arith.constant 0 : index
    %73 = vector.load %arg7[%c0_31, %c0_32] : memref<1x32xf32, #tpu.memory_space<vmem>>, vector<1x32xf32>
    %74 = vector.broadcast %73 : vector<1x32xf32> to vector<32x32xf32>
    %75 = arith.addf %72, %74 : vector<32x32xf32>
    %76 = arith.addf %0, %75 : vector<32x32xf32>
    %c0_33 = arith.constant 0 : index
    %c0_34 = arith.constant 0 : index
    %77 = vector.load %arg8[%c0_33, %c0_34] : memref<32x32xf32, #tpu.memory_space<vmem>>, vector<32x32xf32>
    tpu.vector_store %arg8[%c0_33, %c0_34], %76 {strides = array<i32>} : memref<32x32xf32, #tpu.memory_space<vmem>>, vector<32x32xf32>,
    return
  }
  func.func @transform_0(%arg0: i32) -> (i32, i32) {
    %c0_i32 = arith.constant 0 : i32
    %c0_i32_0 = arith.constant 0 : i32
    return %arg0, %c0_i32 : i32, i32
  }
  func.func @transform_1(%arg0: i32) -> (i32, i32) {
    %c0_i32 = arith.constant 0 : i32
    %c0_i32_0 = arith.constant 0 : i32
    %c0_i32_1 = arith.constant 0 : i32
    return %c0_i32, %c0_i32_0 : i32, i32
  }
  func.func @transform_2(%arg0: i32) -> (i32, i32) {
    %c0_i32 = arith.constant 0 : i32
    %c0_i32_0 = arith.constant 0 : i32
    %c0_i32_1 = arith.constant 0 : i32
    return %c0_i32, %c0_i32_0 : i32, i32
  }
  func.func @transform_3(%arg0: i32) -> (i32, i32) {
    %c0_i32 = arith.constant 0 : i32
    %c0_i32_0 = arith.constant 0 : i32
    %c0_i32_1 = arith.constant 0 : i32
    return %c0_i32, %c0_i32_0 : i32, i32
  }
  func.func @transform_4(%arg0: i32) -> (i32, i32) {
    %c0_i32 = arith.constant 0 : i32
    %c0_i32_0 = arith.constant 0 : i32
    %c0_i32_1 = arith.constant 0 : i32
    return %c0_i32, %c0_i32_0 : i32, i32
  }
  func.func @transform_5(%arg0: i32) -> (i32, i32) {
    %c0_i32 = arith.constant 0 : i32
    %c0_i32_0 = arith.constant 0 : i32
    %c0_i32_1 = arith.constant 0 : i32
    return %c0_i32, %c0_i32_0 : i32, i32
  }
  func.func @transform_6(%arg0: i32) -> (i32, i32) {
    %c0_i32 = arith.constant 0 : i32
    %c0_i32_0 = arith.constant 0 : i32
    %c0_i32_1 = arith.constant 0 : i32
    return %c0_i32, %c0_i32_0 : i32, i32
  }
  func.func @transform_7(%arg0: i32) -> (i32, i32) {
    %c0_i32 = arith.constant 0 : i32
    %c0_i32_0 = arith.constant 0 : i32
    return %arg0, %c0_i32 : i32, i32
  }
}

module attributes {stable_mosaic.version = 11 : i64} {
  func.func @_self_attn_sublayer_kernel(%arg0: i32, %arg1: memref<1x16x32xf32, #tpu.memory_space<vmem>>, %arg2: memref<1x32xf32, #tpu.memory_space<vmem>>, %arg3: memref<1x32xf32, #tpu.memory_space<vmem>>, %arg4: memref<32x96xbf16, #tpu.memory_space<vmem>>, %arg5: memref<1x96xf32, #tpu.memory_space<vmem>>, %arg6: memref<32x32xbf16, #tpu.memory_space<vmem>>, %arg7: memref<1x32xf32, #tpu.memory_space<vmem>>, %arg8: memref<1x16x32xf32, #tpu.memory_space<vmem>>) attributes {dimension_semantics = [#tpu.dimension_semantics<parallel>], iteration_bounds = array<i64: 2>, scalar_prefetch = 0 : i64, scratch_operands = 0 : i64, tpu.core_type = #tpu.core_type<tc>, window_params = [{transform_indices = @transform_0, window_bounds = array<i64: 1, 16, 32>}, {pipeline_mode = #tpu.pipeline_mode<synchronous>, transform_indices = @transform_1, window_bounds = array<i64: 1, 32>}, {pipeline_mode = #tpu.pipeline_mode<synchronous>, transform_indices = @transform_2, window_bounds = array<i64: 1, 32>}, {pipeline_mode = #tpu.pipeline_mode<synchronous>, transform_indices = @transform_3, window_bounds = array<i64: 32, 96>}, {pipeline_mode = #tpu.pipeline_mode<synchronous>, transform_indices = @transform_4, window_bounds = array<i64: 1, 96>}, {pipeline_mode = #tpu.pipeline_mode<synchronous>, transform_indices = @transform_5, window_bounds = array<i64: 32, 32>}, {pipeline_mode = #tpu.pipeline_mode<synchronous>, transform_indices = @transform_6, window_bounds = array<i64: 1, 32>}, {transform_indices = @transform_7, window_bounds = array<i64: 1, 16, 32>}]} {
    %c0 = arith.constant 0 : index
    %c0_0 = arith.constant 0 : index
    %c0_1 = arith.constant 0 : index
    %0 = vector.load %arg1[%c0, %c0_0, %c0_1] : memref<1x16x32xf32, #tpu.memory_space<vmem>>, vector<1x16x32xf32>
    %1 = vector.shape_cast %0 : vector<1x16x32xf32> to vector<16x32xf32>
    %c0_2 = arith.constant 0 : index
    %c0_3 = arith.constant 0 : index
    %2 = vector.load %arg2[%c0_2, %c0_3] : memref<1x32xf32, #tpu.memory_space<vmem>>, vector<1x32xf32>
    %c0_4 = arith.constant 0 : index
    %c0_5 = arith.constant 0 : index
    %3 = vector.load %arg3[%c0_4, %c0_5] : memref<1x32xf32, #tpu.memory_space<vmem>>, vector<1x32xf32>
    %cst = arith.constant dense<0.000000e+00> : vector<16xf32>
    %4 = vector.multi_reduction <add>, %1, %cst [1] : vector<16x32xf32> to vector<16xf32>
    %5 = vector.shape_cast %4 : vector<16xf32> to vector<16x1xf32>
    %cst_6 = arith.constant 3.200000e+01 : f32
    %6 = vector.broadcast %cst_6 : f32 to vector<16x1xf32>
    %7 = arith.divf %5, %6 : vector<16x1xf32>
    %8 = vector.broadcast %7 : vector<16x1xf32> to vector<16x32xf32>
    %9 = arith.subf %1, %8 : vector<16x32xf32>
    %10 = arith.mulf %9, %9 : vector<16x32xf32>
    %cst_7 = arith.constant dense<0.000000e+00> : vector<16xf32>
    %11 = vector.multi_reduction <add>, %10, %cst_7 [1] : vector<16x32xf32> to vector<16xf32>
    %12 = vector.shape_cast %11 : vector<16xf32> to vector<16x1xf32>
    %cst_8 = arith.constant 3.200000e+01 : f32
    %13 = vector.broadcast %cst_8 : f32 to vector<16x1xf32>
    %14 = arith.divf %12, %13 : vector<16x1xf32>
    %15 = vector.broadcast %7 : vector<16x1xf32> to vector<16x32xf32>
    %16 = arith.subf %1, %15 : vector<16x32xf32>
    %cst_9 = arith.constant 9.99999974E-6 : f32
    %17 = vector.broadcast %cst_9 : f32 to vector<16x1xf32>
    %18 = arith.addf %14, %17 : vector<16x1xf32>
    %19 = math.rsqrt %18 : vector<16x1xf32>
    %20 = vector.broadcast %19 : vector<16x1xf32> to vector<16x32xf32>
    %21 = arith.mulf %16, %20 : vector<16x32xf32>
    %22 = vector.broadcast %2 : vector<1x32xf32> to vector<16x32xf32>
    %23 = arith.mulf %21, %22 : vector<16x32xf32>
    %24 = vector.broadcast %3 : vector<1x32xf32> to vector<16x32xf32>
    %25 = arith.addf %23, %24 : vector<16x32xf32>
    %26 = arith.truncf %25 : vector<16x32xf32> to vector<16x32xbf16>
    %c0_10 = arith.constant 0 : index
    %c0_11 = arith.constant 0 : index
    %27 = vector.load %arg4[%c0_10, %c0_11] : memref<32x96xbf16, #tpu.memory_space<vmem>>, vector<32x96xbf16>
    %cst_12 = arith.constant dense<0.000000e+00> : vector<16x96xf32>
    %28 = tpu.matmul %26, %27, %cst_12 {dimension_numbers = #tpu.dot_dimension_numbers<[1], [0], [0], [1], [0, 0, 1, 1], [], []>} : vector<16x32xbf16>, vector<32x96xbf16>, vector<16x96xf32> -> vector<16x96xf32>
    %c0_13 = arith.constant 0 : index
    %c0_14 = arith.constant 0 : index
    %29 = vector.load %arg5[%c0_13, %c0_14] : memref<1x96xf32, #tpu.memory_space<vmem>>, vector<1x96xf32>
    %30 = vector.broadcast %29 : vector<1x96xf32> to vector<16x96xf32>
    %31 = arith.addf %28, %30 : vector<16x96xf32>
    %32 = vector.extract_strided_slice %31 {offsets = [0, 0], sizes = [16, 32], strides = [1, 1]} : vector<16x96xf32> to vector<16x32xf32>
    %33 = vector.extract_strided_slice %31 {offsets = [0, 32], sizes = [16, 32], strides = [1, 1]} : vector<16x96xf32> to vector<16x32xf32>
    %34 = vector.extract_strided_slice %31 {offsets = [0, 64], sizes = [16, 32], strides = [1, 1]} : vector<16x96xf32> to vector<16x32xf32>
    %c0_15 = arith.constant 0 : index
    %c0_16 = arith.constant 0 : index
    %35 = vector.load %arg6[%c0_15, %c0_16] : memref<32x32xbf16, #tpu.memory_space<vmem>>, vector<32x32xbf16>
    %c0_17 = arith.constant 0 : index
    %c0_18 = arith.constant 0 : index
    %36 = vector.load %arg7[%c0_17, %c0_18] : memref<1x32xf32, #tpu.memory_space<vmem>>, vector<1x32xf32>
    %cst_19 = arith.constant 0.353553385 : f32
    %37 = vector.broadcast %cst_19 : f32 to vector<16x32xf32>
    %38 = arith.mulf %32, %37 : vector<16x32xf32>
    %39 = arith.truncf %38 : vector<16x32xf32> to vector<16x32xbf16>
    %40 = arith.truncf %33 : vector<16x32xf32> to vector<16x32xbf16>
    %41 = arith.truncf %34 : vector<16x32xf32> to vector<16x32xbf16>
    %42 = vector.extract_strided_slice %39 {offsets = [0, 0], sizes = [16, 8], strides = [1, 1]} : vector<16x32xbf16> to vector<16x8xbf16>
    %43 = vector.extract_strided_slice %40 {offsets = [0, 0], sizes = [16, 8], strides = [1, 1]} : vector<16x32xbf16> to vector<16x8xbf16>
    %cst_20 = arith.constant dense<0.000000e+00> : vector<16x16xf32>
    %44 = tpu.matmul %42, %43, %cst_20 {dimension_numbers = #tpu.dot_dimension_numbers<[1], [1], [0], [0], [0, 0, 1, 0], [], []>} : vector<16x8xbf16>, vector<16x8xbf16>, vector<16x16xf32> -> vector<16x16xf32>
    %cst_21 = arith.constant dense<0xFF800000> : vector<16xf32>
    %45 = vector.multi_reduction <maximumf>, %44, %cst_21 [1] : vector<16x16xf32> to vector<16xf32>
    %46 = vector.shape_cast %45 : vector<16xf32> to vector<16x1xf32>
    %47 = vector.broadcast %46 : vector<16x1xf32> to vector<16x16xf32>
    %48 = arith.subf %44, %47 : vector<16x16xf32>
    %49 = math.exp %48 : vector<16x16xf32>
    %cst_22 = arith.constant dense<0.000000e+00> : vector<16xf32>
    %50 = vector.multi_reduction <add>, %49, %cst_22 [1] : vector<16x16xf32> to vector<16xf32>
    %51 = vector.shape_cast %50 : vector<16xf32> to vector<16x1xf32>
    %52 = arith.truncf %49 : vector<16x16xf32> to vector<16x16xbf16>
    %53 = vector.extract_strided_slice %41 {offsets = [0, 0], sizes = [16, 8], strides = [1, 1]} : vector<16x32xbf16> to vector<16x8xbf16>
    %cst_23 = arith.constant dense<0.000000e+00> : vector<16x8xf32>
    %54 = tpu.matmul %52, %53, %cst_23 {dimension_numbers = #tpu.dot_dimension_numbers<[1], [0], [0], [1], [0, 0, 1, 1], [], []>} : vector<16x16xbf16>, vector<16x8xbf16>, vector<16x8xf32> -> vector<16x8xf32>
    %55 = tpu.reciprocal %51 {approx = true} : vector<16x1xf32> -> vector<16x1xf32>
    %56 = vector.broadcast %55 : vector<16x1xf32> to vector<16x8xf32>
    %57 = arith.mulf %54, %56 : vector<16x8xf32>
    %58 = vector.extract_strided_slice %39 {offsets = [0, 8], sizes = [16, 8], strides = [1, 1]} : vector<16x32xbf16> to vector<16x8xbf16>
    %59 = vector.extract_strided_slice %40 {offsets = [0, 8], sizes = [16, 8], strides = [1, 1]} : vector<16x32xbf16> to vector<16x8xbf16>
    %cst_24 = arith.constant dense<0.000000e+00> : vector<16x16xf32>
    %60 = tpu.matmul %58, %59, %cst_24 {dimension_numbers = #tpu.dot_dimension_numbers<[1], [1], [0], [0], [0, 0, 1, 0], [], []>} : vector<16x8xbf16>, vector<16x8xbf16>, vector<16x16xf32> -> vector<16x16xf32>
    %cst_25 = arith.constant dense<0xFF800000> : vector<16xf32>
    %61 = vector.multi_reduction <maximumf>, %60, %cst_25 [1] : vector<16x16xf32> to vector<16xf32>
    %62 = vector.shape_cast %61 : vector<16xf32> to vector<16x1xf32>
    %63 = vector.broadcast %62 : vector<16x1xf32> to vector<16x16xf32>
    %64 = arith.subf %60, %63 : vector<16x16xf32>
    %65 = math.exp %64 : vector<16x16xf32>
    %cst_26 = arith.constant dense<0.000000e+00> : vector<16xf32>
    %66 = vector.multi_reduction <add>, %65, %cst_26 [1] : vector<16x16xf32> to vector<16xf32>
    %67 = vector.shape_cast %66 : vector<16xf32> to vector<16x1xf32>
    %68 = arith.truncf %65 : vector<16x16xf32> to vector<16x16xbf16>
    %69 = vector.extract_strided_slice %41 {offsets = [0, 8], sizes = [16, 8], strides = [1, 1]} : vector<16x32xbf16> to vector<16x8xbf16>
    %cst_27 = arith.constant dense<0.000000e+00> : vector<16x8xf32>
    %70 = tpu.matmul %68, %69, %cst_27 {dimension_numbers = #tpu.dot_dimension_numbers<[1], [0], [0], [1], [0, 0, 1, 1], [], []>} : vector<16x16xbf16>, vector<16x8xbf16>, vector<16x8xf32> -> vector<16x8xf32>
    %71 = tpu.reciprocal %67 {approx = true} : vector<16x1xf32> -> vector<16x1xf32>
    %72 = vector.broadcast %71 : vector<16x1xf32> to vector<16x8xf32>
    %73 = arith.mulf %70, %72 : vector<16x8xf32>
    %74 = vector.extract_strided_slice %39 {offsets = [0, 16], sizes = [16, 8], strides = [1, 1]} : vector<16x32xbf16> to vector<16x8xbf16>
    %75 = vector.extract_strided_slice %40 {offsets = [0, 16], sizes = [16, 8], strides = [1, 1]} : vector<16x32xbf16> to vector<16x8xbf16>
    %cst_28 = arith.constant dense<0.000000e+00> : vector<16x16xf32>
    %76 = tpu.matmul %74, %75, %cst_28 {dimension_numbers = #tpu.dot_dimension_numbers<[1], [1], [0], [0], [0, 0, 1, 0], [], []>} : vector<16x8xbf16>, vector<16x8xbf16>, vector<16x16xf32> -> vector<16x16xf32>
    %cst_29 = arith.constant dense<0xFF800000> : vector<16xf32>
    %77 = vector.multi_reduction <maximumf>, %76, %cst_29 [1] : vector<16x16xf32> to vector<16xf32>
    %78 = vector.shape_cast %77 : vector<16xf32> to vector<16x1xf32>
    %79 = vector.broadcast %78 : vector<16x1xf32> to vector<16x16xf32>
    %80 = arith.subf %76, %79 : vector<16x16xf32>
    %81 = math.exp %80 : vector<16x16xf32>
    %cst_30 = arith.constant dense<0.000000e+00> : vector<16xf32>
    %82 = vector.multi_reduction <add>, %81, %cst_30 [1] : vector<16x16xf32> to vector<16xf32>
    %83 = vector.shape_cast %82 : vector<16xf32> to vector<16x1xf32>
    %84 = arith.truncf %81 : vector<16x16xf32> to vector<16x16xbf16>
    %85 = vector.extract_strided_slice %41 {offsets = [0, 16], sizes = [16, 8], strides = [1, 1]} : vector<16x32xbf16> to vector<16x8xbf16>
    %cst_31 = arith.constant dense<0.000000e+00> : vector<16x8xf32>
    %86 = tpu.matmul %84, %85, %cst_31 {dimension_numbers = #tpu.dot_dimension_numbers<[1], [0], [0], [1], [0, 0, 1, 1], [], []>} : vector<16x16xbf16>, vector<16x8xbf16>, vector<16x8xf32> -> vector<16x8xf32>
    %87 = tpu.reciprocal %83 {approx = true} : vector<16x1xf32> -> vector<16x1xf32>
    %88 = vector.broadcast %87 : vector<16x1xf32> to vector<16x8xf32>
    %89 = arith.mulf %86, %88 : vector<16x8xf32>
    %90 = vector.extract_strided_slice %39 {offsets = [0, 24], sizes = [16, 8], strides = [1, 1]} : vector<16x32xbf16> to vector<16x8xbf16>
    %91 = vector.extract_strided_slice %40 {offsets = [0, 24], sizes = [16, 8], strides = [1, 1]} : vector<16x32xbf16> to vector<16x8xbf16>
    %cst_32 = arith.constant dense<0.000000e+00> : vector<16x16xf32>
    %92 = tpu.matmul %90, %91, %cst_32 {dimension_numbers = #tpu.dot_dimension_numbers<[1], [1], [0], [0], [0, 0, 1, 0], [], []>} : vector<16x8xbf16>, vector<16x8xbf16>, vector<16x16xf32> -> vector<16x16xf32>
    %cst_33 = arith.constant dense<0xFF800000> : vector<16xf32>
    %93 = vector.multi_reduction <maximumf>, %92, %cst_33 [1] : vector<16x16xf32> to vector<16xf32>
    %94 = vector.shape_cast %93 : vector<16xf32> to vector<16x1xf32>
    %95 = vector.broadcast %94 : vector<16x1xf32> to vector<16x16xf32>
    %96 = arith.subf %92, %95 : vector<16x16xf32>
    %97 = math.exp %96 : vector<16x16xf32>
    %cst_34 = arith.constant dense<0.000000e+00> : vector<16xf32>
    %98 = vector.multi_reduction <add>, %97, %cst_34 [1] : vector<16x16xf32> to vector<16xf32>
    %99 = vector.shape_cast %98 : vector<16xf32> to vector<16x1xf32>
    %100 = arith.truncf %97 : vector<16x16xf32> to vector<16x16xbf16>
    %101 = vector.extract_strided_slice %41 {offsets = [0, 24], sizes = [16, 8], strides = [1, 1]} : vector<16x32xbf16> to vector<16x8xbf16>
    %cst_35 = arith.constant dense<0.000000e+00> : vector<16x8xf32>
    %102 = tpu.matmul %100, %101, %cst_35 {dimension_numbers = #tpu.dot_dimension_numbers<[1], [0], [0], [1], [0, 0, 1, 1], [], []>} : vector<16x16xbf16>, vector<16x8xbf16>, vector<16x8xf32> -> vector<16x8xf32>
    %103 = tpu.reciprocal %99 {approx = true} : vector<16x1xf32> -> vector<16x1xf32>
    %104 = vector.broadcast %103 : vector<16x1xf32> to vector<16x8xf32>
    %105 = arith.mulf %102, %104 : vector<16x8xf32>
    %106 = tpu.concatenate %57, %73, %89, %105 in 1 : vector<16x8xf32>, vector<16x8xf32>, vector<16x8xf32>, vector<16x8xf32> -> vector<16x32xf32>
    %107 = arith.truncf %106 : vector<16x32xf32> to vector<16x32xbf16>
    %cst_36 = arith.constant dense<0.000000e+00> : vector<16x32xf32>
    %108 = tpu.matmul %107, %35, %cst_36 {dimension_numbers = #tpu.dot_dimension_numbers<[1], [0], [0], [1], [0, 0, 1, 1], [], []>} : vector<16x32xbf16>, vector<32x32xbf16>, vector<16x32xf32> -> vector<16x32xf32>
    %109 = vector.broadcast %36 : vector<1x32xf32> to vector<16x32xf32>
    %110 = arith.addf %108, %109 : vector<16x32xf32>
    %111 = arith.addf %1, %110 : vector<16x32xf32>
    %c0_37 = arith.constant 0 : index
    %c0_38 = arith.constant 0 : index
    %c0_39 = arith.constant 0 : index
    %112 = vector.load %arg8[%c0_37, %c0_38, %c0_39] : memref<1x16x32xf32, #tpu.memory_space<vmem>>, vector<1x16x32xf32>
    %113 = vector.shape_cast %112 : vector<1x16x32xf32> to vector<16x32xf32>
    %114 = vector.shape_cast %111 : vector<16x32xf32> to vector<1x16x32xf32>
    tpu.vector_store %arg8[%c0_37, %c0_38, %c0_39], %114 {strides = array<i32>} : memref<1x16x32xf32, #tpu.memory_space<vmem>>, vector<1x16x32xf32>,
    return
  }
  func.func @transform_0(%arg0: i32) -> (i32, i32, i32) {
    %c0_i32 = arith.constant 0 : i32
    %c0_i32_0 = arith.constant 0 : i32
    %c0_i32_1 = arith.constant 0 : i32
    return %arg0, %c0_i32, %c0_i32_0 : i32, i32, i32
  }
  func.func @transform_1(%arg0: i32) -> (i32, i32) {
    %c0_i32 = arith.constant 0 : i32
    %c0_i32_0 = arith.constant 0 : i32
    %c0_i32_1 = arith.constant 0 : i32
    return %c0_i32, %c0_i32_0 : i32, i32
  }
  func.func @transform_2(%arg0: i32) -> (i32, i32) {
    %c0_i32 = arith.constant 0 : i32
    %c0_i32_0 = arith.constant 0 : i32
    %c0_i32_1 = arith.constant 0 : i32
    return %c0_i32, %c0_i32_0 : i32, i32
  }
  func.func @transform_3(%arg0: i32) -> (i32, i32) {
    %c0_i32 = arith.constant 0 : i32
    %c0_i32_0 = arith.constant 0 : i32
    %c0_i32_1 = arith.constant 0 : i32
    return %c0_i32, %c0_i32_0 : i32, i32
  }
  func.func @transform_4(%arg0: i32) -> (i32, i32) {
    %c0_i32 = arith.constant 0 : i32
    %c0_i32_0 = arith.constant 0 : i32
    %c0_i32_1 = arith.constant 0 : i32
    return %c0_i32, %c0_i32_0 : i32, i32
  }
  func.func @transform_5(%arg0: i32) -> (i32, i32) {
    %c0_i32 = arith.constant 0 : i32
    %c0_i32_0 = arith.constant 0 : i32
    %c0_i32_1 = arith.constant 0 : i32
    return %c0_i32, %c0_i32_0 : i32, i32
  }
  func.func @transform_6(%arg0: i32) -> (i32, i32) {
    %c0_i32 = arith.constant 0 : i32
    %c0_i32_0 = arith.constant 0 : i32
    %c0_i32_1 = arith.constant 0 : i32
    return %c0_i32, %c0_i32_0 : i32, i32
  }
  func.func @transform_7(%arg0: i32) -> (i32, i32, i32) {
    %c0_i32 = arith.constant 0 : i32
    %c0_i32_0 = arith.constant 0 : i32
    %c0_i32_1 = arith.constant 0 : i32
    return %arg0, %c0_i32, %c0_i32_0 : i32, i32, i32
  }
}

module attributes {stable_mosaic.version = 11 : i64} {
  func.func @_ffn_sublayer_kernel(%arg0: i32, %arg1: memref<16x32xf32, #tpu.memory_space<vmem>>, %arg2: memref<1x32xf32, #tpu.memory_space<vmem>>, %arg3: memref<1x32xf32, #tpu.memory_space<vmem>>, %arg4: memref<32x64xbf16, #tpu.memory_space<vmem>>, %arg5: memref<1x64xf32, #tpu.memory_space<vmem>>, %arg6: memref<64x32xbf16, #tpu.memory_space<vmem>>, %arg7: memref<1x32xf32, #tpu.memory_space<vmem>>, %arg8: memref<16x32xf32, #tpu.memory_space<vmem>>) attributes {dimension_semantics = [#tpu.dimension_semantics<parallel>], iteration_bounds = array<i64: 1>, scalar_prefetch = 0 : i64, scratch_operands = 0 : i64, tpu.core_type = #tpu.core_type<tc>, window_params = [{transform_indices = @transform_0, window_bounds = array<i64: 16, 32>}, {pipeline_mode = #tpu.pipeline_mode<synchronous>, transform_indices = @transform_1, window_bounds = array<i64: 1, 32>}, {pipeline_mode = #tpu.pipeline_mode<synchronous>, transform_indices = @transform_2, window_bounds = array<i64: 1, 32>}, {pipeline_mode = #tpu.pipeline_mode<synchronous>, transform_indices = @transform_3, window_bounds = array<i64: 32, 64>}, {pipeline_mode = #tpu.pipeline_mode<synchronous>, transform_indices = @transform_4, window_bounds = array<i64: 1, 64>}, {pipeline_mode = #tpu.pipeline_mode<synchronous>, transform_indices = @transform_5, window_bounds = array<i64: 64, 32>}, {pipeline_mode = #tpu.pipeline_mode<synchronous>, transform_indices = @transform_6, window_bounds = array<i64: 1, 32>}, {transform_indices = @transform_7, window_bounds = array<i64: 16, 32>}]} {
    %c0 = arith.constant 0 : index
    %c0_0 = arith.constant 0 : index
    %0 = vector.load %arg1[%c0, %c0_0] : memref<16x32xf32, #tpu.memory_space<vmem>>, vector<16x32xf32>
    %c0_1 = arith.constant 0 : index
    %c0_2 = arith.constant 0 : index
    %1 = vector.load %arg2[%c0_1, %c0_2] : memref<1x32xf32, #tpu.memory_space<vmem>>, vector<1x32xf32>
    %c0_3 = arith.constant 0 : index
    %c0_4 = arith.constant 0 : index
    %2 = vector.load %arg3[%c0_3, %c0_4] : memref<1x32xf32, #tpu.memory_space<vmem>>, vector<1x32xf32>
    %cst = arith.constant dense<0.000000e+00> : vector<16xf32>
    %3 = vector.multi_reduction <add>, %0, %cst [1] : vector<16x32xf32> to vector<16xf32>
    %4 = vector.shape_cast %3 : vector<16xf32> to vector<16x1xf32>
    %cst_5 = arith.constant 3.200000e+01 : f32
    %5 = vector.broadcast %cst_5 : f32 to vector<16x1xf32>
    %6 = arith.divf %4, %5 : vector<16x1xf32>
    %7 = vector.broadcast %6 : vector<16x1xf32> to vector<16x32xf32>
    %8 = arith.subf %0, %7 : vector<16x32xf32>
    %9 = arith.mulf %8, %8 : vector<16x32xf32>
    %cst_6 = arith.constant dense<0.000000e+00> : vector<16xf32>
    %10 = vector.multi_reduction <add>, %9, %cst_6 [1] : vector<16x32xf32> to vector<16xf32>
    %11 = vector.shape_cast %10 : vector<16xf32> to vector<16x1xf32>
    %cst_7 = arith.constant 3.200000e+01 : f32
    %12 = vector.broadcast %cst_7 : f32 to vector<16x1xf32>
    %13 = arith.divf %11, %12 : vector<16x1xf32>
    %14 = vector.broadcast %6 : vector<16x1xf32> to vector<16x32xf32>
    %15 = arith.subf %0, %14 : vector<16x32xf32>
    %cst_8 = arith.constant 9.99999974E-6 : f32
    %16 = vector.broadcast %cst_8 : f32 to vector<16x1xf32>
    %17 = arith.addf %13, %16 : vector<16x1xf32>
    %18 = math.rsqrt %17 : vector<16x1xf32>
    %19 = vector.broadcast %18 : vector<16x1xf32> to vector<16x32xf32>
    %20 = arith.mulf %15, %19 : vector<16x32xf32>
    %21 = vector.broadcast %1 : vector<1x32xf32> to vector<16x32xf32>
    %22 = arith.mulf %20, %21 : vector<16x32xf32>
    %23 = vector.broadcast %2 : vector<1x32xf32> to vector<16x32xf32>
    %24 = arith.addf %22, %23 : vector<16x32xf32>
    %25 = arith.truncf %24 : vector<16x32xf32> to vector<16x32xbf16>
    %c0_9 = arith.constant 0 : index
    %c0_10 = arith.constant 0 : index
    %26 = vector.load %arg4[%c0_9, %c0_10] : memref<32x64xbf16, #tpu.memory_space<vmem>>, vector<32x64xbf16>
    %cst_11 = arith.constant dense<0.000000e+00> : vector<16x64xf32>
    %27 = tpu.matmul %25, %26, %cst_11 {dimension_numbers = #tpu.dot_dimension_numbers<[1], [0], [0], [1], [0, 0, 1, 1], [], []>} : vector<16x32xbf16>, vector<32x64xbf16>, vector<16x64xf32> -> vector<16x64xf32>
    %c0_12 = arith.constant 0 : index
    %c0_13 = arith.constant 0 : index
    %28 = vector.load %arg5[%c0_12, %c0_13] : memref<1x64xf32, #tpu.memory_space<vmem>>, vector<1x64xf32>
    %29 = vector.broadcast %28 : vector<1x64xf32> to vector<16x64xf32>
    %30 = arith.addf %27, %29 : vector<16x64xf32>
    %cst_14 = arith.constant 5.000000e-01 : f32
    %31 = vector.broadcast %cst_14 : f32 to vector<16x64xf32>
    %32 = arith.mulf %31, %30 : vector<16x64xf32>
    %cst_15 = arith.constant 0.707106769 : f32
    %33 = vector.broadcast %cst_15 : f32 to vector<16x64xf32>
    %34 = arith.mulf %30, %33 : vector<16x64xf32>
    %35 = math.absf %34 : vector<16x64xf32>
    %cst_16 = arith.constant 0.327591091 : f32
    %36 = vector.broadcast %cst_16 : f32 to vector<16x64xf32>
    %37 = arith.mulf %36, %35 : vector<16x64xf32>
    %cst_17 = arith.constant 1.000000e+00 : f32
    %38 = vector.broadcast %cst_17 : f32 to vector<16x64xf32>
    %39 = arith.addf %38, %37 : vector<16x64xf32>
    %40 = tpu.reciprocal %39 {approx = true} : vector<16x64xf32> -> vector<16x64xf32>
    %cst_18 = arith.constant 1.06140542 : f32
    %41 = vector.broadcast %cst_18 : f32 to vector<16x64xf32>
    %42 = arith.mulf %41, %40 : vector<16x64xf32>
    %cst_19 = arith.constant -1.45315206 : f32
    %43 = vector.broadcast %cst_19 : f32 to vector<16x64xf32>
    %44 = arith.addf %42, %43 : vector<16x64xf32>
    %45 = arith.mulf %44, %40 : vector<16x64xf32>
    %cst_20 = arith.constant 1.42141378 : f32
    %46 = vector.broadcast %cst_20 : f32 to vector<16x64xf32>
    %47 = arith.addf %45, %46 : vector<16x64xf32>
    %48 = arith.mulf %47, %40 : vector<16x64xf32>
    %cst_21 = arith.constant -0.284496725 : f32
    %49 = vector.broadcast %cst_21 : f32 to vector<16x64xf32>
    %50 = arith.addf %48, %49 : vector<16x64xf32>
    %51 = arith.mulf %50, %40 : vector<16x64xf32>
    %cst_22 = arith.constant 0.254829586 : f32
    %52 = vector.broadcast %cst_22 : f32 to vector<16x64xf32>
    %53 = arith.addf %51, %52 : vector<16x64xf32>
    %54 = arith.mulf %53, %40 : vector<16x64xf32>
    %cst_23 = arith.constant 0.000000e+00 : f32
    %55 = vector.broadcast %cst_23 : f32 to vector<16x64xf32>
    %56 = arith.subf %55, %35 : vector<16x64xf32>
    %57 = arith.mulf %56, %35 : vector<16x64xf32>
    %58 = math.exp %57 : vector<16x64xf32>
    %59 = arith.mulf %54, %58 : vector<16x64xf32>
    %cst_24 = arith.constant 1.000000e+00 : f32
    %60 = vector.broadcast %cst_24 : f32 to vector<16x64xf32>
    %61 = arith.subf %60, %59 : vector<16x64xf32>
    %cst_25 = arith.constant 0.000000e+00 : f32
    %62 = vector.broadcast %cst_25 : f32 to vector<16x64xf32>
    %63 = arith.cmpf oge, %34, %62 : vector<16x64xf32>
    %cst_26 = arith.constant 0.000000e+00 : f32
    %64 = vector.broadcast %cst_26 : f32 to vector<16x64xf32>
    %65 = arith.subf %64, %61 : vector<16x64xf32>
    %66 = arith.select %63, %61, %65 : vector<16x64xi1>, vector<16x64xf32>
    %cst_27 = arith.constant 1.000000e+00 : f32
    %67 = vector.broadcast %cst_27 : f32 to vector<16x64xf32>
    %68 = arith.addf %67, %66 : vector<16x64xf32>
    %69 = arith.mulf %32, %68 : vector<16x64xf32>
    %70 = arith.truncf %69 : vector<16x64xf32> to vector<16x64xbf16>
    %c0_28 = arith.constant 0 : index
    %c0_29 = arith.constant 0 : index
    %71 = vector.load %arg6[%c0_28, %c0_29] : memref<64x32xbf16, #tpu.memory_space<vmem>>, vector<64x32xbf16>
    %cst_30 = arith.constant dense<0.000000e+00> : vector<16x32xf32>
    %72 = tpu.matmul %70, %71, %cst_30 {dimension_numbers = #tpu.dot_dimension_numbers<[1], [0], [0], [1], [0, 0, 1, 1], [], []>} : vector<16x64xbf16>, vector<64x32xbf16>, vector<16x32xf32> -> vector<16x32xf32>
    %c0_31 = arith.constant 0 : index
    %c0_32 = arith.constant 0 : index
    %73 = vector.load %arg7[%c0_31, %c0_32] : memref<1x32xf32, #tpu.memory_space<vmem>>, vector<1x32xf32>
    %74 = vector.broadcast %73 : vector<1x32xf32> to vector<16x32xf32>
    %75 = arith.addf %72, %74 : vector<16x32xf32>
    %76 = arith.addf %0, %75 : vector<16x32xf32>
    %c0_33 = arith.constant 0 : index
    %c0_34 = arith.constant 0 : index
    %77 = vector.load %arg8[%c0_33, %c0_34] : memref<16x32xf32, #tpu.memory_space<vmem>>, vector<16x32xf32>
    tpu.vector_store %arg8[%c0_33, %c0_34], %76 {strides = array<i32>} : memref<16x32xf32, #tpu.memory_space<vmem>>, vector<16x32xf32>,
    return
  }
  func.func @transform_0(%arg0: i32) -> (i32, i32) {
    %c0_i32 = arith.constant 0 : i32
    %c0_i32_0 = arith.constant 0 : i32
    return %arg0, %c0_i32 : i32, i32
  }
  func.func @transform_1(%arg0: i32) -> (i32, i32) {
    %c0_i32 = arith.constant 0 : i32
    %c0_i32_0 = arith.constant 0 : i32
    %c0_i32_1 = arith.constant 0 : i32
    return %c0_i32, %c0_i32_0 : i32, i32
  }
  func.func @transform_2(%arg0: i32) -> (i32, i32) {
    %c0_i32 = arith.constant 0 : i32
    %c0_i32_0 = arith.constant 0 : i32
    %c0_i32_1 = arith.constant 0 : i32
    return %c0_i32, %c0_i32_0 : i32, i32
  }
  func.func @transform_3(%arg0: i32) -> (i32, i32) {
    %c0_i32 = arith.constant 0 : i32
    %c0_i32_0 = arith.constant 0 : i32
    %c0_i32_1 = arith.constant 0 : i32
    return %c0_i32, %c0_i32_0 : i32, i32
  }
  func.func @transform_4(%arg0: i32) -> (i32, i32) {
    %c0_i32 = arith.constant 0 : i32
    %c0_i32_0 = arith.constant 0 : i32
    %c0_i32_1 = arith.constant 0 : i32
    return %c0_i32, %c0_i32_0 : i32, i32
  }
  func.func @transform_5(%arg0: i32) -> (i32, i32) {
    %c0_i32 = arith.constant 0 : i32
    %c0_i32_0 = arith.constant 0 : i32
    %c0_i32_1 = arith.constant 0 : i32
    return %c0_i32, %c0_i32_0 : i32, i32
  }
  func.func @transform_6(%arg0: i32) -> (i32, i32) {
    %c0_i32 = arith.constant 0 : i32
    %c0_i32_0 = arith.constant 0 : i32
    %c0_i32_1 = arith.constant 0 : i32
    return %c0_i32, %c0_i32_0 : i32, i32
  }
  func.func @transform_7(%arg0: i32) -> (i32, i32) {
    %c0_i32 = arith.constant 0 : i32
    %c0_i32_0 = arith.constant 0 : i32
    return %arg0, %c0_i32 : i32, i32
  }
}

module attributes {stable_mosaic.version = 11 : i64} {
  func.func @_avg_ffn_sublayer_kernel(%arg0: i32, %arg1: memref<32x32xf32, #tpu.memory_space<vmem>>, %arg2: memref<32x32xf32, #tpu.memory_space<vmem>>, %arg3: memref<32x32xf32, #tpu.memory_space<vmem>>, %arg4: memref<1x32xf32, #tpu.memory_space<vmem>>, %arg5: memref<1x32xf32, #tpu.memory_space<vmem>>, %arg6: memref<32x64xbf16, #tpu.memory_space<vmem>>, %arg7: memref<1x64xf32, #tpu.memory_space<vmem>>, %arg8: memref<64x32xbf16, #tpu.memory_space<vmem>>, %arg9: memref<1x32xf32, #tpu.memory_space<vmem>>, %arg10: memref<32x32xf32, #tpu.memory_space<vmem>>) attributes {dimension_semantics = [#tpu.dimension_semantics<parallel>], iteration_bounds = array<i64: 1>, scalar_prefetch = 0 : i64, scratch_operands = 0 : i64, tpu.core_type = #tpu.core_type<tc>, window_params = [{transform_indices = @transform_0, window_bounds = array<i64: 32, 32>}, {transform_indices = @transform_1, window_bounds = array<i64: 32, 32>}, {transform_indices = @transform_2, window_bounds = array<i64: 32, 32>}, {pipeline_mode = #tpu.pipeline_mode<synchronous>, transform_indices = @transform_3, window_bounds = array<i64: 1, 32>}, {pipeline_mode = #tpu.pipeline_mode<synchronous>, transform_indices = @transform_4, window_bounds = array<i64: 1, 32>}, {pipeline_mode = #tpu.pipeline_mode<synchronous>, transform_indices = @transform_5, window_bounds = array<i64: 32, 64>}, {pipeline_mode = #tpu.pipeline_mode<synchronous>, transform_indices = @transform_6, window_bounds = array<i64: 1, 64>}, {pipeline_mode = #tpu.pipeline_mode<synchronous>, transform_indices = @transform_7, window_bounds = array<i64: 64, 32>}, {pipeline_mode = #tpu.pipeline_mode<synchronous>, transform_indices = @transform_8, window_bounds = array<i64: 1, 32>}, {transform_indices = @transform_9, window_bounds = array<i64: 32, 32>}]} {
    %c0 = arith.constant 0 : index
    %c0_0 = arith.constant 0 : index
    %0 = vector.load %arg1[%c0, %c0_0] : memref<32x32xf32, #tpu.memory_space<vmem>>, vector<32x32xf32>
    %c0_1 = arith.constant 0 : index
    %c0_2 = arith.constant 0 : index
    %1 = vector.load %arg2[%c0_1, %c0_2] : memref<32x32xf32, #tpu.memory_space<vmem>>, vector<32x32xf32>
    %2 = arith.addf %0, %1 : vector<32x32xf32>
    %c0_3 = arith.constant 0 : index
    %c0_4 = arith.constant 0 : index
    %3 = vector.load %arg3[%c0_3, %c0_4] : memref<32x32xf32, #tpu.memory_space<vmem>>, vector<32x32xf32>
    %4 = arith.addf %2, %3 : vector<32x32xf32>
    %cst = arith.constant 3.000000e+00 : f32
    %5 = vector.broadcast %cst : f32 to vector<32x32xf32>
    %6 = arith.divf %4, %5 : vector<32x32xf32>
    %c0_5 = arith.constant 0 : index
    %c0_6 = arith.constant 0 : index
    %7 = vector.load %arg4[%c0_5, %c0_6] : memref<1x32xf32, #tpu.memory_space<vmem>>, vector<1x32xf32>
    %c0_7 = arith.constant 0 : index
    %c0_8 = arith.constant 0 : index
    %8 = vector.load %arg5[%c0_7, %c0_8] : memref<1x32xf32, #tpu.memory_space<vmem>>, vector<1x32xf32>
    %cst_9 = arith.constant dense<0.000000e+00> : vector<32xf32>
    %9 = vector.multi_reduction <add>, %6, %cst_9 [1] : vector<32x32xf32> to vector<32xf32>
    %10 = vector.shape_cast %9 : vector<32xf32> to vector<32x1xf32>
    %cst_10 = arith.constant 3.200000e+01 : f32
    %11 = vector.broadcast %cst_10 : f32 to vector<32x1xf32>
    %12 = arith.divf %10, %11 : vector<32x1xf32>
    %13 = vector.broadcast %12 : vector<32x1xf32> to vector<32x32xf32>
    %14 = arith.subf %6, %13 : vector<32x32xf32>
    %15 = arith.mulf %14, %14 : vector<32x32xf32>
    %cst_11 = arith.constant dense<0.000000e+00> : vector<32xf32>
    %16 = vector.multi_reduction <add>, %15, %cst_11 [1] : vector<32x32xf32> to vector<32xf32>
    %17 = vector.shape_cast %16 : vector<32xf32> to vector<32x1xf32>
    %cst_12 = arith.constant 3.200000e+01 : f32
    %18 = vector.broadcast %cst_12 : f32 to vector<32x1xf32>
    %19 = arith.divf %17, %18 : vector<32x1xf32>
    %20 = vector.broadcast %12 : vector<32x1xf32> to vector<32x32xf32>
    %21 = arith.subf %6, %20 : vector<32x32xf32>
    %cst_13 = arith.constant 9.99999974E-6 : f32
    %22 = vector.broadcast %cst_13 : f32 to vector<32x1xf32>
    %23 = arith.addf %19, %22 : vector<32x1xf32>
    %24 = math.rsqrt %23 : vector<32x1xf32>
    %25 = vector.broadcast %24 : vector<32x1xf32> to vector<32x32xf32>
    %26 = arith.mulf %21, %25 : vector<32x32xf32>
    %27 = vector.broadcast %7 : vector<1x32xf32> to vector<32x32xf32>
    %28 = arith.mulf %26, %27 : vector<32x32xf32>
    %29 = vector.broadcast %8 : vector<1x32xf32> to vector<32x32xf32>
    %30 = arith.addf %28, %29 : vector<32x32xf32>
    %31 = arith.truncf %30 : vector<32x32xf32> to vector<32x32xbf16>
    %c0_14 = arith.constant 0 : index
    %c0_15 = arith.constant 0 : index
    %32 = vector.load %arg6[%c0_14, %c0_15] : memref<32x64xbf16, #tpu.memory_space<vmem>>, vector<32x64xbf16>
    %cst_16 = arith.constant dense<0.000000e+00> : vector<32x64xf32>
    %33 = tpu.matmul %31, %32, %cst_16 {dimension_numbers = #tpu.dot_dimension_numbers<[1], [0], [0], [1], [0, 0, 1, 1], [], []>} : vector<32x32xbf16>, vector<32x64xbf16>, vector<32x64xf32> -> vector<32x64xf32>
    %c0_17 = arith.constant 0 : index
    %c0_18 = arith.constant 0 : index
    %34 = vector.load %arg7[%c0_17, %c0_18] : memref<1x64xf32, #tpu.memory_space<vmem>>, vector<1x64xf32>
    %35 = vector.broadcast %34 : vector<1x64xf32> to vector<32x64xf32>
    %36 = arith.addf %33, %35 : vector<32x64xf32>
    %cst_19 = arith.constant 5.000000e-01 : f32
    %37 = vector.broadcast %cst_19 : f32 to vector<32x64xf32>
    %38 = arith.mulf %37, %36 : vector<32x64xf32>
    %cst_20 = arith.constant 0.707106769 : f32
    %39 = vector.broadcast %cst_20 : f32 to vector<32x64xf32>
    %40 = arith.mulf %36, %39 : vector<32x64xf32>
    %41 = math.absf %40 : vector<32x64xf32>
    %cst_21 = arith.constant 0.327591091 : f32
    %42 = vector.broadcast %cst_21 : f32 to vector<32x64xf32>
    %43 = arith.mulf %42, %41 : vector<32x64xf32>
    %cst_22 = arith.constant 1.000000e+00 : f32
    %44 = vector.broadcast %cst_22 : f32 to vector<32x64xf32>
    %45 = arith.addf %44, %43 : vector<32x64xf32>
    %46 = tpu.reciprocal %45 {approx = true} : vector<32x64xf32> -> vector<32x64xf32>
    %cst_23 = arith.constant 1.06140542 : f32
    %47 = vector.broadcast %cst_23 : f32 to vector<32x64xf32>
    %48 = arith.mulf %47, %46 : vector<32x64xf32>
    %cst_24 = arith.constant -1.45315206 : f32
    %49 = vector.broadcast %cst_24 : f32 to vector<32x64xf32>
    %50 = arith.addf %48, %49 : vector<32x64xf32>
    %51 = arith.mulf %50, %46 : vector<32x64xf32>
    %cst_25 = arith.constant 1.42141378 : f32
    %52 = vector.broadcast %cst_25 : f32 to vector<32x64xf32>
    %53 = arith.addf %51, %52 : vector<32x64xf32>
    %54 = arith.mulf %53, %46 : vector<32x64xf32>
    %cst_26 = arith.constant -0.284496725 : f32
    %55 = vector.broadcast %cst_26 : f32 to vector<32x64xf32>
    %56 = arith.addf %54, %55 : vector<32x64xf32>
    %57 = arith.mulf %56, %46 : vector<32x64xf32>
    %cst_27 = arith.constant 0.254829586 : f32
    %58 = vector.broadcast %cst_27 : f32 to vector<32x64xf32>
    %59 = arith.addf %57, %58 : vector<32x64xf32>
    %60 = arith.mulf %59, %46 : vector<32x64xf32>
    %cst_28 = arith.constant 0.000000e+00 : f32
    %61 = vector.broadcast %cst_28 : f32 to vector<32x64xf32>
    %62 = arith.subf %61, %41 : vector<32x64xf32>
    %63 = arith.mulf %62, %41 : vector<32x64xf32>
    %64 = math.exp %63 : vector<32x64xf32>
    %65 = arith.mulf %60, %64 : vector<32x64xf32>
    %cst_29 = arith.constant 1.000000e+00 : f32
    %66 = vector.broadcast %cst_29 : f32 to vector<32x64xf32>
    %67 = arith.subf %66, %65 : vector<32x64xf32>
    %cst_30 = arith.constant 0.000000e+00 : f32
    %68 = vector.broadcast %cst_30 : f32 to vector<32x64xf32>
    %69 = arith.cmpf oge, %40, %68 : vector<32x64xf32>
    %cst_31 = arith.constant 0.000000e+00 : f32
    %70 = vector.broadcast %cst_31 : f32 to vector<32x64xf32>
    %71 = arith.subf %70, %67 : vector<32x64xf32>
    %72 = arith.select %69, %67, %71 : vector<32x64xi1>, vector<32x64xf32>
    %cst_32 = arith.constant 1.000000e+00 : f32
    %73 = vector.broadcast %cst_32 : f32 to vector<32x64xf32>
    %74 = arith.addf %73, %72 : vector<32x64xf32>
    %75 = arith.mulf %38, %74 : vector<32x64xf32>
    %76 = arith.truncf %75 : vector<32x64xf32> to vector<32x64xbf16>
    %c0_33 = arith.constant 0 : index
    %c0_34 = arith.constant 0 : index
    %77 = vector.load %arg8[%c0_33, %c0_34] : memref<64x32xbf16, #tpu.memory_space<vmem>>, vector<64x32xbf16>
    %cst_35 = arith.constant dense<0.000000e+00> : vector<32x32xf32>
    %78 = tpu.matmul %76, %77, %cst_35 {dimension_numbers = #tpu.dot_dimension_numbers<[1], [0], [0], [1], [0, 0, 1, 1], [], []>} : vector<32x64xbf16>, vector<64x32xbf16>, vector<32x32xf32> -> vector<32x32xf32>
    %c0_36 = arith.constant 0 : index
    %c0_37 = arith.constant 0 : index
    %79 = vector.load %arg9[%c0_36, %c0_37] : memref<1x32xf32, #tpu.memory_space<vmem>>, vector<1x32xf32>
    %80 = vector.broadcast %79 : vector<1x32xf32> to vector<32x32xf32>
    %81 = arith.addf %78, %80 : vector<32x32xf32>
    %82 = arith.addf %6, %81 : vector<32x32xf32>
    %c0_38 = arith.constant 0 : index
    %c0_39 = arith.constant 0 : index
    %83 = vector.load %arg10[%c0_38, %c0_39] : memref<32x32xf32, #tpu.memory_space<vmem>>, vector<32x32xf32>
    tpu.vector_store %arg10[%c0_38, %c0_39], %82 {strides = array<i32>} : memref<32x32xf32, #tpu.memory_space<vmem>>, vector<32x32xf32>,
    return
  }
  func.func @transform_0(%arg0: i32) -> (i32, i32) {
    %c0_i32 = arith.constant 0 : i32
    %c0_i32_0 = arith.constant 0 : i32
    return %arg0, %c0_i32 : i32, i32
  }
  func.func @transform_1(%arg0: i32) -> (i32, i32) {
    %c0_i32 = arith.constant 0 : i32
    %c0_i32_0 = arith.constant 0 : i32
    return %arg0, %c0_i32 : i32, i32
  }
  func.func @transform_2(%arg0: i32) -> (i32, i32) {
    %c0_i32 = arith.constant 0 : i32
    %c0_i32_0 = arith.constant 0 : i32
    return %arg0, %c0_i32 : i32, i32
  }
  func.func @transform_3(%arg0: i32) -> (i32, i32) {
    %c0_i32 = arith.constant 0 : i32
    %c0_i32_0 = arith.constant 0 : i32
    %c0_i32_1 = arith.constant 0 : i32
    return %c0_i32, %c0_i32_0 : i32, i32
  }
  func.func @transform_4(%arg0: i32) -> (i32, i32) {
    %c0_i32 = arith.constant 0 : i32
    %c0_i32_0 = arith.constant 0 : i32
    %c0_i32_1 = arith.constant 0 : i32
    return %c0_i32, %c0_i32_0 : i32, i32
  }
  func.func @transform_5(%arg0: i32) -> (i32, i32) {
    %c0_i32 = arith.constant 0 : i32
    %c0_i32_0 = arith.constant 0 : i32
    %c0_i32_1 = arith.constant 0 : i32
    return %c0_i32, %c0_i32_0 : i32, i32
  }
  func.func @transform_6(%arg0: i32) -> (i32, i32) {
    %c0_i32 = arith.constant 0 : i32
    %c0_i32_0 = arith.constant 0 : i32
    %c0_i32_1 = arith.constant 0 : i32
    return %c0_i32, %c0_i32_0 : i32, i32
  }
  func.func @transform_7(%arg0: i32) -> (i32, i32) {
    %c0_i32 = arith.constant 0 : i32
    %c0_i32_0 = arith.constant 0 : i32
    %c0_i32_1 = arith.constant 0 : i32
    return %c0_i32, %c0_i32_0 : i32, i32
  }
  func.func @transform_8(%arg0: i32) -> (i32, i32) {
    %c0_i32 = arith.constant 0 : i32
    %c0_i32_0 = arith.constant 0 : i32
    %c0_i32_1 = arith.constant 0 : i32
    return %c0_i32, %c0_i32_0 : i32, i32
  }
  func.func @transform_9(%arg0: i32) -> (i32, i32) {
    %c0_i32 = arith.constant 0 : i32
    %c0_i32_0 = arith.constant 0 : i32
    return %arg0, %c0_i32 : i32, i32
  }
}

module attributes {stable_mosaic.version = 11 : i64} {
  func.func @_cross_attn_sublayer_kernel(%arg0: i32, %arg1: memref<1x16x32xf32, #tpu.memory_space<vmem>>, %arg2: memref<1x8x32xf32, #tpu.memory_space<vmem>>, %arg3: memref<1x32xf32, #tpu.memory_space<vmem>>, %arg4: memref<1x32xf32, #tpu.memory_space<vmem>>, %arg5: memref<1x32xf32, #tpu.memory_space<vmem>>, %arg6: memref<1x32xf32, #tpu.memory_space<vmem>>, %arg7: memref<32x32xbf16, #tpu.memory_space<vmem>>, %arg8: memref<1x32xf32, #tpu.memory_space<vmem>>, %arg9: memref<32x64xbf16, #tpu.memory_space<vmem>>, %arg10: memref<1x64xf32, #tpu.memory_space<vmem>>, %arg11: memref<32x32xbf16, #tpu.memory_space<vmem>>, %arg12: memref<1x32xf32, #tpu.memory_space<vmem>>, %arg13: memref<1x16x32xf32, #tpu.memory_space<vmem>>) attributes {dimension_semantics = [#tpu.dimension_semantics<parallel>], iteration_bounds = array<i64: 2>, scalar_prefetch = 0 : i64, scratch_operands = 0 : i64, tpu.core_type = #tpu.core_type<tc>, window_params = [{transform_indices = @transform_0, window_bounds = array<i64: 1, 16, 32>}, {transform_indices = @transform_1, window_bounds = array<i64: 1, 8, 32>}, {pipeline_mode = #tpu.pipeline_mode<synchronous>, transform_indices = @transform_2, window_bounds = array<i64: 1, 32>}, {pipeline_mode = #tpu.pipeline_mode<synchronous>, transform_indices = @transform_3, window_bounds = array<i64: 1, 32>}, {pipeline_mode = #tpu.pipeline_mode<synchronous>, transform_indices = @transform_4, window_bounds = array<i64: 1, 32>}, {pipeline_mode = #tpu.pipeline_mode<synchronous>, transform_indices = @transform_5, window_bounds = array<i64: 1, 32>}, {pipeline_mode = #tpu.pipeline_mode<synchronous>, transform_indices = @transform_6, window_bounds = array<i64: 32, 32>}, {pipeline_mode = #tpu.pipeline_mode<synchronous>, transform_indices = @transform_7, window_bounds = array<i64: 1, 32>}, {pipeline_mode = #tpu.pipeline_mode<synchronous>, transform_indices = @transform_8, window_bounds = array<i64: 32, 64>}, {pipeline_mode = #tpu.pipeline_mode<synchronous>, transform_indices = @transform_9, window_bounds = array<i64: 1, 64>}, {pipeline_mode = #tpu.pipeline_mode<synchronous>, transform_indices = @transform_10, window_bounds = array<i64: 32, 32>}, {pipeline_mode = #tpu.pipeline_mode<synchronous>, transform_indices = @transform_11, window_bounds = array<i64: 1, 32>}, {transform_indices = @transform_12, window_bounds = array<i64: 1, 16, 32>}]} {
    %c0 = arith.constant 0 : index
    %c0_0 = arith.constant 0 : index
    %c0_1 = arith.constant 0 : index
    %0 = vector.load %arg1[%c0, %c0_0, %c0_1] : memref<1x16x32xf32, #tpu.memory_space<vmem>>, vector<1x16x32xf32>
    %1 = vector.shape_cast %0 : vector<1x16x32xf32> to vector<16x32xf32>
    %c0_2 = arith.constant 0 : index
    %c0_3 = arith.constant 0 : index
    %c0_4 = arith.constant 0 : index
    %2 = vector.load %arg2[%c0_2, %c0_3, %c0_4] : memref<1x8x32xf32, #tpu.memory_space<vmem>>, vector<1x8x32xf32>
    %3 = vector.shape_cast %2 : vector<1x8x32xf32> to vector<8x32xf32>
    %c0_5 = arith.constant 0 : index
    %c0_6 = arith.constant 0 : index
    %4 = vector.load %arg3[%c0_5, %c0_6] : memref<1x32xf32, #tpu.memory_space<vmem>>, vector<1x32xf32>
    %c0_7 = arith.constant 0 : index
    %c0_8 = arith.constant 0 : index
    %5 = vector.load %arg4[%c0_7, %c0_8] : memref<1x32xf32, #tpu.memory_space<vmem>>, vector<1x32xf32>
    %cst = arith.constant dense<0.000000e+00> : vector<16xf32>
    %6 = vector.multi_reduction <add>, %1, %cst [1] : vector<16x32xf32> to vector<16xf32>
    %7 = vector.shape_cast %6 : vector<16xf32> to vector<16x1xf32>
    %cst_9 = arith.constant 3.200000e+01 : f32
    %8 = vector.broadcast %cst_9 : f32 to vector<16x1xf32>
    %9 = arith.divf %7, %8 : vector<16x1xf32>
    %10 = vector.broadcast %9 : vector<16x1xf32> to vector<16x32xf32>
    %11 = arith.subf %1, %10 : vector<16x32xf32>
    %12 = arith.mulf %11, %11 : vector<16x32xf32>
    %cst_10 = arith.constant dense<0.000000e+00> : vector<16xf32>
    %13 = vector.multi_reduction <add>, %12, %cst_10 [1] : vector<16x32xf32> to vector<16xf32>
    %14 = vector.shape_cast %13 : vector<16xf32> to vector<16x1xf32>
    %cst_11 = arith.constant 3.200000e+01 : f32
    %15 = vector.broadcast %cst_11 : f32 to vector<16x1xf32>
    %16 = arith.divf %14, %15 : vector<16x1xf32>
    %17 = vector.broadcast %9 : vector<16x1xf32> to vector<16x32xf32>
    %18 = arith.subf %1, %17 : vector<16x32xf32>
    %cst_12 = arith.constant 9.99999974E-6 : f32
    %19 = vector.broadcast %cst_12 : f32 to vector<16x1xf32>
    %20 = arith.addf %16, %19 : vector<16x1xf32>
    %21 = math.rsqrt %20 : vector<16x1xf32>
    %22 = vector.broadcast %21 : vector<16x1xf32> to vector<16x32xf32>
    %23 = arith.mulf %18, %22 : vector<16x32xf32>
    %24 = vector.broadcast %4 : vector<1x32xf32> to vector<16x32xf32>
    %25 = arith.mulf %23, %24 : vector<16x32xf32>
    %26 = vector.broadcast %5 : vector<1x32xf32> to vector<16x32xf32>
    %27 = arith.addf %25, %26 : vector<16x32xf32>
    %c0_13 = arith.constant 0 : index
    %c0_14 = arith.constant 0 : index
    %28 = vector.load %arg5[%c0_13, %c0_14] : memref<1x32xf32, #tpu.memory_space<vmem>>, vector<1x32xf32>
    %c0_15 = arith.constant 0 : index
    %c0_16 = arith.constant 0 : index
    %29 = vector.load %arg6[%c0_15, %c0_16] : memref<1x32xf32, #tpu.memory_space<vmem>>, vector<1x32xf32>
    %cst_17 = arith.constant dense<0.000000e+00> : vector<8xf32>
    %30 = vector.multi_reduction <add>, %3, %cst_17 [1] : vector<8x32xf32> to vector<8xf32>
    %31 = vector.shape_cast %30 : vector<8xf32> to vector<8x1xf32>
    %cst_18 = arith.constant 3.200000e+01 : f32
    %32 = vector.broadcast %cst_18 : f32 to vector<8x1xf32>
    %33 = arith.divf %31, %32 : vector<8x1xf32>
    %34 = vector.broadcast %33 : vector<8x1xf32> to vector<8x32xf32>
    %35 = arith.subf %3, %34 : vector<8x32xf32>
    %36 = arith.mulf %35, %35 : vector<8x32xf32>
    %cst_19 = arith.constant dense<0.000000e+00> : vector<8xf32>
    %37 = vector.multi_reduction <add>, %36, %cst_19 [1] : vector<8x32xf32> to vector<8xf32>
    %38 = vector.shape_cast %37 : vector<8xf32> to vector<8x1xf32>
    %cst_20 = arith.constant 3.200000e+01 : f32
    %39 = vector.broadcast %cst_20 : f32 to vector<8x1xf32>
    %40 = arith.divf %38, %39 : vector<8x1xf32>
    %41 = vector.broadcast %33 : vector<8x1xf32> to vector<8x32xf32>
    %42 = arith.subf %3, %41 : vector<8x32xf32>
    %cst_21 = arith.constant 9.99999974E-6 : f32
    %43 = vector.broadcast %cst_21 : f32 to vector<8x1xf32>
    %44 = arith.addf %40, %43 : vector<8x1xf32>
    %45 = math.rsqrt %44 : vector<8x1xf32>
    %46 = vector.broadcast %45 : vector<8x1xf32> to vector<8x32xf32>
    %47 = arith.mulf %42, %46 : vector<8x32xf32>
    %48 = vector.broadcast %28 : vector<1x32xf32> to vector<8x32xf32>
    %49 = arith.mulf %47, %48 : vector<8x32xf32>
    %50 = vector.broadcast %29 : vector<1x32xf32> to vector<8x32xf32>
    %51 = arith.addf %49, %50 : vector<8x32xf32>
    %52 = arith.truncf %27 : vector<16x32xf32> to vector<16x32xbf16>
    %c0_22 = arith.constant 0 : index
    %c0_23 = arith.constant 0 : index
    %53 = vector.load %arg7[%c0_22, %c0_23] : memref<32x32xbf16, #tpu.memory_space<vmem>>, vector<32x32xbf16>
    %cst_24 = arith.constant dense<0.000000e+00> : vector<16x32xf32>
    %54 = tpu.matmul %52, %53, %cst_24 {dimension_numbers = #tpu.dot_dimension_numbers<[1], [0], [0], [1], [0, 0, 1, 1], [], []>} : vector<16x32xbf16>, vector<32x32xbf16>, vector<16x32xf32> -> vector<16x32xf32>
    %c0_25 = arith.constant 0 : index
    %c0_26 = arith.constant 0 : index
    %55 = vector.load %arg8[%c0_25, %c0_26] : memref<1x32xf32, #tpu.memory_space<vmem>>, vector<1x32xf32>
    %56 = vector.broadcast %55 : vector<1x32xf32> to vector<16x32xf32>
    %57 = arith.addf %54, %56 : vector<16x32xf32>
    %58 = arith.truncf %51 : vector<8x32xf32> to vector<8x32xbf16>
    %c0_27 = arith.constant 0 : index
    %c0_28 = arith.constant 0 : index
    %59 = vector.load %arg9[%c0_27, %c0_28] : memref<32x64xbf16, #tpu.memory_space<vmem>>, vector<32x64xbf16>
    %cst_29 = arith.constant dense<0.000000e+00> : vector<8x64xf32>
    %60 = tpu.matmul %58, %59, %cst_29 {dimension_numbers = #tpu.dot_dimension_numbers<[1], [0], [0], [1], [0, 0, 1, 1], [], []>} : vector<8x32xbf16>, vector<32x64xbf16>, vector<8x64xf32> -> vector<8x64xf32>
    %c0_30 = arith.constant 0 : index
    %c0_31 = arith.constant 0 : index
    %61 = vector.load %arg10[%c0_30, %c0_31] : memref<1x64xf32, #tpu.memory_space<vmem>>, vector<1x64xf32>
    %62 = vector.broadcast %61 : vector<1x64xf32> to vector<8x64xf32>
    %63 = arith.addf %60, %62 : vector<8x64xf32>
    %64 = vector.extract_strided_slice %63 {offsets = [0, 0], sizes = [8, 32], strides = [1, 1]} : vector<8x64xf32> to vector<8x32xf32>
    %65 = vector.extract_strided_slice %63 {offsets = [0, 32], sizes = [8, 32], strides = [1, 1]} : vector<8x64xf32> to vector<8x32xf32>
    %c0_32 = arith.constant 0 : index
    %c0_33 = arith.constant 0 : index
    %66 = vector.load %arg11[%c0_32, %c0_33] : memref<32x32xbf16, #tpu.memory_space<vmem>>, vector<32x32xbf16>
    %c0_34 = arith.constant 0 : index
    %c0_35 = arith.constant 0 : index
    %67 = vector.load %arg12[%c0_34, %c0_35] : memref<1x32xf32, #tpu.memory_space<vmem>>, vector<1x32xf32>
    %cst_36 = arith.constant 0.353553385 : f32
    %68 = vector.broadcast %cst_36 : f32 to vector<16x32xf32>
    %69 = arith.mulf %57, %68 : vector<16x32xf32>
    %70 = arith.truncf %69 : vector<16x32xf32> to vector<16x32xbf16>
    %71 = arith.truncf %64 : vector<8x32xf32> to vector<8x32xbf16>
    %72 = arith.truncf %65 : vector<8x32xf32> to vector<8x32xbf16>
    %73 = vector.extract_strided_slice %70 {offsets = [0, 0], sizes = [16, 8], strides = [1, 1]} : vector<16x32xbf16> to vector<16x8xbf16>
    %74 = vector.extract_strided_slice %71 {offsets = [0, 0], sizes = [8, 8], strides = [1, 1]} : vector<8x32xbf16> to vector<8x8xbf16>
    %cst_37 = arith.constant dense<0.000000e+00> : vector<16x8xf32>
    %75 = tpu.matmul %73, %74, %cst_37 {dimension_numbers = #tpu.dot_dimension_numbers<[1], [1], [0], [0], [0, 0, 1, 0], [], []>} : vector<16x8xbf16>, vector<8x8xbf16>, vector<16x8xf32> -> vector<16x8xf32>
    %cst_38 = arith.constant dense<0xFF800000> : vector<16xf32>
    %76 = vector.multi_reduction <maximumf>, %75, %cst_38 [1] : vector<16x8xf32> to vector<16xf32>
    %77 = vector.shape_cast %76 : vector<16xf32> to vector<16x1xf32>
    %78 = vector.broadcast %77 : vector<16x1xf32> to vector<16x8xf32>
    %79 = arith.subf %75, %78 : vector<16x8xf32>
    %80 = math.exp %79 : vector<16x8xf32>
    %cst_39 = arith.constant dense<0.000000e+00> : vector<16xf32>
    %81 = vector.multi_reduction <add>, %80, %cst_39 [1] : vector<16x8xf32> to vector<16xf32>
    %82 = vector.shape_cast %81 : vector<16xf32> to vector<16x1xf32>
    %83 = arith.truncf %80 : vector<16x8xf32> to vector<16x8xbf16>
    %84 = vector.extract_strided_slice %72 {offsets = [0, 0], sizes = [8, 8], strides = [1, 1]} : vector<8x32xbf16> to vector<8x8xbf16>
    %cst_40 = arith.constant dense<0.000000e+00> : vector<16x8xf32>
    %85 = tpu.matmul %83, %84, %cst_40 {dimension_numbers = #tpu.dot_dimension_numbers<[1], [0], [0], [1], [0, 0, 1, 1], [], []>} : vector<16x8xbf16>, vector<8x8xbf16>, vector<16x8xf32> -> vector<16x8xf32>
    %86 = tpu.reciprocal %82 {approx = true} : vector<16x1xf32> -> vector<16x1xf32>
    %87 = vector.broadcast %86 : vector<16x1xf32> to vector<16x8xf32>
    %88 = arith.mulf %85, %87 : vector<16x8xf32>
    %89 = vector.extract_strided_slice %70 {offsets = [0, 8], sizes = [16, 8], strides = [1, 1]} : vector<16x32xbf16> to vector<16x8xbf16>
    %90 = vector.extract_strided_slice %71 {offsets = [0, 8], sizes = [8, 8], strides = [1, 1]} : vector<8x32xbf16> to vector<8x8xbf16>
    %cst_41 = arith.constant dense<0.000000e+00> : vector<16x8xf32>
    %91 = tpu.matmul %89, %90, %cst_41 {dimension_numbers = #tpu.dot_dimension_numbers<[1], [1], [0], [0], [0, 0, 1, 0], [], []>} : vector<16x8xbf16>, vector<8x8xbf16>, vector<16x8xf32> -> vector<16x8xf32>
    %cst_42 = arith.constant dense<0xFF800000> : vector<16xf32>
    %92 = vector.multi_reduction <maximumf>, %91, %cst_42 [1] : vector<16x8xf32> to vector<16xf32>
    %93 = vector.shape_cast %92 : vector<16xf32> to vector<16x1xf32>
    %94 = vector.broadcast %93 : vector<16x1xf32> to vector<16x8xf32>
    %95 = arith.subf %91, %94 : vector<16x8xf32>
    %96 = math.exp %95 : vector<16x8xf32>
    %cst_43 = arith.constant dense<0.000000e+00> : vector<16xf32>
    %97 = vector.multi_reduction <add>, %96, %cst_43 [1] : vector<16x8xf32> to vector<16xf32>
    %98 = vector.shape_cast %97 : vector<16xf32> to vector<16x1xf32>
    %99 = arith.truncf %96 : vector<16x8xf32> to vector<16x8xbf16>
    %100 = vector.extract_strided_slice %72 {offsets = [0, 8], sizes = [8, 8], strides = [1, 1]} : vector<8x32xbf16> to vector<8x8xbf16>
    %cst_44 = arith.constant dense<0.000000e+00> : vector<16x8xf32>
    %101 = tpu.matmul %99, %100, %cst_44 {dimension_numbers = #tpu.dot_dimension_numbers<[1], [0], [0], [1], [0, 0, 1, 1], [], []>} : vector<16x8xbf16>, vector<8x8xbf16>, vector<16x8xf32> -> vector<16x8xf32>
    %102 = tpu.reciprocal %98 {approx = true} : vector<16x1xf32> -> vector<16x1xf32>
    %103 = vector.broadcast %102 : vector<16x1xf32> to vector<16x8xf32>
    %104 = arith.mulf %101, %103 : vector<16x8xf32>
    %105 = vector.extract_strided_slice %70 {offsets = [0, 16], sizes = [16, 8], strides = [1, 1]} : vector<16x32xbf16> to vector<16x8xbf16>
    %106 = vector.extract_strided_slice %71 {offsets = [0, 16], sizes = [8, 8], strides = [1, 1]} : vector<8x32xbf16> to vector<8x8xbf16>
    %cst_45 = arith.constant dense<0.000000e+00> : vector<16x8xf32>
    %107 = tpu.matmul %105, %106, %cst_45 {dimension_numbers = #tpu.dot_dimension_numbers<[1], [1], [0], [0], [0, 0, 1, 0], [], []>} : vector<16x8xbf16>, vector<8x8xbf16>, vector<16x8xf32> -> vector<16x8xf32>
    %cst_46 = arith.constant dense<0xFF800000> : vector<16xf32>
    %108 = vector.multi_reduction <maximumf>, %107, %cst_46 [1] : vector<16x8xf32> to vector<16xf32>
    %109 = vector.shape_cast %108 : vector<16xf32> to vector<16x1xf32>
    %110 = vector.broadcast %109 : vector<16x1xf32> to vector<16x8xf32>
    %111 = arith.subf %107, %110 : vector<16x8xf32>
    %112 = math.exp %111 : vector<16x8xf32>
    %cst_47 = arith.constant dense<0.000000e+00> : vector<16xf32>
    %113 = vector.multi_reduction <add>, %112, %cst_47 [1] : vector<16x8xf32> to vector<16xf32>
    %114 = vector.shape_cast %113 : vector<16xf32> to vector<16x1xf32>
    %115 = arith.truncf %112 : vector<16x8xf32> to vector<16x8xbf16>
    %116 = vector.extract_strided_slice %72 {offsets = [0, 16], sizes = [8, 8], strides = [1, 1]} : vector<8x32xbf16> to vector<8x8xbf16>
    %cst_48 = arith.constant dense<0.000000e+00> : vector<16x8xf32>
    %117 = tpu.matmul %115, %116, %cst_48 {dimension_numbers = #tpu.dot_dimension_numbers<[1], [0], [0], [1], [0, 0, 1, 1], [], []>} : vector<16x8xbf16>, vector<8x8xbf16>, vector<16x8xf32> -> vector<16x8xf32>
    %118 = tpu.reciprocal %114 {approx = true} : vector<16x1xf32> -> vector<16x1xf32>
    %119 = vector.broadcast %118 : vector<16x1xf32> to vector<16x8xf32>
    %120 = arith.mulf %117, %119 : vector<16x8xf32>
    %121 = vector.extract_strided_slice %70 {offsets = [0, 24], sizes = [16, 8], strides = [1, 1]} : vector<16x32xbf16> to vector<16x8xbf16>
    %122 = vector.extract_strided_slice %71 {offsets = [0, 24], sizes = [8, 8], strides = [1, 1]} : vector<8x32xbf16> to vector<8x8xbf16>
    %cst_49 = arith.constant dense<0.000000e+00> : vector<16x8xf32>
    %123 = tpu.matmul %121, %122, %cst_49 {dimension_numbers = #tpu.dot_dimension_numbers<[1], [1], [0], [0], [0, 0, 1, 0], [], []>} : vector<16x8xbf16>, vector<8x8xbf16>, vector<16x8xf32> -> vector<16x8xf32>
    %cst_50 = arith.constant dense<0xFF800000> : vector<16xf32>
    %124 = vector.multi_reduction <maximumf>, %123, %cst_50 [1] : vector<16x8xf32> to vector<16xf32>
    %125 = vector.shape_cast %124 : vector<16xf32> to vector<16x1xf32>
    %126 = vector.broadcast %125 : vector<16x1xf32> to vector<16x8xf32>
    %127 = arith.subf %123, %126 : vector<16x8xf32>
    %128 = math.exp %127 : vector<16x8xf32>
    %cst_51 = arith.constant dense<0.000000e+00> : vector<16xf32>
    %129 = vector.multi_reduction <add>, %128, %cst_51 [1] : vector<16x8xf32> to vector<16xf32>
    %130 = vector.shape_cast %129 : vector<16xf32> to vector<16x1xf32>
    %131 = arith.truncf %128 : vector<16x8xf32> to vector<16x8xbf16>
    %132 = vector.extract_strided_slice %72 {offsets = [0, 24], sizes = [8, 8], strides = [1, 1]} : vector<8x32xbf16> to vector<8x8xbf16>
    %cst_52 = arith.constant dense<0.000000e+00> : vector<16x8xf32>
    %133 = tpu.matmul %131, %132, %cst_52 {dimension_numbers = #tpu.dot_dimension_numbers<[1], [0], [0], [1], [0, 0, 1, 1], [], []>} : vector<16x8xbf16>, vector<8x8xbf16>, vector<16x8xf32> -> vector<16x8xf32>
    %134 = tpu.reciprocal %130 {approx = true} : vector<16x1xf32> -> vector<16x1xf32>
    %135 = vector.broadcast %134 : vector<16x1xf32> to vector<16x8xf32>
    %136 = arith.mulf %133, %135 : vector<16x8xf32>
    %137 = tpu.concatenate %88, %104, %120, %136 in 1 : vector<16x8xf32>, vector<16x8xf32>, vector<16x8xf32>, vector<16x8xf32> -> vector<16x32xf32>
    %138 = arith.truncf %137 : vector<16x32xf32> to vector<16x32xbf16>
    %cst_53 = arith.constant dense<0.000000e+00> : vector<16x32xf32>
    %139 = tpu.matmul %138, %66, %cst_53 {dimension_numbers = #tpu.dot_dimension_numbers<[1], [0], [0], [1], [0, 0, 1, 1], [], []>} : vector<16x32xbf16>, vector<32x32xbf16>, vector<16x32xf32> -> vector<16x32xf32>
    %140 = vector.broadcast %67 : vector<1x32xf32> to vector<16x32xf32>
    %141 = arith.addf %139, %140 : vector<16x32xf32>
    %142 = arith.addf %1, %141 : vector<16x32xf32>
    %c0_54 = arith.constant 0 : index
    %c0_55 = arith.constant 0 : index
    %c0_56 = arith.constant 0 : index
    %143 = vector.load %arg13[%c0_54, %c0_55, %c0_56] : memref<1x16x32xf32, #tpu.memory_space<vmem>>, vector<1x16x32xf32>
    %144 = vector.shape_cast %143 : vector<1x16x32xf32> to vector<16x32xf32>
    %145 = vector.shape_cast %142 : vector<16x32xf32> to vector<1x16x32xf32>
    tpu.vector_store %arg13[%c0_54, %c0_55, %c0_56], %145 {strides = array<i32>} : memref<1x16x32xf32, #tpu.memory_space<vmem>>, vector<1x16x32xf32>,
    return
  }
  func.func @transform_0(%arg0: i32) -> (i32, i32, i32) {
    %c0_i32 = arith.constant 0 : i32
    %c0_i32_0 = arith.constant 0 : i32
    %c0_i32_1 = arith.constant 0 : i32
    return %arg0, %c0_i32, %c0_i32_0 : i32, i32, i32
  }
  func.func @transform_1(%arg0: i32) -> (i32, i32, i32) {
    %c0_i32 = arith.constant 0 : i32
    %c0_i32_0 = arith.constant 0 : i32
    %c0_i32_1 = arith.constant 0 : i32
    return %arg0, %c0_i32, %c0_i32_0 : i32, i32, i32
  }
  func.func @transform_2(%arg0: i32) -> (i32, i32) {
    %c0_i32 = arith.constant 0 : i32
    %c0_i32_0 = arith.constant 0 : i32
    %c0_i32_1 = arith.constant 0 : i32
    return %c0_i32, %c0_i32_0 : i32, i32
  }
  func.func @transform_3(%arg0: i32) -> (i32, i32) {
    %c0_i32 = arith.constant 0 : i32
    %c0_i32_0 = arith.constant 0 : i32
    %c0_i32_1 = arith.constant 0 : i32
    return %c0_i32, %c0_i32_0 : i32, i32
  }
  func.func @transform_4(%arg0: i32) -> (i32, i32) {
    %c0_i32 = arith.constant 0 : i32
    %c0_i32_0 = arith.constant 0 : i32
    %c0_i32_1 = arith.constant 0 : i32
    return %c0_i32, %c0_i32_0 : i32, i32
  }
  func.func @transform_5(%arg0: i32) -> (i32, i32) {
    %c0_i32 = arith.constant 0 : i32
    %c0_i32_0 = arith.constant 0 : i32
    %c0_i32_1 = arith.constant 0 : i32
    return %c0_i32, %c0_i32_0 : i32, i32
  }
  func.func @transform_6(%arg0: i32) -> (i32, i32) {
    %c0_i32 = arith.constant 0 : i32
    %c0_i32_0 = arith.constant 0 : i32
    %c0_i32_1 = arith.constant 0 : i32
    return %c0_i32, %c0_i32_0 : i32, i32
  }
  func.func @transform_7(%arg0: i32) -> (i32, i32) {
    %c0_i32 = arith.constant 0 : i32
    %c0_i32_0 = arith.constant 0 : i32
    %c0_i32_1 = arith.constant 0 : i32
    return %c0_i32, %c0_i32_0 : i32, i32
  }
  func.func @transform_8(%arg0: i32) -> (i32, i32) {
    %c0_i32 = arith.constant 0 : i32
    %c0_i32_0 = arith.constant 0 : i32
    %c0_i32_1 = arith.constant 0 : i32
    return %c0_i32, %c0_i32_0 : i32, i32
  }
  func.func @transform_9(%arg0: i32) -> (i32, i32) {
    %c0_i32 = arith.constant 0 : i32
    %c0_i32_0 = arith.constant 0 : i32
    %c0_i32_1 = arith.constant 0 : i32
    return %c0_i32, %c0_i32_0 : i32, i32
  }
  func.func @transform_10(%arg0: i32) -> (i32, i32) {
    %c0_i32 = arith.constant 0 : i32
    %c0_i32_0 = arith.constant 0 : i32
    %c0_i32_1 = arith.constant 0 : i32
    return %c0_i32, %c0_i32_0 : i32, i32
  }
  func.func @transform_11(%arg0: i32) -> (i32, i32) {
    %c0_i32 = arith.constant 0 : i32
    %c0_i32_0 = arith.constant 0 : i32
    %c0_i32_1 = arith.constant 0 : i32
    return %c0_i32, %c0_i32_0 : i32, i32
  }
  func.func @transform_12(%arg0: i32) -> (i32, i32, i32) {
    %c0_i32 = arith.constant 0 : i32
    %c0_i32_0 = arith.constant 0 : i32
    %c0_i32_1 = arith.constant 0 : i32
    return %arg0, %c0_i32, %c0_i32_0 : i32, i32, i32
  }
}

module attributes {stable_mosaic.version = 11 : i64} {
  func.func @_cross_attn_sublayer_kernel(%arg0: i32, %arg1: memref<1x8x32xf32, #tpu.memory_space<vmem>>, %arg2: memref<1x16x32xf32, #tpu.memory_space<vmem>>, %arg3: memref<1x32xf32, #tpu.memory_space<vmem>>, %arg4: memref<1x32xf32, #tpu.memory_space<vmem>>, %arg5: memref<1x32xf32, #tpu.memory_space<vmem>>, %arg6: memref<1x32xf32, #tpu.memory_space<vmem>>, %arg7: memref<32x32xbf16, #tpu.memory_space<vmem>>, %arg8: memref<1x32xf32, #tpu.memory_space<vmem>>, %arg9: memref<32x64xbf16, #tpu.memory_space<vmem>>, %arg10: memref<1x64xf32, #tpu.memory_space<vmem>>, %arg11: memref<32x32xbf16, #tpu.memory_space<vmem>>, %arg12: memref<1x32xf32, #tpu.memory_space<vmem>>, %arg13: memref<1x8x32xf32, #tpu.memory_space<vmem>>) attributes {dimension_semantics = [#tpu.dimension_semantics<parallel>], iteration_bounds = array<i64: 2>, scalar_prefetch = 0 : i64, scratch_operands = 0 : i64, tpu.core_type = #tpu.core_type<tc>, window_params = [{transform_indices = @transform_0, window_bounds = array<i64: 1, 8, 32>}, {transform_indices = @transform_1, window_bounds = array<i64: 1, 16, 32>}, {pipeline_mode = #tpu.pipeline_mode<synchronous>, transform_indices = @transform_2, window_bounds = array<i64: 1, 32>}, {pipeline_mode = #tpu.pipeline_mode<synchronous>, transform_indices = @transform_3, window_bounds = array<i64: 1, 32>}, {pipeline_mode = #tpu.pipeline_mode<synchronous>, transform_indices = @transform_4, window_bounds = array<i64: 1, 32>}, {pipeline_mode = #tpu.pipeline_mode<synchronous>, transform_indices = @transform_5, window_bounds = array<i64: 1, 32>}, {pipeline_mode = #tpu.pipeline_mode<synchronous>, transform_indices = @transform_6, window_bounds = array<i64: 32, 32>}, {pipeline_mode = #tpu.pipeline_mode<synchronous>, transform_indices = @transform_7, window_bounds = array<i64: 1, 32>}, {pipeline_mode = #tpu.pipeline_mode<synchronous>, transform_indices = @transform_8, window_bounds = array<i64: 32, 64>}, {pipeline_mode = #tpu.pipeline_mode<synchronous>, transform_indices = @transform_9, window_bounds = array<i64: 1, 64>}, {pipeline_mode = #tpu.pipeline_mode<synchronous>, transform_indices = @transform_10, window_bounds = array<i64: 32, 32>}, {pipeline_mode = #tpu.pipeline_mode<synchronous>, transform_indices = @transform_11, window_bounds = array<i64: 1, 32>}, {transform_indices = @transform_12, window_bounds = array<i64: 1, 8, 32>}]} {
    %c0 = arith.constant 0 : index
    %c0_0 = arith.constant 0 : index
    %c0_1 = arith.constant 0 : index
    %0 = vector.load %arg1[%c0, %c0_0, %c0_1] : memref<1x8x32xf32, #tpu.memory_space<vmem>>, vector<1x8x32xf32>
    %1 = vector.shape_cast %0 : vector<1x8x32xf32> to vector<8x32xf32>
    %c0_2 = arith.constant 0 : index
    %c0_3 = arith.constant 0 : index
    %c0_4 = arith.constant 0 : index
    %2 = vector.load %arg2[%c0_2, %c0_3, %c0_4] : memref<1x16x32xf32, #tpu.memory_space<vmem>>, vector<1x16x32xf32>
    %3 = vector.shape_cast %2 : vector<1x16x32xf32> to vector<16x32xf32>
    %c0_5 = arith.constant 0 : index
    %c0_6 = arith.constant 0 : index
    %4 = vector.load %arg3[%c0_5, %c0_6] : memref<1x32xf32, #tpu.memory_space<vmem>>, vector<1x32xf32>
    %c0_7 = arith.constant 0 : index
    %c0_8 = arith.constant 0 : index
    %5 = vector.load %arg4[%c0_7, %c0_8] : memref<1x32xf32, #tpu.memory_space<vmem>>, vector<1x32xf32>
    %cst = arith.constant dense<0.000000e+00> : vector<8xf32>
    %6 = vector.multi_reduction <add>, %1, %cst [1] : vector<8x32xf32> to vector<8xf32>
    %7 = vector.shape_cast %6 : vector<8xf32> to vector<8x1xf32>
    %cst_9 = arith.constant 3.200000e+01 : f32
    %8 = vector.broadcast %cst_9 : f32 to vector<8x1xf32>
    %9 = arith.divf %7, %8 : vector<8x1xf32>
    %10 = vector.broadcast %9 : vector<8x1xf32> to vector<8x32xf32>
    %11 = arith.subf %1, %10 : vector<8x32xf32>
    %12 = arith.mulf %11, %11 : vector<8x32xf32>
    %cst_10 = arith.constant dense<0.000000e+00> : vector<8xf32>
    %13 = vector.multi_reduction <add>, %12, %cst_10 [1] : vector<8x32xf32> to vector<8xf32>
    %14 = vector.shape_cast %13 : vector<8xf32> to vector<8x1xf32>
    %cst_11 = arith.constant 3.200000e+01 : f32
    %15 = vector.broadcast %cst_11 : f32 to vector<8x1xf32>
    %16 = arith.divf %14, %15 : vector<8x1xf32>
    %17 = vector.broadcast %9 : vector<8x1xf32> to vector<8x32xf32>
    %18 = arith.subf %1, %17 : vector<8x32xf32>
    %cst_12 = arith.constant 9.99999974E-6 : f32
    %19 = vector.broadcast %cst_12 : f32 to vector<8x1xf32>
    %20 = arith.addf %16, %19 : vector<8x1xf32>
    %21 = math.rsqrt %20 : vector<8x1xf32>
    %22 = vector.broadcast %21 : vector<8x1xf32> to vector<8x32xf32>
    %23 = arith.mulf %18, %22 : vector<8x32xf32>
    %24 = vector.broadcast %4 : vector<1x32xf32> to vector<8x32xf32>
    %25 = arith.mulf %23, %24 : vector<8x32xf32>
    %26 = vector.broadcast %5 : vector<1x32xf32> to vector<8x32xf32>
    %27 = arith.addf %25, %26 : vector<8x32xf32>
    %c0_13 = arith.constant 0 : index
    %c0_14 = arith.constant 0 : index
    %28 = vector.load %arg5[%c0_13, %c0_14] : memref<1x32xf32, #tpu.memory_space<vmem>>, vector<1x32xf32>
    %c0_15 = arith.constant 0 : index
    %c0_16 = arith.constant 0 : index
    %29 = vector.load %arg6[%c0_15, %c0_16] : memref<1x32xf32, #tpu.memory_space<vmem>>, vector<1x32xf32>
    %cst_17 = arith.constant dense<0.000000e+00> : vector<16xf32>
    %30 = vector.multi_reduction <add>, %3, %cst_17 [1] : vector<16x32xf32> to vector<16xf32>
    %31 = vector.shape_cast %30 : vector<16xf32> to vector<16x1xf32>
    %cst_18 = arith.constant 3.200000e+01 : f32
    %32 = vector.broadcast %cst_18 : f32 to vector<16x1xf32>
    %33 = arith.divf %31, %32 : vector<16x1xf32>
    %34 = vector.broadcast %33 : vector<16x1xf32> to vector<16x32xf32>
    %35 = arith.subf %3, %34 : vector<16x32xf32>
    %36 = arith.mulf %35, %35 : vector<16x32xf32>
    %cst_19 = arith.constant dense<0.000000e+00> : vector<16xf32>
    %37 = vector.multi_reduction <add>, %36, %cst_19 [1] : vector<16x32xf32> to vector<16xf32>
    %38 = vector.shape_cast %37 : vector<16xf32> to vector<16x1xf32>
    %cst_20 = arith.constant 3.200000e+01 : f32
    %39 = vector.broadcast %cst_20 : f32 to vector<16x1xf32>
    %40 = arith.divf %38, %39 : vector<16x1xf32>
    %41 = vector.broadcast %33 : vector<16x1xf32> to vector<16x32xf32>
    %42 = arith.subf %3, %41 : vector<16x32xf32>
    %cst_21 = arith.constant 9.99999974E-6 : f32
    %43 = vector.broadcast %cst_21 : f32 to vector<16x1xf32>
    %44 = arith.addf %40, %43 : vector<16x1xf32>
    %45 = math.rsqrt %44 : vector<16x1xf32>
    %46 = vector.broadcast %45 : vector<16x1xf32> to vector<16x32xf32>
    %47 = arith.mulf %42, %46 : vector<16x32xf32>
    %48 = vector.broadcast %28 : vector<1x32xf32> to vector<16x32xf32>
    %49 = arith.mulf %47, %48 : vector<16x32xf32>
    %50 = vector.broadcast %29 : vector<1x32xf32> to vector<16x32xf32>
    %51 = arith.addf %49, %50 : vector<16x32xf32>
    %52 = arith.truncf %27 : vector<8x32xf32> to vector<8x32xbf16>
    %c0_22 = arith.constant 0 : index
    %c0_23 = arith.constant 0 : index
    %53 = vector.load %arg7[%c0_22, %c0_23] : memref<32x32xbf16, #tpu.memory_space<vmem>>, vector<32x32xbf16>
    %cst_24 = arith.constant dense<0.000000e+00> : vector<8x32xf32>
    %54 = tpu.matmul %52, %53, %cst_24 {dimension_numbers = #tpu.dot_dimension_numbers<[1], [0], [0], [1], [0, 0, 1, 1], [], []>} : vector<8x32xbf16>, vector<32x32xbf16>, vector<8x32xf32> -> vector<8x32xf32>
    %c0_25 = arith.constant 0 : index
    %c0_26 = arith.constant 0 : index
    %55 = vector.load %arg8[%c0_25, %c0_26] : memref<1x32xf32, #tpu.memory_space<vmem>>, vector<1x32xf32>
    %56 = vector.broadcast %55 : vector<1x32xf32> to vector<8x32xf32>
    %57 = arith.addf %54, %56 : vector<8x32xf32>
    %58 = arith.truncf %51 : vector<16x32xf32> to vector<16x32xbf16>
    %c0_27 = arith.constant 0 : index
    %c0_28 = arith.constant 0 : index
    %59 = vector.load %arg9[%c0_27, %c0_28] : memref<32x64xbf16, #tpu.memory_space<vmem>>, vector<32x64xbf16>
    %cst_29 = arith.constant dense<0.000000e+00> : vector<16x64xf32>
    %60 = tpu.matmul %58, %59, %cst_29 {dimension_numbers = #tpu.dot_dimension_numbers<[1], [0], [0], [1], [0, 0, 1, 1], [], []>} : vector<16x32xbf16>, vector<32x64xbf16>, vector<16x64xf32> -> vector<16x64xf32>
    %c0_30 = arith.constant 0 : index
    %c0_31 = arith.constant 0 : index
    %61 = vector.load %arg10[%c0_30, %c0_31] : memref<1x64xf32, #tpu.memory_space<vmem>>, vector<1x64xf32>
    %62 = vector.broadcast %61 : vector<1x64xf32> to vector<16x64xf32>
    %63 = arith.addf %60, %62 : vector<16x64xf32>
    %64 = vector.extract_strided_slice %63 {offsets = [0, 0], sizes = [16, 32], strides = [1, 1]} : vector<16x64xf32> to vector<16x32xf32>
    %65 = vector.extract_strided_slice %63 {offsets = [0, 32], sizes = [16, 32], strides = [1, 1]} : vector<16x64xf32> to vector<16x32xf32>
    %c0_32 = arith.constant 0 : index
    %c0_33 = arith.constant 0 : index
    %66 = vector.load %arg11[%c0_32, %c0_33] : memref<32x32xbf16, #tpu.memory_space<vmem>>, vector<32x32xbf16>
    %c0_34 = arith.constant 0 : index
    %c0_35 = arith.constant 0 : index
    %67 = vector.load %arg12[%c0_34, %c0_35] : memref<1x32xf32, #tpu.memory_space<vmem>>, vector<1x32xf32>
    %cst_36 = arith.constant 0.353553385 : f32
    %68 = vector.broadcast %cst_36 : f32 to vector<8x32xf32>
    %69 = arith.mulf %57, %68 : vector<8x32xf32>
    %70 = arith.truncf %69 : vector<8x32xf32> to vector<8x32xbf16>
    %71 = arith.truncf %64 : vector<16x32xf32> to vector<16x32xbf16>
    %72 = arith.truncf %65 : vector<16x32xf32> to vector<16x32xbf16>
    %73 = vector.extract_strided_slice %70 {offsets = [0, 0], sizes = [8, 8], strides = [1, 1]} : vector<8x32xbf16> to vector<8x8xbf16>
    %74 = vector.extract_strided_slice %71 {offsets = [0, 0], sizes = [16, 8], strides = [1, 1]} : vector<16x32xbf16> to vector<16x8xbf16>
    %cst_37 = arith.constant dense<0.000000e+00> : vector<8x16xf32>
    %75 = tpu.matmul %73, %74, %cst_37 {dimension_numbers = #tpu.dot_dimension_numbers<[1], [1], [0], [0], [0, 0, 1, 0], [], []>} : vector<8x8xbf16>, vector<16x8xbf16>, vector<8x16xf32> -> vector<8x16xf32>
    %cst_38 = arith.constant dense<0xFF800000> : vector<8xf32>
    %76 = vector.multi_reduction <maximumf>, %75, %cst_38 [1] : vector<8x16xf32> to vector<8xf32>
    %77 = vector.shape_cast %76 : vector<8xf32> to vector<8x1xf32>
    %78 = vector.broadcast %77 : vector<8x1xf32> to vector<8x16xf32>
    %79 = arith.subf %75, %78 : vector<8x16xf32>
    %80 = math.exp %79 : vector<8x16xf32>
    %cst_39 = arith.constant dense<0.000000e+00> : vector<8xf32>
    %81 = vector.multi_reduction <add>, %80, %cst_39 [1] : vector<8x16xf32> to vector<8xf32>
    %82 = vector.shape_cast %81 : vector<8xf32> to vector<8x1xf32>
    %83 = arith.truncf %80 : vector<8x16xf32> to vector<8x16xbf16>
    %84 = vector.extract_strided_slice %72 {offsets = [0, 0], sizes = [16, 8], strides = [1, 1]} : vector<16x32xbf16> to vector<16x8xbf16>
    %cst_40 = arith.constant dense<0.000000e+00> : vector<8x8xf32>
    %85 = tpu.matmul %83, %84, %cst_40 {dimension_numbers = #tpu.dot_dimension_numbers<[1], [0], [0], [1], [0, 0, 1, 1], [], []>} : vector<8x16xbf16>, vector<16x8xbf16>, vector<8x8xf32> -> vector<8x8xf32>
    %86 = tpu.reciprocal %82 {approx = true} : vector<8x1xf32> -> vector<8x1xf32>
    %87 = vector.broadcast %86 : vector<8x1xf32> to vector<8x8xf32>
    %88 = arith.mulf %85, %87 : vector<8x8xf32>
    %89 = vector.extract_strided_slice %70 {offsets = [0, 8], sizes = [8, 8], strides = [1, 1]} : vector<8x32xbf16> to vector<8x8xbf16>
    %90 = vector.extract_strided_slice %71 {offsets = [0, 8], sizes = [16, 8], strides = [1, 1]} : vector<16x32xbf16> to vector<16x8xbf16>
    %cst_41 = arith.constant dense<0.000000e+00> : vector<8x16xf32>
    %91 = tpu.matmul %89, %90, %cst_41 {dimension_numbers = #tpu.dot_dimension_numbers<[1], [1], [0], [0], [0, 0, 1, 0], [], []>} : vector<8x8xbf16>, vector<16x8xbf16>, vector<8x16xf32> -> vector<8x16xf32>
    %cst_42 = arith.constant dense<0xFF800000> : vector<8xf32>
    %92 = vector.multi_reduction <maximumf>, %91, %cst_42 [1] : vector<8x16xf32> to vector<8xf32>
    %93 = vector.shape_cast %92 : vector<8xf32> to vector<8x1xf32>
    %94 = vector.broadcast %93 : vector<8x1xf32> to vector<8x16xf32>
    %95 = arith.subf %91, %94 : vector<8x16xf32>
    %96 = math.exp %95 : vector<8x16xf32>
    %cst_43 = arith.constant dense<0.000000e+00> : vector<8xf32>
    %97 = vector.multi_reduction <add>, %96, %cst_43 [1] : vector<8x16xf32> to vector<8xf32>
    %98 = vector.shape_cast %97 : vector<8xf32> to vector<8x1xf32>
    %99 = arith.truncf %96 : vector<8x16xf32> to vector<8x16xbf16>
    %100 = vector.extract_strided_slice %72 {offsets = [0, 8], sizes = [16, 8], strides = [1, 1]} : vector<16x32xbf16> to vector<16x8xbf16>
    %cst_44 = arith.constant dense<0.000000e+00> : vector<8x8xf32>
    %101 = tpu.matmul %99, %100, %cst_44 {dimension_numbers = #tpu.dot_dimension_numbers<[1], [0], [0], [1], [0, 0, 1, 1], [], []>} : vector<8x16xbf16>, vector<16x8xbf16>, vector<8x8xf32> -> vector<8x8xf32>
    %102 = tpu.reciprocal %98 {approx = true} : vector<8x1xf32> -> vector<8x1xf32>
    %103 = vector.broadcast %102 : vector<8x1xf32> to vector<8x8xf32>
    %104 = arith.mulf %101, %103 : vector<8x8xf32>
    %105 = vector.extract_strided_slice %70 {offsets = [0, 16], sizes = [8, 8], strides = [1, 1]} : vector<8x32xbf16> to vector<8x8xbf16>
    %106 = vector.extract_strided_slice %71 {offsets = [0, 16], sizes = [16, 8], strides = [1, 1]} : vector<16x32xbf16> to vector<16x8xbf16>
    %cst_45 = arith.constant dense<0.000000e+00> : vector<8x16xf32>
    %107 = tpu.matmul %105, %106, %cst_45 {dimension_numbers = #tpu.dot_dimension_numbers<[1], [1], [0], [0], [0, 0, 1, 0], [], []>} : vector<8x8xbf16>, vector<16x8xbf16>, vector<8x16xf32> -> vector<8x16xf32>
    %cst_46 = arith.constant dense<0xFF800000> : vector<8xf32>
    %108 = vector.multi_reduction <maximumf>, %107, %cst_46 [1] : vector<8x16xf32> to vector<8xf32>
    %109 = vector.shape_cast %108 : vector<8xf32> to vector<8x1xf32>
    %110 = vector.broadcast %109 : vector<8x1xf32> to vector<8x16xf32>
    %111 = arith.subf %107, %110 : vector<8x16xf32>
    %112 = math.exp %111 : vector<8x16xf32>
    %cst_47 = arith.constant dense<0.000000e+00> : vector<8xf32>
    %113 = vector.multi_reduction <add>, %112, %cst_47 [1] : vector<8x16xf32> to vector<8xf32>
    %114 = vector.shape_cast %113 : vector<8xf32> to vector<8x1xf32>
    %115 = arith.truncf %112 : vector<8x16xf32> to vector<8x16xbf16>
    %116 = vector.extract_strided_slice %72 {offsets = [0, 16], sizes = [16, 8], strides = [1, 1]} : vector<16x32xbf16> to vector<16x8xbf16>
    %cst_48 = arith.constant dense<0.000000e+00> : vector<8x8xf32>
    %117 = tpu.matmul %115, %116, %cst_48 {dimension_numbers = #tpu.dot_dimension_numbers<[1], [0], [0], [1], [0, 0, 1, 1], [], []>} : vector<8x16xbf16>, vector<16x8xbf16>, vector<8x8xf32> -> vector<8x8xf32>
    %118 = tpu.reciprocal %114 {approx = true} : vector<8x1xf32> -> vector<8x1xf32>
    %119 = vector.broadcast %118 : vector<8x1xf32> to vector<8x8xf32>
    %120 = arith.mulf %117, %119 : vector<8x8xf32>
    %121 = vector.extract_strided_slice %70 {offsets = [0, 24], sizes = [8, 8], strides = [1, 1]} : vector<8x32xbf16> to vector<8x8xbf16>
    %122 = vector.extract_strided_slice %71 {offsets = [0, 24], sizes = [16, 8], strides = [1, 1]} : vector<16x32xbf16> to vector<16x8xbf16>
    %cst_49 = arith.constant dense<0.000000e+00> : vector<8x16xf32>
    %123 = tpu.matmul %121, %122, %cst_49 {dimension_numbers = #tpu.dot_dimension_numbers<[1], [1], [0], [0], [0, 0, 1, 0], [], []>} : vector<8x8xbf16>, vector<16x8xbf16>, vector<8x16xf32> -> vector<8x16xf32>
    %cst_50 = arith.constant dense<0xFF800000> : vector<8xf32>
    %124 = vector.multi_reduction <maximumf>, %123, %cst_50 [1] : vector<8x16xf32> to vector<8xf32>
    %125 = vector.shape_cast %124 : vector<8xf32> to vector<8x1xf32>
    %126 = vector.broadcast %125 : vector<8x1xf32> to vector<8x16xf32>
    %127 = arith.subf %123, %126 : vector<8x16xf32>
    %128 = math.exp %127 : vector<8x16xf32>
    %cst_51 = arith.constant dense<0.000000e+00> : vector<8xf32>
    %129 = vector.multi_reduction <add>, %128, %cst_51 [1] : vector<8x16xf32> to vector<8xf32>
    %130 = vector.shape_cast %129 : vector<8xf32> to vector<8x1xf32>
    %131 = arith.truncf %128 : vector<8x16xf32> to vector<8x16xbf16>
    %132 = vector.extract_strided_slice %72 {offsets = [0, 24], sizes = [16, 8], strides = [1, 1]} : vector<16x32xbf16> to vector<16x8xbf16>
    %cst_52 = arith.constant dense<0.000000e+00> : vector<8x8xf32>
    %133 = tpu.matmul %131, %132, %cst_52 {dimension_numbers = #tpu.dot_dimension_numbers<[1], [0], [0], [1], [0, 0, 1, 1], [], []>} : vector<8x16xbf16>, vector<16x8xbf16>, vector<8x8xf32> -> vector<8x8xf32>
    %134 = tpu.reciprocal %130 {approx = true} : vector<8x1xf32> -> vector<8x1xf32>
    %135 = vector.broadcast %134 : vector<8x1xf32> to vector<8x8xf32>
    %136 = arith.mulf %133, %135 : vector<8x8xf32>
    %137 = tpu.concatenate %88, %104, %120, %136 in 1 : vector<8x8xf32>, vector<8x8xf32>, vector<8x8xf32>, vector<8x8xf32> -> vector<8x32xf32>
    %138 = arith.truncf %137 : vector<8x32xf32> to vector<8x32xbf16>
    %cst_53 = arith.constant dense<0.000000e+00> : vector<8x32xf32>
    %139 = tpu.matmul %138, %66, %cst_53 {dimension_numbers = #tpu.dot_dimension_numbers<[1], [0], [0], [1], [0, 0, 1, 1], [], []>} : vector<8x32xbf16>, vector<32x32xbf16>, vector<8x32xf32> -> vector<8x32xf32>
    %140 = vector.broadcast %67 : vector<1x32xf32> to vector<8x32xf32>
    %141 = arith.addf %139, %140 : vector<8x32xf32>
    %142 = arith.addf %1, %141 : vector<8x32xf32>
    %c0_54 = arith.constant 0 : index
    %c0_55 = arith.constant 0 : index
    %c0_56 = arith.constant 0 : index
    %143 = vector.load %arg13[%c0_54, %c0_55, %c0_56] : memref<1x8x32xf32, #tpu.memory_space<vmem>>, vector<1x8x32xf32>
    %144 = vector.shape_cast %143 : vector<1x8x32xf32> to vector<8x32xf32>
    %145 = vector.shape_cast %142 : vector<8x32xf32> to vector<1x8x32xf32>
    tpu.vector_store %arg13[%c0_54, %c0_55, %c0_56], %145 {strides = array<i32>} : memref<1x8x32xf32, #tpu.memory_space<vmem>>, vector<1x8x32xf32>,
    return
  }
  func.func @transform_0(%arg0: i32) -> (i32, i32, i32) {
    %c0_i32 = arith.constant 0 : i32
    %c0_i32_0 = arith.constant 0 : i32
    %c0_i32_1 = arith.constant 0 : i32
    return %arg0, %c0_i32, %c0_i32_0 : i32, i32, i32
  }
  func.func @transform_1(%arg0: i32) -> (i32, i32, i32) {
    %c0_i32 = arith.constant 0 : i32
    %c0_i32_0 = arith.constant 0 : i32
    %c0_i32_1 = arith.constant 0 : i32
    return %arg0, %c0_i32, %c0_i32_0 : i32, i32, i32
  }
  func.func @transform_2(%arg0: i32) -> (i32, i32) {
    %c0_i32 = arith.constant 0 : i32
    %c0_i32_0 = arith.constant 0 : i32
    %c0_i32_1 = arith.constant 0 : i32
    return %c0_i32, %c0_i32_0 : i32, i32
  }
  func.func @transform_3(%arg0: i32) -> (i32, i32) {
    %c0_i32 = arith.constant 0 : i32
    %c0_i32_0 = arith.constant 0 : i32
    %c0_i32_1 = arith.constant 0 : i32
    return %c0_i32, %c0_i32_0 : i32, i32
  }
  func.func @transform_4(%arg0: i32) -> (i32, i32) {
    %c0_i32 = arith.constant 0 : i32
    %c0_i32_0 = arith.constant 0 : i32
    %c0_i32_1 = arith.constant 0 : i32
    return %c0_i32, %c0_i32_0 : i32, i32
  }
  func.func @transform_5(%arg0: i32) -> (i32, i32) {
    %c0_i32 = arith.constant 0 : i32
    %c0_i32_0 = arith.constant 0 : i32
    %c0_i32_1 = arith.constant 0 : i32
    return %c0_i32, %c0_i32_0 : i32, i32
  }
  func.func @transform_6(%arg0: i32) -> (i32, i32) {
    %c0_i32 = arith.constant 0 : i32
    %c0_i32_0 = arith.constant 0 : i32
    %c0_i32_1 = arith.constant 0 : i32
    return %c0_i32, %c0_i32_0 : i32, i32
  }
  func.func @transform_7(%arg0: i32) -> (i32, i32) {
    %c0_i32 = arith.constant 0 : i32
    %c0_i32_0 = arith.constant 0 : i32
    %c0_i32_1 = arith.constant 0 : i32
    return %c0_i32, %c0_i32_0 : i32, i32
  }
  func.func @transform_8(%arg0: i32) -> (i32, i32) {
    %c0_i32 = arith.constant 0 : i32
    %c0_i32_0 = arith.constant 0 : i32
    %c0_i32_1 = arith.constant 0 : i32
    return %c0_i32, %c0_i32_0 : i32, i32
  }
  func.func @transform_9(%arg0: i32) -> (i32, i32) {
    %c0_i32 = arith.constant 0 : i32
    %c0_i32_0 = arith.constant 0 : i32
    %c0_i32_1 = arith.constant 0 : i32
    return %c0_i32, %c0_i32_0 : i32, i32
  }
  func.func @transform_10(%arg0: i32) -> (i32, i32) {
    %c0_i32 = arith.constant 0 : i32
    %c0_i32_0 = arith.constant 0 : i32
    %c0_i32_1 = arith.constant 0 : i32
    return %c0_i32, %c0_i32_0 : i32, i32
  }
  func.func @transform_11(%arg0: i32) -> (i32, i32) {
    %c0_i32 = arith.constant 0 : i32
    %c0_i32_0 = arith.constant 0 : i32
    %c0_i32_1 = arith.constant 0 : i32
    return %c0_i32, %c0_i32_0 : i32, i32
  }
  func.func @transform_12(%arg0: i32) -> (i32, i32, i32) {
    %c0_i32 = arith.constant 0 : i32
    %c0_i32_0 = arith.constant 0 : i32
    %c0_i32_1 = arith.constant 0 : i32
    return %arg0, %c0_i32, %c0_i32_0 : i32, i32, i32
  }
}

module attributes {stable_mosaic.version = 11 : i64} {
  func.func @_cross_attn_sublayer_kernel(%arg0: i32, %arg1: memref<1x8x32xf32, #tpu.memory_space<vmem>>, %arg2: memref<1x8x32xf32, #tpu.memory_space<vmem>>, %arg3: memref<1x32xf32, #tpu.memory_space<vmem>>, %arg4: memref<1x32xf32, #tpu.memory_space<vmem>>, %arg5: memref<1x32xf32, #tpu.memory_space<vmem>>, %arg6: memref<1x32xf32, #tpu.memory_space<vmem>>, %arg7: memref<32x32xbf16, #tpu.memory_space<vmem>>, %arg8: memref<1x32xf32, #tpu.memory_space<vmem>>, %arg9: memref<32x64xbf16, #tpu.memory_space<vmem>>, %arg10: memref<1x64xf32, #tpu.memory_space<vmem>>, %arg11: memref<32x32xbf16, #tpu.memory_space<vmem>>, %arg12: memref<1x32xf32, #tpu.memory_space<vmem>>, %arg13: memref<1x8x32xf32, #tpu.memory_space<vmem>>) attributes {dimension_semantics = [#tpu.dimension_semantics<parallel>], iteration_bounds = array<i64: 2>, scalar_prefetch = 0 : i64, scratch_operands = 0 : i64, tpu.core_type = #tpu.core_type<tc>, window_params = [{transform_indices = @transform_0, window_bounds = array<i64: 1, 8, 32>}, {transform_indices = @transform_1, window_bounds = array<i64: 1, 8, 32>}, {pipeline_mode = #tpu.pipeline_mode<synchronous>, transform_indices = @transform_2, window_bounds = array<i64: 1, 32>}, {pipeline_mode = #tpu.pipeline_mode<synchronous>, transform_indices = @transform_3, window_bounds = array<i64: 1, 32>}, {pipeline_mode = #tpu.pipeline_mode<synchronous>, transform_indices = @transform_4, window_bounds = array<i64: 1, 32>}, {pipeline_mode = #tpu.pipeline_mode<synchronous>, transform_indices = @transform_5, window_bounds = array<i64: 1, 32>}, {pipeline_mode = #tpu.pipeline_mode<synchronous>, transform_indices = @transform_6, window_bounds = array<i64: 32, 32>}, {pipeline_mode = #tpu.pipeline_mode<synchronous>, transform_indices = @transform_7, window_bounds = array<i64: 1, 32>}, {pipeline_mode = #tpu.pipeline_mode<synchronous>, transform_indices = @transform_8, window_bounds = array<i64: 32, 64>}, {pipeline_mode = #tpu.pipeline_mode<synchronous>, transform_indices = @transform_9, window_bounds = array<i64: 1, 64>}, {pipeline_mode = #tpu.pipeline_mode<synchronous>, transform_indices = @transform_10, window_bounds = array<i64: 32, 32>}, {pipeline_mode = #tpu.pipeline_mode<synchronous>, transform_indices = @transform_11, window_bounds = array<i64: 1, 32>}, {transform_indices = @transform_12, window_bounds = array<i64: 1, 8, 32>}]} {
    %c0 = arith.constant 0 : index
    %c0_0 = arith.constant 0 : index
    %c0_1 = arith.constant 0 : index
    %0 = vector.load %arg1[%c0, %c0_0, %c0_1] : memref<1x8x32xf32, #tpu.memory_space<vmem>>, vector<1x8x32xf32>
    %1 = vector.shape_cast %0 : vector<1x8x32xf32> to vector<8x32xf32>
    %c0_2 = arith.constant 0 : index
    %c0_3 = arith.constant 0 : index
    %c0_4 = arith.constant 0 : index
    %2 = vector.load %arg2[%c0_2, %c0_3, %c0_4] : memref<1x8x32xf32, #tpu.memory_space<vmem>>, vector<1x8x32xf32>
    %3 = vector.shape_cast %2 : vector<1x8x32xf32> to vector<8x32xf32>
    %c0_5 = arith.constant 0 : index
    %c0_6 = arith.constant 0 : index
    %4 = vector.load %arg3[%c0_5, %c0_6] : memref<1x32xf32, #tpu.memory_space<vmem>>, vector<1x32xf32>
    %c0_7 = arith.constant 0 : index
    %c0_8 = arith.constant 0 : index
    %5 = vector.load %arg4[%c0_7, %c0_8] : memref<1x32xf32, #tpu.memory_space<vmem>>, vector<1x32xf32>
    %cst = arith.constant dense<0.000000e+00> : vector<8xf32>
    %6 = vector.multi_reduction <add>, %1, %cst [1] : vector<8x32xf32> to vector<8xf32>
    %7 = vector.shape_cast %6 : vector<8xf32> to vector<8x1xf32>
    %cst_9 = arith.constant 3.200000e+01 : f32
    %8 = vector.broadcast %cst_9 : f32 to vector<8x1xf32>
    %9 = arith.divf %7, %8 : vector<8x1xf32>
    %10 = vector.broadcast %9 : vector<8x1xf32> to vector<8x32xf32>
    %11 = arith.subf %1, %10 : vector<8x32xf32>
    %12 = arith.mulf %11, %11 : vector<8x32xf32>
    %cst_10 = arith.constant dense<0.000000e+00> : vector<8xf32>
    %13 = vector.multi_reduction <add>, %12, %cst_10 [1] : vector<8x32xf32> to vector<8xf32>
    %14 = vector.shape_cast %13 : vector<8xf32> to vector<8x1xf32>
    %cst_11 = arith.constant 3.200000e+01 : f32
    %15 = vector.broadcast %cst_11 : f32 to vector<8x1xf32>
    %16 = arith.divf %14, %15 : vector<8x1xf32>
    %17 = vector.broadcast %9 : vector<8x1xf32> to vector<8x32xf32>
    %18 = arith.subf %1, %17 : vector<8x32xf32>
    %cst_12 = arith.constant 9.99999974E-6 : f32
    %19 = vector.broadcast %cst_12 : f32 to vector<8x1xf32>
    %20 = arith.addf %16, %19 : vector<8x1xf32>
    %21 = math.rsqrt %20 : vector<8x1xf32>
    %22 = vector.broadcast %21 : vector<8x1xf32> to vector<8x32xf32>
    %23 = arith.mulf %18, %22 : vector<8x32xf32>
    %24 = vector.broadcast %4 : vector<1x32xf32> to vector<8x32xf32>
    %25 = arith.mulf %23, %24 : vector<8x32xf32>
    %26 = vector.broadcast %5 : vector<1x32xf32> to vector<8x32xf32>
    %27 = arith.addf %25, %26 : vector<8x32xf32>
    %c0_13 = arith.constant 0 : index
    %c0_14 = arith.constant 0 : index
    %28 = vector.load %arg5[%c0_13, %c0_14] : memref<1x32xf32, #tpu.memory_space<vmem>>, vector<1x32xf32>
    %c0_15 = arith.constant 0 : index
    %c0_16 = arith.constant 0 : index
    %29 = vector.load %arg6[%c0_15, %c0_16] : memref<1x32xf32, #tpu.memory_space<vmem>>, vector<1x32xf32>
    %cst_17 = arith.constant dense<0.000000e+00> : vector<8xf32>
    %30 = vector.multi_reduction <add>, %3, %cst_17 [1] : vector<8x32xf32> to vector<8xf32>
    %31 = vector.shape_cast %30 : vector<8xf32> to vector<8x1xf32>
    %cst_18 = arith.constant 3.200000e+01 : f32
    %32 = vector.broadcast %cst_18 : f32 to vector<8x1xf32>
    %33 = arith.divf %31, %32 : vector<8x1xf32>
    %34 = vector.broadcast %33 : vector<8x1xf32> to vector<8x32xf32>
    %35 = arith.subf %3, %34 : vector<8x32xf32>
    %36 = arith.mulf %35, %35 : vector<8x32xf32>
    %cst_19 = arith.constant dense<0.000000e+00> : vector<8xf32>
    %37 = vector.multi_reduction <add>, %36, %cst_19 [1] : vector<8x32xf32> to vector<8xf32>
    %38 = vector.shape_cast %37 : vector<8xf32> to vector<8x1xf32>
    %cst_20 = arith.constant 3.200000e+01 : f32
    %39 = vector.broadcast %cst_20 : f32 to vector<8x1xf32>
    %40 = arith.divf %38, %39 : vector<8x1xf32>
    %41 = vector.broadcast %33 : vector<8x1xf32> to vector<8x32xf32>
    %42 = arith.subf %3, %41 : vector<8x32xf32>
    %cst_21 = arith.constant 9.99999974E-6 : f32
    %43 = vector.broadcast %cst_21 : f32 to vector<8x1xf32>
    %44 = arith.addf %40, %43 : vector<8x1xf32>
    %45 = math.rsqrt %44 : vector<8x1xf32>
    %46 = vector.broadcast %45 : vector<8x1xf32> to vector<8x32xf32>
    %47 = arith.mulf %42, %46 : vector<8x32xf32>
    %48 = vector.broadcast %28 : vector<1x32xf32> to vector<8x32xf32>
    %49 = arith.mulf %47, %48 : vector<8x32xf32>
    %50 = vector.broadcast %29 : vector<1x32xf32> to vector<8x32xf32>
    %51 = arith.addf %49, %50 : vector<8x32xf32>
    %52 = arith.truncf %27 : vector<8x32xf32> to vector<8x32xbf16>
    %c0_22 = arith.constant 0 : index
    %c0_23 = arith.constant 0 : index
    %53 = vector.load %arg7[%c0_22, %c0_23] : memref<32x32xbf16, #tpu.memory_space<vmem>>, vector<32x32xbf16>
    %cst_24 = arith.constant dense<0.000000e+00> : vector<8x32xf32>
    %54 = tpu.matmul %52, %53, %cst_24 {dimension_numbers = #tpu.dot_dimension_numbers<[1], [0], [0], [1], [0, 0, 1, 1], [], []>} : vector<8x32xbf16>, vector<32x32xbf16>, vector<8x32xf32> -> vector<8x32xf32>
    %c0_25 = arith.constant 0 : index
    %c0_26 = arith.constant 0 : index
    %55 = vector.load %arg8[%c0_25, %c0_26] : memref<1x32xf32, #tpu.memory_space<vmem>>, vector<1x32xf32>
    %56 = vector.broadcast %55 : vector<1x32xf32> to vector<8x32xf32>
    %57 = arith.addf %54, %56 : vector<8x32xf32>
    %58 = arith.truncf %51 : vector<8x32xf32> to vector<8x32xbf16>
    %c0_27 = arith.constant 0 : index
    %c0_28 = arith.constant 0 : index
    %59 = vector.load %arg9[%c0_27, %c0_28] : memref<32x64xbf16, #tpu.memory_space<vmem>>, vector<32x64xbf16>
    %cst_29 = arith.constant dense<0.000000e+00> : vector<8x64xf32>
    %60 = tpu.matmul %58, %59, %cst_29 {dimension_numbers = #tpu.dot_dimension_numbers<[1], [0], [0], [1], [0, 0, 1, 1], [], []>} : vector<8x32xbf16>, vector<32x64xbf16>, vector<8x64xf32> -> vector<8x64xf32>
    %c0_30 = arith.constant 0 : index
    %c0_31 = arith.constant 0 : index
    %61 = vector.load %arg10[%c0_30, %c0_31] : memref<1x64xf32, #tpu.memory_space<vmem>>, vector<1x64xf32>
    %62 = vector.broadcast %61 : vector<1x64xf32> to vector<8x64xf32>
    %63 = arith.addf %60, %62 : vector<8x64xf32>
    %64 = vector.extract_strided_slice %63 {offsets = [0, 0], sizes = [8, 32], strides = [1, 1]} : vector<8x64xf32> to vector<8x32xf32>
    %65 = vector.extract_strided_slice %63 {offsets = [0, 32], sizes = [8, 32], strides = [1, 1]} : vector<8x64xf32> to vector<8x32xf32>
    %c0_32 = arith.constant 0 : index
    %c0_33 = arith.constant 0 : index
    %66 = vector.load %arg11[%c0_32, %c0_33] : memref<32x32xbf16, #tpu.memory_space<vmem>>, vector<32x32xbf16>
    %c0_34 = arith.constant 0 : index
    %c0_35 = arith.constant 0 : index
    %67 = vector.load %arg12[%c0_34, %c0_35] : memref<1x32xf32, #tpu.memory_space<vmem>>, vector<1x32xf32>
    %cst_36 = arith.constant 0.353553385 : f32
    %68 = vector.broadcast %cst_36 : f32 to vector<8x32xf32>
    %69 = arith.mulf %57, %68 : vector<8x32xf32>
    %70 = arith.truncf %69 : vector<8x32xf32> to vector<8x32xbf16>
    %71 = arith.truncf %64 : vector<8x32xf32> to vector<8x32xbf16>
    %72 = arith.truncf %65 : vector<8x32xf32> to vector<8x32xbf16>
    %73 = vector.extract_strided_slice %70 {offsets = [0, 0], sizes = [8, 8], strides = [1, 1]} : vector<8x32xbf16> to vector<8x8xbf16>
    %74 = vector.extract_strided_slice %71 {offsets = [0, 0], sizes = [8, 8], strides = [1, 1]} : vector<8x32xbf16> to vector<8x8xbf16>
    %cst_37 = arith.constant dense<0.000000e+00> : vector<8x8xf32>
    %75 = tpu.matmul %73, %74, %cst_37 {dimension_numbers = #tpu.dot_dimension_numbers<[1], [1], [0], [0], [0, 0, 1, 0], [], []>} : vector<8x8xbf16>, vector<8x8xbf16>, vector<8x8xf32> -> vector<8x8xf32>
    %cst_38 = arith.constant dense<0xFF800000> : vector<8xf32>
    %76 = vector.multi_reduction <maximumf>, %75, %cst_38 [1] : vector<8x8xf32> to vector<8xf32>
    %77 = vector.shape_cast %76 : vector<8xf32> to vector<8x1xf32>
    %78 = vector.broadcast %77 : vector<8x1xf32> to vector<8x8xf32>
    %79 = arith.subf %75, %78 : vector<8x8xf32>
    %80 = math.exp %79 : vector<8x8xf32>
    %cst_39 = arith.constant dense<0.000000e+00> : vector<8xf32>
    %81 = vector.multi_reduction <add>, %80, %cst_39 [1] : vector<8x8xf32> to vector<8xf32>
    %82 = vector.shape_cast %81 : vector<8xf32> to vector<8x1xf32>
    %83 = arith.truncf %80 : vector<8x8xf32> to vector<8x8xbf16>
    %84 = vector.extract_strided_slice %72 {offsets = [0, 0], sizes = [8, 8], strides = [1, 1]} : vector<8x32xbf16> to vector<8x8xbf16>
    %cst_40 = arith.constant dense<0.000000e+00> : vector<8x8xf32>
    %85 = tpu.matmul %83, %84, %cst_40 {dimension_numbers = #tpu.dot_dimension_numbers<[1], [0], [0], [1], [0, 0, 1, 1], [], []>} : vector<8x8xbf16>, vector<8x8xbf16>, vector<8x8xf32> -> vector<8x8xf32>
    %86 = tpu.reciprocal %82 {approx = true} : vector<8x1xf32> -> vector<8x1xf32>
    %87 = vector.broadcast %86 : vector<8x1xf32> to vector<8x8xf32>
    %88 = arith.mulf %85, %87 : vector<8x8xf32>
    %89 = vector.extract_strided_slice %70 {offsets = [0, 8], sizes = [8, 8], strides = [1, 1]} : vector<8x32xbf16> to vector<8x8xbf16>
    %90 = vector.extract_strided_slice %71 {offsets = [0, 8], sizes = [8, 8], strides = [1, 1]} : vector<8x32xbf16> to vector<8x8xbf16>
    %cst_41 = arith.constant dense<0.000000e+00> : vector<8x8xf32>
    %91 = tpu.matmul %89, %90, %cst_41 {dimension_numbers = #tpu.dot_dimension_numbers<[1], [1], [0], [0], [0, 0, 1, 0], [], []>} : vector<8x8xbf16>, vector<8x8xbf16>, vector<8x8xf32> -> vector<8x8xf32>
    %cst_42 = arith.constant dense<0xFF800000> : vector<8xf32>
    %92 = vector.multi_reduction <maximumf>, %91, %cst_42 [1] : vector<8x8xf32> to vector<8xf32>
    %93 = vector.shape_cast %92 : vector<8xf32> to vector<8x1xf32>
    %94 = vector.broadcast %93 : vector<8x1xf32> to vector<8x8xf32>
    %95 = arith.subf %91, %94 : vector<8x8xf32>
    %96 = math.exp %95 : vector<8x8xf32>
    %cst_43 = arith.constant dense<0.000000e+00> : vector<8xf32>
    %97 = vector.multi_reduction <add>, %96, %cst_43 [1] : vector<8x8xf32> to vector<8xf32>
    %98 = vector.shape_cast %97 : vector<8xf32> to vector<8x1xf32>
    %99 = arith.truncf %96 : vector<8x8xf32> to vector<8x8xbf16>
    %100 = vector.extract_strided_slice %72 {offsets = [0, 8], sizes = [8, 8], strides = [1, 1]} : vector<8x32xbf16> to vector<8x8xbf16>
    %cst_44 = arith.constant dense<0.000000e+00> : vector<8x8xf32>
    %101 = tpu.matmul %99, %100, %cst_44 {dimension_numbers = #tpu.dot_dimension_numbers<[1], [0], [0], [1], [0, 0, 1, 1], [], []>} : vector<8x8xbf16>, vector<8x8xbf16>, vector<8x8xf32> -> vector<8x8xf32>
    %102 = tpu.reciprocal %98 {approx = true} : vector<8x1xf32> -> vector<8x1xf32>
    %103 = vector.broadcast %102 : vector<8x1xf32> to vector<8x8xf32>
    %104 = arith.mulf %101, %103 : vector<8x8xf32>
    %105 = vector.extract_strided_slice %70 {offsets = [0, 16], sizes = [8, 8], strides = [1, 1]} : vector<8x32xbf16> to vector<8x8xbf16>
    %106 = vector.extract_strided_slice %71 {offsets = [0, 16], sizes = [8, 8], strides = [1, 1]} : vector<8x32xbf16> to vector<8x8xbf16>
    %cst_45 = arith.constant dense<0.000000e+00> : vector<8x8xf32>
    %107 = tpu.matmul %105, %106, %cst_45 {dimension_numbers = #tpu.dot_dimension_numbers<[1], [1], [0], [0], [0, 0, 1, 0], [], []>} : vector<8x8xbf16>, vector<8x8xbf16>, vector<8x8xf32> -> vector<8x8xf32>
    %cst_46 = arith.constant dense<0xFF800000> : vector<8xf32>
    %108 = vector.multi_reduction <maximumf>, %107, %cst_46 [1] : vector<8x8xf32> to vector<8xf32>
    %109 = vector.shape_cast %108 : vector<8xf32> to vector<8x1xf32>
    %110 = vector.broadcast %109 : vector<8x1xf32> to vector<8x8xf32>
    %111 = arith.subf %107, %110 : vector<8x8xf32>
    %112 = math.exp %111 : vector<8x8xf32>
    %cst_47 = arith.constant dense<0.000000e+00> : vector<8xf32>
    %113 = vector.multi_reduction <add>, %112, %cst_47 [1] : vector<8x8xf32> to vector<8xf32>
    %114 = vector.shape_cast %113 : vector<8xf32> to vector<8x1xf32>
    %115 = arith.truncf %112 : vector<8x8xf32> to vector<8x8xbf16>
    %116 = vector.extract_strided_slice %72 {offsets = [0, 16], sizes = [8, 8], strides = [1, 1]} : vector<8x32xbf16> to vector<8x8xbf16>
    %cst_48 = arith.constant dense<0.000000e+00> : vector<8x8xf32>
    %117 = tpu.matmul %115, %116, %cst_48 {dimension_numbers = #tpu.dot_dimension_numbers<[1], [0], [0], [1], [0, 0, 1, 1], [], []>} : vector<8x8xbf16>, vector<8x8xbf16>, vector<8x8xf32> -> vector<8x8xf32>
    %118 = tpu.reciprocal %114 {approx = true} : vector<8x1xf32> -> vector<8x1xf32>
    %119 = vector.broadcast %118 : vector<8x1xf32> to vector<8x8xf32>
    %120 = arith.mulf %117, %119 : vector<8x8xf32>
    %121 = vector.extract_strided_slice %70 {offsets = [0, 24], sizes = [8, 8], strides = [1, 1]} : vector<8x32xbf16> to vector<8x8xbf16>
    %122 = vector.extract_strided_slice %71 {offsets = [0, 24], sizes = [8, 8], strides = [1, 1]} : vector<8x32xbf16> to vector<8x8xbf16>
    %cst_49 = arith.constant dense<0.000000e+00> : vector<8x8xf32>
    %123 = tpu.matmul %121, %122, %cst_49 {dimension_numbers = #tpu.dot_dimension_numbers<[1], [1], [0], [0], [0, 0, 1, 0], [], []>} : vector<8x8xbf16>, vector<8x8xbf16>, vector<8x8xf32> -> vector<8x8xf32>
    %cst_50 = arith.constant dense<0xFF800000> : vector<8xf32>
    %124 = vector.multi_reduction <maximumf>, %123, %cst_50 [1] : vector<8x8xf32> to vector<8xf32>
    %125 = vector.shape_cast %124 : vector<8xf32> to vector<8x1xf32>
    %126 = vector.broadcast %125 : vector<8x1xf32> to vector<8x8xf32>
    %127 = arith.subf %123, %126 : vector<8x8xf32>
    %128 = math.exp %127 : vector<8x8xf32>
    %cst_51 = arith.constant dense<0.000000e+00> : vector<8xf32>
    %129 = vector.multi_reduction <add>, %128, %cst_51 [1] : vector<8x8xf32> to vector<8xf32>
    %130 = vector.shape_cast %129 : vector<8xf32> to vector<8x1xf32>
    %131 = arith.truncf %128 : vector<8x8xf32> to vector<8x8xbf16>
    %132 = vector.extract_strided_slice %72 {offsets = [0, 24], sizes = [8, 8], strides = [1, 1]} : vector<8x32xbf16> to vector<8x8xbf16>
    %cst_52 = arith.constant dense<0.000000e+00> : vector<8x8xf32>
    %133 = tpu.matmul %131, %132, %cst_52 {dimension_numbers = #tpu.dot_dimension_numbers<[1], [0], [0], [1], [0, 0, 1, 1], [], []>} : vector<8x8xbf16>, vector<8x8xbf16>, vector<8x8xf32> -> vector<8x8xf32>
    %134 = tpu.reciprocal %130 {approx = true} : vector<8x1xf32> -> vector<8x1xf32>
    %135 = vector.broadcast %134 : vector<8x1xf32> to vector<8x8xf32>
    %136 = arith.mulf %133, %135 : vector<8x8xf32>
    %137 = tpu.concatenate %88, %104, %120, %136 in 1 : vector<8x8xf32>, vector<8x8xf32>, vector<8x8xf32>, vector<8x8xf32> -> vector<8x32xf32>
    %138 = arith.truncf %137 : vector<8x32xf32> to vector<8x32xbf16>
    %cst_53 = arith.constant dense<0.000000e+00> : vector<8x32xf32>
    %139 = tpu.matmul %138, %66, %cst_53 {dimension_numbers = #tpu.dot_dimension_numbers<[1], [0], [0], [1], [0, 0, 1, 1], [], []>} : vector<8x32xbf16>, vector<32x32xbf16>, vector<8x32xf32> -> vector<8x32xf32>
    %140 = vector.broadcast %67 : vector<1x32xf32> to vector<8x32xf32>
    %141 = arith.addf %139, %140 : vector<8x32xf32>
    %142 = arith.addf %1, %141 : vector<8x32xf32>
    %c0_54 = arith.constant 0 : index
    %c0_55 = arith.constant 0 : index
    %c0_56 = arith.constant 0 : index
    %143 = vector.load %arg13[%c0_54, %c0_55, %c0_56] : memref<1x8x32xf32, #tpu.memory_space<vmem>>, vector<1x8x32xf32>
    %144 = vector.shape_cast %143 : vector<1x8x32xf32> to vector<8x32xf32>
    %145 = vector.shape_cast %142 : vector<8x32xf32> to vector<1x8x32xf32>
    tpu.vector_store %arg13[%c0_54, %c0_55, %c0_56], %145 {strides = array<i32>} : memref<1x8x32xf32, #tpu.memory_space<vmem>>, vector<1x8x32xf32>,
    return
  }
  func.func @transform_0(%arg0: i32) -> (i32, i32, i32) {
    %c0_i32 = arith.constant 0 : i32
    %c0_i32_0 = arith.constant 0 : i32
    %c0_i32_1 = arith.constant 0 : i32
    return %arg0, %c0_i32, %c0_i32_0 : i32, i32, i32
  }
  func.func @transform_1(%arg0: i32) -> (i32, i32, i32) {
    %c0_i32 = arith.constant 0 : i32
    %c0_i32_0 = arith.constant 0 : i32
    %c0_i32_1 = arith.constant 0 : i32
    return %arg0, %c0_i32, %c0_i32_0 : i32, i32, i32
  }
  func.func @transform_2(%arg0: i32) -> (i32, i32) {
    %c0_i32 = arith.constant 0 : i32
    %c0_i32_0 = arith.constant 0 : i32
    %c0_i32_1 = arith.constant 0 : i32
    return %c0_i32, %c0_i32_0 : i32, i32
  }
  func.func @transform_3(%arg0: i32) -> (i32, i32) {
    %c0_i32 = arith.constant 0 : i32
    %c0_i32_0 = arith.constant 0 : i32
    %c0_i32_1 = arith.constant 0 : i32
    return %c0_i32, %c0_i32_0 : i32, i32
  }
  func.func @transform_4(%arg0: i32) -> (i32, i32) {
    %c0_i32 = arith.constant 0 : i32
    %c0_i32_0 = arith.constant 0 : i32
    %c0_i32_1 = arith.constant 0 : i32
    return %c0_i32, %c0_i32_0 : i32, i32
  }
  func.func @transform_5(%arg0: i32) -> (i32, i32) {
    %c0_i32 = arith.constant 0 : i32
    %c0_i32_0 = arith.constant 0 : i32
    %c0_i32_1 = arith.constant 0 : i32
    return %c0_i32, %c0_i32_0 : i32, i32
  }
  func.func @transform_6(%arg0: i32) -> (i32, i32) {
    %c0_i32 = arith.constant 0 : i32
    %c0_i32_0 = arith.constant 0 : i32
    %c0_i32_1 = arith.constant 0 : i32
    return %c0_i32, %c0_i32_0 : i32, i32
  }
  func.func @transform_7(%arg0: i32) -> (i32, i32) {
    %c0_i32 = arith.constant 0 : i32
    %c0_i32_0 = arith.constant 0 : i32
    %c0_i32_1 = arith.constant 0 : i32
    return %c0_i32, %c0_i32_0 : i32, i32
  }
  func.func @transform_8(%arg0: i32) -> (i32, i32) {
    %c0_i32 = arith.constant 0 : i32
    %c0_i32_0 = arith.constant 0 : i32
    %c0_i32_1 = arith.constant 0 : i32
    return %c0_i32, %c0_i32_0 : i32, i32
  }
  func.func @transform_9(%arg0: i32) -> (i32, i32) {
    %c0_i32 = arith.constant 0 : i32
    %c0_i32_0 = arith.constant 0 : i32
    %c0_i32_1 = arith.constant 0 : i32
    return %c0_i32, %c0_i32_0 : i32, i32
  }
  func.func @transform_10(%arg0: i32) -> (i32, i32) {
    %c0_i32 = arith.constant 0 : i32
    %c0_i32_0 = arith.constant 0 : i32
    %c0_i32_1 = arith.constant 0 : i32
    return %c0_i32, %c0_i32_0 : i32, i32
  }
  func.func @transform_11(%arg0: i32) -> (i32, i32) {
    %c0_i32 = arith.constant 0 : i32
    %c0_i32_0 = arith.constant 0 : i32
    %c0_i32_1 = arith.constant 0 : i32
    return %c0_i32, %c0_i32_0 : i32, i32
  }
  func.func @transform_12(%arg0: i32) -> (i32, i32, i32) {
    %c0_i32 = arith.constant 0 : i32
    %c0_i32_0 = arith.constant 0 : i32
    %c0_i32_1 = arith.constant 0 : i32
    return %arg0, %c0_i32, %c0_i32_0 : i32, i32, i32
  }
}

module attributes {stable_mosaic.version = 11 : i64} {
  func.func @_avg_ffn_sublayer_kernel(%arg0: i32, %arg1: memref<16x32xf32, #tpu.memory_space<vmem>>, %arg2: memref<16x32xf32, #tpu.memory_space<vmem>>, %arg3: memref<16x32xf32, #tpu.memory_space<vmem>>, %arg4: memref<1x32xf32, #tpu.memory_space<vmem>>, %arg5: memref<1x32xf32, #tpu.memory_space<vmem>>, %arg6: memref<32x64xbf16, #tpu.memory_space<vmem>>, %arg7: memref<1x64xf32, #tpu.memory_space<vmem>>, %arg8: memref<64x32xbf16, #tpu.memory_space<vmem>>, %arg9: memref<1x32xf32, #tpu.memory_space<vmem>>, %arg10: memref<16x32xf32, #tpu.memory_space<vmem>>) attributes {dimension_semantics = [#tpu.dimension_semantics<parallel>], iteration_bounds = array<i64: 1>, scalar_prefetch = 0 : i64, scratch_operands = 0 : i64, tpu.core_type = #tpu.core_type<tc>, window_params = [{transform_indices = @transform_0, window_bounds = array<i64: 16, 32>}, {transform_indices = @transform_1, window_bounds = array<i64: 16, 32>}, {transform_indices = @transform_2, window_bounds = array<i64: 16, 32>}, {pipeline_mode = #tpu.pipeline_mode<synchronous>, transform_indices = @transform_3, window_bounds = array<i64: 1, 32>}, {pipeline_mode = #tpu.pipeline_mode<synchronous>, transform_indices = @transform_4, window_bounds = array<i64: 1, 32>}, {pipeline_mode = #tpu.pipeline_mode<synchronous>, transform_indices = @transform_5, window_bounds = array<i64: 32, 64>}, {pipeline_mode = #tpu.pipeline_mode<synchronous>, transform_indices = @transform_6, window_bounds = array<i64: 1, 64>}, {pipeline_mode = #tpu.pipeline_mode<synchronous>, transform_indices = @transform_7, window_bounds = array<i64: 64, 32>}, {pipeline_mode = #tpu.pipeline_mode<synchronous>, transform_indices = @transform_8, window_bounds = array<i64: 1, 32>}, {transform_indices = @transform_9, window_bounds = array<i64: 16, 32>}]} {
    %c0 = arith.constant 0 : index
    %c0_0 = arith.constant 0 : index
    %0 = vector.load %arg1[%c0, %c0_0] : memref<16x32xf32, #tpu.memory_space<vmem>>, vector<16x32xf32>
    %c0_1 = arith.constant 0 : index
    %c0_2 = arith.constant 0 : index
    %1 = vector.load %arg2[%c0_1, %c0_2] : memref<16x32xf32, #tpu.memory_space<vmem>>, vector<16x32xf32>
    %2 = arith.addf %0, %1 : vector<16x32xf32>
    %c0_3 = arith.constant 0 : index
    %c0_4 = arith.constant 0 : index
    %3 = vector.load %arg3[%c0_3, %c0_4] : memref<16x32xf32, #tpu.memory_space<vmem>>, vector<16x32xf32>
    %4 = arith.addf %2, %3 : vector<16x32xf32>
    %cst = arith.constant 3.000000e+00 : f32
    %5 = vector.broadcast %cst : f32 to vector<16x32xf32>
    %6 = arith.divf %4, %5 : vector<16x32xf32>
    %c0_5 = arith.constant 0 : index
    %c0_6 = arith.constant 0 : index
    %7 = vector.load %arg4[%c0_5, %c0_6] : memref<1x32xf32, #tpu.memory_space<vmem>>, vector<1x32xf32>
    %c0_7 = arith.constant 0 : index
    %c0_8 = arith.constant 0 : index
    %8 = vector.load %arg5[%c0_7, %c0_8] : memref<1x32xf32, #tpu.memory_space<vmem>>, vector<1x32xf32>
    %cst_9 = arith.constant dense<0.000000e+00> : vector<16xf32>
    %9 = vector.multi_reduction <add>, %6, %cst_9 [1] : vector<16x32xf32> to vector<16xf32>
    %10 = vector.shape_cast %9 : vector<16xf32> to vector<16x1xf32>
    %cst_10 = arith.constant 3.200000e+01 : f32
    %11 = vector.broadcast %cst_10 : f32 to vector<16x1xf32>
    %12 = arith.divf %10, %11 : vector<16x1xf32>
    %13 = vector.broadcast %12 : vector<16x1xf32> to vector<16x32xf32>
    %14 = arith.subf %6, %13 : vector<16x32xf32>
    %15 = arith.mulf %14, %14 : vector<16x32xf32>
    %cst_11 = arith.constant dense<0.000000e+00> : vector<16xf32>
    %16 = vector.multi_reduction <add>, %15, %cst_11 [1] : vector<16x32xf32> to vector<16xf32>
    %17 = vector.shape_cast %16 : vector<16xf32> to vector<16x1xf32>
    %cst_12 = arith.constant 3.200000e+01 : f32
    %18 = vector.broadcast %cst_12 : f32 to vector<16x1xf32>
    %19 = arith.divf %17, %18 : vector<16x1xf32>
    %20 = vector.broadcast %12 : vector<16x1xf32> to vector<16x32xf32>
    %21 = arith.subf %6, %20 : vector<16x32xf32>
    %cst_13 = arith.constant 9.99999974E-6 : f32
    %22 = vector.broadcast %cst_13 : f32 to vector<16x1xf32>
    %23 = arith.addf %19, %22 : vector<16x1xf32>
    %24 = math.rsqrt %23 : vector<16x1xf32>
    %25 = vector.broadcast %24 : vector<16x1xf32> to vector<16x32xf32>
    %26 = arith.mulf %21, %25 : vector<16x32xf32>
    %27 = vector.broadcast %7 : vector<1x32xf32> to vector<16x32xf32>
    %28 = arith.mulf %26, %27 : vector<16x32xf32>
    %29 = vector.broadcast %8 : vector<1x32xf32> to vector<16x32xf32>
    %30 = arith.addf %28, %29 : vector<16x32xf32>
    %31 = arith.truncf %30 : vector<16x32xf32> to vector<16x32xbf16>
    %c0_14 = arith.constant 0 : index
    %c0_15 = arith.constant 0 : index
    %32 = vector.load %arg6[%c0_14, %c0_15] : memref<32x64xbf16, #tpu.memory_space<vmem>>, vector<32x64xbf16>
    %cst_16 = arith.constant dense<0.000000e+00> : vector<16x64xf32>
    %33 = tpu.matmul %31, %32, %cst_16 {dimension_numbers = #tpu.dot_dimension_numbers<[1], [0], [0], [1], [0, 0, 1, 1], [], []>} : vector<16x32xbf16>, vector<32x64xbf16>, vector<16x64xf32> -> vector<16x64xf32>
    %c0_17 = arith.constant 0 : index
    %c0_18 = arith.constant 0 : index
    %34 = vector.load %arg7[%c0_17, %c0_18] : memref<1x64xf32, #tpu.memory_space<vmem>>, vector<1x64xf32>
    %35 = vector.broadcast %34 : vector<1x64xf32> to vector<16x64xf32>
    %36 = arith.addf %33, %35 : vector<16x64xf32>
    %cst_19 = arith.constant 5.000000e-01 : f32
    %37 = vector.broadcast %cst_19 : f32 to vector<16x64xf32>
    %38 = arith.mulf %37, %36 : vector<16x64xf32>
    %cst_20 = arith.constant 0.707106769 : f32
    %39 = vector.broadcast %cst_20 : f32 to vector<16x64xf32>
    %40 = arith.mulf %36, %39 : vector<16x64xf32>
    %41 = math.absf %40 : vector<16x64xf32>
    %cst_21 = arith.constant 0.327591091 : f32
    %42 = vector.broadcast %cst_21 : f32 to vector<16x64xf32>
    %43 = arith.mulf %42, %41 : vector<16x64xf32>
    %cst_22 = arith.constant 1.000000e+00 : f32
    %44 = vector.broadcast %cst_22 : f32 to vector<16x64xf32>
    %45 = arith.addf %44, %43 : vector<16x64xf32>
    %46 = tpu.reciprocal %45 {approx = true} : vector<16x64xf32> -> vector<16x64xf32>
    %cst_23 = arith.constant 1.06140542 : f32
    %47 = vector.broadcast %cst_23 : f32 to vector<16x64xf32>
    %48 = arith.mulf %47, %46 : vector<16x64xf32>
    %cst_24 = arith.constant -1.45315206 : f32
    %49 = vector.broadcast %cst_24 : f32 to vector<16x64xf32>
    %50 = arith.addf %48, %49 : vector<16x64xf32>
    %51 = arith.mulf %50, %46 : vector<16x64xf32>
    %cst_25 = arith.constant 1.42141378 : f32
    %52 = vector.broadcast %cst_25 : f32 to vector<16x64xf32>
    %53 = arith.addf %51, %52 : vector<16x64xf32>
    %54 = arith.mulf %53, %46 : vector<16x64xf32>
    %cst_26 = arith.constant -0.284496725 : f32
    %55 = vector.broadcast %cst_26 : f32 to vector<16x64xf32>
    %56 = arith.addf %54, %55 : vector<16x64xf32>
    %57 = arith.mulf %56, %46 : vector<16x64xf32>
    %cst_27 = arith.constant 0.254829586 : f32
    %58 = vector.broadcast %cst_27 : f32 to vector<16x64xf32>
    %59 = arith.addf %57, %58 : vector<16x64xf32>
    %60 = arith.mulf %59, %46 : vector<16x64xf32>
    %cst_28 = arith.constant 0.000000e+00 : f32
    %61 = vector.broadcast %cst_28 : f32 to vector<16x64xf32>
    %62 = arith.subf %61, %41 : vector<16x64xf32>
    %63 = arith.mulf %62, %41 : vector<16x64xf32>
    %64 = math.exp %63 : vector<16x64xf32>
    %65 = arith.mulf %60, %64 : vector<16x64xf32>
    %cst_29 = arith.constant 1.000000e+00 : f32
    %66 = vector.broadcast %cst_29 : f32 to vector<16x64xf32>
    %67 = arith.subf %66, %65 : vector<16x64xf32>
    %cst_30 = arith.constant 0.000000e+00 : f32
    %68 = vector.broadcast %cst_30 : f32 to vector<16x64xf32>
    %69 = arith.cmpf oge, %40, %68 : vector<16x64xf32>
    %cst_31 = arith.constant 0.000000e+00 : f32
    %70 = vector.broadcast %cst_31 : f32 to vector<16x64xf32>
    %71 = arith.subf %70, %67 : vector<16x64xf32>
    %72 = arith.select %69, %67, %71 : vector<16x64xi1>, vector<16x64xf32>
    %cst_32 = arith.constant 1.000000e+00 : f32
    %73 = vector.broadcast %cst_32 : f32 to vector<16x64xf32>
    %74 = arith.addf %73, %72 : vector<16x64xf32>
    %75 = arith.mulf %38, %74 : vector<16x64xf32>
    %76 = arith.truncf %75 : vector<16x64xf32> to vector<16x64xbf16>
    %c0_33 = arith.constant 0 : index
    %c0_34 = arith.constant 0 : index
    %77 = vector.load %arg8[%c0_33, %c0_34] : memref<64x32xbf16, #tpu.memory_space<vmem>>, vector<64x32xbf16>
    %cst_35 = arith.constant dense<0.000000e+00> : vector<16x32xf32>
    %78 = tpu.matmul %76, %77, %cst_35 {dimension_numbers = #tpu.dot_dimension_numbers<[1], [0], [0], [1], [0, 0, 1, 1], [], []>} : vector<16x64xbf16>, vector<64x32xbf16>, vector<16x32xf32> -> vector<16x32xf32>
    %c0_36 = arith.constant 0 : index
    %c0_37 = arith.constant 0 : index
    %79 = vector.load %arg9[%c0_36, %c0_37] : memref<1x32xf32, #tpu.memory_space<vmem>>, vector<1x32xf32>
    %80 = vector.broadcast %79 : vector<1x32xf32> to vector<16x32xf32>
    %81 = arith.addf %78, %80 : vector<16x32xf32>
    %82 = arith.addf %6, %81 : vector<16x32xf32>
    %c0_38 = arith.constant 0 : index
    %c0_39 = arith.constant 0 : index
    %83 = vector.load %arg10[%c0_38, %c0_39] : memref<16x32xf32, #tpu.memory_space<vmem>>, vector<16x32xf32>
    tpu.vector_store %arg10[%c0_38, %c0_39], %82 {strides = array<i32>} : memref<16x32xf32, #tpu.memory_space<vmem>>, vector<16x32xf32>,
    return
  }
  func.func @transform_0(%arg0: i32) -> (i32, i32) {
    %c0_i32 = arith.constant 0 : i32
    %c0_i32_0 = arith.constant 0 : i32
    return %arg0, %c0_i32 : i32, i32
  }
  func.func @transform_1(%arg0: i32) -> (i32, i32) {
    %c0_i32 = arith.constant 0 : i32
    %c0_i32_0 = arith.constant 0 : i32
    return %arg0, %c0_i32 : i32, i32
  }
  func.func @transform_2(%arg0: i32) -> (i32, i32) {
    %c0_i32 = arith.constant 0 : i32
    %c0_i32_0 = arith.constant 0 : i32
    return %arg0, %c0_i32 : i32, i32
  }
  func.func @transform_3(%arg0: i32) -> (i32, i32) {
    %c0_i32 = arith.constant 0 : i32
    %c0_i32_0 = arith.constant 0 : i32
    %c0_i32_1 = arith.constant 0 : i32
    return %c0_i32, %c0_i32_0 : i32, i32
  }
  func.func @transform_4(%arg0: i32) -> (i32, i32) {
    %c0_i32 = arith.constant 0 : i32
    %c0_i32_0 = arith.constant 0 : i32
    %c0_i32_1 = arith.constant 0 : i32
    return %c0_i32, %c0_i32_0 : i32, i32
  }
  func.func @transform_5(%arg0: i32) -> (i32, i32) {
    %c0_i32 = arith.constant 0 : i32
    %c0_i32_0 = arith.constant 0 : i32
    %c0_i32_1 = arith.constant 0 : i32
    return %c0_i32, %c0_i32_0 : i32, i32
  }
  func.func @transform_6(%arg0: i32) -> (i32, i32) {
    %c0_i32 = arith.constant 0 : i32
    %c0_i32_0 = arith.constant 0 : i32
    %c0_i32_1 = arith.constant 0 : i32
    return %c0_i32, %c0_i32_0 : i32, i32
  }
  func.func @transform_7(%arg0: i32) -> (i32, i32) {
    %c0_i32 = arith.constant 0 : i32
    %c0_i32_0 = arith.constant 0 : i32
    %c0_i32_1 = arith.constant 0 : i32
    return %c0_i32, %c0_i32_0 : i32, i32
  }
  func.func @transform_8(%arg0: i32) -> (i32, i32) {
    %c0_i32 = arith.constant 0 : i32
    %c0_i32_0 = arith.constant 0 : i32
    %c0_i32_1 = arith.constant 0 : i32
    return %c0_i32, %c0_i32_0 : i32, i32
  }
  func.func @transform_9(%arg0: i32) -> (i32, i32) {
    %c0_i32 = arith.constant 0 : i32
    %c0_i32_0 = arith.constant 0 : i32
    return %arg0, %c0_i32 : i32, i32
  }
}

</mosaic_0001>

<llo_original>
// kernel: tpu_custom_call.1
$region0: #{tpu_custom_call.1}
  #allocation0 [shape = 'u32[]', space=smem, size = 0x4, offset = 0x4, fixed_abs, tag = 'smem constant byte address 0x4 - core index']
  #allocation1 [shape = 'u32[144,128]{1,0:T(1,128)}', space=vmem, size = 0x12000, scoped, tag = 'internal scratch']
  %s0 = inlined_call_operand.hbm [shape: f32[8,128], index: 0, kind: input, shape index: {}]
  %s1 = inlined_call_operand.hbm [shape: f32[8,128], index: 1, kind: output, shape index: {}]
  %s2 = sld [smem:[#allocation0]]
  $region18: #{tpu_custom_call.1} parent=0
    _
  %s4 = ssub.s32 1, %s2
  %s5 = scalar_select 0, %s4, %s2
  $region1: #{tpu_custom_call.1} parent=0
    #allocation2 [shape = 'u8[4096]{0}', space=vmem, size = 0x1000, scoped, tag = 'input window, operand 0, single buffered']
    #allocation3 [shape = 's32[1]{0}', space=sflag, size = 0x4, scoped, tag = 'scoped memory for tpu_custom_call.1']
    #allocation4 [shape = 's32[1]{0}', space=sflag, size = 0x4, scoped, tag = 'scoped memory for tpu_custom_call.1']
    #allocation5 [shape = 'u8[4096]{0}', space=vmem, size = 0x1000, scoped, tag = 'output window, operand 0, single buffered']
    %6 = vsyncpa [#allocation3], 0
    %7 = vsyncpa [#allocation4], 0
    // Predicated region
    $region2: #{tpu_custom_call.1} parent=1 // pred_check
      _
    $region3: #{tpu_custom_call.1} parent=1 // pred_check_branch
      %9 = sbr.rel (0) target = $region5
    $region4: #{tpu_custom_call.1} parent=1 // pred_region
      %s11 = ssub.s32 128, 128
      %12 = vsyncadd [#allocation3], %s11
      %s14 = sshll.u32 [#allocation2], 4
      %s15 = int_to_ptr.vmem [resolvable:$true] %s14
      %17 = dma.hbm_to_vmem [thread:$0]  %s0, 128, %s15, [#allocation3]
    $region5: #{tpu_custom_call.1} parent=1 // pred_fallthru
      _
    // Predicated region
    $region6: #{tpu_custom_call.1} parent=1 // pred_check
      _
    $region7: #{tpu_custom_call.1} parent=1 // pred_check_branch
      %19 = sbr.rel (0) target = $region9
    $region8: #{tpu_custom_call.1} parent=1 // pred_region
      %20 = dma.done [#allocation3], 128
    $region9: #{tpu_custom_call.1} parent=1 // pred_fallthru
      _
    %v21 = vld [vmem:[#allocation2] sm:$0xff]
    %v22 = vadd.f32 %v21, 1.0
    %23 = vst [vmem:[#allocation5] sm:$0xff] %v22
    // Predicated region
    $region10: #{tpu_custom_call.1} parent=1 // pred_check
      _
    $region11: #{tpu_custom_call.1} parent=1 // pred_check_branch
      %25 = sbr.rel (0) target = $region13
    $region12: #{tpu_custom_call.1} parent=1 // pred_region
      %s27 = ssub.s32 128, 128
      %28 = vsyncadd [#allocation4], %s27
      %s30 = sshll.u32 [#allocation5], 4
      %s31 = int_to_ptr.vmem [resolvable:$true] %s30
      %33 = dma.vmem_to_hbm [thread:$0]  %s31, 128, %s1, [#allocation4]
    $region13: #{tpu_custom_call.1} parent=1 // pred_fallthru
      _
    // Predicated region
    $region14: #{tpu_custom_call.1} parent=1 // pred_check
      _
    $region15: #{tpu_custom_call.1} parent=1 // pred_check_branch
      %35 = sbr.rel (0) target = $region17
    $region16: #{tpu_custom_call.1} parent=1 // pred_region
      %36 = dma.done [#allocation4], 128
    $region17: #{tpu_custom_call.1} parent=1 // pred_fallthru
      _
    %37 = vsyncpa [#allocation3], 1
    %38 = vsyncpa [#allocation4], 1

// kernel: cross_modal_block.18
$region0: #{cross_modal_block.18}
  #allocation0 [shape = 'u32[]', space=smem, size = 0x4, offset = 0x4, fixed_abs, tag = 'smem constant byte address 0x4 - core index']
  #allocation1 [shape = 'u32[144,128]{1,0:T(1,128)}', space=vmem, size = 0x12000, scoped, tag = 'internal scratch']
  %s0 = inlined_call_operand.vmem [shape: f32[32,32], index: 0, kind: input, shape index: {}]
  %s1 = inlined_call_operand.vmem [shape: f32[1,32], index: 1, kind: input, shape index: {}]
  %s2 = inlined_call_operand.vmem [shape: f32[1,32], index: 2, kind: input, shape index: {}]
  %s3 = inlined_call_operand.vmem [shape: bf16[32,64], index: 3, kind: input, shape index: {}]
  %s4 = inlined_call_operand.vmem [shape: f32[1,64], index: 4, kind: input, shape index: {}]
  %s5 = inlined_call_operand.vmem [shape: bf16[64,32], index: 5, kind: input, shape index: {}]
  %s6 = inlined_call_operand.vmem [shape: f32[1,32], index: 6, kind: input, shape index: {}]
  %s7 = inlined_call_operand.vmem [shape: f32[32,32], index: 7, kind: output, shape index: {}]
  %s8 = sld [smem:[#allocation0]]
  $region38: #{cross_modal_block.18} parent=0
    _
  %s10 = ssub.s32 1, %s8
  %s11 = scalar_select 0, %s10, %s8
  // Predicated region
  $region2: #{cross_modal_block.18} parent=0 // pred_check
    _
  $region3: #{cross_modal_block.18} parent=0 // pred_check_branch
    %13 = sbr.rel (0) target = $region5
  $region4: #{cross_modal_block.18} parent=0 // pred_region
    _
  $region5: #{cross_modal_block.18} parent=0 // pred_fallthru
    _
  // Predicated region
  $region6: #{cross_modal_block.18} parent=0 // pred_check
    _
  $region7: #{cross_modal_block.18} parent=0 // pred_check_branch
    %15 = sbr.rel (0) target = $region9
  $region8: #{cross_modal_block.18} parent=0 // pred_region
    _
  $region9: #{cross_modal_block.18} parent=0 // pred_fallthru
    _
  // Predicated region
  $region10: #{cross_modal_block.18} parent=0 // pred_check
    _
  $region11: #{cross_modal_block.18} parent=0 // pred_check_branch
    %17 = sbr.rel (0) target = $region13
  $region12: #{cross_modal_block.18} parent=0 // pred_region
    _
  $region13: #{cross_modal_block.18} parent=0 // pred_fallthru
    _
  // Predicated region
  $region14: #{cross_modal_block.18} parent=0 // pred_check
    _
  $region15: #{cross_modal_block.18} parent=0 // pred_check_branch
    %19 = sbr.rel (0) target = $region17
  $region16: #{cross_modal_block.18} parent=0 // pred_region
    _
  $region17: #{cross_modal_block.18} parent=0 // pred_fallthru
    _
  // Predicated region
  $region18: #{cross_modal_block.18} parent=0 // pred_check
    _
  $region19: #{cross_modal_block.18} parent=0 // pred_check_branch
    %21 = sbr.rel (0) target = $region21
  $region20: #{cross_modal_block.18} parent=0 // pred_region
    _
  $region21: #{cross_modal_block.18} parent=0 // pred_fallthru
    _
  // Predicated region
  $region22: #{cross_modal_block.18} parent=0 // pred_check
    _
  $region23: #{cross_modal_block.18} parent=0 // pred_check_branch
    %23 = sbr.rel (0) target = $region25
  $region24: #{cross_modal_block.18} parent=0 // pred_region
    _
  $region25: #{cross_modal_block.18} parent=0 // pred_fallthru
    _
  // Predicated region
  $region26: #{cross_modal_block.18} parent=0 // pred_check
    _
  $region27: #{cross_modal_block.18} parent=0 // pred_check_branch
    %25 = sbr.rel (0) target = $region29
  $region28: #{cross_modal_block.18} parent=0 // pred_region
    _
  $region29: #{cross_modal_block.18} parent=0 // pred_fallthru
    _
  %v27 = vld [vmem:[%s0] sm:$0xff]
  %v28 = vld [vmem:[%s0 + $0x8] sm:$0xff]
  %v29 = vld [vmem:[%s0 + $0x10] sm:$0xff]
  %v30 = vld [vmem:[%s0 + $0x18] sm:$0xff]
  %v31 = vld [vmem:[%s1] sm:$0x1]
  %v32 = vld [vmem:[%s2] sm:$0x1]
  %vm33 = vcmask 261120
  %v34 = vsel %vm33, %v27, 0.0
  %35 = vadd.xlane.f32.xlu0 %v34
  %v36 = vpop.xlane.xlu0 %35
  %v37 = vsel %vm33, %v28, 0.0
  %38 = vadd.xlane.f32.xlu0 %v37
  %v39 = vpop.xlane.xlu0 %38
  %v40 = vsel %vm33, %v29, 0.0
  %41 = vadd.xlane.f32.xlu0 %v40
  %v42 = vpop.xlane.xlu0 %41
  %v43 = vsel %vm33, %v30, 0.0
  %44 = vadd.xlane.f32.xlu0 %v43
  %v45 = vpop.xlane.xlu0 %44
  %v46 = vrcp.pop 32.0
  %v47 = vmul.f32 %v36, %v46
  %v48 = vmul.f32 %v39, %v46
  %v49 = vmul.f32 %v42, %v46
  %v50 = vmul.f32 %v45, %v46
  %v51 = vsub.f32 %v27, %v47
  %v52 = vsub.f32 %v28, %v48
  %v53 = vsub.f32 %v29, %v49
  %v54 = vsub.f32 %v30, %v50
  %v55 = vmul.f32 %v51, %v51
  %v56 = vmul.f32 %v52, %v52
  %v57 = vmul.f32 %v53, %v53
  %v58 = vmul.f32 %v54, %v54
  %v59 = vsel %vm33, %v55, 0.0
  %60 = vadd.xlane.f32.xlu0 %v59
  %v61 = vpop.xlane.xlu0 %60
  %v62 = vsel %vm33, %v56, 0.0
  %63 = vadd.xlane.f32.xlu0 %v62
  %v64 = vpop.xlane.xlu0 %63
  %v65 = vsel %vm33, %v57, 0.0
  %66 = vadd.xlane.f32.xlu0 %v65
  %v67 = vpop.xlane.xlu0 %66
  %v68 = vsel %vm33, %v58, 0.0
  %69 = vadd.xlane.f32.xlu0 %v68
  %v70 = vpop.xlane.xlu0 %69
  %v71 = vmul.f32 %v61, %v46
  %v72 = vmul.f32 %v64, %v46
  %v73 = vmul.f32 %v67, %v46
  %v74 = vmul.f32 %v70, %v46
  %v75 = vadd.f32 %v71, 1e-05
  %v76 = vadd.f32 %v72, 1e-05
  %v77 = vadd.f32 %v73, 1e-05
  %v78 = vadd.f32 %v74, 1e-05
  %v79 = vrsqrt.pop %v75
  %v80 = vrsqrt.pop %v76
  %v81 = vrsqrt.pop %v77
  %v82 = vrsqrt.pop %v78
  %v83 = vmul.f32 %v51, %v79
  %v84 = vmul.f32 %v52, %v80
  %v85 = vmul.f32 %v53, %v81
  %v86 = vmul.f32 %v54, %v82
  %v88 = vlaneseq
  %v89 = vshrl.u32 %v88, 7
  %v90 = vsub.s32 0, %v89
  %v91 = vrot.slane %v31, %v90
  %v93 = vmul.f32 %v83, %v91
  %v94 = vmul.f32 %v84, %v91
  %v95 = vmul.f32 %v85, %v91
  %v96 = vmul.f32 %v86, %v91
  %v98 = vlaneseq
  %v99 = vshrl.u32 %v98, 7
  %v100 = vsub.s32 0, %v99
  %v101 = vrot.slane %v32, %v100
  %v103 = vadd.f32 %v93, %v101
  %v104 = vadd.f32 %v94, %v101
  %v105 = vadd.f32 %v95, %v101
  %v106 = vadd.f32 %v96, %v101
  %v107 = vpack.c.bf16 %v104, %v103
  %v108 = vpack.c.bf16 %v106, %v105
  %v109 = vld [vmem:[%s3] sm:$0xf]
  %v110 = vld [vmem:[%s3 + $0x4] sm:$0xf]
  %v111 = vld [vmem:[%s3 + $0x8] sm:$0xf]
  %v112 = vld [vmem:[%s3 + $0xc] sm:$0xf]
  %v113 = vld [vmem:[%s4] sm:$0x1]
  %v115 = vlaneseq
  %v116 = vshrl.u32 %v115, 7
  %v117 = vsub.s32 0, %v116
  %v118 = vrot.slane %v113, %v117
  %v124 = vunpack.c.l.b16 %v109
  %v125 = vunpack.c.l.b16 %v110
  %v126 = vunpack.c.l.b16 %v111
  %v127 = vunpack.c.l.b16 %v112
  %v128 = vpack.c.b16 %v125, %v124
  %v129 = vpack.c.b16 %v127, %v126
  %v133 = vsel %vm33, %v107, 0
  %v136 = vsel %vm33, %v108, 0
  %138 = vmatprep.subr.bf16.mxu0 0
  %139 = vmatpush1.bf16.msra.mxu0 0
  %140 = vmatprep.subr.bf16.mxu0 0
  %141 = vmatpush1.bf16.msra.mxu0 0
  %142 = vmatprep.subr.bf16.mxu0 0
  %143 = vmatpush1.bf16.msra.mxu0 0
  %144 = vmatprep.subr.bf16.mxu0 0
  %145 = vmatpush1.bf16.msra.mxu0 0
  %146 = vmatprep.subr.bf16.mxu0 0
  %147 = vmatpush1.bf16.msra.mxu0 0
  %148 = vmatprep.subr.bf16.mxu0 0
  %149 = vmatpush1.bf16.msra.mxu0 0
  %150 = vmatprep.subr.bf16.mxu0 0
  %151 = vmatpush1.bf16.msra.mxu0 %v129
  %152 = vmatprep.subr.bf16.mxu0 0
  %153 = vmatpush1.bf16.msra.mxu0 %v128
  %154 = vmatprep.subr.bf16.mxu0 0
  %155 = vmatpush2.bf16.msra.mxu0 0
  %156 = vmatprep.subr.bf16.mxu0 0
  %157 = vmatpush2.bf16.msra.mxu0 0
  %158 = vmatprep.subr.bf16.mxu0 0
  %159 = vmatpush2.bf16.msra.mxu0 0
  %160 = vmatprep.subr.bf16.mxu0 0
  %161 = vmatpush2.bf16.msra.mxu0 0
  %162 = vmatprep.subr.bf16.mxu0 0
  %163 = vmatpush2.bf16.msra.mxu0 0
  %164 = vmatprep.subr.bf16.mxu0 0
  %165 = vmatpush2.bf16.msra.mxu0 0
  %166 = vmatprep.subr.bf16.mxu0 0
  %167 = vmatpush2.bf16.msra.mxu0 0
  %168 = vmatprep.subr.bf16.mxu0 0
  %169 = vmatpush2.bf16.msra.mxu0 0
  %170 = vmatprep.mubr.bf16.mxu0 0
  %171 = vmatmul.mubr.bf16.gmra.mxu0 %v133
  %v172 = vpop.f32.mrf.mxu0
  %v173 = vadd.f32 %v118, %v172
  %v174 = vpop.f32.mrf.mxu0
  %v175 = vpop.f32.mrf.mxu0
  %v176 = vadd.f32 %v118, %v175
  %v177 = vpop.f32.mrf.mxu0
  %178 = vmatprep.mubr.bf16.mxu0 0
  %179 = vmatmul.mubr.bf16.gmra.mxu0 %v136
  %v180 = vpop.f32.mrf.mxu0
  %v181 = vadd.f32 %v118, %v180
  %v182 = vpop.f32.mrf.mxu0
  %v183 = vpop.f32.mrf.mxu0
  %v184 = vadd.f32 %v118, %v183
  %v185 = vpop.f32.mrf.mxu0
  %186 = vdwg.mxu0
  %v187 = vmul.f32 %v173, 0.5
  %v188 = vmul.f32 %v176, 0.5
  %v189 = vmul.f32 %v181, 0.5
  %v190 = vmul.f32 %v184, 0.5
  %v191 = vmul.f32 %v173, 0.70710677
  %v192 = vmul.f32 %v176, 0.70710677
  %v193 = vmul.f32 %v181, 0.70710677
  %v194 = vmul.f32 %v184, 0.70710677
  %v195 = vand.u32 2147483647, %v191
  %v196 = vand.u32 2147483647, %v192
  %v197 = vand.u32 2147483647, %v193
  %v198 = vand.u32 2147483647, %v194
  %v199 = vmul.f32 %v195, 0.3275911
  %v200 = vmul.f32 %v196, 0.3275911
  %v201 = vmul.f32 %v197, 0.3275911
  %v202 = vmul.f32 %v198, 0.3275911
  %v203 = vadd.f32 %v199, 1.0
  %v204 = vadd.f32 %v200, 1.0
  %v205 = vadd.f32 %v201, 1.0
  %v206 = vadd.f32 %v202, 1.0
  %v207 = vrcp.pop %v203
  %v208 = vrcp.pop %v204
  %v209 = vrcp.pop %v205
  %v210 = vrcp.pop %v206
  %v211 = vmul.f32 %v207, 1.0614054
  %v212 = vmul.f32 %v208, 1.0614054
  %v213 = vmul.f32 %v209, 1.0614054
  %v214 = vmul.f32 %v210, 1.0614054
  %v215 = vadd.f32 %v211, -1.4531521
  %v216 = vadd.f32 %v212, -1.4531521
  %v217 = vadd.f32 %v213, -1.4531521
  %v218 = vadd.f32 %v214, -1.4531521
  %v219 = vmul.f32 %v215, %v207
  %v220 = vmul.f32 %v216, %v208
  %v221 = vmul.f32 %v217, %v209
  %v222 = vmul.f32 %v218, %v210
  %v223 = vadd.f32 %v219, 1.4214138
  %v224 = vadd.f32 %v220, 1.4214138
  %v225 = vadd.f32 %v221, 1.4214138
  %v226 = vadd.f32 %v222, 1.4214138
  %v227 = vmul.f32 %v223, %v207
  %v228 = vmul.f32 %v224, %v208
  %v229 = vmul.f32 %v225, %v209
  %v230 = vmul.f32 %v226, %v210
  %v231 = vadd.f32 %v227, -0.28449672
  %v232 = vadd.f32 %v228, -0.28449672
  %v233 = vadd.f32 %v229, -0.28449672
  %v234 = vadd.f32 %v230, -0.28449672
  %v235 = vmul.f32 %v231, %v207
  %v236 = vmul.f32 %v232, %v208
  %v237 = vmul.f32 %v233, %v209
  %v238 = vmul.f32 %v234, %v210
  %v239 = vadd.f32 %v235, 0.2548296
  %v240 = vadd.f32 %v236, 0.2548296
  %v241 = vadd.f32 %v237, 0.2548296
  %v242 = vadd.f32 %v238, 0.2548296
  %v243 = vmul.f32 %v239, %v207
  %v244 = vmul.f32 %v240, %v208
  %v245 = vmul.f32 %v241, %v209
  %v246 = vmul.f32 %v242, %v210
  %v247 = vsub.f32 0.0, %v195
  %v248 = vsub.f32 0.0, %v196
  %v249 = vsub.f32 0.0, %v197
  %v250 = vsub.f32 0.0, %v198
  %v251 = vmul.f32 %v247, %v195
  %v252 = vmul.f32 %v248, %v196
  %v253 = vmul.f32 %v249, %v197
  %v254 = vmul.f32 %v250, %v198
  %v255 = vmul.f32 %v251, 1.442695
  %v256 = vpow.pop %v255
  %v257 = vmul.f32 %v252, 1.442695
  %v258 = vpow.pop %v257
  %v259 = vmul.f32 %v253, 1.442695
  %v260 = vpow.pop %v259
  %v261 = vmul.f32 %v254, 1.442695
  %v262 = vpow.pop %v261
  %v263 = vmul.f32 %v243, %v256
  %v264 = vmul.f32 %v244, %v258
  %v265 = vmul.f32 %v245, %v260
  %v266 = vmul.f32 %v246, %v262
  %v267 = vsub.f32 1.0, %v263
  %v268 = vsub.f32 1.0, %v264
  %v269 = vsub.f32 1.0, %v265
  %v270 = vsub.f32 1.0, %v266
  %vm271 = vcmp.ge.f32.partialorder %v191, 0.0
  %vm272 = vcmp.ge.f32.partialorder %v192, 0.0
  %vm273 = vcmp.ge.f32.partialorder %v193, 0.0
  %vm274 = vcmp.ge.f32.partialorder %v194, 0.0
  %v275 = vsub.f32 0.0, %v267
  %v276 = vsub.f32 0.0, %v268
  %v277 = vsub.f32 0.0, %v269
  %v278 = vsub.f32 0.0, %v270
  %v279 = vsel %vm271, %v267, %v275
  %v280 = vsel %vm272, %v268, %v276
  %v281 = vsel %vm273, %v269, %v277
  %v282 = vsel %vm274, %v270, %v278
  %v283 = vadd.f32 %v279, 1.0
  %v284 = vadd.f32 %v280, 1.0
  %v285 = vadd.f32 %v281, 1.0
  %v286 = vadd.f32 %v282, 1.0
  %v287 = vmul.f32 %v187, %v283
  %v288 = vmul.f32 %v188, %v284
  %v289 = vmul.f32 %v189, %v285
  %v290 = vmul.f32 %v190, %v286
  %v291 = vpack.c.bf16 %v288, %v287
  %v292 = vpack.c.bf16 %v290, %v289
  %v293 = vld [vmem:[%s5] sm:$0xf]
  %v294 = vld [vmem:[%s5 + $0x4] sm:$0xf]
  %v295 = vld [vmem:[%s5 + $0x8] sm:$0xf]
  %v296 = vld [vmem:[%s5 + $0xc] sm:$0xf]
  %v297 = vld [vmem:[%s5 + $0x10] sm:$0xf]
  %v298 = vld [vmem:[%s5 + $0x14] sm:$0xf]
  %v299 = vld [vmem:[%s5 + $0x18] sm:$0xf]
  %v300 = vld [vmem:[%s5 + $0x1c] sm:$0xf]
  %v301 = vld [vmem:[%s6] sm:$0x1]
  %v303 = vlaneseq
  %v304 = vshrl.u32 %v303, 7
  %v305 = vsub.s32 0, %v304
  %v306 = vrot.slane %v301, %v305
  %v316 = vunpack.c.l.b16 %v293
  %v317 = vunpack.c.l.b16 %v294
  %v318 = vunpack.c.l.b16 %v295
  %v319 = vunpack.c.l.b16 %v296
  %v320 = vunpack.c.l.b16 %v297
  %v321 = vunpack.c.l.b16 %v298
  %v322 = vunpack.c.l.b16 %v299
  %v323 = vunpack.c.l.b16 %v300
  %v324 = vpack.c.b16 %v317, %v316
  %v325 = vpack.c.b16 %v319, %v318
  %v326 = vpack.c.b16 %v321, %v320
  %v327 = vpack.c.b16 %v323, %v322
  %vm332 = vcmask 523264
  %v334 = vsel %vm332, %v291, 0
  %v337 = vsel %vm332, %v292, 0
  %339 = vmatprep.subr.bf16.mxu0 0
  %340 = vmatpush1.bf16.msra.mxu0 0
  %341 = vmatprep.subr.bf16.mxu0 0
  %342 = vmatpush1.bf16.msra.mxu0 0
  %343 = vmatprep.subr.bf16.mxu0 0
  %344 = vmatpush1.bf16.msra.mxu0 0
  %345 = vmatprep.subr.bf16.mxu0 0
  %346 = vmatpush1.bf16.msra.mxu0 0
  %347 = vmatprep.subr.bf16.mxu0 0
  %348 = vmatpush1.bf16.msra.mxu0 %v327
  %349 = vmatprep.subr.bf16.mxu0 0
  %350 = vmatpush1.bf16.msra.mxu0 %v326
  %351 = vmatprep.subr.bf16.mxu0 0
  %352 = vmatpush1.bf16.msra.mxu0 %v325
  %353 = vmatprep.subr.bf16.mxu0 0
  %354 = vmatpush1.bf16.msra.mxu0 %v324
  %355 = vmatprep.subr.bf16.mxu0 0
  %356 = vmatpush2.bf16.msra.mxu0 0
  %357 = vmatprep.subr.bf16.mxu0 0
  %358 = vmatpush2.bf16.msra.mxu0 0
  %359 = vmatprep.subr.bf16.mxu0 0
  %360 = vmatpush2.bf16.msra.mxu0 0
  %361 = vmatprep.subr.bf16.mxu0 0
  %362 = vmatpush2.bf16.msra.mxu0 0
  %363 = vmatprep.subr.bf16.mxu0 0
  %364 = vmatpush2.bf16.msra.mxu0 0
  %365 = vmatprep.subr.bf16.mxu0 0
  %366 = vmatpush2.bf16.msra.mxu0 0
  %367 = vmatprep.subr.bf16.mxu0 0
  %368 = vmatpush2.bf16.msra.mxu0 0
  %369 = vmatprep.subr.bf16.mxu0 0
  %370 = vmatpush2.bf16.msra.mxu0 0
  %371 = vmatprep.mubr.bf16.mxu0 0
  %372 = vmatmul.mubr.bf16.gmra.mxu0 %v334
  %v373 = vpop.f32.mrf.mxu0
  %v374 = vadd.f32 %v306, %v373
  %v375 = vpop.f32.mrf.mxu0
  %v376 = vpop.f32.mrf.mxu0
  %v377 = vadd.f32 %v306, %v376
  %v378 = vpop.f32.mrf.mxu0
  %379 = vmatprep.mubr.bf16.mxu0 0
  %380 = vmatmul.mubr.bf16.gmra.mxu0 %v337
  %v381 = vpop.f32.mrf.mxu0
  %v382 = vadd.f32 %v306, %v381
  %v383 = vpop.f32.mrf.mxu0
  %v384 = vpop.f32.mrf.mxu0
  %v385 = vadd.f32 %v306, %v384
  %v386 = vpop.f32.mrf.mxu0
  %387 = vdwg.mxu0
  %v388 = vadd.f32 %v27, %v374
  %v389 = vadd.f32 %v28, %v377
  %v390 = vadd.f32 %v29, %v382
  %v391 = vadd.f32 %v30, %v385
  %392 = vst.msk [vmem:[%s7] sm:$0xff] %vm33, %v388
  %393 = vst.msk [vmem:[%s7 + $0x8] sm:$0xff] %vm33, %v389
  %394 = vst.msk [vmem:[%s7 + $0x10] sm:$0xff] %vm33, %v390
  %395 = vst.msk [vmem:[%s7 + $0x18] sm:$0xff] %vm33, %v391
  // Predicated region
  $region30: #{cross_modal_block.18} parent=0 // pred_check
    _
  $region31: #{cross_modal_block.18} parent=0 // pred_check_branch
    %397 = sbr.rel (0) target = $region33
  $region32: #{cross_modal_block.18} parent=0 // pred_region
    _
  $region33: #{cross_modal_block.18} parent=0 // pred_fallthru
    _
  // Predicated region
  $region34: #{cross_modal_block.18} parent=0 // pred_check
    _
  $region35: #{cross_modal_block.18} parent=0 // pred_check_branch
    %399 = sbr.rel (0) target = $region37
  $region36: #{cross_modal_block.18} parent=0 // pred_region
    _
  $region37: #{cross_modal_block.18} parent=0 // pred_fallthru
    _

// kernel: cross_modal_block.19
$region0: #{cross_modal_block.19}
  #allocation0 [shape = 'u32[]', space=smem, size = 0x4, offset = 0x4, fixed_abs, tag = 'smem constant byte address 0x4 - core index']
  #allocation1 [shape = 'u32[144,128]{1,0:T(1,128)}', space=vmem, size = 0x12000, scoped, tag = 'internal scratch']
  %s0 = inlined_call_operand.vmem [shape: f32[2,8,32], index: 0, kind: input, shape index: {}]
  %s1 = inlined_call_operand.vmem [shape: f32[1,32], index: 1, kind: input, shape index: {}]
  %s2 = inlined_call_operand.vmem [shape: f32[1,32], index: 2, kind: input, shape index: {}]
  %s3 = inlined_call_operand.vmem [shape: bf16[32,96], index: 3, kind: input, shape index: {}]
  %s4 = inlined_call_operand.vmem [shape: f32[1,96], index: 4, kind: input, shape index: {}]
  %s5 = inlined_call_operand.vmem [shape: bf16[32,32], index: 5, kind: input, shape index: {}]
  %s6 = inlined_call_operand.vmem [shape: f32[1,32], index: 6, kind: input, shape index: {}]
  %s7 = inlined_call_operand.vmem [shape: f32[2,8,32], index: 7, kind: output, shape index: {}]
  %s8 = sld [smem:[#allocation0]]
  $region61: #{cross_modal_block.19} parent=0
    _
  %s10 = ssub.s32 1, %s8
  %s11 = scalar_select 0, %s10, %s8
  loop: start=0, step=1, limit=4
  $region2: #{cross_modal_block.19} parent=0 // loop_pre_header
    _
  $region3: #{cross_modal_block.19} parent=0 // loop_header
    %s13 = sphi 0, %s17
    %p14 = scmp.ge.s32.totalorder %s13, 4
    %s23 = sphi 0, %s25
    %s26 = sphi 0, %s23
    %s27 = sphi 0, %s26
    %s43 = sphi 0, %s27
    %s47 = sphi 0, %s47
    %s49 = sphi 0, %s47
    %s50 = sphi 0, %s49
    %s64 = sphi 0, %s50
    %s68 = sphi 0, %s68
    %s70 = sphi 0, %s68
    %s71 = sphi 0, %s70
    %s85 = sphi 0, %s71
    %s89 = sphi 0, %s89
    %s91 = sphi 0, %s89
    %s92 = sphi 0, %s91
    %s106 = sphi 0, %s92
    %s110 = sphi 0, %s110
    %s112 = sphi 0, %s110
    %s113 = sphi 0, %s112
    %s127 = sphi 0, %s113
    %s131 = sphi 0, %s131
    %s133 = sphi 0, %s131
    %s134 = sphi 0, %s133
    %s148 = sphi 0, %s134
    %s152 = sphi 0, %s152
    %s154 = sphi 0, %s152
    %s155 = sphi 0, %s154
    %s169 = sphi 0, %s155
    %s175 = sphi 0, %s177
    %s178 = sphi 0, %s175
    %s179 = sphi 0, %s178
    %s195 = sphi 0, %s179
  $region4: #{cross_modal_block.19} parent=0 // loop_header_branch
    %16 = sbr.rel (%p14) target = $region8
  $region5: #{cross_modal_block.19} parent=0 // loop_body
    %s18 = ssub.s32 %s13, 1
    %s19 = ssub.s32 %s13, 2
    %s20 = sadd.s32 %s13, 1
    %s21 = ssub.s32 %s13, %s20
    %p22 = scmp.eq.s32.totalorder %s21, 0
    %s24 = sadd.s32 %s23, 1
    %s25 = scalar_select %p22, %s23, %s24
    %p28 = pneg %p22
    %p29 = scmp.eq.s32.totalorder %s13, 1
    %p30 = por %p28, %p29
    %p31 = scmp.ne.s32.totalorder %s23, %s26
    %p32 = scmp.eq.s32.totalorder %s13, 0
    %p33 = por %p31, %p32
    %p34 = scmp.ne.s32.totalorder %s23, %s26
    %p35 = scmp.eq.s32.totalorder %s18, 1
    %p36 = por %p34, %p35
    %p37 = scmp.ne.s32.totalorder %s26, %s27
    %p38 = scmp.eq.s32.totalorder %s18, 0
    %p39 = por %p37, %p38
    %p40 = scmp.ne.s32.totalorder %s26, %s27
    %p41 = scmp.eq.s32.totalorder %s19, 1
    %p42 = por %p40, %p41
    %p44 = scmp.ne.s32.totalorder %s27, %s43
    %p45 = scmp.eq.s32.totalorder %s19, 0
    %p46 = por %p44, %p45
    %s48 = sadd.s32 %s47, 1
    %p51 = scmp.eq.s32.totalorder %s13, 1
    %p52 = scmp.ne.s32.totalorder %s47, %s49
    %p53 = scmp.eq.s32.totalorder %s13, 0
    %p54 = por %p52, %p53
    %p55 = scmp.ne.s32.totalorder %s47, %s49
    %p56 = scmp.eq.s32.totalorder %s18, 1
    %p57 = por %p55, %p56
    %p58 = scmp.ne.s32.totalorder %s49, %s50
    %p59 = scmp.eq.s32.totalorder %s18, 0
    %p60 = por %p58, %p59
    %p61 = scmp.ne.s32.totalorder %s49, %s50
    %p62 = scmp.eq.s32.totalorder %s19, 1
    %p63 = por %p61, %p62
    %p65 = scmp.ne.s32.totalorder %s50, %s64
    %p66 = scmp.eq.s32.totalorder %s19, 0
    %p67 = por %p65, %p66
    %s69 = sadd.s32 %s68, 1
    %p72 = scmp.eq.s32.totalorder %s13, 1
    %p73 = scmp.ne.s32.totalorder %s68, %s70
    %p74 = scmp.eq.s32.totalorder %s13, 0
    %p75 = por %p73, %p74
    %p76 = scmp.ne.s32.totalorder %s68, %s70
    %p77 = scmp.eq.s32.totalorder %s18, 1
    %p78 = por %p76, %p77
    %p79 = scmp.ne.s32.totalorder %s70, %s71
    %p80 = scmp.eq.s32.totalorder %s18, 0
    %p81 = por %p79, %p80
    %p82 = scmp.ne.s32.totalorder %s70, %s71
    %p83 = scmp.eq.s32.totalorder %s19, 1
    %p84 = por %p82, %p83
    %p86 = scmp.ne.s32.totalorder %s71, %s85
    %p87 = scmp.eq.s32.totalorder %s19, 0
    %p88 = por %p86, %p87
    %s90 = sadd.s32 %s89, 1
    %p93 = scmp.eq.s32.totalorder %s13, 1
    %p94 = scmp.ne.s32.totalorder %s89, %s91
    %p95 = scmp.eq.s32.totalorder %s13, 0
    %p96 = por %p94, %p95
    %p97 = scmp.ne.s32.totalorder %s89, %s91
    %p98 = scmp.eq.s32.totalorder %s18, 1
    %p99 = por %p97, %p98
    %p100 = scmp.ne.s32.totalorder %s91, %s92
    %p101 = scmp.eq.s32.totalorder %s18, 0
    %p102 = por %p100, %p101
    %p103 = scmp.ne.s32.totalorder %s91, %s92
    %p104 = scmp.eq.s32.totalorder %s19, 1
    %p105 = por %p103, %p104
    %p107 = scmp.ne.s32.totalorder %s92, %s106
    %p108 = scmp.eq.s32.totalorder %s19, 0
    %p109 = por %p107, %p108
    %s111 = sadd.s32 %s110, 1
    %p114 = scmp.eq.s32.totalorder %s13, 1
    %p115 = scmp.ne.s32.totalorder %s110, %s112
    %p116 = scmp.eq.s32.totalorder %s13, 0
    %p117 = por %p115, %p116
    %p118 = scmp.ne.s32.totalorder %s110, %s112
    %p119 = scmp.eq.s32.totalorder %s18, 1
    %p120 = por %p118, %p119
    %p121 = scmp.ne.s32.totalorder %s112, %s113
    %p122 = scmp.eq.s32.totalorder %s18, 0
    %p123 = por %p121, %p122
    %p124 = scmp.ne.s32.totalorder %s112, %s113
    %p125 = scmp.eq.s32.totalorder %s19, 1
    %p126 = por %p124, %p125
    %p128 = scmp.ne.s32.totalorder %s113, %s127
    %p129 = scmp.eq.s32.totalorder %s19, 0
    %p130 = por %p128, %p129
    %s132 = sadd.s32 %s131, 1
    %p135 = scmp.eq.s32.totalorder %s13, 1
    %p136 = scmp.ne.s32.totalorder %s131, %s133
    %p137 = scmp.eq.s32.totalorder %s13, 0
    %p138 = por %p136, %p137
    %p139 = scmp.ne.s32.totalorder %s131, %s133
    %p140 = scmp.eq.s32.totalorder %s18, 1
    %p141 = por %p139, %p140
    %p142 = scmp.ne.s32.totalorder %s133, %s134
    %p143 = scmp.eq.s32.totalorder %s18, 0
    %p144 = por %p142, %p143
    %p145 = scmp.ne.s32.totalorder %s133, %s134
    %p146 = scmp.eq.s32.totalorder %s19, 1
    %p147 = por %p145, %p146
    %p149 = scmp.ne.s32.totalorder %s134, %s148
    %p150 = scmp.eq.s32.totalorder %s19, 0
    %p151 = por %p149, %p150
    %s153 = sadd.s32 %s152, 1
    %p156 = scmp.eq.s32.totalorder %s13, 1
    %p157 = scmp.ne.s32.totalorder %s152, %s154
    %p158 = scmp.eq.s32.totalorder %s13, 0
    %p159 = por %p157, %p158
    %p160 = scmp.ne.s32.totalorder %s152, %s154
    %p161 = scmp.eq.s32.totalorder %s18, 1
    %p162 = por %p160, %p161
    %p163 = scmp.ne.s32.totalorder %s154, %s155
    %p164 = scmp.eq.s32.totalorder %s18, 0
    %p165 = por %p163, %p164
    %p166 = scmp.ne.s32.totalorder %s154, %s155
    %p167 = scmp.eq.s32.totalorder %s19, 1
    %p168 = por %p166, %p167
    %p170 = scmp.ne.s32.totalorder %s155, %s169
    %p171 = scmp.eq.s32.totalorder %s19, 0
    %p172 = por %p170, %p171
    %s173 = ssub.s32 %s13, %s20
    %p174 = scmp.eq.s32.totalorder %s173, 0
    %s176 = sadd.s32 %s175, 1
    %s177 = scalar_select %p174, %s175, %s176
    %p180 = pneg %p174
    %p181 = scmp.eq.s32.totalorder %s13, 1
    %p182 = por %p180, %p181
    %p183 = scmp.ne.s32.totalorder %s175, %s178
    %p184 = scmp.eq.s32.totalorder %s13, 0
    %p185 = por %p183, %p184
    %p186 = scmp.ne.s32.totalorder %s175, %s178
    %p187 = scmp.eq.s32.totalorder %s18, 1
    %p188 = por %p186, %p187
    %p189 = scmp.ne.s32.totalorder %s178, %s179
    %p190 = scmp.eq.s32.totalorder %s18, 0
    %p191 = por %p189, %p190
    %p192 = scmp.ne.s32.totalorder %s178, %s179
    %p193 = scmp.eq.s32.totalorder %s19, 1
    %p194 = por %p192, %p193
    %p196 = scmp.ne.s32.totalorder %s179, %s195
    %p197 = scmp.eq.s32.totalorder %s19, 0
    %p198 = por %p196, %p197
    %p199 = scmp.le.s32.totalorder 1, %s13
    %p200 = scmp.lt.s32.totalorder %s13, 3
    %p201 = pnand %p199, %p200
    %p202 = pneg %p201
    // Predicated region
    $region9: #{cross_modal_block.19} parent=5 // pred_check
      _
    $region10: #{cross_modal_block.19} parent=5 // pred_check_branch
      %204 = sbr.rel (%p201) target = $region12
    $region11: #{cross_modal_block.19} parent=5 // pred_region
      %s205 = ssub.s32 %s13, 1
      // Predicated region
      $region13: #{cross_modal_block.19} parent=11 // pred_check
        %p206 = pneg %p60
      $region14: #{cross_modal_block.19} parent=11 // pred_check_branch
        %208 = sbr.rel (%p206) target = $region16
      $region15: #{cross_modal_block.19} parent=11 // pred_region
        _
      $region16: #{cross_modal_block.19} parent=11 // pred_fallthru
        _
      // Predicated region
      $region17: #{cross_modal_block.19} parent=11 // pred_check
        %p209 = pneg %p81
      $region18: #{cross_modal_block.19} parent=11 // pred_check_branch
        %211 = sbr.rel (%p209) target = $region20
      $region19: #{cross_modal_block.19} parent=11 // pred_region
        _
      $region20: #{cross_modal_block.19} parent=11 // pred_fallthru
        _
      // Predicated region
      $region21: #{cross_modal_block.19} parent=11 // pred_check
        %p212 = pneg %p102
      $region22: #{cross_modal_block.19} parent=11 // pred_check_branch
        %214 = sbr.rel (%p212) target = $region24
      $region23: #{cross_modal_block.19} parent=11 // pred_region
        _
      $region24: #{cross_modal_block.19} parent=11 // pred_fallthru
        _
      // Predicated region
      $region25: #{cross_modal_block.19} parent=11 // pred_check
        %p215 = pneg %p123
      $region26: #{cross_modal_block.19} parent=11 // pred_check_branch
        %217 = sbr.rel (%p215) target = $region28
      $region27: #{cross_modal_block.19} parent=11 // pred_region
        _
      $region28: #{cross_modal_block.19} parent=11 // pred_fallthru
        _
      // Predicated region
      $region29: #{cross_modal_block.19} parent=11 // pred_check
        %p218 = pneg %p144
      $region30: #{cross_modal_block.19} parent=11 // pred_check_branch
        %220 = sbr.rel (%p218) target = $region32
      $region31: #{cross_modal_block.19} parent=11 // pred_region
        _
      $region32: #{cross_modal_block.19} parent=11 // pred_fallthru
        _
      // Predicated region
      $region33: #{cross_modal_block.19} parent=11 // pred_check
        %p221 = pneg %p165
      $region34: #{cross_modal_block.19} parent=11 // pred_check_branch
        %223 = sbr.rel (%p221) target = $region36
      $region35: #{cross_modal_block.19} parent=11 // pred_region
        _
      $region36: #{cross_modal_block.19} parent=11 // pred_fallthru
        _
    $region12: #{cross_modal_block.19} parent=5 // pred_fallthru
      _
    %p224 = scmp.lt.s32.totalorder %s13, 2
    // Predicated region
    $region37: #{cross_modal_block.19} parent=5 // pred_check
      %p225 = pneg %p224
    $region38: #{cross_modal_block.19} parent=5 // pred_check_branch
      %227 = sbr.rel (%p225) target = $region40
    $region39: #{cross_modal_block.19} parent=5 // pred_region
      // Predicated region
      $region41: #{cross_modal_block.19} parent=39 // pred_check
        %p228 = pneg %p33
      $region42: #{cross_modal_block.19} parent=39 // pred_check_branch
        %230 = sbr.rel (%p228) target = $region44
      $region43: #{cross_modal_block.19} parent=39 // pred_region
        %p231 = scmp.lt.s32.totalorder %s13, 1
        %s232 = scalar_select %p231, %s13, 1
        %s233 = smul.addr %s232, 8
        %s234 = scalar_lea.vmem %s0, %s233
      $region44: #{cross_modal_block.19} parent=39 // pred_fallthru
        _
    $region40: #{cross_modal_block.19} parent=5 // pred_fallthru
      _
    %p235 = scmp.le.s32.totalorder 1, %s13
    %p236 = scmp.lt.s32.totalorder %s13, 3
    %p237 = pnand %p235, %p236
    %p238 = pneg %p237
    // Predicated region
    $region45: #{cross_modal_block.19} parent=5 // pred_check
      _
    $region46: #{cross_modal_block.19} parent=5 // pred_check_branch
      %240 = sbr.rel (%p237) target = $region48
    $region47: #{cross_modal_block.19} parent=5 // pred_region
      %s241 = ssub.s32 %s13, 1
      %p242 = scmp.lt.s32.totalorder %s18, 1
      %s243 = scalar_select %p242, %s18, 1
      %s244 = smul.addr %s243, 8
      %s245 = scalar_lea.vmem %s0, %s244
      %p246 = pneg %p39
      %p247 = pneg %p36
      %p248 = pneg %p60
      %p249 = pneg %p57
      %p250 = pneg %p81
      %p251 = pneg %p78
      %p252 = pneg %p102
      %p253 = pneg %p99
      %p254 = pneg %p123
      %p255 = pneg %p120
      %p256 = pneg %p144
      %p257 = pneg %p141
      %p258 = pneg %p165
      %p259 = pneg %p162
      %p260 = pneg %p191
      %p261 = pneg %p188
      %p262 = scmp.lt.s32.totalorder %s18, 1
      %s263 = scalar_select %p262, %s18, 1
      %s264 = smul.addr %s263, 8
      %s265 = scalar_lea.vmem %s7, %s264
      %p266 = scmp.lt.s32.totalorder %s18, 1
      %s267 = scalar_select %p266, %s18, 1
      %s268 = smul.addr %s267, 8
      %s269 = scalar_lea.vmem %s0, %s268
      %p270 = scmp.lt.s32.totalorder %s18, 1
      %s271 = scalar_select %p270, %s18, 1
      %s272 = smul.addr %s271, 8
      %s273 = scalar_lea.vmem %s7, %s272
      %v275 = vld [vmem:[%s269] sm:$0xff]
      %v276 = vld [vmem:[%s1] sm:$0x1]
      %v277 = vld [vmem:[%s2] sm:$0x1]
      %vm278 = vcmask 261120
      %v279 = vsel %vm278, %v275, 0.0
      %280 = vadd.xlane.f32.xlu0 %v279
      %v281 = vpop.xlane.xlu0 %280
      %v282 = vrcp.pop 32.0
      %v283 = vmul.f32 %v281, %v282
      %v284 = vsub.f32 %v275, %v283
      %v285 = vmul.f32 %v284, %v284
      %v286 = vsel %vm278, %v285, 0.0
      %287 = vadd.xlane.f32.xlu0 %v286
      %v288 = vpop.xlane.xlu0 %287
      %v289 = vmul.f32 %v288, %v282
      %v290 = vadd.f32 %v289, 1e-05
      %v291 = vrsqrt.pop %v290
      %v292 = vmul.f32 %v284, %v291
      %v294 = vlaneseq
      %v295 = vshrl.u32 %v294, 7
      %v296 = vsub.s32 0, %v295
      %v297 = vrot.slane %v276, %v296
      %v299 = vmul.f32 %v292, %v297
      %v301 = vlaneseq
      %v302 = vshrl.u32 %v301, 7
      %v303 = vsub.s32 0, %v302
      %v304 = vrot.slane %v277, %v303
      %v306 = vadd.f32 %v299, %v304
      %v307 = vpack.c.bf16 %v306, %v306
      %v308 = vld [vmem:[%s3] sm:$0xf]
      %v309 = vld [vmem:[%s3 + $0x4] sm:$0xf]
      %v310 = vld [vmem:[%s3 + $0x8] sm:$0xf]
      %v311 = vld [vmem:[%s3 + $0xc] sm:$0xf]
      %v312 = vld [vmem:[%s4] sm:$0x1]
      %v314 = vlaneseq
      %v315 = vshrl.u32 %v314, 7
      %v316 = vsub.s32 0, %v315
      %v317 = vrot.slane %v312, %v316
      %v323 = vunpack.c.l.b16 %v308
      %v324 = vunpack.c.l.b16 %v309
      %v325 = vunpack.c.l.b16 %v310
      %v326 = vunpack.c.l.b16 %v311
      %v327 = vpack.c.b16 %v324, %v323
      %v328 = vpack.c.b16 %v326, %v325
      %v332 = vsel %vm278, %v307, 0
      %334 = vmatprep.subr.bf16.mxu0 0
      %335 = vmatpush1.bf16.msra.mxu0 0
      %336 = vmatprep.subr.bf16.mxu0 0
      %337 = vmatpush1.bf16.msra.mxu0 0
      %338 = vmatprep.subr.bf16.mxu0 0
      %339 = vmatpush1.bf16.msra.mxu0 0
      %340 = vmatprep.subr.bf16.mxu0 0
      %341 = vmatpush1.bf16.msra.mxu0 0
      %342 = vmatprep.subr.bf16.mxu0 0
      %343 = vmatpush1.bf16.msra.mxu0 0
      %344 = vmatprep.subr.bf16.mxu0 0
      %345 = vmatpush1.bf16.msra.mxu0 0
      %346 = vmatprep.subr.bf16.mxu0 0
      %347 = vmatpush1.bf16.msra.mxu0 %v328
      %348 = vmatprep.subr.bf16.mxu0 0
      %349 = vmatpush1.bf16.msra.mxu0 %v327
      %350 = vmatprep.subr.bf16.mxu0 0
      %351 = vmatpush2.bf16.msra.mxu0 0
      %352 = vmatprep.subr.bf16.mxu0 0
      %353 = vmatpush2.bf16.msra.mxu0 0
      %354 = vmatprep.subr.bf16.mxu0 0
      %355 = vmatpush2.bf16.msra.mxu0 0
      %356 = vmatprep.subr.bf16.mxu0 0
      %357 = vmatpush2.bf16.msra.mxu0 0
      %358 = vmatprep.subr.bf16.mxu0 0
      %359 = vmatpush2.bf16.msra.mxu0 0
      %360 = vmatprep.subr.bf16.mxu0 0
      %361 = vmatpush2.bf16.msra.mxu0 0
      %362 = vmatprep.subr.bf16.mxu0 0
      %363 = vmatpush2.bf16.msra.mxu0 0
      %364 = vmatprep.subr.bf16.mxu0 0
      %365 = vmatpush2.bf16.msra.mxu0 0
      %366 = vmatprep.mubr.bf16.mxu0 0
      %367 = vmatmul.mubr.bf16.gmra.mxu0 %v332
      %v368 = vpop.f32.mrf.mxu0
      %v369 = vadd.f32 %v317, %v368
      %v370 = vpop.f32.mrf.mxu0
      %v371 = vpop.f32.mrf.mxu0
      %v372 = vpop.f32.mrf.mxu0
      %373 = vdwg.mxu0
      %v374 = vld [vmem:[%s5] sm:$0xf]
      %v375 = vld [vmem:[%s5 + $0x4] sm:$0xf]
      %v376 = vld [vmem:[%s5 + $0x8] sm:$0xf]
      %v377 = vld [vmem:[%s5 + $0xc] sm:$0xf]
      %v378 = vld [vmem:[%s6] sm:$0x1]
      %v379 = vmul.f32 %v369, 0.35355338
      %v380 = vpack.c.bf16 %v379, %v379
      %v381 = vpack.c.bf16 %v369, %v369
      %383 = vrot.lane.b32.xlu0 %v381, 96
      %v384 = vpop.permute.xlu0 %383
      %vm385 = vcmask 64512
      %v387 = vsel %vm385, %v380, 0
      %v390 = vsel %vm385, %v384, 0
      %392 = vmatprep.subr.bf16.mxu0 0
      %393 = vmatpush1.bf16.xpose.msra.mxu0 0
      %394 = vmatprep.subr.bf16.mxu0 0
      %395 = vmatpush1.bf16.xpose.msra.mxu0 0
      %396 = vmatprep.subr.bf16.mxu0 0
      %397 = vmatpush1.bf16.xpose.msra.mxu0 0
      %398 = vmatprep.subr.bf16.mxu0 0
      %399 = vmatpush1.bf16.xpose.msra.mxu0 0
      %400 = vmatprep.subr.bf16.mxu0 0
      %401 = vmatpush1.bf16.xpose.msra.mxu0 0
      %402 = vmatprep.subr.bf16.mxu0 0
      %403 = vmatpush1.bf16.xpose.msra.mxu0 0
      %404 = vmatprep.subr.bf16.mxu0 0
      %405 = vmatpush1.bf16.xpose.msra.mxu0 0
      %406 = vmatprep.subr.bf16.mxu0 0
      %407 = vmatpush1.bf16.xpose.msra.mxu0 %v390
      %408 = vmatprep.subr.bf16.mxu0 0
      %409 = vmatpush2.bf16.xpose.msra.mxu0 0
      %410 = vmatprep.subr.bf16.mxu0 0
      %411 = vmatpush2.bf16.xpose.msra.mxu0 0
      %412 = vmatprep.subr.bf16.mxu0 0
      %413 = vmatpush2.bf16.xpose.msra.mxu0 0
      %414 = vmatprep.subr.bf16.mxu0 0
      %415 = vmatpush2.bf16.xpose.msra.mxu0 0
      %416 = vmatprep.subr.bf16.mxu0 0
      %417 = vmatpush2.bf16.xpose.msra.mxu0 0
      %418 = vmatprep.subr.bf16.mxu0 0
      %419 = vmatpush2.bf16.xpose.msra.mxu0 0
      %420 = vmatprep.subr.bf16.mxu0 0
      %421 = vmatpush2.bf16.xpose.msra.mxu0 0
      %422 = vmatprep.subr.bf16.mxu0 0
      %423 = vmatpush2.bf16.xpose.msra.mxu0 0
      %424 = vmatprep.mubr.bf16.mxu0 0
      %425 = vmatmul.mubr.bf16.gmra.mxu0 %v387
      %v426 = vpop.f32.mrf.mxu0
      %v427 = vadd.f32 0.0, %v426
      %v428 = vpop.f32.mrf.mxu0
      %v429 = vpop.f32.mrf.mxu0
      %v430 = vpop.f32.mrf.mxu0
      %431 = vdwg.mxu0
      %v432 = vsel %vm385, %v427, -inf
      %433 = vmax.xlane.f32.xlu0 %v432
      %v434 = vpop.xlane.xlu0 %433
      %v435 = vsub.f32 %v427, %v434
      %v436 = vmul.f32 %v435, 1.442695
      %v437 = vpow.pop %v436
      %v438 = vsel %vm385, %v437, 0.0
      %439 = vadd.xlane.f32.xlu0 %v438
      %v440 = vpop.xlane.xlu0 %439
      %v441 = vpack.c.bf16 %v437, %v437
      %442 = vrot.lane.b32.xlu0 %v381, 64
      %v443 = vpop.permute.xlu0 %442
      %v445 = vsel %vm385, %v441, 0
      %vm447 = vcmask 1043456
      %v449 = vsel %vm447, %v443, 0
      %451 = vmatprep.subr.bf16.mxu0 0
      %452 = vmatpush1.bf16.msra.mxu0 0
      %453 = vmatprep.subr.bf16.mxu0 0
      %454 = vmatpush1.bf16.msra.mxu0 0
      %455 = vmatprep.subr.bf16.mxu0 0
      %456 = vmatpush1.bf16.msra.mxu0 0
      %457 = vmatprep.subr.bf16.mxu0 0
      %458 = vmatpush1.bf16.msra.mxu0 0
      %459 = vmatprep.subr.bf16.mxu0 0
      %460 = vmatpush1.bf16.msra.mxu0 0
      %461 = vmatprep.subr.bf16.mxu0 0
      %462 = vmatpush1.bf16.msra.mxu0 0
      %463 = vmatprep.subr.bf16.mxu0 0
      %464 = vmatpush1.bf16.msra.mxu0 0
      %465 = vmatprep.subr.bf16.mxu0 0
      %466 = vmatpush1.bf16.msra.mxu0 %v449
      %467 = vmatprep.subr.bf16.mxu0 0
      %468 = vmatpush2.bf16.msra.mxu0 0
      %469 = vmatprep.subr.bf16.mxu0 0
      %470 = vmatpush2.bf16.msra.mxu0 0
      %471 = vmatprep.subr.bf16.mxu0 0
      %472 = vmatpush2.bf16.msra.mxu0 0
      %473 = vmatprep.subr.bf16.mxu0 0
      %474 = vmatpush2.bf16.msra.mxu0 0
      %475 = vmatprep.subr.bf16.mxu0 0
      %476 = vmatpush2.bf16.msra.mxu0 0
      %477 = vmatprep.subr.bf16.mxu0 0
      %478 = vmatpush2.bf16.msra.mxu0 0
      %479 = vmatprep.subr.bf16.mxu0 0
      %480 = vmatpush2.bf16.msra.mxu0 0
      %481 = vmatprep.subr.bf16.mxu0 0
      %482 = vmatpush2.bf16.msra.mxu0 0
      %483 = vmatprep.mubr.bf16.mxu0 0
      %484 = vmatmul.mubr.bf16.gmra.mxu0 %v445
      %v485 = vpop.f32.mrf.mxu0
      %v486 = vadd.f32 0.0, %v485
      %v487 = vpop.f32.mrf.mxu0
      %v488 = vpop.f32.mrf.mxu0
      %v489 = vpop.f32.mrf.mxu0
      %490 = vdwg.mxu0
      %v491 = vrcp.pop %v440
      %v492 = vmul.f32 %v486, %v491
      %494 = vrot.lane.b32.xlu0 %v380, 120
      %v495 = vpop.permute.xlu0 %494
      %496 = vrot.lane.b32.xlu0 %v381, 88
      %v497 = vpop.permute.xlu0 %496
      %v499 = vsel %vm385, %v495, 0
      %v502 = vsel %vm385, %v497, 0
      %504 = vmatprep.subr.bf16.mxu0 0
      %505 = vmatpush1.bf16.xpose.msra.mxu0 0
      %506 = vmatprep.subr.bf16.mxu0 0
      %507 = vmatpush1.bf16.xpose.msra.mxu0 0
      %508 = vmatprep.subr.bf16.mxu0 0
      %509 = vmatpush1.bf16.xpose.msra.mxu0 0
      %510 = vmatprep.subr.bf16.mxu0 0
      %511 = vmatpush1.bf16.xpose.msra.mxu0 0
      %512 = vmatprep.subr.bf16.mxu0 0
      %513 = vmatpush1.bf16.xpose.msra.mxu0 0
      %514 = vmatprep.subr.bf16.mxu0 0
      %515 = vmatpush1.bf16.xpose.msra.mxu0 0
      %516 = vmatprep.subr.bf16.mxu0 0
      %517 = vmatpush1.bf16.xpose.msra.mxu0 0
      %518 = vmatprep.subr.bf16.mxu0 0
      %519 = vmatpush1.bf16.xpose.msra.mxu0 %v502
      %520 = vmatprep.subr.bf16.mxu0 0
      %521 = vmatpush2.bf16.xpose.msra.mxu0 0
      %522 = vmatprep.subr.bf16.mxu0 0
      %523 = vmatpush2.bf16.xpose.msra.mxu0 0
      %524 = vmatprep.subr.bf16.mxu0 0
      %525 = vmatpush2.bf16.xpose.msra.mxu0 0
      %526 = vmatprep.subr.bf16.mxu0 0
      %527 = vmatpush2.bf16.xpose.msra.mxu0 0
      %528 = vmatprep.subr.bf16.mxu0 0
      %529 = vmatpush2.bf16.xpose.msra.mxu0 0
      %530 = vmatprep.subr.bf16.mxu0 0
      %531 = vmatpush2.bf16.xpose.msra.mxu0 0
      %532 = vmatprep.subr.bf16.mxu0 0
      %533 = vmatpush2.bf16.xpose.msra.mxu0 0
      %534 = vmatprep.subr.bf16.mxu0 0
      %535 = vmatpush2.bf16.xpose.msra.mxu0 0
      %536 = vmatprep.mubr.bf16.mxu0 0
      %537 = vmatmul.mubr.bf16.gmra.mxu0 %v499
      %v538 = vpop.f32.mrf.mxu0
      %v539 = vadd.f32 0.0, %v538
      %v540 = vpop.f32.mrf.mxu0
      %v541 = vpop.f32.mrf.mxu0
      %v542 = vpop.f32.mrf.mxu0
      %543 = vdwg.mxu0
      %v544 = vsel %vm385, %v539, -inf
      %545 = vmax.xlane.f32.xlu0 %v544
      %v546 = vpop.xlane.xlu0 %545
      %v547 = vsub.f32 %v539, %v546
      %v548 = vmul.f32 %v547, 1.442695
      %v549 = vpow.pop %v548
      %v550 = vsel %vm385, %v549, 0.0
      %551 = vadd.xlane.f32.xlu0 %v550
      %v552 = vpop.xlane.xlu0 %551
      %v553 = vpack.c.bf16 %v549, %v549
      %554 = vrot.lane.b32.xlu0 %v381, 56
      %v555 = vpop.permute.xlu0 %554
      %v557 = vsel %vm385, %v553, 0
      %v560 = vsel %vm447, %v555, 0
      %562 = vmatprep.subr.bf16.mxu0 0
      %563 = vmatpush1.bf16.msra.mxu0 0
      %564 = vmatprep.subr.bf16.mxu0 0
      %565 = vmatpush1.bf16.msra.mxu0 0
      %566 = vmatprep.subr.bf16.mxu0 0
      %567 = vmatpush1.bf16.msra.mxu0 0
      %568 = vmatprep.subr.bf16.mxu0 0
      %569 = vmatpush1.bf16.msra.mxu0 0
      %570 = vmatprep.subr.bf16.mxu0 0
      %571 = vmatpush1.bf16.msra.mxu0 0
      %572 = vmatprep.subr.bf16.mxu0 0
      %573 = vmatpush1.bf16.msra.mxu0 0
      %574 = vmatprep.subr.bf16.mxu0 0
      %575 = vmatpush1.bf16.msra.mxu0 0
      %576 = vmatprep.subr.bf16.mxu0 0
      %577 = vmatpush1.bf16.msra.mxu0 %v560
      %578 = vmatprep.subr.bf16.mxu0 0
      %579 = vmatpush2.bf16.msra.mxu0 0
      %580 = vmatprep.subr.bf16.mxu0 0
      %581 = vmatpush2.bf16.msra.mxu0 0
      %582 = vmatprep.subr.bf16.mxu0 0
      %583 = vmatpush2.bf16.msra.mxu0 0
      %584 = vmatprep.subr.bf16.mxu0 0
      %585 = vmatpush2.bf16.msra.mxu0 0
      %586 = vmatprep.subr.bf16.mxu0 0
      %587 = vmatpush2.bf16.msra.mxu0 0
      %588 = vmatprep.subr.bf16.mxu0 0
      %589 = vmatpush2.bf16.msra.mxu0 0
      %590 = vmatprep.subr.bf16.mxu0 0
      %591 = vmatpush2.bf16.msra.mxu0 0
      %592 = vmatprep.subr.bf16.mxu0 0
      %593 = vmatpush2.bf16.msra.mxu0 0
      %594 = vmatprep.mubr.bf16.mxu0 0
      %595 = vmatmul.mubr.bf16.gmra.mxu0 %v557
      %v596 = vpop.f32.mrf.mxu0
      %v597 = vadd.f32 0.0, %v596
      %v598 = vpop.f32.mrf.mxu0
      %v599 = vpop.f32.mrf.mxu0
      %v600 = vpop.f32.mrf.mxu0
      %601 = vdwg.mxu0
      %v602 = vrcp.pop %v552
      %v603 = vmul.f32 %v597, %v602
      %604 = vrot.lane.b32.xlu0 %v380, 112
      %v605 = vpop.permute.xlu0 %604
      %606 = vrot.lane.b32.xlu0 %v381, 80
      %v607 = vpop.permute.xlu0 %606
      %v609 = vsel %vm385, %v605, 0
      %v612 = vsel %vm385, %v607, 0
      %614 = vmatprep.subr.bf16.mxu0 0
      %615 = vmatpush1.bf16.xpose.msra.mxu0 0
      %616 = vmatprep.subr.bf16.mxu0 0
      %617 = vmatpush1.bf16.xpose.msra.mxu0 0
      %618 = vmatprep.subr.bf16.mxu0 0
      %619 = vmatpush1.bf16.xpose.msra.mxu0 0
      %620 = vmatprep.subr.bf16.mxu0 0
      %621 = vmatpush1.bf16.xpose.msra.mxu0 0
      %622 = vmatprep.subr.bf16.mxu0 0
      %623 = vmatpush1.bf16.xpose.msra.mxu0 0
      %624 = vmatprep.subr.bf16.mxu0 0
      %625 = vmatpush1.bf16.xpose.msra.mxu0 0
      %626 = vmatprep.subr.bf16.mxu0 0
      %627 = vmatpush1.bf16.xpose.msra.mxu0 0
      %628 = vmatprep.subr.bf16.mxu0 0
      %629 = vmatpush1.bf16.xpose.msra.mxu0 %v612
      %630 = vmatprep.subr.bf16.mxu0 0
      %631 = vmatpush2.bf16.xpose.msra.mxu0 0
      %632 = vmatprep.subr.bf16.mxu0 0
      %633 = vmatpush2.bf16.xpose.msra.mxu0 0
      %634 = vmatprep.subr.bf16.mxu0 0
      %635 = vmatpush2.bf16.xpose.msra.mxu0 0
      %636 = vmatprep.subr.bf16.mxu0 0
      %637 = vmatpush2.bf16.xpose.msra.mxu0 0
      %638 = vmatprep.subr.bf16.mxu0 0
      %639 = vmatpush2.bf16.xpose.msra.mxu0 0
      %640 = vmatprep.subr.bf16.mxu0 0
      %641 = vmatpush2.bf16.xpose.msra.mxu0 0
      %642 = vmatprep.subr.bf16.mxu0 0
      %643 = vmatpush2.bf16.xpose.msra.mxu0 0
      %644 = vmatprep.subr.bf16.mxu0 0
      %645 = vmatpush2.bf16.xpose.msra.mxu0 0
      %646 = vmatprep.mubr.bf16.mxu0 0
      %647 = vmatmul.mubr.bf16.gmra.mxu0 %v609
      %v648 = vpop.f32.mrf.mxu0
      %v649 = vadd.f32 0.0, %v648
      %v650 = vpop.f32.mrf.mxu0
      %v651 = vpop.f32.mrf.mxu0
      %v652 = vpop.f32.mrf.mxu0
      %653 = vdwg.mxu0
      %v654 = vsel %vm385, %v649, -inf
      %655 = vmax.xlane.f32.xlu0 %v654
      %v656 = vpop.xlane.xlu0 %655
      %v657 = vsub.f32 %v649, %v656
      %v658 = vmul.f32 %v657, 1.442695
      %v659 = vpow.pop %v658
      %v660 = vsel %vm385, %v659, 0.0
      %661 = vadd.xlane.f32.xlu0 %v660
      %v662 = vpop.xlane.xlu0 %661
      %v663 = vpack.c.bf16 %v659, %v659
      %664 = vrot.lane.b32.xlu0 %v381, 48
      %v665 = vpop.permute.xlu0 %664
      %v667 = vsel %vm385, %v663, 0
      %v670 = vsel %vm447, %v665, 0
      %672 = vmatprep.subr.bf16.mxu0 0
      %673 = vmatpush1.bf16.msra.mxu0 0
      %674 = vmatprep.subr.bf16.mxu0 0
      %675 = vmatpush1.bf16.msra.mxu0 0
      %676 = vmatprep.subr.bf16.mxu0 0
      %677 = vmatpush1.bf16.msra.mxu0 0
      %678 = vmatprep.subr.bf16.mxu0 0
      %679 = vmatpush1.bf16.msra.mxu0 0
      %680 = vmatprep.subr.bf16.mxu0 0
      %681 = vmatpush1.bf16.msra.mxu0 0
      %682 = vmatprep.subr.bf16.mxu0 0
      %683 = vmatpush1.bf16.msra.mxu0 0
      %684 = vmatprep.subr.bf16.mxu0 0
      %685 = vmatpush1.bf16.msra.mxu0 0
      %686 = vmatprep.subr.bf16.mxu0 0
      %687 = vmatpush1.bf16.msra.mxu0 %v670
      %688 = vmatprep.subr.bf16.mxu0 0
      %689 = vmatpush2.bf16.msra.mxu0 0
      %690 = vmatprep.subr.bf16.mxu0 0
      %691 = vmatpush2.bf16.msra.mxu0 0
      %692 = vmatprep.subr.bf16.mxu0 0
      %693 = vmatpush2.bf16.msra.mxu0 0
      %694 = vmatprep.subr.bf16.mxu0 0
      %695 = vmatpush2.bf16.msra.mxu0 0
      %696 = vmatprep.subr.bf16.mxu0 0
      %697 = vmatpush2.bf16.msra.mxu0 0
      %698 = vmatprep.subr.bf16.mxu0 0
      %699 = vmatpush2.bf16.msra.mxu0 0
      %700 = vmatprep.subr.bf16.mxu0 0
      %701 = vmatpush2.bf16.msra.mxu0 0
      %702 = vmatprep.subr.bf16.mxu0 0
      %703 = vmatpush2.bf16.msra.mxu0 0
      %704 = vmatprep.mubr.bf16.mxu0 0
      %705 = vmatmul.mubr.bf16.gmra.mxu0 %v667
      %v706 = vpop.f32.mrf.mxu0
      %v707 = vadd.f32 0.0, %v706
      %v708 = vpop.f32.mrf.mxu0
      %v709 = vpop.f32.mrf.mxu0
      %v710 = vpop.f32.mrf.mxu0
      %711 = vdwg.mxu0
      %v712 = vrcp.pop %v662
      %v713 = vmul.f32 %v707, %v712
      %714 = vrot.lane.b32.xlu0 %v380, 104
      %v715 = vpop.permute.xlu0 %714
      %716 = vrot.lane.b32.xlu0 %v381, 72
      %v717 = vpop.permute.xlu0 %716
      %v719 = vsel %vm385, %v715, 0
      %v722 = vsel %vm385, %v717, 0
      %724 = vmatprep.subr.bf16.mxu0 0
      %725 = vmatpush1.bf16.xpose.msra.mxu0 0
      %726 = vmatprep.subr.bf16.mxu0 0
      %727 = vmatpush1.bf16.xpose.msra.mxu0 0
      %728 = vmatprep.subr.bf16.mxu0 0
      %729 = vmatpush1.bf16.xpose.msra.mxu0 0
      %730 = vmatprep.subr.bf16.mxu0 0
      %731 = vmatpush1.bf16.xpose.msra.mxu0 0
      %732 = vmatprep.subr.bf16.mxu0 0
      %733 = vmatpush1.bf16.xpose.msra.mxu0 0
      %734 = vmatprep.subr.bf16.mxu0 0
      %735 = vmatpush1.bf16.xpose.msra.mxu0 0
      %736 = vmatprep.subr.bf16.mxu0 0
      %737 = vmatpush1.bf16.xpose.msra.mxu0 0
      %738 = vmatprep.subr.bf16.mxu0 0
      %739 = vmatpush1.bf16.xpose.msra.mxu0 %v722
      %740 = vmatprep.subr.bf16.mxu0 0
      %741 = vmatpush2.bf16.xpose.msra.mxu0 0
      %742 = vmatprep.subr.bf16.mxu0 0
      %743 = vmatpush2.bf16.xpose.msra.mxu0 0
      %744 = vmatprep.subr.bf16.mxu0 0
      %745 = vmatpush2.bf16.xpose.msra.mxu0 0
      %746 = vmatprep.subr.bf16.mxu0 0
      %747 = vmatpush2.bf16.xpose.msra.mxu0 0
      %748 = vmatprep.subr.bf16.mxu0 0
      %749 = vmatpush2.bf16.xpose.msra.mxu0 0
      %750 = vmatprep.subr.bf16.mxu0 0
      %751 = vmatpush2.bf16.xpose.msra.mxu0 0
      %752 = vmatprep.subr.bf16.mxu0 0
      %753 = vmatpush2.bf16.xpose.msra.mxu0 0
      %754 = vmatprep.subr.bf16.mxu0 0
      %755 = vmatpush2.bf16.xpose.msra.mxu0 0
      %756 = vmatprep.mubr.bf16.mxu0 0
      %757 = vmatmul.mubr.bf16.gmra.mxu0 %v719
      %v758 = vpop.f32.mrf.mxu0
      %v759 = vadd.f32 0.0, %v758
      %v760 = vpop.f32.mrf.mxu0
      %v761 = vpop.f32.mrf.mxu0
      %v762 = vpop.f32.mrf.mxu0
      %763 = vdwg.mxu0
      %v764 = vsel %vm385, %v759, -inf
      %765 = vmax.xlane.f32.xlu0 %v764
      %v766 = vpop.xlane.xlu0 %765
      %v767 = vsub.f32 %v759, %v766
      %v768 = vmul.f32 %v767, 1.442695
      %v769 = vpow.pop %v768
      %v770 = vsel %vm385, %v769, 0.0
      %771 = vadd.xlane.f32.xlu0 %v770
      %v772 = vpop.xlane.xlu0 %771
      %v773 = vpack.c.bf16 %v769, %v769
      %774 = vrot.lane.b32.xlu0 %v381, 40
      %v775 = vpop.permute.xlu0 %774
      %v777 = vsel %vm385, %v773, 0
      %v780 = vsel %vm447, %v775, 0
      %782 = vmatprep.subr.bf16.mxu0 0
      %783 = vmatpush1.bf16.msra.mxu0 0
      %784 = vmatprep.subr.bf16.mxu0 0
      %785 = vmatpush1.bf16.msra.mxu0 0
      %786 = vmatprep.subr.bf16.mxu0 0
      %787 = vmatpush1.bf16.msra.mxu0 0
      %788 = vmatprep.subr.bf16.mxu0 0
      %789 = vmatpush1.bf16.msra.mxu0 0
      %790 = vmatprep.subr.bf16.mxu0 0
      %791 = vmatpush1.bf16.msra.mxu0 0
      %792 = vmatprep.subr.bf16.mxu0 0
      %793 = vmatpush1.bf16.msra.mxu0 0
      %794 = vmatprep.subr.bf16.mxu0 0
      %795 = vmatpush1.bf16.msra.mxu0 0
      %796 = vmatprep.subr.bf16.mxu0 0
      %797 = vmatpush1.bf16.msra.mxu0 %v780
      %798 = vmatprep.subr.bf16.mxu0 0
      %799 = vmatpush2.bf16.msra.mxu0 0
      %800 = vmatprep.subr.bf16.mxu0 0
      %801 = vmatpush2.bf16.msra.mxu0 0
      %802 = vmatprep.subr.bf16.mxu0 0
      %803 = vmatpush2.bf16.msra.mxu0 0
      %804 = vmatprep.subr.bf16.mxu0 0
      %805 = vmatpush2.bf16.msra.mxu0 0
      %806 = vmatprep.subr.bf16.mxu0 0
      %807 = vmatpush2.bf16.msra.mxu0 0
      %808 = vmatprep.subr.bf16.mxu0 0
      %809 = vmatpush2.bf16.msra.mxu0 0
      %810 = vmatprep.subr.bf16.mxu0 0
      %811 = vmatpush2.bf16.msra.mxu0 0
      %812 = vmatprep.subr.bf16.mxu0 0
      %813 = vmatpush2.bf16.msra.mxu0 0
      %814 = vmatprep.mubr.bf16.mxu0 0
      %815 = vmatmul.mubr.bf16.gmra.mxu0 %v777
      %v816 = vpop.f32.mrf.mxu0
      %v817 = vadd.f32 0.0, %v816
      %v818 = vpop.f32.mrf.mxu0
      %v819 = vpop.f32.mrf.mxu0
      %v820 = vpop.f32.mrf.mxu0
      %821 = vdwg.mxu0
      %v822 = vrcp.pop %v772
      %v823 = vmul.f32 %v817, %v822
      %825 = vrot.lane.b32.xlu0 %v603, 8
      %v826 = vpop.permute.xlu0 %825
      %829 = vrot.lane.b32.xlu0 %v713, 16
      %v830 = vpop.permute.xlu0 %829
      %833 = vrot.lane.b32.xlu0 %v823, 24
      %v834 = vpop.permute.xlu0 %833
      %v836 = vsel %vm385, %v492, %v826
      %vm837 = vcmask 130048
      %v838 = vsel %vm837, %v836, %v830
      %vm839 = vcmask 195584
      %v840 = vsel %vm839, %v838, %v834
      %v841 = vpack.c.bf16 %v840, %v840
      %v843 = vlaneseq
      %v844 = vshrl.u32 %v843, 7
      %v845 = vsub.s32 0, %v844
      %v846 = vrot.slane %v378, %v845
      %v852 = vunpack.c.l.b16 %v374
      %v853 = vunpack.c.l.b16 %v375
      %v854 = vunpack.c.l.b16 %v376
      %v855 = vunpack.c.l.b16 %v377
      %v856 = vpack.c.b16 %v853, %v852
      %v857 = vpack.c.b16 %v855, %v854
      %v861 = vsel %vm278, %v841, 0
      %863 = vmatprep.subr.bf16.mxu0 0
      %864 = vmatpush1.bf16.msra.mxu0 0
      %865 = vmatprep.subr.bf16.mxu0 0
      %866 = vmatpush1.bf16.msra.mxu0 0
      %867 = vmatprep.subr.bf16.mxu0 0
      %868 = vmatpush1.bf16.msra.mxu0 0
      %869 = vmatprep.subr.bf16.mxu0 0
      %870 = vmatpush1.bf16.msra.mxu0 0
      %871 = vmatprep.subr.bf16.mxu0 0
      %872 = vmatpush1.bf16.msra.mxu0 0
      %873 = vmatprep.subr.bf16.mxu0 0
      %874 = vmatpush1.bf16.msra.mxu0 0
      %875 = vmatprep.subr.bf16.mxu0 0
      %876 = vmatpush1.bf16.msra.mxu0 %v857
      %877 = vmatprep.subr.bf16.mxu0 0
      %878 = vmatpush1.bf16.msra.mxu0 %v856
      %879 = vmatprep.subr.bf16.mxu0 0
      %880 = vmatpush2.bf16.msra.mxu0 0
      %881 = vmatprep.subr.bf16.mxu0 0
      %882 = vmatpush2.bf16.msra.mxu0 0
      %883 = vmatprep.subr.bf16.mxu0 0
      %884 = vmatpush2.bf16.msra.mxu0 0
      %885 = vmatprep.subr.bf16.mxu0 0
      %886 = vmatpush2.bf16.msra.mxu0 0
      %887 = vmatprep.subr.bf16.mxu0 0
      %888 = vmatpush2.bf16.msra.mxu0 0
      %889 = vmatprep.subr.bf16.mxu0 0
      %890 = vmatpush2.bf16.msra.mxu0 0
      %891 = vmatprep.subr.bf16.mxu0 0
      %892 = vmatpush2.bf16.msra.mxu0 0
      %893 = vmatprep.subr.bf16.mxu0 0
      %894 = vmatpush2.bf16.msra.mxu0 0
      %895 = vmatprep.mubr.bf16.mxu0 0
      %896 = vmatmul.mubr.bf16.gmra.mxu0 %v861
      %v897 = vpop.f32.mrf.mxu0
      %v898 = vadd.f32 %v846, %v897
      %v899 = vpop.f32.mrf.mxu0
      %v900 = vpop.f32.mrf.mxu0
      %v901 = vpop.f32.mrf.mxu0
      %902 = vdwg.mxu0
      %v903 = vadd.f32 %v275, %v898
      %904 = vst.msk [vmem:[%s273] sm:$0xff] %vm278, %v903
      %p905 = scmp.lt.s32.totalorder %s18, 1
      %s906 = scalar_select %p905, %s18, 1
      %s907 = smul.addr %s906, 8
      %s908 = scalar_lea.vmem %s7, %s907
      // Predicated region
      $region49: #{cross_modal_block.19} parent=47 // pred_check
        %p909 = pneg %p188
      $region50: #{cross_modal_block.19} parent=47 // pred_check_branch
        %911 = sbr.rel (%p909) target = $region52
      $region51: #{cross_modal_block.19} parent=47 // pred_region
        _
      $region52: #{cross_modal_block.19} parent=47 // pred_fallthru
        _
    $region48: #{cross_modal_block.19} parent=5 // pred_fallthru
      _
    %p912 = scmp.le.s32.totalorder 2, %s13
    // Predicated region
    $region53: #{cross_modal_block.19} parent=5 // pred_check
      %p913 = pneg %p912
    $region54: #{cross_modal_block.19} parent=5 // pred_check_branch
      %915 = sbr.rel (%p913) target = $region56
    $region55: #{cross_modal_block.19} parent=5 // pred_region
      %s916 = ssub.s32 %s13, 2
      // Predicated region
      $region57: #{cross_modal_block.19} parent=55 // pred_check
        %p917 = pneg %p194
      $region58: #{cross_modal_block.19} parent=55 // pred_check_branch
        %919 = sbr.rel (%p917) target = $region60
      $region59: #{cross_modal_block.19} parent=55 // pred_region
        %p920 = scmp.lt.s32.totalorder %s19, 1
        %s921 = scalar_select %p920, %s19, 1
        %s922 = smul.addr %s921, 8
        %s923 = scalar_lea.vmem %s7, %s922
      $region60: #{cross_modal_block.19} parent=55 // pred_fallthru
        _
    $region56: #{cross_modal_block.19} parent=5 // pred_fallthru
      _
  $region6: #{cross_modal_block.19} parent=0 // loop_footer
    %s17 = sadd.s32 1, %s13
  $region7: #{cross_modal_block.19} parent=0 // loop_footer_branch
    %12 = sbr.rel target = $region3
  $region8: #{cross_modal_block.19} parent=0 // loop_exit
    _

// kernel: cross_modal_block.17
$region0: #{cross_modal_block.17}
  #allocation0 [shape = 'u32[]', space=smem, size = 0x4, offset = 0x4, fixed_abs, tag = 'smem constant byte address 0x4 - core index']
  #allocation1 [shape = 'u32[144,128]{1,0:T(1,128)}', space=vmem, size = 0x12000, scoped, tag = 'internal scratch']
  %s0 = inlined_call_operand.vmem [shape: f32[2,16,32], index: 0, kind: input, shape index: {}]
  %s1 = inlined_call_operand.vmem [shape: f32[1,32], index: 1, kind: input, shape index: {}]
  %s2 = inlined_call_operand.vmem [shape: f32[1,32], index: 2, kind: input, shape index: {}]
  %s3 = inlined_call_operand.vmem [shape: bf16[32,96], index: 3, kind: input, shape index: {}]
  %s4 = inlined_call_operand.vmem [shape: f32[1,96], index: 4, kind: input, shape index: {}]
  %s5 = inlined_call_operand.vmem [shape: bf16[32,32], index: 5, kind: input, shape index: {}]
  %s6 = inlined_call_operand.vmem [shape: f32[1,32], index: 6, kind: input, shape index: {}]
  %s7 = inlined_call_operand.vmem [shape: f32[2,16,32], index: 7, kind: output, shape index: {}]
  %s8 = sld [smem:[#allocation0]]
  $region61: #{cross_modal_block.17} parent=0
    _
  %s10 = ssub.s32 1, %s8
  %s11 = scalar_select 0, %s10, %s8
  loop: start=0, step=1, limit=4
  $region2: #{cross_modal_block.17} parent=0 // loop_pre_header
    _
  $region3: #{cross_modal_block.17} parent=0 // loop_header
    %s13 = sphi 0, %s17
    %p14 = scmp.ge.s32.totalorder %s13, 4
    %s23 = sphi 0, %s25
    %s26 = sphi 0, %s23
    %s27 = sphi 0, %s26
    %s43 = sphi 0, %s27
    %s47 = sphi 0, %s47
    %s49 = sphi 0, %s47
    %s50 = sphi 0, %s49
    %s64 = sphi 0, %s50
    %s68 = sphi 0, %s68
    %s70 = sphi 0, %s68
    %s71 = sphi 0, %s70
    %s85 = sphi 0, %s71
    %s89 = sphi 0, %s89
    %s91 = sphi 0, %s89
    %s92 = sphi 0, %s91
    %s106 = sphi 0, %s92
    %s110 = sphi 0, %s110
    %s112 = sphi 0, %s110
    %s113 = sphi 0, %s112
    %s127 = sphi 0, %s113
    %s131 = sphi 0, %s131
    %s133 = sphi 0, %s131
    %s134 = sphi 0, %s133
    %s148 = sphi 0, %s134
    %s152 = sphi 0, %s152
    %s154 = sphi 0, %s152
    %s155 = sphi 0, %s154
    %s169 = sphi 0, %s155
    %s175 = sphi 0, %s177
    %s178 = sphi 0, %s175
    %s179 = sphi 0, %s178
    %s195 = sphi 0, %s179
  $region4: #{cross_modal_block.17} parent=0 // loop_header_branch
    %16 = sbr.rel (%p14) target = $region8
  $region5: #{cross_modal_block.17} parent=0 // loop_body
    %s18 = ssub.s32 %s13, 1
    %s19 = ssub.s32 %s13, 2
    %s20 = sadd.s32 %s13, 1
    %s21 = ssub.s32 %s13, %s20
    %p22 = scmp.eq.s32.totalorder %s21, 0
    %s24 = sadd.s32 %s23, 1
    %s25 = scalar_select %p22, %s23, %s24
    %p28 = pneg %p22
    %p29 = scmp.eq.s32.totalorder %s13, 1
    %p30 = por %p28, %p29
    %p31 = scmp.ne.s32.totalorder %s23, %s26
    %p32 = scmp.eq.s32.totalorder %s13, 0
    %p33 = por %p31, %p32
    %p34 = scmp.ne.s32.totalorder %s23, %s26
    %p35 = scmp.eq.s32.totalorder %s18, 1
    %p36 = por %p34, %p35
    %p37 = scmp.ne.s32.totalorder %s26, %s27
    %p38 = scmp.eq.s32.totalorder %s18, 0
    %p39 = por %p37, %p38
    %p40 = scmp.ne.s32.totalorder %s26, %s27
    %p41 = scmp.eq.s32.totalorder %s19, 1
    %p42 = por %p40, %p41
    %p44 = scmp.ne.s32.totalorder %s27, %s43
    %p45 = scmp.eq.s32.totalorder %s19, 0
    %p46 = por %p44, %p45
    %s48 = sadd.s32 %s47, 1
    %p51 = scmp.eq.s32.totalorder %s13, 1
    %p52 = scmp.ne.s32.totalorder %s47, %s49
    %p53 = scmp.eq.s32.totalorder %s13, 0
    %p54 = por %p52, %p53
    %p55 = scmp.ne.s32.totalorder %s47, %s49
    %p56 = scmp.eq.s32.totalorder %s18, 1
    %p57 = por %p55, %p56
    %p58 = scmp.ne.s32.totalorder %s49, %s50
    %p59 = scmp.eq.s32.totalorder %s18, 0
    %p60 = por %p58, %p59
    %p61 = scmp.ne.s32.totalorder %s49, %s50
    %p62 = scmp.eq.s32.totalorder %s19, 1
    %p63 = por %p61, %p62
    %p65 = scmp.ne.s32.totalorder %s50, %s64
    %p66 = scmp.eq.s32.totalorder %s19, 0
    %p67 = por %p65, %p66
    %s69 = sadd.s32 %s68, 1
    %p72 = scmp.eq.s32.totalorder %s13, 1
    %p73 = scmp.ne.s32.totalorder %s68, %s70
    %p74 = scmp.eq.s32.totalorder %s13, 0
    %p75 = por %p73, %p74
    %p76 = scmp.ne.s32.totalorder %s68, %s70
    %p77 = scmp.eq.s32.totalorder %s18, 1
    %p78 = por %p76, %p77
    %p79 = scmp.ne.s32.totalorder %s70, %s71
    %p80 = scmp.eq.s32.totalorder %s18, 0
    %p81 = por %p79, %p80
    %p82 = scmp.ne.s32.totalorder %s70, %s71
    %p83 = scmp.eq.s32.totalorder %s19, 1
    %p84 = por %p82, %p83
    %p86 = scmp.ne.s32.totalorder %s71, %s85
    %p87 = scmp.eq.s32.totalorder %s19, 0
    %p88 = por %p86, %p87
    %s90 = sadd.s32 %s89, 1
    %p93 = scmp.eq.s32.totalorder %s13, 1
    %p94 = scmp.ne.s32.totalorder %s89, %s91
    %p95 = scmp.eq.s32.totalorder %s13, 0
    %p96 = por %p94, %p95
    %p97 = scmp.ne.s32.totalorder %s89, %s91
    %p98 = scmp.eq.s32.totalorder %s18, 1
    %p99 = por %p97, %p98
    %p100 = scmp.ne.s32.totalorder %s91, %s92
    %p101 = scmp.eq.s32.totalorder %s18, 0
    %p102 = por %p100, %p101
    %p103 = scmp.ne.s32.totalorder %s91, %s92
    %p104 = scmp.eq.s32.totalorder %s19, 1
    %p105 = por %p103, %p104
    %p107 = scmp.ne.s32.totalorder %s92, %s106
    %p108 = scmp.eq.s32.totalorder %s19, 0
    %p109 = por %p107, %p108
    %s111 = sadd.s32 %s110, 1
    %p114 = scmp.eq.s32.totalorder %s13, 1
    %p115 = scmp.ne.s32.totalorder %s110, %s112
    %p116 = scmp.eq.s32.totalorder %s13, 0
    %p117 = por %p115, %p116
    %p118 = scmp.ne.s32.totalorder %s110, %s112
    %p119 = scmp.eq.s32.totalorder %s18, 1
    %p120 = por %p118, %p119
    %p121 = scmp.ne.s32.totalorder %s112, %s113
    %p122 = scmp.eq.s32.totalorder %s18, 0
    %p123 = por %p121, %p122
    %p124 = scmp.ne.s32.totalorder %s112, %s113
    %p125 = scmp.eq.s32.totalorder %s19, 1
    %p126 = por %p124, %p125
    %p128 = scmp.ne.s32.totalorder %s113, %s127
    %p129 = scmp.eq.s32.totalorder %s19, 0
    %p130 = por %p128, %p129
    %s132 = sadd.s32 %s131, 1
    %p135 = scmp.eq.s32.totalorder %s13, 1
    %p136 = scmp.ne.s32.totalorder %s131, %s133
    %p137 = scmp.eq.s32.totalorder %s13, 0
    %p138 = por %p136, %p137
    %p139 = scmp.ne.s32.totalorder %s131, %s133
    %p140 = scmp.eq.s32.totalorder %s18, 1
    %p141 = por %p139, %p140
    %p142 = scmp.ne.s32.totalorder %s133, %s134
    %p143 = scmp.eq.s32.totalorder %s18, 0
    %p144 = por %p142, %p143
    %p145 = scmp.ne.s32.totalorder %s133, %s134
    %p146 = scmp.eq.s32.totalorder %s19, 1
    %p147 = por %p145, %p146
    %p149 = scmp.ne.s32.totalorder %s134, %s148
    %p150 = scmp.eq.s32.totalorder %s19, 0
    %p151 = por %p149, %p150
    %s153 = sadd.s32 %s152, 1
    %p156 = scmp.eq.s32.totalorder %s13, 1
    %p157 = scmp.ne.s32.totalorder %s152, %s154
    %p158 = scmp.eq.s32.totalorder %s13, 0
    %p159 = por %p157, %p158
    %p160 = scmp.ne.s32.totalorder %s152, %s154
    %p161 = scmp.eq.s32.totalorder %s18, 1
    %p162 = por %p160, %p161
    %p163 = scmp.ne.s32.totalorder %s154, %s155
    %p164 = scmp.eq.s32.totalorder %s18, 0
    %p165 = por %p163, %p164
    %p166 = scmp.ne.s32.totalorder %s154, %s155
    %p167 = scmp.eq.s32.totalorder %s19, 1
    %p168 = por %p166, %p167
    %p170 = scmp.ne.s32.totalorder %s155, %s169
    %p171 = scmp.eq.s32.totalorder %s19, 0
    %p172 = por %p170, %p171
    %s173 = ssub.s32 %s13, %s20
    %p174 = scmp.eq.s32.totalorder %s173, 0
    %s176 = sadd.s32 %s175, 1
    %s177 = scalar_select %p174, %s175, %s176
    %p180 = pneg %p174
    %p181 = scmp.eq.s32.totalorder %s13, 1
    %p182 = por %p180, %p181
    %p183 = scmp.ne.s32.totalorder %s175, %s178
    %p184 = scmp.eq.s32.totalorder %s13, 0
    %p185 = por %p183, %p184
    %p186 = scmp.ne.s32.totalorder %s175, %s178
    %p187 = scmp.eq.s32.totalorder %s18, 1
    %p188 = por %p186, %p187
    %p189 = scmp.ne.s32.totalorder %s178, %s179
    %p190 = scmp.eq.s32.totalorder %s18, 0
    %p191 = por %p189, %p190
    %p192 = scmp.ne.s32.totalorder %s178, %s179
    %p193 = scmp.eq.s32.totalorder %s19, 1
    %p194 = por %p192, %p193
    %p196 = scmp.ne.s32.totalorder %s179, %s195
    %p197 = scmp.eq.s32.totalorder %s19, 0
    %p198 = por %p196, %p197
    %p199 = scmp.le.s32.totalorder 1, %s13
    %p200 = scmp.lt.s32.totalorder %s13, 3
    %p201 = pnand %p199, %p200
    %p202 = pneg %p201
    // Predicated region
    $region9: #{cross_modal_block.17} parent=5 // pred_check
      _
    $region10: #{cross_modal_block.17} parent=5 // pred_check_branch
      %204 = sbr.rel (%p201) target = $region12
    $region11: #{cross_modal_block.17} parent=5 // pred_region
      %s205 = ssub.s32 %s13, 1
      // Predicated region
      $region13: #{cross_modal_block.17} parent=11 // pred_check
        %p206 = pneg %p60
      $region14: #{cross_modal_block.17} parent=11 // pred_check_branch
        %208 = sbr.rel (%p206) target = $region16
      $region15: #{cross_modal_block.17} parent=11 // pred_region
        _
      $region16: #{cross_modal_block.17} parent=11 // pred_fallthru
        _
      // Predicated region
      $region17: #{cross_modal_block.17} parent=11 // pred_check
        %p209 = pneg %p81
      $region18: #{cross_modal_block.17} parent=11 // pred_check_branch
        %211 = sbr.rel (%p209) target = $region20
      $region19: #{cross_modal_block.17} parent=11 // pred_region
        _
      $region20: #{cross_modal_block.17} parent=11 // pred_fallthru
        _
      // Predicated region
      $region21: #{cross_modal_block.17} parent=11 // pred_check
        %p212 = pneg %p102
      $region22: #{cross_modal_block.17} parent=11 // pred_check_branch
        %214 = sbr.rel (%p212) target = $region24
      $region23: #{cross_modal_block.17} parent=11 // pred_region
        _
      $region24: #{cross_modal_block.17} parent=11 // pred_fallthru
        _
      // Predicated region
      $region25: #{cross_modal_block.17} parent=11 // pred_check
        %p215 = pneg %p123
      $region26: #{cross_modal_block.17} parent=11 // pred_check_branch
        %217 = sbr.rel (%p215) target = $region28
      $region27: #{cross_modal_block.17} parent=11 // pred_region
        _
      $region28: #{cross_modal_block.17} parent=11 // pred_fallthru
        _
      // Predicated region
      $region29: #{cross_modal_block.17} parent=11 // pred_check
        %p218 = pneg %p144
      $region30: #{cross_modal_block.17} parent=11 // pred_check_branch
        %220 = sbr.rel (%p218) target = $region32
      $region31: #{cross_modal_block.17} parent=11 // pred_region
        _
      $region32: #{cross_modal_block.17} parent=11 // pred_fallthru
        _
      // Predicated region
      $region33: #{cross_modal_block.17} parent=11 // pred_check
        %p221 = pneg %p165
      $region34: #{cross_modal_block.17} parent=11 // pred_check_branch
        %223 = sbr.rel (%p221) target = $region36
      $region35: #{cross_modal_block.17} parent=11 // pred_region
        _
      $region36: #{cross_modal_block.17} parent=11 // pred_fallthru
        _
    $region12: #{cross_modal_block.17} parent=5 // pred_fallthru
      _
    %p224 = scmp.lt.s32.totalorder %s13, 2
    // Predicated region
    $region37: #{cross_modal_block.17} parent=5 // pred_check
      %p225 = pneg %p224
    $region38: #{cross_modal_block.17} parent=5 // pred_check_branch
      %227 = sbr.rel (%p225) target = $region40
    $region39: #{cross_modal_block.17} parent=5 // pred_region
      // Predicated region
      $region41: #{cross_modal_block.17} parent=39 // pred_check
        %p228 = pneg %p33
      $region42: #{cross_modal_block.17} parent=39 // pred_check_branch
        %230 = sbr.rel (%p228) target = $region44
      $region43: #{cross_modal_block.17} parent=39 // pred_region
        %p231 = scmp.lt.s32.totalorder %s13, 1
        %s232 = scalar_select %p231, %s13, 1
        %s233 = smul.addr %s232, 2
        %s234 = smul.addr %s233, 8
        %s235 = scalar_lea.vmem %s0, %s234
      $region44: #{cross_modal_block.17} parent=39 // pred_fallthru
        _
    $region40: #{cross_modal_block.17} parent=5 // pred_fallthru
      _
    %p236 = scmp.le.s32.totalorder 1, %s13
    %p237 = scmp.lt.s32.totalorder %s13, 3
    %p238 = pnand %p236, %p237
    %p239 = pneg %p238
    // Predicated region
    $region45: #{cross_modal_block.17} parent=5 // pred_check
      _
    $region46: #{cross_modal_block.17} parent=5 // pred_check_branch
      %241 = sbr.rel (%p238) target = $region48
    $region47: #{cross_modal_block.17} parent=5 // pred_region
      %s242 = ssub.s32 %s13, 1
      %p243 = scmp.lt.s32.totalorder %s18, 1
      %s244 = scalar_select %p243, %s18, 1
      %s245 = smul.addr %s244, 2
      %s246 = smul.addr %s245, 8
      %s247 = scalar_lea.vmem %s0, %s246
      %p248 = pneg %p39
      %p249 = pneg %p36
      %p250 = pneg %p60
      %p251 = pneg %p57
      %p252 = pneg %p81
      %p253 = pneg %p78
      %p254 = pneg %p102
      %p255 = pneg %p99
      %p256 = pneg %p123
      %p257 = pneg %p120
      %p258 = pneg %p144
      %p259 = pneg %p141
      %p260 = pneg %p165
      %p261 = pneg %p162
      %p262 = pneg %p191
      %p263 = pneg %p188
      %p264 = scmp.lt.s32.totalorder %s18, 1
      %s265 = scalar_select %p264, %s18, 1
      %s266 = smul.addr %s265, 2
      %s267 = smul.addr %s266, 8
      %s268 = scalar_lea.vmem %s7, %s267
      %p269 = scmp.lt.s32.totalorder %s18, 1
      %s270 = scalar_select %p269, %s18, 1
      %s271 = smul.addr %s270, 2
      %s272 = smul.addr %s271, 8
      %s273 = scalar_lea.vmem %s0, %s272
      %p274 = scmp.lt.s32.totalorder %s18, 1
      %s275 = scalar_select %p274, %s18, 1
      %s276 = smul.addr %s275, 2
      %s277 = smul.addr %s276, 8
      %s278 = scalar_lea.vmem %s7, %s277
      %v280 = vld [vmem:[%s273] sm:$0xff]
      %v281 = vld [vmem:[%s273 + $0x8] sm:$0xff]
      %v282 = vld [vmem:[%s1] sm:$0x1]
      %v283 = vld [vmem:[%s2] sm:$0x1]
      %vm284 = vcmask 261120
      %v285 = vsel %vm284, %v280, 0.0
      %286 = vadd.xlane.f32.xlu0 %v285
      %v287 = vpop.xlane.xlu0 %286
      %v288 = vsel %vm284, %v281, 0.0
      %289 = vadd.xlane.f32.xlu0 %v288
      %v290 = vpop.xlane.xlu0 %289
      %v291 = vrcp.pop 32.0
      %v292 = vmul.f32 %v287, %v291
      %v293 = vmul.f32 %v290, %v291
      %v294 = vsub.f32 %v280, %v292
      %v295 = vsub.f32 %v281, %v293
      %v296 = vmul.f32 %v294, %v294
      %v297 = vmul.f32 %v295, %v295
      %v298 = vsel %vm284, %v296, 0.0
      %299 = vadd.xlane.f32.xlu0 %v298
      %v300 = vpop.xlane.xlu0 %299
      %v301 = vsel %vm284, %v297, 0.0
      %302 = vadd.xlane.f32.xlu0 %v301
      %v303 = vpop.xlane.xlu0 %302
      %v304 = vmul.f32 %v300, %v291
      %v305 = vmul.f32 %v303, %v291
      %v306 = vadd.f32 %v304, 1e-05
      %v307 = vadd.f32 %v305, 1e-05
      %v308 = vrsqrt.pop %v306
      %v309 = vrsqrt.pop %v307
      %v310 = vmul.f32 %v294, %v308
      %v311 = vmul.f32 %v295, %v309
      %v313 = vlaneseq
      %v314 = vshrl.u32 %v313, 7
      %v315 = vsub.s32 0, %v314
      %v316 = vrot.slane %v282, %v315
      %v318 = vmul.f32 %v310, %v316
      %v319 = vmul.f32 %v311, %v316
      %v321 = vlaneseq
      %v322 = vshrl.u32 %v321, 7
      %v323 = vsub.s32 0, %v322
      %v324 = vrot.slane %v283, %v323
      %v326 = vadd.f32 %v318, %v324
      %v327 = vadd.f32 %v319, %v324
      %v328 = vpack.c.bf16 %v327, %v326
      %v329 = vld [vmem:[%s3] sm:$0xf]
      %v330 = vld [vmem:[%s3 + $0x4] sm:$0xf]
      %v331 = vld [vmem:[%s3 + $0x8] sm:$0xf]
      %v332 = vld [vmem:[%s3 + $0xc] sm:$0xf]
      %v333 = vld [vmem:[%s4] sm:$0x1]
      %v335 = vlaneseq
      %v336 = vshrl.u32 %v335, 7
      %v337 = vsub.s32 0, %v336
      %v338 = vrot.slane %v333, %v337
      %v344 = vunpack.c.l.b16 %v329
      %v345 = vunpack.c.l.b16 %v330
      %v346 = vunpack.c.l.b16 %v331
      %v347 = vunpack.c.l.b16 %v332
      %v348 = vpack.c.b16 %v345, %v344
      %v349 = vpack.c.b16 %v347, %v346
      %v353 = vsel %vm284, %v328, 0
      %355 = vmatprep.subr.bf16.mxu0 0
      %356 = vmatpush1.bf16.msra.mxu0 0
      %357 = vmatprep.subr.bf16.mxu0 0
      %358 = vmatpush1.bf16.msra.mxu0 0
      %359 = vmatprep.subr.bf16.mxu0 0
      %360 = vmatpush1.bf16.msra.mxu0 0
      %361 = vmatprep.subr.bf16.mxu0 0
      %362 = vmatpush1.bf16.msra.mxu0 0
      %363 = vmatprep.subr.bf16.mxu0 0
      %364 = vmatpush1.bf16.msra.mxu0 0
      %365 = vmatprep.subr.bf16.mxu0 0
      %366 = vmatpush1.bf16.msra.mxu0 0
      %367 = vmatprep.subr.bf16.mxu0 0
      %368 = vmatpush1.bf16.msra.mxu0 %v349
      %369 = vmatprep.subr.bf16.mxu0 0
      %370 = vmatpush1.bf16.msra.mxu0 %v348
      %371 = vmatprep.subr.bf16.mxu0 0
      %372 = vmatpush2.bf16.msra.mxu0 0
      %373 = vmatprep.subr.bf16.mxu0 0
      %374 = vmatpush2.bf16.msra.mxu0 0
      %375 = vmatprep.subr.bf16.mxu0 0
      %376 = vmatpush2.bf16.msra.mxu0 0
      %377 = vmatprep.subr.bf16.mxu0 0
      %378 = vmatpush2.bf16.msra.mxu0 0
      %379 = vmatprep.subr.bf16.mxu0 0
      %380 = vmatpush2.bf16.msra.mxu0 0
      %381 = vmatprep.subr.bf16.mxu0 0
      %382 = vmatpush2.bf16.msra.mxu0 0
      %383 = vmatprep.subr.bf16.mxu0 0
      %384 = vmatpush2.bf16.msra.mxu0 0
      %385 = vmatprep.subr.bf16.mxu0 0
      %386 = vmatpush2.bf16.msra.mxu0 0
      %387 = vmatprep.mubr.bf16.mxu0 0
      %388 = vmatmul.mubr.bf16.gmra.mxu0 %v353
      %v389 = vpop.f32.mrf.mxu0
      %v390 = vadd.f32 %v338, %v389
      %v391 = vpop.f32.mrf.mxu0
      %v392 = vpop.f32.mrf.mxu0
      %v393 = vadd.f32 %v338, %v392
      %v394 = vpop.f32.mrf.mxu0
      %395 = vdwg.mxu0
      %v396 = vld [vmem:[%s5] sm:$0xf]
      %v397 = vld [vmem:[%s5 + $0x4] sm:$0xf]
      %v398 = vld [vmem:[%s5 + $0x8] sm:$0xf]
      %v399 = vld [vmem:[%s5 + $0xc] sm:$0xf]
      %v400 = vld [vmem:[%s6] sm:$0x1]
      %v401 = vmul.f32 %v390, 0.35355338
      %v402 = vmul.f32 %v393, 0.35355338
      %v403 = vpack.c.bf16 %v402, %v401
      %v404 = vpack.c.bf16 %v393, %v390
      %406 = vrot.lane.b32.xlu0 %v404, 96
      %v407 = vpop.permute.xlu0 %406
      %vm408 = vcmask 64512
      %v410 = vsel %vm408, %v403, 0
      %v413 = vsel %vm408, %v407, 0
      %415 = vmatprep.subr.bf16.mxu0 0
      %416 = vmatpush1.bf16.xpose.msra.mxu0 0
      %417 = vmatprep.subr.bf16.mxu0 0
      %418 = vmatpush1.bf16.xpose.msra.mxu0 0
      %419 = vmatprep.subr.bf16.mxu0 0
      %420 = vmatpush1.bf16.xpose.msra.mxu0 0
      %421 = vmatprep.subr.bf16.mxu0 0
      %422 = vmatpush1.bf16.xpose.msra.mxu0 0
      %423 = vmatprep.subr.bf16.mxu0 0
      %424 = vmatpush1.bf16.xpose.msra.mxu0 0
      %425 = vmatprep.subr.bf16.mxu0 0
      %426 = vmatpush1.bf16.xpose.msra.mxu0 0
      %427 = vmatprep.subr.bf16.mxu0 0
      %428 = vmatpush1.bf16.xpose.msra.mxu0 0
      %429 = vmatprep.subr.bf16.mxu0 0
      %430 = vmatpush1.bf16.xpose.msra.mxu0 %v413
      %431 = vmatprep.subr.bf16.mxu0 0
      %432 = vmatpush2.bf16.xpose.msra.mxu0 0
      %433 = vmatprep.subr.bf16.mxu0 0
      %434 = vmatpush2.bf16.xpose.msra.mxu0 0
      %435 = vmatprep.subr.bf16.mxu0 0
      %436 = vmatpush2.bf16.xpose.msra.mxu0 0
      %437 = vmatprep.subr.bf16.mxu0 0
      %438 = vmatpush2.bf16.xpose.msra.mxu0 0
      %439 = vmatprep.subr.bf16.mxu0 0
      %440 = vmatpush2.bf16.xpose.msra.mxu0 0
      %441 = vmatprep.subr.bf16.mxu0 0
      %442 = vmatpush2.bf16.xpose.msra.mxu0 0
      %443 = vmatprep.subr.bf16.mxu0 0
      %444 = vmatpush2.bf16.xpose.msra.mxu0 0
      %445 = vmatprep.subr.bf16.mxu0 0
      %446 = vmatpush2.bf16.xpose.msra.mxu0 0
      %447 = vmatprep.mubr.bf16.mxu0 0
      %448 = vmatmul.mubr.bf16.gmra.mxu0 %v410
      %v449 = vpop.f32.mrf.mxu0
      %v450 = vadd.f32 0.0, %v449
      %v451 = vpop.f32.mrf.mxu0
      %v452 = vpop.f32.mrf.mxu0
      %v453 = vadd.f32 0.0, %v452
      %v454 = vpop.f32.mrf.mxu0
      %455 = vdwg.mxu0
      %vm456 = vcmask 130048
      %v457 = vsel %vm456, %v450, -inf
      %458 = vmax.xlane.f32.xlu0 %v457
      %v459 = vpop.xlane.xlu0 %458
      %v460 = vsel %vm456, %v453, -inf
      %461 = vmax.xlane.f32.xlu0 %v460
      %v462 = vpop.xlane.xlu0 %461
      %v463 = vsub.f32 %v450, %v459
      %v464 = vsub.f32 %v453, %v462
      %v465 = vmul.f32 %v463, 1.442695
      %v466 = vpow.pop %v465
      %v467 = vmul.f32 %v464, 1.442695
      %v468 = vpow.pop %v467
      %v469 = vsel %vm456, %v466, 0.0
      %470 = vadd.xlane.f32.xlu0 %v469
      %v471 = vpop.xlane.xlu0 %470
      %v472 = vsel %vm456, %v468, 0.0
      %473 = vadd.xlane.f32.xlu0 %v472
      %v474 = vpop.xlane.xlu0 %473
      %v475 = vpack.c.bf16 %v468, %v466
      %476 = vrot.lane.b32.xlu0 %v404, 64
      %v477 = vpop.permute.xlu0 %476
      %v480 = vsel %vm456, %v475, 0
      %482 = vmatprep.subr.bf16.mxu0 0
      %483 = vmatpush1.bf16.msra.mxu0 0
      %484 = vmatprep.subr.bf16.mxu0 0
      %485 = vmatpush1.bf16.msra.mxu0 0
      %486 = vmatprep.subr.bf16.mxu0 0
      %487 = vmatpush1.bf16.msra.mxu0 0
      %488 = vmatprep.subr.bf16.mxu0 0
      %489 = vmatpush1.bf16.msra.mxu0 0
      %490 = vmatprep.subr.bf16.mxu0 0
      %491 = vmatpush1.bf16.msra.mxu0 0
      %492 = vmatprep.subr.bf16.mxu0 0
      %493 = vmatpush1.bf16.msra.mxu0 0
      %494 = vmatprep.subr.bf16.mxu0 0
      %495 = vmatpush1.bf16.msra.mxu0 0
      %496 = vmatprep.subr.bf16.mxu0 0
      %497 = vmatpush1.bf16.msra.mxu0 %v477
      %498 = vmatprep.subr.bf16.mxu0 0
      %499 = vmatpush2.bf16.msra.mxu0 0
      %500 = vmatprep.subr.bf16.mxu0 0
      %501 = vmatpush2.bf16.msra.mxu0 0
      %502 = vmatprep.subr.bf16.mxu0 0
      %503 = vmatpush2.bf16.msra.mxu0 0
      %504 = vmatprep.subr.bf16.mxu0 0
      %505 = vmatpush2.bf16.msra.mxu0 0
      %506 = vmatprep.subr.bf16.mxu0 0
      %507 = vmatpush2.bf16.msra.mxu0 0
      %508 = vmatprep.subr.bf16.mxu0 0
      %509 = vmatpush2.bf16.msra.mxu0 0
      %510 = vmatprep.subr.bf16.mxu0 0
      %511 = vmatpush2.bf16.msra.mxu0 0
      %512 = vmatprep.subr.bf16.mxu0 0
      %513 = vmatpush2.bf16.msra.mxu0 0
      %514 = vmatprep.mubr.bf16.mxu0 0
      %515 = vmatmul.mubr.bf16.gmra.mxu0 %v480
      %v516 = vpop.f32.mrf.mxu0
      %v517 = vadd.f32 0.0, %v516
      %v518 = vpop.f32.mrf.mxu0
      %v519 = vpop.f32.mrf.mxu0
      %v520 = vadd.f32 0.0, %v519
      %v521 = vpop.f32.mrf.mxu0
      %522 = vdwg.mxu0
      %v523 = vrcp.pop %v471
      %v524 = vrcp.pop %v474
      %v525 = vmul.f32 %v517, %v523
      %v526 = vmul.f32 %v520, %v524
      %528 = vrot.lane.b32.xlu0 %v403, 120
      %v529 = vpop.permute.xlu0 %528
      %530 = vrot.lane.b32.xlu0 %v404, 88
      %v531 = vpop.permute.xlu0 %530
      %v533 = vsel %vm408, %v529, 0
      %v536 = vsel %vm408, %v531, 0
      %538 = vmatprep.subr.bf16.mxu0 0
      %539 = vmatpush1.bf16.xpose.msra.mxu0 0
      %540 = vmatprep.subr.bf16.mxu0 0
      %541 = vmatpush1.bf16.xpose.msra.mxu0 0
      %542 = vmatprep.subr.bf16.mxu0 0
      %543 = vmatpush1.bf16.xpose.msra.mxu0 0
      %544 = vmatprep.subr.bf16.mxu0 0
      %545 = vmatpush1.bf16.xpose.msra.mxu0 0
      %546 = vmatprep.subr.bf16.mxu0 0
      %547 = vmatpush1.bf16.xpose.msra.mxu0 0
      %548 = vmatprep.subr.bf16.mxu0 0
      %549 = vmatpush1.bf16.xpose.msra.mxu0 0
      %550 = vmatprep.subr.bf16.mxu0 0
      %551 = vmatpush1.bf16.xpose.msra.mxu0 0
      %552 = vmatprep.subr.bf16.mxu0 0
      %553 = vmatpush1.bf16.xpose.msra.mxu0 %v536
      %554 = vmatprep.subr.bf16.mxu0 0
      %555 = vmatpush2.bf16.xpose.msra.mxu0 0
      %556 = vmatprep.subr.bf16.mxu0 0
      %557 = vmatpush2.bf16.xpose.msra.mxu0 0
      %558 = vmatprep.subr.bf16.mxu0 0
      %559 = vmatpush2.bf16.xpose.msra.mxu0 0
      %560 = vmatprep.subr.bf16.mxu0 0
      %561 = vmatpush2.bf16.xpose.msra.mxu0 0
      %562 = vmatprep.subr.bf16.mxu0 0
      %563 = vmatpush2.bf16.xpose.msra.mxu0 0
      %564 = vmatprep.subr.bf16.mxu0 0
      %565 = vmatpush2.bf16.xpose.msra.mxu0 0
      %566 = vmatprep.subr.bf16.mxu0 0
      %567 = vmatpush2.bf16.xpose.msra.mxu0 0
      %568 = vmatprep.subr.bf16.mxu0 0
      %569 = vmatpush2.bf16.xpose.msra.mxu0 0
      %570 = vmatprep.mubr.bf16.mxu0 0
      %571 = vmatmul.mubr.bf16.gmra.mxu0 %v533
      %v572 = vpop.f32.mrf.mxu0
      %v573 = vadd.f32 0.0, %v572
      %v574 = vpop.f32.mrf.mxu0
      %v575 = vpop.f32.mrf.mxu0
      %v576 = vadd.f32 0.0, %v575
      %v577 = vpop.f32.mrf.mxu0
      %578 = vdwg.mxu0
      %v579 = vsel %vm456, %v573, -inf
      %580 = vmax.xlane.f32.xlu0 %v579
      %v581 = vpop.xlane.xlu0 %580
      %v582 = vsel %vm456, %v576, -inf
      %583 = vmax.xlane.f32.xlu0 %v582
      %v584 = vpop.xlane.xlu0 %583
      %v585 = vsub.f32 %v573, %v581
      %v586 = vsub.f32 %v576, %v584
      %v587 = vmul.f32 %v585, 1.442695
      %v588 = vpow.pop %v587
      %v589 = vmul.f32 %v586, 1.442695
      %v590 = vpow.pop %v589
      %v591 = vsel %vm456, %v588, 0.0
      %592 = vadd.xlane.f32.xlu0 %v591
      %v593 = vpop.xlane.xlu0 %592
      %v594 = vsel %vm456, %v590, 0.0
      %595 = vadd.xlane.f32.xlu0 %v594
      %v596 = vpop.xlane.xlu0 %595
      %v597 = vpack.c.bf16 %v590, %v588
      %598 = vrot.lane.b32.xlu0 %v404, 56
      %v599 = vpop.permute.xlu0 %598
      %v602 = vsel %vm456, %v597, 0
      %604 = vmatprep.subr.bf16.mxu0 0
      %605 = vmatpush1.bf16.msra.mxu0 0
      %606 = vmatprep.subr.bf16.mxu0 0
      %607 = vmatpush1.bf16.msra.mxu0 0
      %608 = vmatprep.subr.bf16.mxu0 0
      %609 = vmatpush1.bf16.msra.mxu0 0
      %610 = vmatprep.subr.bf16.mxu0 0
      %611 = vmatpush1.bf16.msra.mxu0 0
      %612 = vmatprep.subr.bf16.mxu0 0
      %613 = vmatpush1.bf16.msra.mxu0 0
      %614 = vmatprep.subr.bf16.mxu0 0
      %615 = vmatpush1.bf16.msra.mxu0 0
      %616 = vmatprep.subr.bf16.mxu0 0
      %617 = vmatpush1.bf16.msra.mxu0 0
      %618 = vmatprep.subr.bf16.mxu0 0
      %619 = vmatpush1.bf16.msra.mxu0 %v599
      %620 = vmatprep.subr.bf16.mxu0 0
      %621 = vmatpush2.bf16.msra.mxu0 0
      %622 = vmatprep.subr.bf16.mxu0 0
      %623 = vmatpush2.bf16.msra.mxu0 0
      %624 = vmatprep.subr.bf16.mxu0 0
      %625 = vmatpush2.bf16.msra.mxu0 0
      %626 = vmatprep.subr.bf16.mxu0 0
      %627 = vmatpush2.bf16.msra.mxu0 0
      %628 = vmatprep.subr.bf16.mxu0 0
      %629 = vmatpush2.bf16.msra.mxu0 0
      %630 = vmatprep.subr.bf16.mxu0 0
      %631 = vmatpush2.bf16.msra.mxu0 0
      %632 = vmatprep.subr.bf16.mxu0 0
      %633 = vmatpush2.bf16.msra.mxu0 0
      %634 = vmatprep.subr.bf16.mxu0 0
      %635 = vmatpush2.bf16.msra.mxu0 0
      %636 = vmatprep.mubr.bf16.mxu0 0
      %637 = vmatmul.mubr.bf16.gmra.mxu0 %v602
      %v638 = vpop.f32.mrf.mxu0
      %v639 = vadd.f32 0.0, %v638
      %v640 = vpop.f32.mrf.mxu0
      %v641 = vpop.f32.mrf.mxu0
      %v642 = vadd.f32 0.0, %v641
      %v643 = vpop.f32.mrf.mxu0
      %644 = vdwg.mxu0
      %v645 = vrcp.pop %v593
      %v646 = vrcp.pop %v596
      %v647 = vmul.f32 %v639, %v645
      %v648 = vmul.f32 %v642, %v646
      %649 = vrot.lane.b32.xlu0 %v403, 112
      %v650 = vpop.permute.xlu0 %649
      %651 = vrot.lane.b32.xlu0 %v404, 80
      %v652 = vpop.permute.xlu0 %651
      %v654 = vsel %vm408, %v650, 0
      %v657 = vsel %vm408, %v652, 0
      %659 = vmatprep.subr.bf16.mxu0 0
      %660 = vmatpush1.bf16.xpose.msra.mxu0 0
      %661 = vmatprep.subr.bf16.mxu0 0
      %662 = vmatpush1.bf16.xpose.msra.mxu0 0
      %663 = vmatprep.subr.bf16.mxu0 0
      %664 = vmatpush1.bf16.xpose.msra.mxu0 0
      %665 = vmatprep.subr.bf16.mxu0 0
      %666 = vmatpush1.bf16.xpose.msra.mxu0 0
      %667 = vmatprep.subr.bf16.mxu0 0
      %668 = vmatpush1.bf16.xpose.msra.mxu0 0
      %669 = vmatprep.subr.bf16.mxu0 0
      %670 = vmatpush1.bf16.xpose.msra.mxu0 0
      %671 = vmatprep.subr.bf16.mxu0 0
      %672 = vmatpush1.bf16.xpose.msra.mxu0 0
      %673 = vmatprep.subr.bf16.mxu0 0
      %674 = vmatpush1.bf16.xpose.msra.mxu0 %v657
      %675 = vmatprep.subr.bf16.mxu0 0
      %676 = vmatpush2.bf16.xpose.msra.mxu0 0
      %677 = vmatprep.subr.bf16.mxu0 0
      %678 = vmatpush2.bf16.xpose.msra.mxu0 0
      %679 = vmatprep.subr.bf16.mxu0 0
      %680 = vmatpush2.bf16.xpose.msra.mxu0 0
      %681 = vmatprep.subr.bf16.mxu0 0
      %682 = vmatpush2.bf16.xpose.msra.mxu0 0
      %683 = vmatprep.subr.bf16.mxu0 0
      %684 = vmatpush2.bf16.xpose.msra.mxu0 0
      %685 = vmatprep.subr.bf16.mxu0 0
      %686 = vmatpush2.bf16.xpose.msra.mxu0 0
      %687 = vmatprep.subr.bf16.mxu0 0
      %688 = vmatpush2.bf16.xpose.msra.mxu0 0
      %689 = vmatprep.subr.bf16.mxu0 0
      %690 = vmatpush2.bf16.xpose.msra.mxu0 0
      %691 = vmatprep.mubr.bf16.mxu0 0
      %692 = vmatmul.mubr.bf16.gmra.mxu0 %v654
      %v693 = vpop.f32.mrf.mxu0
      %v694 = vadd.f32 0.0, %v693
      %v695 = vpop.f32.mrf.mxu0
      %v696 = vpop.f32.mrf.mxu0
      %v697 = vadd.f32 0.0, %v696
      %v698 = vpop.f32.mrf.mxu0
      %699 = vdwg.mxu0
      %v700 = vsel %vm456, %v694, -inf
      %701 = vmax.xlane.f32.xlu0 %v700
      %v702 = vpop.xlane.xlu0 %701
      %v703 = vsel %vm456, %v697, -inf
      %704 = vmax.xlane.f32.xlu0 %v703
      %v705 = vpop.xlane.xlu0 %704
      %v706 = vsub.f32 %v694, %v702
      %v707 = vsub.f32 %v697, %v705
      %v708 = vmul.f32 %v706, 1.442695
      %v709 = vpow.pop %v708
      %v710 = vmul.f32 %v707, 1.442695
      %v711 = vpow.pop %v710
      %v712 = vsel %vm456, %v709, 0.0
      %713 = vadd.xlane.f32.xlu0 %v712
      %v714 = vpop.xlane.xlu0 %713
      %v715 = vsel %vm456, %v711, 0.0
      %716 = vadd.xlane.f32.xlu0 %v715
      %v717 = vpop.xlane.xlu0 %716
      %v718 = vpack.c.bf16 %v711, %v709
      %719 = vrot.lane.b32.xlu0 %v404, 48
      %v720 = vpop.permute.xlu0 %719
      %v723 = vsel %vm456, %v718, 0
      %725 = vmatprep.subr.bf16.mxu0 0
      %726 = vmatpush1.bf16.msra.mxu0 0
      %727 = vmatprep.subr.bf16.mxu0 0
      %728 = vmatpush1.bf16.msra.mxu0 0
      %729 = vmatprep.subr.bf16.mxu0 0
      %730 = vmatpush1.bf16.msra.mxu0 0
      %731 = vmatprep.subr.bf16.mxu0 0
      %732 = vmatpush1.bf16.msra.mxu0 0
      %733 = vmatprep.subr.bf16.mxu0 0
      %734 = vmatpush1.bf16.msra.mxu0 0
      %735 = vmatprep.subr.bf16.mxu0 0
      %736 = vmatpush1.bf16.msra.mxu0 0
      %737 = vmatprep.subr.bf16.mxu0 0
      %738 = vmatpush1.bf16.msra.mxu0 0
      %739 = vmatprep.subr.bf16.mxu0 0
      %740 = vmatpush1.bf16.msra.mxu0 %v720
      %741 = vmatprep.subr.bf16.mxu0 0
      %742 = vmatpush2.bf16.msra.mxu0 0
      %743 = vmatprep.subr.bf16.mxu0 0
      %744 = vmatpush2.bf16.msra.mxu0 0
      %745 = vmatprep.subr.bf16.mxu0 0
      %746 = vmatpush2.bf16.msra.mxu0 0
      %747 = vmatprep.subr.bf16.mxu0 0
      %748 = vmatpush2.bf16.msra.mxu0 0
      %749 = vmatprep.subr.bf16.mxu0 0
      %750 = vmatpush2.bf16.msra.mxu0 0
      %751 = vmatprep.subr.bf16.mxu0 0
      %752 = vmatpush2.bf16.msra.mxu0 0
      %753 = vmatprep.subr.bf16.mxu0 0
      %754 = vmatpush2.bf16.msra.mxu0 0
      %755 = vmatprep.subr.bf16.mxu0 0
      %756 = vmatpush2.bf16.msra.mxu0 0
      %757 = vmatprep.mubr.bf16.mxu0 0
      %758 = vmatmul.mubr.bf16.gmra.mxu0 %v723
      %v759 = vpop.f32.mrf.mxu0
      %v760 = vadd.f32 0.0, %v759
      %v761 = vpop.f32.mrf.mxu0
      %v762 = vpop.f32.mrf.mxu0
      %v763 = vadd.f32 0.0, %v762
      %v764 = vpop.f32.mrf.mxu0
      %765 = vdwg.mxu0
      %v766 = vrcp.pop %v714
      %v767 = vrcp.pop %v717
      %v768 = vmul.f32 %v760, %v766
      %v769 = vmul.f32 %v763, %v767
      %770 = vrot.lane.b32.xlu0 %v403, 104
      %v771 = vpop.permute.xlu0 %770
      %772 = vrot.lane.b32.xlu0 %v404, 72
      %v773 = vpop.permute.xlu0 %772
      %v775 = vsel %vm408, %v771, 0
      %v778 = vsel %vm408, %v773, 0
      %780 = vmatprep.subr.bf16.mxu0 0
      %781 = vmatpush1.bf16.xpose.msra.mxu0 0
      %782 = vmatprep.subr.bf16.mxu0 0
      %783 = vmatpush1.bf16.xpose.msra.mxu0 0
      %784 = vmatprep.subr.bf16.mxu0 0
      %785 = vmatpush1.bf16.xpose.msra.mxu0 0
      %786 = vmatprep.subr.bf16.mxu0 0
      %787 = vmatpush1.bf16.xpose.msra.mxu0 0
      %788 = vmatprep.subr.bf16.mxu0 0
      %789 = vmatpush1.bf16.xpose.msra.mxu0 0
      %790 = vmatprep.subr.bf16.mxu0 0
      %791 = vmatpush1.bf16.xpose.msra.mxu0 0
      %792 = vmatprep.subr.bf16.mxu0 0
      %793 = vmatpush1.bf16.xpose.msra.mxu0 0
      %794 = vmatprep.subr.bf16.mxu0 0
      %795 = vmatpush1.bf16.xpose.msra.mxu0 %v778
      %796 = vmatprep.subr.bf16.mxu0 0
      %797 = vmatpush2.bf16.xpose.msra.mxu0 0
      %798 = vmatprep.subr.bf16.mxu0 0
      %799 = vmatpush2.bf16.xpose.msra.mxu0 0
      %800 = vmatprep.subr.bf16.mxu0 0
      %801 = vmatpush2.bf16.xpose.msra.mxu0 0
      %802 = vmatprep.subr.bf16.mxu0 0
      %803 = vmatpush2.bf16.xpose.msra.mxu0 0
      %804 = vmatprep.subr.bf16.mxu0 0
      %805 = vmatpush2.bf16.xpose.msra.mxu0 0
      %806 = vmatprep.subr.bf16.mxu0 0
      %807 = vmatpush2.bf16.xpose.msra.mxu0 0
      %808 = vmatprep.subr.bf16.mxu0 0
      %809 = vmatpush2.bf16.xpose.msra.mxu0 0
      %810 = vmatprep.subr.bf16.mxu0 0
      %811 = vmatpush2.bf16.xpose.msra.mxu0 0
      %812 = vmatprep.mubr.bf16.mxu0 0
      %813 = vmatmul.mubr.bf16.gmra.mxu0 %v775
      %v814 = vpop.f32.mrf.mxu0
      %v815 = vadd.f32 0.0, %v814
      %v816 = vpop.f32.mrf.mxu0
      %v817 = vpop.f32.mrf.mxu0
      %v818 = vadd.f32 0.0, %v817
      %v819 = vpop.f32.mrf.mxu0
      %820 = vdwg.mxu0
      %v821 = vsel %vm456, %v815, -inf
      %822 = vmax.xlane.f32.xlu0 %v821
      %v823 = vpop.xlane.xlu0 %822
      %v824 = vsel %vm456, %v818, -inf
      %825 = vmax.xlane.f32.xlu0 %v824
      %v826 = vpop.xlane.xlu0 %825
      %v827 = vsub.f32 %v815, %v823
      %v828 = vsub.f32 %v818, %v826
      %v829 = vmul.f32 %v827, 1.442695
      %v830 = vpow.pop %v829
      %v831 = vmul.f32 %v828, 1.442695
      %v832 = vpow.pop %v831
      %v833 = vsel %vm456, %v830, 0.0
      %834 = vadd.xlane.f32.xlu0 %v833
      %v835 = vpop.xlane.xlu0 %834
      %v836 = vsel %vm456, %v832, 0.0
      %837 = vadd.xlane.f32.xlu0 %v836
      %v838 = vpop.xlane.xlu0 %837
      %v839 = vpack.c.bf16 %v832, %v830
      %840 = vrot.lane.b32.xlu0 %v404, 40
      %v841 = vpop.permute.xlu0 %840
      %v844 = vsel %vm456, %v839, 0
      %846 = vmatprep.subr.bf16.mxu0 0
      %847 = vmatpush1.bf16.msra.mxu0 0
      %848 = vmatprep.subr.bf16.mxu0 0
      %849 = vmatpush1.bf16.msra.mxu0 0
      %850 = vmatprep.subr.bf16.mxu0 0
      %851 = vmatpush1.bf16.msra.mxu0 0
      %852 = vmatprep.subr.bf16.mxu0 0
      %853 = vmatpush1.bf16.msra.mxu0 0
      %854 = vmatprep.subr.bf16.mxu0 0
      %855 = vmatpush1.bf16.msra.mxu0 0
      %856 = vmatprep.subr.bf16.mxu0 0
      %857 = vmatpush1.bf16.msra.mxu0 0
      %858 = vmatprep.subr.bf16.mxu0 0
      %859 = vmatpush1.bf16.msra.mxu0 0
      %860 = vmatprep.subr.bf16.mxu0 0
      %861 = vmatpush1.bf16.msra.mxu0 %v841
      %862 = vmatprep.subr.bf16.mxu0 0
      %863 = vmatpush2.bf16.msra.mxu0 0
      %864 = vmatprep.subr.bf16.mxu0 0
      %865 = vmatpush2.bf16.msra.mxu0 0
      %866 = vmatprep.subr.bf16.mxu0 0
      %867 = vmatpush2.bf16.msra.mxu0 0
      %868 = vmatprep.subr.bf16.mxu0 0
      %869 = vmatpush2.bf16.msra.mxu0 0
      %870 = vmatprep.subr.bf16.mxu0 0
      %871 = vmatpush2.bf16.msra.mxu0 0
      %872 = vmatprep.subr.bf16.mxu0 0
      %873 = vmatpush2.bf16.msra.mxu0 0
      %874 = vmatprep.subr.bf16.mxu0 0
      %875 = vmatpush2.bf16.msra.mxu0 0
      %876 = vmatprep.subr.bf16.mxu0 0
      %877 = vmatpush2.bf16.msra.mxu0 0
      %878 = vmatprep.mubr.bf16.mxu0 0
      %879 = vmatmul.mubr.bf16.gmra.mxu0 %v844
      %v880 = vpop.f32.mrf.mxu0
      %v881 = vadd.f32 0.0, %v880
      %v882 = vpop.f32.mrf.mxu0
      %v883 = vpop.f32.mrf.mxu0
      %v884 = vadd.f32 0.0, %v883
      %v885 = vpop.f32.mrf.mxu0
      %886 = vdwg.mxu0
      %v887 = vrcp.pop %v835
      %v888 = vrcp.pop %v838
      %v889 = vmul.f32 %v881, %v887
      %v890 = vmul.f32 %v884, %v888
      %893 = vrot.lane.b32.xlu0 %v647, 8
      %v894 = vpop.permute.xlu0 %893
      %895 = vrot.lane.b32.xlu0 %v648, 8
      %v896 = vpop.permute.xlu0 %895
      %901 = vrot.lane.b32.xlu0 %v768, 16
      %v902 = vpop.permute.xlu0 %901
      %903 = vrot.lane.b32.xlu0 %v769, 16
      %v904 = vpop.permute.xlu0 %903
      %909 = vrot.lane.b32.xlu0 %v889, 24
      %v910 = vpop.permute.xlu0 %909
      %911 = vrot.lane.b32.xlu0 %v890, 24
      %v912 = vpop.permute.xlu0 %911
      %v915 = vsel %vm408, %v525, %v894
      %v916 = vsel %vm408, %v526, %v896
      %v917 = vsel %vm456, %v915, %v902
      %v918 = vsel %vm456, %v916, %v904
      %vm919 = vcmask 195584
      %v920 = vsel %vm919, %v917, %v910
      %v921 = vsel %vm919, %v918, %v912
      %v922 = vpack.c.bf16 %v921, %v920
      %v924 = vlaneseq
      %v925 = vshrl.u32 %v924, 7
      %v926 = vsub.s32 0, %v925
      %v927 = vrot.slane %v400, %v926
      %v933 = vunpack.c.l.b16 %v396
      %v934 = vunpack.c.l.b16 %v397
      %v935 = vunpack.c.l.b16 %v398
      %v936 = vunpack.c.l.b16 %v399
      %v937 = vpack.c.b16 %v934, %v933
      %v938 = vpack.c.b16 %v936, %v935
      %v942 = vsel %vm284, %v922, 0
      %944 = vmatprep.subr.bf16.mxu0 0
      %945 = vmatpush1.bf16.msra.mxu0 0
      %946 = vmatprep.subr.bf16.mxu0 0
      %947 = vmatpush1.bf16.msra.mxu0 0
      %948 = vmatprep.subr.bf16.mxu0 0
      %949 = vmatpush1.bf16.msra.mxu0 0
      %950 = vmatprep.subr.bf16.mxu0 0
      %951 = vmatpush1.bf16.msra.mxu0 0
      %952 = vmatprep.subr.bf16.mxu0 0
      %953 = vmatpush1.bf16.msra.mxu0 0
      %954 = vmatprep.subr.bf16.mxu0 0
      %955 = vmatpush1.bf16.msra.mxu0 0
      %956 = vmatprep.subr.bf16.mxu0 0
      %957 = vmatpush1.bf16.msra.mxu0 %v938
      %958 = vmatprep.subr.bf16.mxu0 0
      %959 = vmatpush1.bf16.msra.mxu0 %v937
      %960 = vmatprep.subr.bf16.mxu0 0
      %961 = vmatpush2.bf16.msra.mxu0 0
      %962 = vmatprep.subr.bf16.mxu0 0
      %963 = vmatpush2.bf16.msra.mxu0 0
      %964 = vmatprep.subr.bf16.mxu0 0
      %965 = vmatpush2.bf16.msra.mxu0 0
      %966 = vmatprep.subr.bf16.mxu0 0
      %967 = vmatpush2.bf16.msra.mxu0 0
      %968 = vmatprep.subr.bf16.mxu0 0
      %969 = vmatpush2.bf16.msra.mxu0 0
      %970 = vmatprep.subr.bf16.mxu0 0
      %971 = vmatpush2.bf16.msra.mxu0 0
      %972 = vmatprep.subr.bf16.mxu0 0
      %973 = vmatpush2.bf16.msra.mxu0 0
      %974 = vmatprep.subr.bf16.mxu0 0
      %975 = vmatpush2.bf16.msra.mxu0 0
      %976 = vmatprep.mubr.bf16.mxu0 0
      %977 = vmatmul.mubr.bf16.gmra.mxu0 %v942
      %v978 = vpop.f32.mrf.mxu0
      %v979 = vadd.f32 %v927, %v978
      %v980 = vpop.f32.mrf.mxu0
      %v981 = vpop.f32.mrf.mxu0
      %v982 = vadd.f32 %v927, %v981
      %v983 = vpop.f32.mrf.mxu0
      %984 = vdwg.mxu0
      %v985 = vadd.f32 %v280, %v979
      %v986 = vadd.f32 %v281, %v982
      %987 = vst.msk [vmem:[%s278] sm:$0xff] %vm284, %v985
      %988 = vst.msk [vmem:[%s278 + $0x8] sm:$0xff] %vm284, %v986
      %p989 = scmp.lt.s32.totalorder %s18, 1
      %s990 = scalar_select %p989, %s18, 1
      %s991 = smul.addr %s990, 2
      %s992 = smul.addr %s991, 8
      %s993 = scalar_lea.vmem %s7, %s992
      // Predicated region
      $region49: #{cross_modal_block.17} parent=47 // pred_check
        %p994 = pneg %p188
      $region50: #{cross_modal_block.17} parent=47 // pred_check_branch
        %996 = sbr.rel (%p994) target = $region52
      $region51: #{cross_modal_block.17} parent=47 // pred_region
        _
      $region52: #{cross_modal_block.17} parent=47 // pred_fallthru
        _
    $region48: #{cross_modal_block.17} parent=5 // pred_fallthru
      _
    %p997 = scmp.le.s32.totalorder 2, %s13
    // Predicated region
    $region53: #{cross_modal_block.17} parent=5 // pred_check
      %p998 = pneg %p997
    $region54: #{cross_modal_block.17} parent=5 // pred_check_branch
      %1000 = sbr.rel (%p998) target = $region56
    $region55: #{cross_modal_block.17} parent=5 // pred_region
      %s1001 = ssub.s32 %s13, 2
      // Predicated region
      $region57: #{cross_modal_block.17} parent=55 // pred_check
        %p1002 = pneg %p194
      $region58: #{cross_modal_block.17} parent=55 // pred_check_branch
        %1004 = sbr.rel (%p1002) target = $region60
      $region59: #{cross_modal_block.17} parent=55 // pred_region
        %p1005 = scmp.lt.s32.totalorder %s19, 1
        %s1006 = scalar_select %p1005, %s19, 1
        %s1007 = smul.addr %s1006, 2
        %s1008 = smul.addr %s1007, 8
        %s1009 = scalar_lea.vmem %s7, %s1008
      $region60: #{cross_modal_block.17} parent=55 // pred_fallthru
        _
    $region56: #{cross_modal_block.17} parent=5 // pred_fallthru
      _
  $region6: #{cross_modal_block.17} parent=0 // loop_footer
    %s17 = sadd.s32 1, %s13
  $region7: #{cross_modal_block.17} parent=0 // loop_footer_branch
    %12 = sbr.rel target = $region3
  $region8: #{cross_modal_block.17} parent=0 // loop_exit
    _

// kernel: cross_modal_block.20
$region0: #{cross_modal_block.20}
  #allocation0 [shape = 'u32[]', space=smem, size = 0x4, offset = 0x4, fixed_abs, tag = 'smem constant byte address 0x4 - core index']
  #allocation1 [shape = 'u32[144,128]{1,0:T(1,128)}', space=vmem, size = 0x12000, scoped, tag = 'internal scratch']
  %s0 = inlined_call_operand.vmem [shape: f32[16,32], index: 0, kind: input, shape index: {}]
  %s1 = inlined_call_operand.vmem [shape: f32[1,32], index: 1, kind: input, shape index: {}]
  %s2 = inlined_call_operand.vmem [shape: f32[1,32], index: 2, kind: input, shape index: {}]
  %s3 = inlined_call_operand.vmem [shape: bf16[32,64], index: 3, kind: input, shape index: {}]
  %s4 = inlined_call_operand.vmem [shape: f32[1,64], index: 4, kind: input, shape index: {}]
  %s5 = inlined_call_operand.vmem [shape: bf16[64,32], index: 5, kind: input, shape index: {}]
  %s6 = inlined_call_operand.vmem [shape: f32[1,32], index: 6, kind: input, shape index: {}]
  %s7 = inlined_call_operand.vmem [shape: f32[16,32], index: 7, kind: output, shape index: {}]
  %s8 = sld [smem:[#allocation0]]
  $region38: #{cross_modal_block.20} parent=0
    _
  %s10 = ssub.s32 1, %s8
  %s11 = scalar_select 0, %s10, %s8
  // Predicated region
  $region2: #{cross_modal_block.20} parent=0 // pred_check
    _
  $region3: #{cross_modal_block.20} parent=0 // pred_check_branch
    %13 = sbr.rel (0) target = $region5
  $region4: #{cross_modal_block.20} parent=0 // pred_region
    _
  $region5: #{cross_modal_block.20} parent=0 // pred_fallthru
    _
  // Predicated region
  $region6: #{cross_modal_block.20} parent=0 // pred_check
    _
  $region7: #{cross_modal_block.20} parent=0 // pred_check_branch
    %15 = sbr.rel (0) target = $region9
  $region8: #{cross_modal_block.20} parent=0 // pred_region
    _
  $region9: #{cross_modal_block.20} parent=0 // pred_fallthru
    _
  // Predicated region
  $region10: #{cross_modal_block.20} parent=0 // pred_check
    _
  $region11: #{cross_modal_block.20} parent=0 // pred_check_branch
    %17 = sbr.rel (0) target = $region13
  $region12: #{cross_modal_block.20} parent=0 // pred_region
    _
  $region13: #{cross_modal_block.20} parent=0 // pred_fallthru
    _
  // Predicated region
  $region14: #{cross_modal_block.20} parent=0 // pred_check
    _
  $region15: #{cross_modal_block.20} parent=0 // pred_check_branch
    %19 = sbr.rel (0) target = $region17
  $region16: #{cross_modal_block.20} parent=0 // pred_region
    _
  $region17: #{cross_modal_block.20} parent=0 // pred_fallthru
    _
  // Predicated region
  $region18: #{cross_modal_block.20} parent=0 // pred_check
    _
  $region19: #{cross_modal_block.20} parent=0 // pred_check_branch
    %21 = sbr.rel (0) target = $region21
  $region20: #{cross_modal_block.20} parent=0 // pred_region
    _
  $region21: #{cross_modal_block.20} parent=0 // pred_fallthru
    _
  // Predicated region
  $region22: #{cross_modal_block.20} parent=0 // pred_check
    _
  $region23: #{cross_modal_block.20} parent=0 // pred_check_branch
    %23 = sbr.rel (0) target = $region25
  $region24: #{cross_modal_block.20} parent=0 // pred_region
    _
  $region25: #{cross_modal_block.20} parent=0 // pred_fallthru
    _
  // Predicated region
  $region26: #{cross_modal_block.20} parent=0 // pred_check
    _
  $region27: #{cross_modal_block.20} parent=0 // pred_check_branch
    %25 = sbr.rel (0) target = $region29
  $region28: #{cross_modal_block.20} parent=0 // pred_region
    _
  $region29: #{cross_modal_block.20} parent=0 // pred_fallthru
    _
  %v27 = vld [vmem:[%s0] sm:$0xff]
  %v28 = vld [vmem:[%s0 + $0x8] sm:$0xff]
  %v29 = vld [vmem:[%s1] sm:$0x1]
  %v30 = vld [vmem:[%s2] sm:$0x1]
  %vm31 = vcmask 261120
  %v32 = vsel %vm31, %v27, 0.0
  %33 = vadd.xlane.f32.xlu0 %v32
  %v34 = vpop.xlane.xlu0 %33
  %v35 = vsel %vm31, %v28, 0.0
  %36 = vadd.xlane.f32.xlu0 %v35
  %v37 = vpop.xlane.xlu0 %36
  %v38 = vrcp.pop 32.0
  %v39 = vmul.f32 %v34, %v38
  %v40 = vmul.f32 %v37, %v38
  %v41 = vsub.f32 %v27, %v39
  %v42 = vsub.f32 %v28, %v40
  %v43 = vmul.f32 %v41, %v41
  %v44 = vmul.f32 %v42, %v42
  %v45 = vsel %vm31, %v43, 0.0
  %46 = vadd.xlane.f32.xlu0 %v45
  %v47 = vpop.xlane.xlu0 %46
  %v48 = vsel %vm31, %v44, 0.0
  %49 = vadd.xlane.f32.xlu0 %v48
  %v50 = vpop.xlane.xlu0 %49
  %v51 = vmul.f32 %v47, %v38
  %v52 = vmul.f32 %v50, %v38
  %v53 = vadd.f32 %v51, 1e-05
  %v54 = vadd.f32 %v52, 1e-05
  %v55 = vrsqrt.pop %v53
  %v56 = vrsqrt.pop %v54
  %v57 = vmul.f32 %v41, %v55
  %v58 = vmul.f32 %v42, %v56
  %v60 = vlaneseq
  %v61 = vshrl.u32 %v60, 7
  %v62 = vsub.s32 0, %v61
  %v63 = vrot.slane %v29, %v62
  %v65 = vmul.f32 %v57, %v63
  %v66 = vmul.f32 %v58, %v63
  %v68 = vlaneseq
  %v69 = vshrl.u32 %v68, 7
  %v70 = vsub.s32 0, %v69
  %v71 = vrot.slane %v30, %v70
  %v73 = vadd.f32 %v65, %v71
  %v74 = vadd.f32 %v66, %v71
  %v75 = vpack.c.bf16 %v74, %v73
  %v76 = vld [vmem:[%s3] sm:$0xf]
  %v77 = vld [vmem:[%s3 + $0x4] sm:$0xf]
  %v78 = vld [vmem:[%s3 + $0x8] sm:$0xf]
  %v79 = vld [vmem:[%s3 + $0xc] sm:$0xf]
  %v80 = vld [vmem:[%s4] sm:$0x1]
  %v82 = vlaneseq
  %v83 = vshrl.u32 %v82, 7
  %v84 = vsub.s32 0, %v83
  %v85 = vrot.slane %v80, %v84
  %v91 = vunpack.c.l.b16 %v76
  %v92 = vunpack.c.l.b16 %v77
  %v93 = vunpack.c.l.b16 %v78
  %v94 = vunpack.c.l.b16 %v79
  %v95 = vpack.c.b16 %v92, %v91
  %v96 = vpack.c.b16 %v94, %v93
  %v100 = vsel %vm31, %v75, 0
  %102 = vmatprep.subr.bf16.mxu0 0
  %103 = vmatpush1.bf16.msra.mxu0 0
  %104 = vmatprep.subr.bf16.mxu0 0
  %105 = vmatpush1.bf16.msra.mxu0 0
  %106 = vmatprep.subr.bf16.mxu0 0
  %107 = vmatpush1.bf16.msra.mxu0 0
  %108 = vmatprep.subr.bf16.mxu0 0
  %109 = vmatpush1.bf16.msra.mxu0 0
  %110 = vmatprep.subr.bf16.mxu0 0
  %111 = vmatpush1.bf16.msra.mxu0 0
  %112 = vmatprep.subr.bf16.mxu0 0
  %113 = vmatpush1.bf16.msra.mxu0 0
  %114 = vmatprep.subr.bf16.mxu0 0
  %115 = vmatpush1.bf16.msra.mxu0 %v96
  %116 = vmatprep.subr.bf16.mxu0 0
  %117 = vmatpush1.bf16.msra.mxu0 %v95
  %118 = vmatprep.subr.bf16.mxu0 0
  %119 = vmatpush2.bf16.msra.mxu0 0
  %120 = vmatprep.subr.bf16.mxu0 0
  %121 = vmatpush2.bf16.msra.mxu0 0
  %122 = vmatprep.subr.bf16.mxu0 0
  %123 = vmatpush2.bf16.msra.mxu0 0
  %124 = vmatprep.subr.bf16.mxu0 0
  %125 = vmatpush2.bf16.msra.mxu0 0
  %126 = vmatprep.subr.bf16.mxu0 0
  %127 = vmatpush2.bf16.msra.mxu0 0
  %128 = vmatprep.subr.bf16.mxu0 0
  %129 = vmatpush2.bf16.msra.mxu0 0
  %130 = vmatprep.subr.bf16.mxu0 0
  %131 = vmatpush2.bf16.msra.mxu0 0
  %132 = vmatprep.subr.bf16.mxu0 0
  %133 = vmatpush2.bf16.msra.mxu0 0
  %134 = vmatprep.mubr.bf16.mxu0 0
  %135 = vmatmul.mubr.bf16.gmra.mxu0 %v100
  %v136 = vpop.f32.mrf.mxu0
  %v137 = vadd.f32 %v85, %v136
  %v138 = vpop.f32.mrf.mxu0
  %v139 = vpop.f32.mrf.mxu0
  %v140 = vadd.f32 %v85, %v139
  %v141 = vpop.f32.mrf.mxu0
  %142 = vdwg.mxu0
  %v143 = vmul.f32 %v137, 0.5
  %v144 = vmul.f32 %v140, 0.5
  %v145 = vmul.f32 %v137, 0.70710677
  %v146 = vmul.f32 %v140, 0.70710677
  %v147 = vand.u32 2147483647, %v145
  %v148 = vand.u32 2147483647, %v146
  %v149 = vmul.f32 %v147, 0.3275911
  %v150 = vmul.f32 %v148, 0.3275911
  %v151 = vadd.f32 %v149, 1.0
  %v152 = vadd.f32 %v150, 1.0
  %v153 = vrcp.pop %v151
  %v154 = vrcp.pop %v152
  %v155 = vmul.f32 %v153, 1.0614054
  %v156 = vmul.f32 %v154, 1.0614054
  %v157 = vadd.f32 %v155, -1.4531521
  %v158 = vadd.f32 %v156, -1.4531521
  %v159 = vmul.f32 %v157, %v153
  %v160 = vmul.f32 %v158, %v154
  %v161 = vadd.f32 %v159, 1.4214138
  %v162 = vadd.f32 %v160, 1.4214138
  %v163 = vmul.f32 %v161, %v153
  %v164 = vmul.f32 %v162, %v154
  %v165 = vadd.f32 %v163, -0.28449672
  %v166 = vadd.f32 %v164, -0.28449672
  %v167 = vmul.f32 %v165, %v153
  %v168 = vmul.f32 %v166, %v154
  %v169 = vadd.f32 %v167, 0.2548296
  %v170 = vadd.f32 %v168, 0.2548296
  %v171 = vmul.f32 %v169, %v153
  %v172 = vmul.f32 %v170, %v154
  %v173 = vsub.f32 0.0, %v147
  %v174 = vsub.f32 0.0, %v148
  %v175 = vmul.f32 %v173, %v147
  %v176 = vmul.f32 %v174, %v148
  %v177 = vmul.f32 %v175, 1.442695
  %v178 = vpow.pop %v177
  %v179 = vmul.f32 %v176, 1.442695
  %v180 = vpow.pop %v179
  %v181 = vmul.f32 %v171, %v178
  %v182 = vmul.f32 %v172, %v180
  %v183 = vsub.f32 1.0, %v181
  %v184 = vsub.f32 1.0, %v182
  %vm185 = vcmp.ge.f32.partialorder %v145, 0.0
  %vm186 = vcmp.ge.f32.partialorder %v146, 0.0
  %v187 = vsub.f32 0.0, %v183
  %v188 = vsub.f32 0.0, %v184
  %v189 = vsel %vm185, %v183, %v187
  %v190 = vsel %vm186, %v184, %v188
  %v191 = vadd.f32 %v189, 1.0
  %v192 = vadd.f32 %v190, 1.0
  %v193 = vmul.f32 %v143, %v191
  %v194 = vmul.f32 %v144, %v192
  %v195 = vpack.c.bf16 %v194, %v193
  %v196 = vld [vmem:[%s5] sm:$0xf]
  %v197 = vld [vmem:[%s5 + $0x4] sm:$0xf]
  %v198 = vld [vmem:[%s5 + $0x8] sm:$0xf]
  %v199 = vld [vmem:[%s5 + $0xc] sm:$0xf]
  %v200 = vld [vmem:[%s5 + $0x10] sm:$0xf]
  %v201 = vld [vmem:[%s5 + $0x14] sm:$0xf]
  %v202 = vld [vmem:[%s5 + $0x18] sm:$0xf]
  %v203 = vld [vmem:[%s5 + $0x1c] sm:$0xf]
  %v204 = vld [vmem:[%s6] sm:$0x1]
  %v206 = vlaneseq
  %v207 = vshrl.u32 %v206, 7
  %v208 = vsub.s32 0, %v207
  %v209 = vrot.slane %v204, %v208
  %v219 = vunpack.c.l.b16 %v196
  %v220 = vunpack.c.l.b16 %v197
  %v221 = vunpack.c.l.b16 %v198
  %v222 = vunpack.c.l.b16 %v199
  %v223 = vunpack.c.l.b16 %v200
  %v224 = vunpack.c.l.b16 %v201
  %v225 = vunpack.c.l.b16 %v202
  %v226 = vunpack.c.l.b16 %v203
  %v227 = vpack.c.b16 %v220, %v219
  %v228 = vpack.c.b16 %v222, %v221
  %v229 = vpack.c.b16 %v224, %v223
  %v230 = vpack.c.b16 %v226, %v225
  %vm235 = vcmask 523264
  %v237 = vsel %vm235, %v195, 0
  %239 = vmatprep.subr.bf16.mxu0 0
  %240 = vmatpush1.bf16.msra.mxu0 0
  %241 = vmatprep.subr.bf16.mxu0 0
  %242 = vmatpush1.bf16.msra.mxu0 0
  %243 = vmatprep.subr.bf16.mxu0 0
  %244 = vmatpush1.bf16.msra.mxu0 0
  %245 = vmatprep.subr.bf16.mxu0 0
  %246 = vmatpush1.bf16.msra.mxu0 0
  %247 = vmatprep.subr.bf16.mxu0 0
  %248 = vmatpush1.bf16.msra.mxu0 %v230
  %249 = vmatprep.subr.bf16.mxu0 0
  %250 = vmatpush1.bf16.msra.mxu0 %v229
  %251 = vmatprep.subr.bf16.mxu0 0
  %252 = vmatpush1.bf16.msra.mxu0 %v228
  %253 = vmatprep.subr.bf16.mxu0 0
  %254 = vmatpush1.bf16.msra.mxu0 %v227
  %255 = vmatprep.subr.bf16.mxu0 0
  %256 = vmatpush2.bf16.msra.mxu0 0
  %257 = vmatprep.subr.bf16.mxu0 0
  %258 = vmatpush2.bf16.msra.mxu0 0
  %259 = vmatprep.subr.bf16.mxu0 0
  %260 = vmatpush2.bf16.msra.mxu0 0
  %261 = vmatprep.subr.bf16.mxu0 0
  %262 = vmatpush2.bf16.msra.mxu0 0
  %263 = vmatprep.subr.bf16.mxu0 0
  %264 = vmatpush2.bf16.msra.mxu0 0
  %265 = vmatprep.subr.bf16.mxu0 0
  %266 = vmatpush2.bf16.msra.mxu0 0
  %267 = vmatprep.subr.bf16.mxu0 0
  %268 = vmatpush2.bf16.msra.mxu0 0
  %269 = vmatprep.subr.bf16.mxu0 0
  %270 = vmatpush2.bf16.msra.mxu0 0
  %271 = vmatprep.mubr.bf16.mxu0 0
  %272 = vmatmul.mubr.bf16.gmra.mxu0 %v237
  %v273 = vpop.f32.mrf.mxu0
  %v274 = vadd.f32 %v209, %v273
  %v275 = vpop.f32.mrf.mxu0
  %v276 = vpop.f32.mrf.mxu0
  %v277 = vadd.f32 %v209, %v276
  %v278 = vpop.f32.mrf.mxu0
  %279 = vdwg.mxu0
  %v280 = vadd.f32 %v27, %v274
  %v281 = vadd.f32 %v28, %v277
  %282 = vst.msk [vmem:[%s7] sm:$0xff] %vm31, %v280
  %283 = vst.msk [vmem:[%s7 + $0x8] sm:$0xff] %vm31, %v281
  // Predicated region
  $region30: #{cross_modal_block.20} parent=0 // pred_check
    _
  $region31: #{cross_modal_block.20} parent=0 // pred_check_branch
    %285 = sbr.rel (0) target = $region33
  $region32: #{cross_modal_block.20} parent=0 // pred_region
    _
  $region33: #{cross_modal_block.20} parent=0 // pred_fallthru
    _
  // Predicated region
  $region34: #{cross_modal_block.20} parent=0 // pred_check
    _
  $region35: #{cross_modal_block.20} parent=0 // pred_check_branch
    %287 = sbr.rel (0) target = $region37
  $region36: #{cross_modal_block.20} parent=0 // pred_region
    _
  $region37: #{cross_modal_block.20} parent=0 // pred_fallthru
    _

// kernel: cross_modal_block.28
$region0: #{cross_modal_block.28}
  #allocation0 [shape = 'u32[]', space=smem, size = 0x4, offset = 0x4, fixed_abs, tag = 'smem constant byte address 0x4 - core index']
  #allocation1 [shape = 'u32[144,128]{1,0:T(1,128)}', space=vmem, size = 0x12000, scoped, tag = 'internal scratch']
  %s0 = inlined_call_operand.vmem [shape: f32[32,32], index: 0, kind: input, shape index: {}]
  %s1 = inlined_call_operand.vmem [shape: f32[32,32], index: 1, kind: input, shape index: {}]
  %s2 = inlined_call_operand.vmem [shape: f32[32,32], index: 2, kind: input, shape index: {}]
  %s3 = inlined_call_operand.vmem [shape: f32[1,32], index: 3, kind: input, shape index: {}]
  %s4 = inlined_call_operand.vmem [shape: f32[1,32], index: 4, kind: input, shape index: {}]
  %s5 = inlined_call_operand.vmem [shape: bf16[32,64], index: 5, kind: input, shape index: {}]
  %s6 = inlined_call_operand.vmem [shape: f32[1,64], index: 6, kind: input, shape index: {}]
  %s7 = inlined_call_operand.vmem [shape: bf16[64,32], index: 7, kind: input, shape index: {}]
  %s8 = inlined_call_operand.vmem [shape: f32[1,32], index: 8, kind: input, shape index: {}]
  %s9 = inlined_call_operand.hbm [shape: f32[32,32], index: 9, kind: output, shape index: {}]
  %s10 = sld [smem:[#allocation0]]
  $region46: #{cross_modal_block.28} parent=0
    _
  %s12 = ssub.s32 1, %s10
  %s13 = scalar_select 0, %s12, %s10
  $region1: #{cross_modal_block.28} parent=0
    #allocation2 [shape = 'u8[16384]{0}', space=vmem, size = 0x4000, scoped, tag = 'output window, operand 0, single buffered']
    #allocation3 [shape = 's32[1]{0}', space=sflag, size = 0x4, scoped, tag = 'scoped memory for cross_modal_block.28']
    %14 = vsyncpa [#allocation3], 0
    // Predicated region
    $region2: #{cross_modal_block.28} parent=1 // pred_check
      _
    $region3: #{cross_modal_block.28} parent=1 // pred_check_branch
      %16 = sbr.rel (0) target = $region5
    $region4: #{cross_modal_block.28} parent=1 // pred_region
      _
    $region5: #{cross_modal_block.28} parent=1 // pred_fallthru
      _
    // Predicated region
    $region6: #{cross_modal_block.28} parent=1 // pred_check
      _
    $region7: #{cross_modal_block.28} parent=1 // pred_check_branch
      %18 = sbr.rel (0) target = $region9
    $region8: #{cross_modal_block.28} parent=1 // pred_region
      _
    $region9: #{cross_modal_block.28} parent=1 // pred_fallthru
      _
    // Predicated region
    $region10: #{cross_modal_block.28} parent=1 // pred_check
      _
    $region11: #{cross_modal_block.28} parent=1 // pred_check_branch
      %20 = sbr.rel (0) target = $region13
    $region12: #{cross_modal_block.28} parent=1 // pred_region
      _
    $region13: #{cross_modal_block.28} parent=1 // pred_fallthru
      _
    // Predicated region
    $region14: #{cross_modal_block.28} parent=1 // pred_check
      _
    $region15: #{cross_modal_block.28} parent=1 // pred_check_branch
      %22 = sbr.rel (0) target = $region17
    $region16: #{cross_modal_block.28} parent=1 // pred_region
      _
    $region17: #{cross_modal_block.28} parent=1 // pred_fallthru
      _
    // Predicated region
    $region18: #{cross_modal_block.28} parent=1 // pred_check
      _
    $region19: #{cross_modal_block.28} parent=1 // pred_check_branch
      %24 = sbr.rel (0) target = $region21
    $region20: #{cross_modal_block.28} parent=1 // pred_region
      _
    $region21: #{cross_modal_block.28} parent=1 // pred_fallthru
      _
    // Predicated region
    $region22: #{cross_modal_block.28} parent=1 // pred_check
      _
    $region23: #{cross_modal_block.28} parent=1 // pred_check_branch
      %26 = sbr.rel (0) target = $region25
    $region24: #{cross_modal_block.28} parent=1 // pred_region
      _
    $region25: #{cross_modal_block.28} parent=1 // pred_fallthru
      _
    // Predicated region
    $region26: #{cross_modal_block.28} parent=1 // pred_check
      _
    $region27: #{cross_modal_block.28} parent=1 // pred_check_branch
      %28 = sbr.rel (0) target = $region29
    $region28: #{cross_modal_block.28} parent=1 // pred_region
      _
    $region29: #{cross_modal_block.28} parent=1 // pred_fallthru
      _
    // Predicated region
    $region30: #{cross_modal_block.28} parent=1 // pred_check
      _
    $region31: #{cross_modal_block.28} parent=1 // pred_check_branch
      %30 = sbr.rel (0) target = $region33
    $region32: #{cross_modal_block.28} parent=1 // pred_region
      _
    $region33: #{cross_modal_block.28} parent=1 // pred_fallthru
      _
    // Predicated region
    $region34: #{cross_modal_block.28} parent=1 // pred_check
      _
    $region35: #{cross_modal_block.28} parent=1 // pred_check_branch
      %32 = sbr.rel (0) target = $region37
    $region36: #{cross_modal_block.28} parent=1 // pred_region
      _
    $region37: #{cross_modal_block.28} parent=1 // pred_fallthru
      _
    %v34 = vld [vmem:[%s0] sm:$0xff]
    %v35 = vld [vmem:[%s0 + $0x8] sm:$0xff]
    %v36 = vld [vmem:[%s0 + $0x10] sm:$0xff]
    %v37 = vld [vmem:[%s0 + $0x18] sm:$0xff]
    %v38 = vld [vmem:[%s1] sm:$0xff]
    %v39 = vld [vmem:[%s1 + $0x8] sm:$0xff]
    %v40 = vld [vmem:[%s1 + $0x10] sm:$0xff]
    %v41 = vld [vmem:[%s1 + $0x18] sm:$0xff]
    %v42 = vadd.f32 %v34, %v38
    %v43 = vadd.f32 %v35, %v39
    %v44 = vadd.f32 %v36, %v40
    %v45 = vadd.f32 %v37, %v41
    %v46 = vld [vmem:[%s2] sm:$0xff]
    %v47 = vld [vmem:[%s2 + $0x8] sm:$0xff]
    %v48 = vld [vmem:[%s2 + $0x10] sm:$0xff]
    %v49 = vld [vmem:[%s2 + $0x18] sm:$0xff]
    %v50 = vadd.f32 %v42, %v46
    %v51 = vadd.f32 %v43, %v47
    %v52 = vadd.f32 %v44, %v48
    %v53 = vadd.f32 %v45, %v49
    %v54 = vrcp.pop 3.0
    %v55 = vmul.f32 %v50, %v54
    %v56 = vmul.f32 %v51, %v54
    %v57 = vmul.f32 %v52, %v54
    %v58 = vmul.f32 %v53, %v54
    %v59 = vld [vmem:[%s3] sm:$0x1]
    %v60 = vld [vmem:[%s4] sm:$0x1]
    %vm61 = vcmask 261120
    %v62 = vsel %vm61, %v55, 0.0
    %63 = vadd.xlane.f32.xlu0 %v62
    %v64 = vpop.xlane.xlu0 %63
    %v65 = vsel %vm61, %v56, 0.0
    %66 = vadd.xlane.f32.xlu0 %v65
    %v67 = vpop.xlane.xlu0 %66
    %v68 = vsel %vm61, %v57, 0.0
    %69 = vadd.xlane.f32.xlu0 %v68
    %v70 = vpop.xlane.xlu0 %69
    %v71 = vsel %vm61, %v58, 0.0
    %72 = vadd.xlane.f32.xlu0 %v71
    %v73 = vpop.xlane.xlu0 %72
    %v74 = vrcp.pop 32.0
    %v75 = vmul.f32 %v64, %v74
    %v76 = vmul.f32 %v67, %v74
    %v77 = vmul.f32 %v70, %v74
    %v78 = vmul.f32 %v73, %v74
    %v79 = vsub.f32 %v55, %v75
    %v80 = vsub.f32 %v56, %v76
    %v81 = vsub.f32 %v57, %v77
    %v82 = vsub.f32 %v58, %v78
    %v83 = vmul.f32 %v79, %v79
    %v84 = vmul.f32 %v80, %v80
    %v85 = vmul.f32 %v81, %v81
    %v86 = vmul.f32 %v82, %v82
    %v87 = vsel %vm61, %v83, 0.0
    %88 = vadd.xlane.f32.xlu0 %v87
    %v89 = vpop.xlane.xlu0 %88
    %v90 = vsel %vm61, %v84, 0.0
    %91 = vadd.xlane.f32.xlu0 %v90
    %v92 = vpop.xlane.xlu0 %91
    %v93 = vsel %vm61, %v85, 0.0
    %94 = vadd.xlane.f32.xlu0 %v93
    %v95 = vpop.xlane.xlu0 %94
    %v96 = vsel %vm61, %v86, 0.0
    %97 = vadd.xlane.f32.xlu0 %v96
    %v98 = vpop.xlane.xlu0 %97
    %v99 = vmul.f32 %v89, %v74
    %v100 = vmul.f32 %v92, %v74
    %v101 = vmul.f32 %v95, %v74
    %v102 = vmul.f32 %v98, %v74
    %v103 = vadd.f32 %v99, 1e-05
    %v104 = vadd.f32 %v100, 1e-05
    %v105 = vadd.f32 %v101, 1e-05
    %v106 = vadd.f32 %v102, 1e-05
    %v107 = vrsqrt.pop %v103
    %v108 = vrsqrt.pop %v104
    %v109 = vrsqrt.pop %v105
    %v110 = vrsqrt.pop %v106
    %v111 = vmul.f32 %v79, %v107
    %v112 = vmul.f32 %v80, %v108
    %v113 = vmul.f32 %v81, %v109
    %v114 = vmul.f32 %v82, %v110
    %v116 = vlaneseq
    %v117 = vshrl.u32 %v116, 7
    %v118 = vsub.s32 0, %v117
    %v119 = vrot.slane %v59, %v118
    %v121 = vmul.f32 %v111, %v119
    %v122 = vmul.f32 %v112, %v119
    %v123 = vmul.f32 %v113, %v119
    %v124 = vmul.f32 %v114, %v119
    %v126 = vlaneseq
    %v127 = vshrl.u32 %v126, 7
    %v128 = vsub.s32 0, %v127
    %v129 = vrot.slane %v60, %v128
    %v131 = vadd.f32 %v121, %v129
    %v132 = vadd.f32 %v122, %v129
    %v133 = vadd.f32 %v123, %v129
    %v134 = vadd.f32 %v124, %v129
    %v135 = vpack.c.bf16 %v132, %v131
    %v136 = vpack.c.bf16 %v134, %v133
    %v137 = vld [vmem:[%s5] sm:$0xf]
    %v138 = vld [vmem:[%s5 + $0x4] sm:$0xf]
    %v139 = vld [vmem:[%s5 + $0x8] sm:$0xf]
    %v140 = vld [vmem:[%s5 + $0xc] sm:$0xf]
    %v141 = vld [vmem:[%s6] sm:$0x1]
    %v143 = vlaneseq
    %v144 = vshrl.u32 %v143, 7
    %v145 = vsub.s32 0, %v144
    %v146 = vrot.slane %v141, %v145
    %v152 = vunpack.c.l.b16 %v137
    %v153 = vunpack.c.l.b16 %v138
    %v154 = vunpack.c.l.b16 %v139
    %v155 = vunpack.c.l.b16 %v140
    %v156 = vpack.c.b16 %v153, %v152
    %v157 = vpack.c.b16 %v155, %v154
    %v161 = vsel %vm61, %v135, 0
    %v164 = vsel %vm61, %v136, 0
    %166 = vmatprep.subr.bf16.mxu0 0
    %167 = vmatpush1.bf16.msra.mxu0 0
    %168 = vmatprep.subr.bf16.mxu0 0
    %169 = vmatpush1.bf16.msra.mxu0 0
    %170 = vmatprep.subr.bf16.mxu0 0
    %171 = vmatpush1.bf16.msra.mxu0 0
    %172 = vmatprep.subr.bf16.mxu0 0
    %173 = vmatpush1.bf16.msra.mxu0 0
    %174 = vmatprep.subr.bf16.mxu0 0
    %175 = vmatpush1.bf16.msra.mxu0 0
    %176 = vmatprep.subr.bf16.mxu0 0
    %177 = vmatpush1.bf16.msra.mxu0 0
    %178 = vmatprep.subr.bf16.mxu0 0
    %179 = vmatpush1.bf16.msra.mxu0 %v157
    %180 = vmatprep.subr.bf16.mxu0 0
    %181 = vmatpush1.bf16.msra.mxu0 %v156
    %182 = vmatprep.subr.bf16.mxu0 0
    %183 = vmatpush2.bf16.msra.mxu0 0
    %184 = vmatprep.subr.bf16.mxu0 0
    %185 = vmatpush2.bf16.msra.mxu0 0
    %186 = vmatprep.subr.bf16.mxu0 0
    %187 = vmatpush2.bf16.msra.mxu0 0
    %188 = vmatprep.subr.bf16.mxu0 0
    %189 = vmatpush2.bf16.msra.mxu0 0
    %190 = vmatprep.subr.bf16.mxu0 0
    %191 = vmatpush2.bf16.msra.mxu0 0
    %192 = vmatprep.subr.bf16.mxu0 0
    %193 = vmatpush2.bf16.msra.mxu0 0
    %194 = vmatprep.subr.bf16.mxu0 0
    %195 = vmatpush2.bf16.msra.mxu0 0
    %196 = vmatprep.subr.bf16.mxu0 0
    %197 = vmatpush2.bf16.msra.mxu0 0
    %198 = vmatprep.mubr.bf16.mxu0 0
    %199 = vmatmul.mubr.bf16.gmra.mxu0 %v161
    %v200 = vpop.f32.mrf.mxu0
    %v201 = vadd.f32 %v146, %v200
    %v202 = vpop.f32.mrf.mxu0
    %v203 = vpop.f32.mrf.mxu0
    %v204 = vadd.f32 %v146, %v203
    %v205 = vpop.f32.mrf.mxu0
    %206 = vmatprep.mubr.bf16.mxu0 0
    %207 = vmatmul.mubr.bf16.gmra.mxu0 %v164
    %v208 = vpop.f32.mrf.mxu0
    %v209 = vadd.f32 %v146, %v208
    %v210 = vpop.f32.mrf.mxu0
    %v211 = vpop.f32.mrf.mxu0
    %v212 = vadd.f32 %v146, %v211
    %v213 = vpop.f32.mrf.mxu0
    %214 = vdwg.mxu0
    %v215 = vmul.f32 %v201, 0.5
    %v216 = vmul.f32 %v204, 0.5
    %v217 = vmul.f32 %v209, 0.5
    %v218 = vmul.f32 %v212, 0.5
    %v219 = vmul.f32 %v201, 0.70710677
    %v220 = vmul.f32 %v204, 0.70710677
    %v221 = vmul.f32 %v209, 0.70710677
    %v222 = vmul.f32 %v212, 0.70710677
    %v223 = vand.u32 2147483647, %v219
    %v224 = vand.u32 2147483647, %v220
    %v225 = vand.u32 2147483647, %v221
    %v226 = vand.u32 2147483647, %v222
    %v227 = vmul.f32 %v223, 0.3275911
    %v228 = vmul.f32 %v224, 0.3275911
    %v229 = vmul.f32 %v225, 0.3275911
    %v230 = vmul.f32 %v226, 0.3275911
    %v231 = vadd.f32 %v227, 1.0
    %v232 = vadd.f32 %v228, 1.0
    %v233 = vadd.f32 %v229, 1.0
    %v234 = vadd.f32 %v230, 1.0
    %v235 = vrcp.pop %v231
    %v236 = vrcp.pop %v232
    %v237 = vrcp.pop %v233
    %v238 = vrcp.pop %v234
    %v239 = vmul.f32 %v235, 1.0614054
    %v240 = vmul.f32 %v236, 1.0614054
    %v241 = vmul.f32 %v237, 1.0614054
    %v242 = vmul.f32 %v238, 1.0614054
    %v243 = vadd.f32 %v239, -1.4531521
    %v244 = vadd.f32 %v240, -1.4531521
    %v245 = vadd.f32 %v241, -1.4531521
    %v246 = vadd.f32 %v242, -1.4531521
    %v247 = vmul.f32 %v243, %v235
    %v248 = vmul.f32 %v244, %v236
    %v249 = vmul.f32 %v245, %v237
    %v250 = vmul.f32 %v246, %v238
    %v251 = vadd.f32 %v247, 1.4214138
    %v252 = vadd.f32 %v248, 1.4214138
    %v253 = vadd.f32 %v249, 1.4214138
    %v254 = vadd.f32 %v250, 1.4214138
    %v255 = vmul.f32 %v251, %v235
    %v256 = vmul.f32 %v252, %v236
    %v257 = vmul.f32 %v253, %v237
    %v258 = vmul.f32 %v254, %v238
    %v259 = vadd.f32 %v255, -0.28449672
    %v260 = vadd.f32 %v256, -0.28449672
    %v261 = vadd.f32 %v257, -0.28449672
    %v262 = vadd.f32 %v258, -0.28449672
    %v263 = vmul.f32 %v259, %v235
    %v264 = vmul.f32 %v260, %v236
    %v265 = vmul.f32 %v261, %v237
    %v266 = vmul.f32 %v262, %v238
    %v267 = vadd.f32 %v263, 0.2548296
    %v268 = vadd.f32 %v264, 0.2548296
    %v269 = vadd.f32 %v265, 0.2548296
    %v270 = vadd.f32 %v266, 0.2548296
    %v271 = vmul.f32 %v267, %v235
    %v272 = vmul.f32 %v268, %v236
    %v273 = vmul.f32 %v269, %v237
    %v274 = vmul.f32 %v270, %v238
    %v275 = vsub.f32 0.0, %v223
    %v276 = vsub.f32 0.0, %v224
    %v277 = vsub.f32 0.0, %v225
    %v278 = vsub.f32 0.0, %v226
    %v279 = vmul.f32 %v275, %v223
    %v280 = vmul.f32 %v276, %v224
    %v281 = vmul.f32 %v277, %v225
    %v282 = vmul.f32 %v278, %v226
    %v283 = vmul.f32 %v279, 1.442695
    %v284 = vpow.pop %v283
    %v285 = vmul.f32 %v280, 1.442695
    %v286 = vpow.pop %v285
    %v287 = vmul.f32 %v281, 1.442695
    %v288 = vpow.pop %v287
    %v289 = vmul.f32 %v282, 1.442695
    %v290 = vpow.pop %v289
    %v291 = vmul.f32 %v271, %v284
    %v292 = vmul.f32 %v272, %v286
    %v293 = vmul.f32 %v273, %v288
    %v294 = vmul.f32 %v274, %v290
    %v295 = vsub.f32 1.0, %v291
    %v296 = vsub.f32 1.0, %v292
    %v297 = vsub.f32 1.0, %v293
    %v298 = vsub.f32 1.0, %v294
    %vm299 = vcmp.ge.f32.partialorder %v219, 0.0
    %vm300 = vcmp.ge.f32.partialorder %v220, 0.0
    %vm301 = vcmp.ge.f32.partialorder %v221, 0.0
    %vm302 = vcmp.ge.f32.partialorder %v222, 0.0
    %v303 = vsub.f32 0.0, %v295
    %v304 = vsub.f32 0.0, %v296
    %v305 = vsub.f32 0.0, %v297
    %v306 = vsub.f32 0.0, %v298
    %v307 = vsel %vm299, %v295, %v303
    %v308 = vsel %vm300, %v296, %v304
    %v309 = vsel %vm301, %v297, %v305
    %v310 = vsel %vm302, %v298, %v306
    %v311 = vadd.f32 %v307, 1.0
    %v312 = vadd.f32 %v308, 1.0
    %v313 = vadd.f32 %v309, 1.0
    %v314 = vadd.f32 %v310, 1.0
    %v315 = vmul.f32 %v215, %v311
    %v316 = vmul.f32 %v216, %v312
    %v317 = vmul.f32 %v217, %v313
    %v318 = vmul.f32 %v218, %v314
    %v319 = vpack.c.bf16 %v316, %v315
    %v320 = vpack.c.bf16 %v318, %v317
    %v321 = vld [vmem:[%s7] sm:$0xf]
    %v322 = vld [vmem:[%s7 + $0x4] sm:$0xf]
    %v323 = vld [vmem:[%s7 + $0x8] sm:$0xf]
    %v324 = vld [vmem:[%s7 + $0xc] sm:$0xf]
    %v325 = vld [vmem:[%s7 + $0x10] sm:$0xf]
    %v326 = vld [vmem:[%s7 + $0x14] sm:$0xf]
    %v327 = vld [vmem:[%s7 + $0x18] sm:$0xf]
    %v328 = vld [vmem:[%s7 + $0x1c] sm:$0xf]
    %v329 = vld [vmem:[%s8] sm:$0x1]
    %v331 = vlaneseq
    %v332 = vshrl.u32 %v331, 7
    %v333 = vsub.s32 0, %v332
    %v334 = vrot.slane %v329, %v333
    %v344 = vunpack.c.l.b16 %v321
    %v345 = vunpack.c.l.b16 %v322
    %v346 = vunpack.c.l.b16 %v323
    %v347 = vunpack.c.l.b16 %v324
    %v348 = vunpack.c.l.b16 %v325
    %v349 = vunpack.c.l.b16 %v326
    %v350 = vunpack.c.l.b16 %v327
    %v351 = vunpack.c.l.b16 %v328
    %v352 = vpack.c.b16 %v345, %v344
    %v353 = vpack.c.b16 %v347, %v346
    %v354 = vpack.c.b16 %v349, %v348
    %v355 = vpack.c.b16 %v351, %v350
    %vm360 = vcmask 523264
    %v362 = vsel %vm360, %v319, 0
    %v365 = vsel %vm360, %v320, 0
    %367 = vmatprep.subr.bf16.mxu0 0
    %368 = vmatpush1.bf16.msra.mxu0 0
    %369 = vmatprep.subr.bf16.mxu0 0
    %370 = vmatpush1.bf16.msra.mxu0 0
    %371 = vmatprep.subr.bf16.mxu0 0
    %372 = vmatpush1.bf16.msra.mxu0 0
    %373 = vmatprep.subr.bf16.mxu0 0
    %374 = vmatpush1.bf16.msra.mxu0 0
    %375 = vmatprep.subr.bf16.mxu0 0
    %376 = vmatpush1.bf16.msra.mxu0 %v355
    %377 = vmatprep.subr.bf16.mxu0 0
    %378 = vmatpush1.bf16.msra.mxu0 %v354
    %379 = vmatprep.subr.bf16.mxu0 0
    %380 = vmatpush1.bf16.msra.mxu0 %v353
    %381 = vmatprep.subr.bf16.mxu0 0
    %382 = vmatpush1.bf16.msra.mxu0 %v352
    %383 = vmatprep.subr.bf16.mxu0 0
    %384 = vmatpush2.bf16.msra.mxu0 0
    %385 = vmatprep.subr.bf16.mxu0 0
    %386 = vmatpush2.bf16.msra.mxu0 0
    %387 = vmatprep.subr.bf16.mxu0 0
    %388 = vmatpush2.bf16.msra.mxu0 0
    %389 = vmatprep.subr.bf16.mxu0 0
    %390 = vmatpush2.bf16.msra.mxu0 0
    %391 = vmatprep.subr.bf16.mxu0 0
    %392 = vmatpush2.bf16.msra.mxu0 0
    %393 = vmatprep.subr.bf16.mxu0 0
    %394 = vmatpush2.bf16.msra.mxu0 0
    %395 = vmatprep.subr.bf16.mxu0 0
    %396 = vmatpush2.bf16.msra.mxu0 0
    %397 = vmatprep.subr.bf16.mxu0 0
    %398 = vmatpush2.bf16.msra.mxu0 0
    %399 = vmatprep.mubr.bf16.mxu0 0
    %400 = vmatmul.mubr.bf16.gmra.mxu0 %v362
    %v401 = vpop.f32.mrf.mxu0
    %v402 = vadd.f32 %v334, %v401
    %v403 = vpop.f32.mrf.mxu0
    %v404 = vpop.f32.mrf.mxu0
    %v405 = vadd.f32 %v334, %v404
    %v406 = vpop.f32.mrf.mxu0
    %407 = vmatprep.mubr.bf16.mxu0 0
    %408 = vmatmul.mubr.bf16.gmra.mxu0 %v365
    %v409 = vpop.f32.mrf.mxu0
    %v410 = vadd.f32 %v334, %v409
    %v411 = vpop.f32.mrf.mxu0
    %v412 = vpop.f32.mrf.mxu0
    %v413 = vadd.f32 %v334, %v412
    %v414 = vpop.f32.mrf.mxu0
    %415 = vdwg.mxu0
    %v416 = vadd.f32 %v55, %v402
    %v417 = vadd.f32 %v56, %v405
    %v418 = vadd.f32 %v57, %v410
    %v419 = vadd.f32 %v58, %v413
    %420 = vst.msk [vmem:[#allocation2] sm:$0xff] %vm61, %v416
    %421 = vst.msk [vmem:[#allocation2 + $0x8] sm:$0xff] %vm61, %v417
    %422 = vst.msk [vmem:[#allocation2 + $0x10] sm:$0xff] %vm61, %v418
    %423 = vst.msk [vmem:[#allocation2 + $0x18] sm:$0xff] %vm61, %v419
    // Predicated region
    $region38: #{cross_modal_block.28} parent=1 // pred_check
      _
    $region39: #{cross_modal_block.28} parent=1 // pred_check_branch
      %425 = sbr.rel (0) target = $region41
    $region40: #{cross_modal_block.28} parent=1 // pred_region
      %s427 = ssub.s32 512, 512
      %428 = vsyncadd [#allocation3], %s427
      %s429 = sshll.u32 [#allocation2], 4
      %s430 = int_to_ptr.vmem [resolvable:$true] %s429
      %435 = dma.vmem_to_hbm [thread:$0]  %s430, 512, %s9, [#allocation3], 128, 128, 8
    $region41: #{cross_modal_block.28} parent=1 // pred_fallthru
      _
    // Predicated region
    $region42: #{cross_modal_block.28} parent=1 // pred_check
      _
    $region43: #{cross_modal_block.28} parent=1 // pred_check_branch
      %437 = sbr.rel (0) target = $region45
    $region44: #{cross_modal_block.28} parent=1 // pred_region
      %438 = dma.done [#allocation3], 512
    $region45: #{cross_modal_block.28} parent=1 // pred_fallthru
      _
    %439 = vsyncpa [#allocation3], 1

// kernel: cross_modal_block.24
$region0: #{cross_modal_block.24}
  #allocation0 [shape = 'u32[]', space=smem, size = 0x4, offset = 0x4, fixed_abs, tag = 'smem constant byte address 0x4 - core index']
  #allocation1 [shape = 'u32[144,128]{1,0:T(1,128)}', space=vmem, size = 0x12000, scoped, tag = 'internal scratch']
  %s0 = inlined_call_operand.vmem [shape: f32[2,16,32], index: 0, kind: input, shape index: {}]
  %s1 = inlined_call_operand.vmem [shape: f32[2,8,32], index: 1, kind: input, shape index: {}]
  %s2 = inlined_call_operand.vmem [shape: f32[1,32], index: 2, kind: input, shape index: {}]
  %s3 = inlined_call_operand.vmem [shape: f32[1,32], index: 3, kind: input, shape index: {}]
  %s4 = inlined_call_operand.vmem [shape: f32[1,32], index: 4, kind: input, shape index: {}]
  %s5 = inlined_call_operand.vmem [shape: f32[1,32], index: 5, kind: input, shape index: {}]
  %s6 = inlined_call_operand.vmem [shape: bf16[32,32], index: 6, kind: input, shape index: {}]
  %s7 = inlined_call_operand.vmem [shape: f32[1,32], index: 7, kind: input, shape index: {}]
  %s8 = inlined_call_operand.vmem [shape: bf16[32,64], index: 8, kind: input, shape index: {}]
  %s9 = inlined_call_operand.vmem [shape: f32[1,64], index: 9, kind: input, shape index: {}]
  %s10 = inlined_call_operand.vmem [shape: bf16[32,32], index: 10, kind: input, shape index: {}]
  %s11 = inlined_call_operand.vmem [shape: f32[1,32], index: 11, kind: input, shape index: {}]
  %s12 = inlined_call_operand.vmem [shape: f32[2,16,32], index: 12, kind: output, shape index: {}]
  %s13 = sld [smem:[#allocation0]]
  $region81: #{cross_modal_block.24} parent=0
    _
  %s15 = ssub.s32 1, %s13
  %s16 = scalar_select 0, %s15, %s13
  loop: start=0, step=1, limit=4
  $region2: #{cross_modal_block.24} parent=0 // loop_pre_header
    _
  $region3: #{cross_modal_block.24} parent=0 // loop_header
    %s18 = sphi 0, %s22
    %p19 = scmp.ge.s32.totalorder %s18, 4
    %s28 = sphi 0, %s30
    %s31 = sphi 0, %s28
    %s32 = sphi 0, %s31
    %s48 = sphi 0, %s32
    %s54 = sphi 0, %s56
    %s57 = sphi 0, %s54
    %s58 = sphi 0, %s57
    %s74 = sphi 0, %s58
    %s78 = sphi 0, %s78
    %s80 = sphi 0, %s78
    %s81 = sphi 0, %s80
    %s95 = sphi 0, %s81
    %s99 = sphi 0, %s99
    %s101 = sphi 0, %s99
    %s102 = sphi 0, %s101
    %s116 = sphi 0, %s102
    %s120 = sphi 0, %s120
    %s122 = sphi 0, %s120
    %s123 = sphi 0, %s122
    %s137 = sphi 0, %s123
    %s141 = sphi 0, %s141
    %s143 = sphi 0, %s141
    %s144 = sphi 0, %s143
    %s158 = sphi 0, %s144
    %s162 = sphi 0, %s162
    %s164 = sphi 0, %s162
    %s165 = sphi 0, %s164
    %s179 = sphi 0, %s165
    %s183 = sphi 0, %s183
    %s185 = sphi 0, %s183
    %s186 = sphi 0, %s185
    %s200 = sphi 0, %s186
    %s204 = sphi 0, %s204
    %s206 = sphi 0, %s204
    %s207 = sphi 0, %s206
    %s221 = sphi 0, %s207
    %s225 = sphi 0, %s225
    %s227 = sphi 0, %s225
    %s228 = sphi 0, %s227
    %s242 = sphi 0, %s228
    %s246 = sphi 0, %s246
    %s248 = sphi 0, %s246
    %s249 = sphi 0, %s248
    %s263 = sphi 0, %s249
    %s267 = sphi 0, %s267
    %s269 = sphi 0, %s267
    %s270 = sphi 0, %s269
    %s284 = sphi 0, %s270
    %s290 = sphi 0, %s292
    %s293 = sphi 0, %s290
    %s294 = sphi 0, %s293
    %s310 = sphi 0, %s294
  $region4: #{cross_modal_block.24} parent=0 // loop_header_branch
    %21 = sbr.rel (%p19) target = $region8
  $region5: #{cross_modal_block.24} parent=0 // loop_body
    %s23 = ssub.s32 %s18, 1
    %s24 = ssub.s32 %s18, 2
    %s25 = sadd.s32 %s18, 1
    %s26 = ssub.s32 %s18, %s25
    %p27 = scmp.eq.s32.totalorder %s26, 0
    %s29 = sadd.s32 %s28, 1
    %s30 = scalar_select %p27, %s28, %s29
    %p33 = pneg %p27
    %p34 = scmp.eq.s32.totalorder %s18, 1
    %p35 = por %p33, %p34
    %p36 = scmp.ne.s32.totalorder %s28, %s31
    %p37 = scmp.eq.s32.totalorder %s18, 0
    %p38 = por %p36, %p37
    %p39 = scmp.ne.s32.totalorder %s28, %s31
    %p40 = scmp.eq.s32.totalorder %s23, 1
    %p41 = por %p39, %p40
    %p42 = scmp.ne.s32.totalorder %s31, %s32
    %p43 = scmp.eq.s32.totalorder %s23, 0
    %p44 = por %p42, %p43
    %p45 = scmp.ne.s32.totalorder %s31, %s32
    %p46 = scmp.eq.s32.totalorder %s24, 1
    %p47 = por %p45, %p46
    %p49 = scmp.ne.s32.totalorder %s32, %s48
    %p50 = scmp.eq.s32.totalorder %s24, 0
    %p51 = por %p49, %p50
    %s52 = ssub.s32 %s18, %s25
    %p53 = scmp.eq.s32.totalorder %s52, 0
    %s55 = sadd.s32 %s54, 1
    %s56 = scalar_select %p53, %s54, %s55
    %p59 = pneg %p53
    %p60 = scmp.eq.s32.totalorder %s18, 1
    %p61 = por %p59, %p60
    %p62 = scmp.ne.s32.totalorder %s54, %s57
    %p63 = scmp.eq.s32.totalorder %s18, 0
    %p64 = por %p62, %p63
    %p65 = scmp.ne.s32.totalorder %s54, %s57
    %p66 = scmp.eq.s32.totalorder %s23, 1
    %p67 = por %p65, %p66
    %p68 = scmp.ne.s32.totalorder %s57, %s58
    %p69 = scmp.eq.s32.totalorder %s23, 0
    %p70 = por %p68, %p69
    %p71 = scmp.ne.s32.totalorder %s57, %s58
    %p72 = scmp.eq.s32.totalorder %s24, 1
    %p73 = por %p71, %p72
    %p75 = scmp.ne.s32.totalorder %s58, %s74
    %p76 = scmp.eq.s32.totalorder %s24, 0
    %p77 = por %p75, %p76
    %s79 = sadd.s32 %s78, 1
    %p82 = scmp.eq.s32.totalorder %s18, 1
    %p83 = scmp.ne.s32.totalorder %s78, %s80
    %p84 = scmp.eq.s32.totalorder %s18, 0
    %p85 = por %p83, %p84
    %p86 = scmp.ne.s32.totalorder %s78, %s80
    %p87 = scmp.eq.s32.totalorder %s23, 1
    %p88 = por %p86, %p87
    %p89 = scmp.ne.s32.totalorder %s80, %s81
    %p90 = scmp.eq.s32.totalorder %s23, 0
    %p91 = por %p89, %p90
    %p92 = scmp.ne.s32.totalorder %s80, %s81
    %p93 = scmp.eq.s32.totalorder %s24, 1
    %p94 = por %p92, %p93
    %p96 = scmp.ne.s32.totalorder %s81, %s95
    %p97 = scmp.eq.s32.totalorder %s24, 0
    %p98 = por %p96, %p97
    %s100 = sadd.s32 %s99, 1
    %p103 = scmp.eq.s32.totalorder %s18, 1
    %p104 = scmp.ne.s32.totalorder %s99, %s101
    %p105 = scmp.eq.s32.totalorder %s18, 0
    %p106 = por %p104, %p105
    %p107 = scmp.ne.s32.totalorder %s99, %s101
    %p108 = scmp.eq.s32.totalorder %s23, 1
    %p109 = por %p107, %p108
    %p110 = scmp.ne.s32.totalorder %s101, %s102
    %p111 = scmp.eq.s32.totalorder %s23, 0
    %p112 = por %p110, %p111
    %p113 = scmp.ne.s32.totalorder %s101, %s102
    %p114 = scmp.eq.s32.totalorder %s24, 1
    %p115 = por %p113, %p114
    %p117 = scmp.ne.s32.totalorder %s102, %s116
    %p118 = scmp.eq.s32.totalorder %s24, 0
    %p119 = por %p117, %p118
    %s121 = sadd.s32 %s120, 1
    %p124 = scmp.eq.s32.totalorder %s18, 1
    %p125 = scmp.ne.s32.totalorder %s120, %s122
    %p126 = scmp.eq.s32.totalorder %s18, 0
    %p127 = por %p125, %p126
    %p128 = scmp.ne.s32.totalorder %s120, %s122
    %p129 = scmp.eq.s32.totalorder %s23, 1
    %p130 = por %p128, %p129
    %p131 = scmp.ne.s32.totalorder %s122, %s123
    %p132 = scmp.eq.s32.totalorder %s23, 0
    %p133 = por %p131, %p132
    %p134 = scmp.ne.s32.totalorder %s122, %s123
    %p135 = scmp.eq.s32.totalorder %s24, 1
    %p136 = por %p134, %p135
    %p138 = scmp.ne.s32.totalorder %s123, %s137
    %p139 = scmp.eq.s32.totalorder %s24, 0
    %p140 = por %p138, %p139
    %s142 = sadd.s32 %s141, 1
    %p145 = scmp.eq.s32.totalorder %s18, 1
    %p146 = scmp.ne.s32.totalorder %s141, %s143
    %p147 = scmp.eq.s32.totalorder %s18, 0
    %p148 = por %p146, %p147
    %p149 = scmp.ne.s32.totalorder %s141, %s143
    %p150 = scmp.eq.s32.totalorder %s23, 1
    %p151 = por %p149, %p150
    %p152 = scmp.ne.s32.totalorder %s143, %s144
    %p153 = scmp.eq.s32.totalorder %s23, 0
    %p154 = por %p152, %p153
    %p155 = scmp.ne.s32.totalorder %s143, %s144
    %p156 = scmp.eq.s32.totalorder %s24, 1
    %p157 = por %p155, %p156
    %p159 = scmp.ne.s32.totalorder %s144, %s158
    %p160 = scmp.eq.s32.totalorder %s24, 0
    %p161 = por %p159, %p160
    %s163 = sadd.s32 %s162, 1
    %p166 = scmp.eq.s32.totalorder %s18, 1
    %p167 = scmp.ne.s32.totalorder %s162, %s164
    %p168 = scmp.eq.s32.totalorder %s18, 0
    %p169 = por %p167, %p168
    %p170 = scmp.ne.s32.totalorder %s162, %s164
    %p171 = scmp.eq.s32.totalorder %s23, 1
    %p172 = por %p170, %p171
    %p173 = scmp.ne.s32.totalorder %s164, %s165
    %p174 = scmp.eq.s32.totalorder %s23, 0
    %p175 = por %p173, %p174
    %p176 = scmp.ne.s32.totalorder %s164, %s165
    %p177 = scmp.eq.s32.totalorder %s24, 1
    %p178 = por %p176, %p177
    %p180 = scmp.ne.s32.totalorder %s165, %s179
    %p181 = scmp.eq.s32.totalorder %s24, 0
    %p182 = por %p180, %p181
    %s184 = sadd.s32 %s183, 1
    %p187 = scmp.eq.s32.totalorder %s18, 1
    %p188 = scmp.ne.s32.totalorder %s183, %s185
    %p189 = scmp.eq.s32.totalorder %s18, 0
    %p190 = por %p188, %p189
    %p191 = scmp.ne.s32.totalorder %s183, %s185
    %p192 = scmp.eq.s32.totalorder %s23, 1
    %p193 = por %p191, %p192
    %p194 = scmp.ne.s32.totalorder %s185, %s186
    %p195 = scmp.eq.s32.totalorder %s23, 0
    %p196 = por %p194, %p195
    %p197 = scmp.ne.s32.totalorder %s185, %s186
    %p198 = scmp.eq.s32.totalorder %s24, 1
    %p199 = por %p197, %p198
    %p201 = scmp.ne.s32.totalorder %s186, %s200
    %p202 = scmp.eq.s32.totalorder %s24, 0
    %p203 = por %p201, %p202
    %s205 = sadd.s32 %s204, 1
    %p208 = scmp.eq.s32.totalorder %s18, 1
    %p209 = scmp.ne.s32.totalorder %s204, %s206
    %p210 = scmp.eq.s32.totalorder %s18, 0
    %p211 = por %p209, %p210
    %p212 = scmp.ne.s32.totalorder %s204, %s206
    %p213 = scmp.eq.s32.totalorder %s23, 1
    %p214 = por %p212, %p213
    %p215 = scmp.ne.s32.totalorder %s206, %s207
    %p216 = scmp.eq.s32.totalorder %s23, 0
    %p217 = por %p215, %p216
    %p218 = scmp.ne.s32.totalorder %s206, %s207
    %p219 = scmp.eq.s32.totalorder %s24, 1
    %p220 = por %p218, %p219
    %p222 = scmp.ne.s32.totalorder %s207, %s221
    %p223 = scmp.eq.s32.totalorder %s24, 0
    %p224 = por %p222, %p223
    %s226 = sadd.s32 %s225, 1
    %p229 = scmp.eq.s32.totalorder %s18, 1
    %p230 = scmp.ne.s32.totalorder %s225, %s227
    %p231 = scmp.eq.s32.totalorder %s18, 0
    %p232 = por %p230, %p231
    %p233 = scmp.ne.s32.totalorder %s225, %s227
    %p234 = scmp.eq.s32.totalorder %s23, 1
    %p235 = por %p233, %p234
    %p236 = scmp.ne.s32.totalorder %s227, %s228
    %p237 = scmp.eq.s32.totalorder %s23, 0
    %p238 = por %p236, %p237
    %p239 = scmp.ne.s32.totalorder %s227, %s228
    %p240 = scmp.eq.s32.totalorder %s24, 1
    %p241 = por %p239, %p240
    %p243 = scmp.ne.s32.totalorder %s228, %s242
    %p244 = scmp.eq.s32.totalorder %s24, 0
    %p245 = por %p243, %p244
    %s247 = sadd.s32 %s246, 1
    %p250 = scmp.eq.s32.totalorder %s18, 1
    %p251 = scmp.ne.s32.totalorder %s246, %s248
    %p252 = scmp.eq.s32.totalorder %s18, 0
    %p253 = por %p251, %p252
    %p254 = scmp.ne.s32.totalorder %s246, %s248
    %p255 = scmp.eq.s32.totalorder %s23, 1
    %p256 = por %p254, %p255
    %p257 = scmp.ne.s32.totalorder %s248, %s249
    %p258 = scmp.eq.s32.totalorder %s23, 0
    %p259 = por %p257, %p258
    %p260 = scmp.ne.s32.totalorder %s248, %s249
    %p261 = scmp.eq.s32.totalorder %s24, 1
    %p262 = por %p260, %p261
    %p264 = scmp.ne.s32.totalorder %s249, %s263
    %p265 = scmp.eq.s32.totalorder %s24, 0
    %p266 = por %p264, %p265
    %s268 = sadd.s32 %s267, 1
    %p271 = scmp.eq.s32.totalorder %s18, 1
    %p272 = scmp.ne.s32.totalorder %s267, %s269
    %p273 = scmp.eq.s32.totalorder %s18, 0
    %p274 = por %p272, %p273
    %p275 = scmp.ne.s32.totalorder %s267, %s269
    %p276 = scmp.eq.s32.totalorder %s23, 1
    %p277 = por %p275, %p276
    %p278 = scmp.ne.s32.totalorder %s269, %s270
    %p279 = scmp.eq.s32.totalorder %s23, 0
    %p280 = por %p278, %p279
    %p281 = scmp.ne.s32.totalorder %s269, %s270
    %p282 = scmp.eq.s32.totalorder %s24, 1
    %p283 = por %p281, %p282
    %p285 = scmp.ne.s32.totalorder %s270, %s284
    %p286 = scmp.eq.s32.totalorder %s24, 0
    %p287 = por %p285, %p286
    %s288 = ssub.s32 %s18, %s25
    %p289 = scmp.eq.s32.totalorder %s288, 0
    %s291 = sadd.s32 %s290, 1
    %s292 = scalar_select %p289, %s290, %s291
    %p295 = pneg %p289
    %p296 = scmp.eq.s32.totalorder %s18, 1
    %p297 = por %p295, %p296
    %p298 = scmp.ne.s32.totalorder %s290, %s293
    %p299 = scmp.eq.s32.totalorder %s18, 0
    %p300 = por %p298, %p299
    %p301 = scmp.ne.s32.totalorder %s290, %s293
    %p302 = scmp.eq.s32.totalorder %s23, 1
    %p303 = por %p301, %p302
    %p304 = scmp.ne.s32.totalorder %s293, %s294
    %p305 = scmp.eq.s32.totalorder %s23, 0
    %p306 = por %p304, %p305
    %p307 = scmp.ne.s32.totalorder %s293, %s294
    %p308 = scmp.eq.s32.totalorder %s24, 1
    %p309 = por %p307, %p308
    %p311 = scmp.ne.s32.totalorder %s294, %s310
    %p312 = scmp.eq.s32.totalorder %s24, 0
    %p313 = por %p311, %p312
    %p314 = scmp.le.s32.totalorder 1, %s18
    %p315 = scmp.lt.s32.totalorder %s18, 3
    %p316 = pnand %p314, %p315
    %p317 = pneg %p316
    // Predicated region
    $region9: #{cross_modal_block.24} parent=5 // pred_check
      _
    $region10: #{cross_modal_block.24} parent=5 // pred_check_branch
      %319 = sbr.rel (%p316) target = $region12
    $region11: #{cross_modal_block.24} parent=5 // pred_region
      %s320 = ssub.s32 %s18, 1
      // Predicated region
      $region13: #{cross_modal_block.24} parent=11 // pred_check
        %p321 = pneg %p91
      $region14: #{cross_modal_block.24} parent=11 // pred_check_branch
        %323 = sbr.rel (%p321) target = $region16
      $region15: #{cross_modal_block.24} parent=11 // pred_region
        _
      $region16: #{cross_modal_block.24} parent=11 // pred_fallthru
        _
      // Predicated region
      $region17: #{cross_modal_block.24} parent=11 // pred_check
        %p324 = pneg %p112
      $region18: #{cross_modal_block.24} parent=11 // pred_check_branch
        %326 = sbr.rel (%p324) target = $region20
      $region19: #{cross_modal_block.24} parent=11 // pred_region
        _
      $region20: #{cross_modal_block.24} parent=11 // pred_fallthru
        _
      // Predicated region
      $region21: #{cross_modal_block.24} parent=11 // pred_check
        %p327 = pneg %p133
      $region22: #{cross_modal_block.24} parent=11 // pred_check_branch
        %329 = sbr.rel (%p327) target = $region24
      $region23: #{cross_modal_block.24} parent=11 // pred_region
        _
      $region24: #{cross_modal_block.24} parent=11 // pred_fallthru
        _
      // Predicated region
      $region25: #{cross_modal_block.24} parent=11 // pred_check
        %p330 = pneg %p154
      $region26: #{cross_modal_block.24} parent=11 // pred_check_branch
        %332 = sbr.rel (%p330) target = $region28
      $region27: #{cross_modal_block.24} parent=11 // pred_region
        _
      $region28: #{cross_modal_block.24} parent=11 // pred_fallthru
        _
      // Predicated region
      $region29: #{cross_modal_block.24} parent=11 // pred_check
        %p333 = pneg %p175
      $region30: #{cross_modal_block.24} parent=11 // pred_check_branch
        %335 = sbr.rel (%p333) target = $region32
      $region31: #{cross_modal_block.24} parent=11 // pred_region
        _
      $region32: #{cross_modal_block.24} parent=11 // pred_fallthru
        _
      // Predicated region
      $region33: #{cross_modal_block.24} parent=11 // pred_check
        %p336 = pneg %p196
      $region34: #{cross_modal_block.24} parent=11 // pred_check_branch
        %338 = sbr.rel (%p336) target = $region36
      $region35: #{cross_modal_block.24} parent=11 // pred_region
        _
      $region36: #{cross_modal_block.24} parent=11 // pred_fallthru
        _
      // Predicated region
      $region37: #{cross_modal_block.24} parent=11 // pred_check
        %p339 = pneg %p217
      $region38: #{cross_modal_block.24} parent=11 // pred_check_branch
        %341 = sbr.rel (%p339) target = $region40
      $region39: #{cross_modal_block.24} parent=11 // pred_region
        _
      $region40: #{cross_modal_block.24} parent=11 // pred_fallthru
        _
      // Predicated region
      $region41: #{cross_modal_block.24} parent=11 // pred_check
        %p342 = pneg %p238
      $region42: #{cross_modal_block.24} parent=11 // pred_check_branch
        %344 = sbr.rel (%p342) target = $region44
      $region43: #{cross_modal_block.24} parent=11 // pred_region
        _
      $region44: #{cross_modal_block.24} parent=11 // pred_fallthru
        _
      // Predicated region
      $region45: #{cross_modal_block.24} parent=11 // pred_check
        %p345 = pneg %p259
      $region46: #{cross_modal_block.24} parent=11 // pred_check_branch
        %347 = sbr.rel (%p345) target = $region48
      $region47: #{cross_modal_block.24} parent=11 // pred_region
        _
      $region48: #{cross_modal_block.24} parent=11 // pred_fallthru
        _
      // Predicated region
      $region49: #{cross_modal_block.24} parent=11 // pred_check
        %p348 = pneg %p280
      $region50: #{cross_modal_block.24} parent=11 // pred_check_branch
        %350 = sbr.rel (%p348) target = $region52
      $region51: #{cross_modal_block.24} parent=11 // pred_region
        _
      $region52: #{cross_modal_block.24} parent=11 // pred_fallthru
        _
    $region12: #{cross_modal_block.24} parent=5 // pred_fallthru
      _
    %p351 = scmp.lt.s32.totalorder %s18, 2
    // Predicated region
    $region53: #{cross_modal_block.24} parent=5 // pred_check
      %p352 = pneg %p351
    $region54: #{cross_modal_block.24} parent=5 // pred_check_branch
      %354 = sbr.rel (%p352) target = $region56
    $region55: #{cross_modal_block.24} parent=5 // pred_region
      // Predicated region
      $region57: #{cross_modal_block.24} parent=55 // pred_check
        %p355 = pneg %p38
      $region58: #{cross_modal_block.24} parent=55 // pred_check_branch
        %357 = sbr.rel (%p355) target = $region60
      $region59: #{cross_modal_block.24} parent=55 // pred_region
        %p358 = scmp.lt.s32.totalorder %s18, 1
        %s359 = scalar_select %p358, %s18, 1
        %s360 = smul.addr %s359, 2
        %s361 = smul.addr %s360, 8
        %s362 = scalar_lea.vmem %s0, %s361
      $region60: #{cross_modal_block.24} parent=55 // pred_fallthru
        _
      // Predicated region
      $region61: #{cross_modal_block.24} parent=55 // pred_check
        %p363 = pneg %p64
      $region62: #{cross_modal_block.24} parent=55 // pred_check_branch
        %365 = sbr.rel (%p363) target = $region64
      $region63: #{cross_modal_block.24} parent=55 // pred_region
        %p366 = scmp.lt.s32.totalorder %s18, 1
        %s367 = scalar_select %p366, %s18, 1
        %s368 = smul.addr %s367, 8
        %s369 = scalar_lea.vmem %s1, %s368
      $region64: #{cross_modal_block.24} parent=55 // pred_fallthru
        _
    $region56: #{cross_modal_block.24} parent=5 // pred_fallthru
      _
    %p370 = scmp.le.s32.totalorder 1, %s18
    %p371 = scmp.lt.s32.totalorder %s18, 3
    %p372 = pnand %p370, %p371
    %p373 = pneg %p372
    // Predicated region
    $region65: #{cross_modal_block.24} parent=5 // pred_check
      _
    $region66: #{cross_modal_block.24} parent=5 // pred_check_branch
      %375 = sbr.rel (%p372) target = $region68
    $region67: #{cross_modal_block.24} parent=5 // pred_region
      %s376 = ssub.s32 %s18, 1
      %p377 = scmp.lt.s32.totalorder %s23, 1
      %s378 = scalar_select %p377, %s23, 1
      %s379 = smul.addr %s378, 2
      %s380 = smul.addr %s379, 8
      %s381 = scalar_lea.vmem %s0, %s380
      %p382 = pneg %p44
      %p383 = pneg %p41
      %p384 = scmp.lt.s32.totalorder %s23, 1
      %s385 = scalar_select %p384, %s23, 1
      %s386 = smul.addr %s385, 8
      %s387 = scalar_lea.vmem %s1, %s386
      %p388 = pneg %p70
      %p389 = pneg %p67
      %p390 = pneg %p91
      %p391 = pneg %p88
      %p392 = pneg %p112
      %p393 = pneg %p109
      %p394 = pneg %p133
      %p395 = pneg %p130
      %p396 = pneg %p154
      %p397 = pneg %p151
      %p398 = pneg %p175
      %p399 = pneg %p172
      %p400 = pneg %p196
      %p401 = pneg %p193
      %p402 = pneg %p217
      %p403 = pneg %p214
      %p404 = pneg %p238
      %p405 = pneg %p235
      %p406 = pneg %p259
      %p407 = pneg %p256
      %p408 = pneg %p280
      %p409 = pneg %p277
      %p410 = pneg %p306
      %p411 = pneg %p303
      %p412 = scmp.lt.s32.totalorder %s23, 1
      %s413 = scalar_select %p412, %s23, 1
      %s414 = smul.addr %s413, 2
      %s415 = smul.addr %s414, 8
      %s416 = scalar_lea.vmem %s12, %s415
      %p417 = scmp.lt.s32.totalorder %s23, 1
      %s418 = scalar_select %p417, %s23, 1
      %s419 = smul.addr %s418, 2
      %s420 = smul.addr %s419, 8
      %s421 = scalar_lea.vmem %s0, %s420
      %p422 = scmp.lt.s32.totalorder %s23, 1
      %s423 = scalar_select %p422, %s23, 1
      %s424 = smul.addr %s423, 8
      %s425 = scalar_lea.vmem %s1, %s424
      %p426 = scmp.lt.s32.totalorder %s23, 1
      %s427 = scalar_select %p426, %s23, 1
      %s428 = smul.addr %s427, 2
      %s429 = smul.addr %s428, 8
      %s430 = scalar_lea.vmem %s12, %s429
      %v432 = vld [vmem:[%s421] sm:$0xff]
      %v433 = vld [vmem:[%s421 + $0x8] sm:$0xff]
      %v434 = vld [vmem:[%s425] sm:$0xff]
      %v435 = vld [vmem:[%s2] sm:$0x1]
      %v436 = vld [vmem:[%s3] sm:$0x1]
      %vm437 = vcmask 261120
      %v438 = vsel %vm437, %v432, 0.0
      %439 = vadd.xlane.f32.xlu0 %v438
      %v440 = vpop.xlane.xlu0 %439
      %v441 = vsel %vm437, %v433, 0.0
      %442 = vadd.xlane.f32.xlu0 %v441
      %v443 = vpop.xlane.xlu0 %442
      %v444 = vrcp.pop 32.0
      %v445 = vmul.f32 %v440, %v444
      %v446 = vmul.f32 %v443, %v444
      %v447 = vsub.f32 %v432, %v445
      %v448 = vsub.f32 %v433, %v446
      %v449 = vmul.f32 %v447, %v447
      %v450 = vmul.f32 %v448, %v448
      %v451 = vsel %vm437, %v449, 0.0
      %452 = vadd.xlane.f32.xlu0 %v451
      %v453 = vpop.xlane.xlu0 %452
      %v454 = vsel %vm437, %v450, 0.0
      %455 = vadd.xlane.f32.xlu0 %v454
      %v456 = vpop.xlane.xlu0 %455
      %v457 = vmul.f32 %v453, %v444
      %v458 = vmul.f32 %v456, %v444
      %v459 = vadd.f32 %v457, 1e-05
      %v460 = vadd.f32 %v458, 1e-05
      %v461 = vrsqrt.pop %v459
      %v462 = vrsqrt.pop %v460
      %v463 = vmul.f32 %v447, %v461
      %v464 = vmul.f32 %v448, %v462
      %v466 = vlaneseq
      %v467 = vshrl.u32 %v466, 7
      %v468 = vsub.s32 0, %v467
      %v469 = vrot.slane %v435, %v468
      %v471 = vmul.f32 %v463, %v469
      %v472 = vmul.f32 %v464, %v469
      %v474 = vlaneseq
      %v475 = vshrl.u32 %v474, 7
      %v476 = vsub.s32 0, %v475
      %v477 = vrot.slane %v436, %v476
      %v479 = vadd.f32 %v471, %v477
      %v480 = vadd.f32 %v472, %v477
      %v481 = vld [vmem:[%s4] sm:$0x1]
      %v482 = vld [vmem:[%s5] sm:$0x1]
      %v483 = vsel %vm437, %v434, 0.0
      %484 = vadd.xlane.f32.xlu0 %v483
      %v485 = vpop.xlane.xlu0 %484
      %v486 = vmul.f32 %v485, %v444
      %v487 = vsub.f32 %v434, %v486
      %v488 = vmul.f32 %v487, %v487
      %v489 = vsel %vm437, %v488, 0.0
      %490 = vadd.xlane.f32.xlu0 %v489
      %v491 = vpop.xlane.xlu0 %490
      %v492 = vmul.f32 %v491, %v444
      %v493 = vadd.f32 %v492, 1e-05
      %v494 = vrsqrt.pop %v493
      %v495 = vmul.f32 %v487, %v494
      %v497 = vlaneseq
      %v498 = vshrl.u32 %v497, 7
      %v499 = vsub.s32 0, %v498
      %v500 = vrot.slane %v481, %v499
      %v502 = vmul.f32 %v495, %v500
      %v504 = vlaneseq
      %v505 = vshrl.u32 %v504, 7
      %v506 = vsub.s32 0, %v505
      %v507 = vrot.slane %v482, %v506
      %v509 = vadd.f32 %v502, %v507
      %v510 = vpack.c.bf16 %v480, %v479
      %v511 = vld [vmem:[%s6] sm:$0xf]
      %v512 = vld [vmem:[%s6 + $0x4] sm:$0xf]
      %v513 = vld [vmem:[%s6 + $0x8] sm:$0xf]
      %v514 = vld [vmem:[%s6 + $0xc] sm:$0xf]
      %v515 = vld [vmem:[%s7] sm:$0x1]
      %v517 = vlaneseq
      %v518 = vshrl.u32 %v517, 7
      %v519 = vsub.s32 0, %v518
      %v520 = vrot.slane %v515, %v519
      %v526 = vunpack.c.l.b16 %v511
      %v527 = vunpack.c.l.b16 %v512
      %v528 = vunpack.c.l.b16 %v513
      %v529 = vunpack.c.l.b16 %v514
      %v530 = vpack.c.b16 %v527, %v526
      %v531 = vpack.c.b16 %v529, %v528
      %v535 = vsel %vm437, %v510, 0
      %537 = vmatprep.subr.bf16.mxu0 0
      %538 = vmatpush1.bf16.msra.mxu0 0
      %539 = vmatprep.subr.bf16.mxu0 0
      %540 = vmatpush1.bf16.msra.mxu0 0
      %541 = vmatprep.subr.bf16.mxu0 0
      %542 = vmatpush1.bf16.msra.mxu0 0
      %543 = vmatprep.subr.bf16.mxu0 0
      %544 = vmatpush1.bf16.msra.mxu0 0
      %545 = vmatprep.subr.bf16.mxu0 0
      %546 = vmatpush1.bf16.msra.mxu0 0
      %547 = vmatprep.subr.bf16.mxu0 0
      %548 = vmatpush1.bf16.msra.mxu0 0
      %549 = vmatprep.subr.bf16.mxu0 0
      %550 = vmatpush1.bf16.msra.mxu0 %v531
      %551 = vmatprep.subr.bf16.mxu0 0
      %552 = vmatpush1.bf16.msra.mxu0 %v530
      %553 = vmatprep.subr.bf16.mxu0 0
      %554 = vmatpush2.bf16.msra.mxu0 0
      %555 = vmatprep.subr.bf16.mxu0 0
      %556 = vmatpush2.bf16.msra.mxu0 0
      %557 = vmatprep.subr.bf16.mxu0 0
      %558 = vmatpush2.bf16.msra.mxu0 0
      %559 = vmatprep.subr.bf16.mxu0 0
      %560 = vmatpush2.bf16.msra.mxu0 0
      %561 = vmatprep.subr.bf16.mxu0 0
      %562 = vmatpush2.bf16.msra.mxu0 0
      %563 = vmatprep.subr.bf16.mxu0 0
      %564 = vmatpush2.bf16.msra.mxu0 0
      %565 = vmatprep.subr.bf16.mxu0 0
      %566 = vmatpush2.bf16.msra.mxu0 0
      %567 = vmatprep.subr.bf16.mxu0 0
      %568 = vmatpush2.bf16.msra.mxu0 0
      %569 = vmatprep.mubr.bf16.mxu0 0
      %570 = vmatmul.mubr.bf16.gmra.mxu0 %v535
      %v571 = vpop.f32.mrf.mxu0
      %v572 = vadd.f32 %v520, %v571
      %v573 = vpop.f32.mrf.mxu0
      %v574 = vpop.f32.mrf.mxu0
      %v575 = vadd.f32 %v520, %v574
      %v576 = vpop.f32.mrf.mxu0
      %577 = vdwg.mxu0
      %v578 = vpack.c.bf16 %v509, %v509
      %v579 = vld [vmem:[%s8] sm:$0xf]
      %v580 = vld [vmem:[%s8 + $0x4] sm:$0xf]
      %v581 = vld [vmem:[%s8 + $0x8] sm:$0xf]
      %v582 = vld [vmem:[%s8 + $0xc] sm:$0xf]
      %v583 = vld [vmem:[%s9] sm:$0x1]
      %v585 = vlaneseq
      %v586 = vshrl.u32 %v585, 7
      %v587 = vsub.s32 0, %v586
      %v588 = vrot.slane %v583, %v587
      %v594 = vunpack.c.l.b16 %v579
      %v595 = vunpack.c.l.b16 %v580
      %v596 = vunpack.c.l.b16 %v581
      %v597 = vunpack.c.l.b16 %v582
      %v598 = vpack.c.b16 %v595, %v594
      %v599 = vpack.c.b16 %v597, %v596
      %v603 = vsel %vm437, %v578, 0
      %605 = vmatprep.subr.bf16.mxu0 0
      %606 = vmatpush1.bf16.msra.mxu0 0
      %607 = vmatprep.subr.bf16.mxu0 0
      %608 = vmatpush1.bf16.msra.mxu0 0
      %609 = vmatprep.subr.bf16.mxu0 0
      %610 = vmatpush1.bf16.msra.mxu0 0
      %611 = vmatprep.subr.bf16.mxu0 0
      %612 = vmatpush1.bf16.msra.mxu0 0
      %613 = vmatprep.subr.bf16.mxu0 0
      %614 = vmatpush1.bf16.msra.mxu0 0
      %615 = vmatprep.subr.bf16.mxu0 0
      %616 = vmatpush1.bf16.msra.mxu0 0
      %617 = vmatprep.subr.bf16.mxu0 0
      %618 = vmatpush1.bf16.msra.mxu0 %v599
      %619 = vmatprep.subr.bf16.mxu0 0
      %620 = vmatpush1.bf16.msra.mxu0 %v598
      %621 = vmatprep.subr.bf16.mxu0 0
      %622 = vmatpush2.bf16.msra.mxu0 0
      %623 = vmatprep.subr.bf16.mxu0 0
      %624 = vmatpush2.bf16.msra.mxu0 0
      %625 = vmatprep.subr.bf16.mxu0 0
      %626 = vmatpush2.bf16.msra.mxu0 0
      %627 = vmatprep.subr.bf16.mxu0 0
      %628 = vmatpush2.bf16.msra.mxu0 0
      %629 = vmatprep.subr.bf16.mxu0 0
      %630 = vmatpush2.bf16.msra.mxu0 0
      %631 = vmatprep.subr.bf16.mxu0 0
      %632 = vmatpush2.bf16.msra.mxu0 0
      %633 = vmatprep.subr.bf16.mxu0 0
      %634 = vmatpush2.bf16.msra.mxu0 0
      %635 = vmatprep.subr.bf16.mxu0 0
      %636 = vmatpush2.bf16.msra.mxu0 0
      %637 = vmatprep.mubr.bf16.mxu0 0
      %638 = vmatmul.mubr.bf16.gmra.mxu0 %v603
      %v639 = vpop.f32.mrf.mxu0
      %v640 = vadd.f32 %v588, %v639
      %v641 = vpop.f32.mrf.mxu0
      %v642 = vpop.f32.mrf.mxu0
      %v643 = vpop.f32.mrf.mxu0
      %644 = vdwg.mxu0
      %v645 = vld [vmem:[%s10] sm:$0xf]
      %v646 = vld [vmem:[%s10 + $0x4] sm:$0xf]
      %v647 = vld [vmem:[%s10 + $0x8] sm:$0xf]
      %v648 = vld [vmem:[%s10 + $0xc] sm:$0xf]
      %v649 = vld [vmem:[%s11] sm:$0x1]
      %v650 = vmul.f32 %v572, 0.35355338
      %v651 = vmul.f32 %v575, 0.35355338
      %v652 = vpack.c.bf16 %v651, %v650
      %v653 = vpack.c.bf16 %v640, %v640
      %vm654 = vcmask 64512
      %v656 = vsel %vm654, %v652, 0
      %v659 = vsel %vm654, %v653, 0
      %661 = vmatprep.subr.bf16.mxu0 0
      %662 = vmatpush1.bf16.xpose.msra.mxu0 0
      %663 = vmatprep.subr.bf16.mxu0 0
      %664 = vmatpush1.bf16.xpose.msra.mxu0 0
      %665 = vmatprep.subr.bf16.mxu0 0
      %666 = vmatpush1.bf16.xpose.msra.mxu0 0
      %667 = vmatprep.subr.bf16.mxu0 0
      %668 = vmatpush1.bf16.xpose.msra.mxu0 0
      %669 = vmatprep.subr.bf16.mxu0 0
      %670 = vmatpush1.bf16.xpose.msra.mxu0 0
      %671 = vmatprep.subr.bf16.mxu0 0
      %672 = vmatpush1.bf16.xpose.msra.mxu0 0
      %673 = vmatprep.subr.bf16.mxu0 0
      %674 = vmatpush1.bf16.xpose.msra.mxu0 0
      %675 = vmatprep.subr.bf16.mxu0 0
      %676 = vmatpush1.bf16.xpose.msra.mxu0 %v659
      %677 = vmatprep.subr.bf16.mxu0 0
      %678 = vmatpush2.bf16.xpose.msra.mxu0 0
      %679 = vmatprep.subr.bf16.mxu0 0
      %680 = vmatpush2.bf16.xpose.msra.mxu0 0
      %681 = vmatprep.subr.bf16.mxu0 0
      %682 = vmatpush2.bf16.xpose.msra.mxu0 0
      %683 = vmatprep.subr.bf16.mxu0 0
      %684 = vmatpush2.bf16.xpose.msra.mxu0 0
      %685 = vmatprep.subr.bf16.mxu0 0
      %686 = vmatpush2.bf16.xpose.msra.mxu0 0
      %687 = vmatprep.subr.bf16.mxu0 0
      %688 = vmatpush2.bf16.xpose.msra.mxu0 0
      %689 = vmatprep.subr.bf16.mxu0 0
      %690 = vmatpush2.bf16.xpose.msra.mxu0 0
      %691 = vmatprep.subr.bf16.mxu0 0
      %692 = vmatpush2.bf16.xpose.msra.mxu0 0
      %693 = vmatprep.mubr.bf16.mxu0 0
      %694 = vmatmul.mubr.bf16.gmra.mxu0 %v656
      %v695 = vpop.f32.mrf.mxu0
      %v696 = vadd.f32 0.0, %v695
      %v697 = vpop.f32.mrf.mxu0
      %v698 = vpop.f32.mrf.mxu0
      %v699 = vadd.f32 0.0, %v698
      %v700 = vpop.f32.mrf.mxu0
      %701 = vdwg.mxu0
      %v702 = vsel %vm654, %v696, -inf
      %703 = vmax.xlane.f32.xlu0 %v702
      %v704 = vpop.xlane.xlu0 %703
      %v705 = vsel %vm654, %v699, -inf
      %706 = vmax.xlane.f32.xlu0 %v705
      %v707 = vpop.xlane.xlu0 %706
      %v708 = vsub.f32 %v696, %v704
      %v709 = vsub.f32 %v699, %v707
      %v710 = vmul.f32 %v708, 1.442695
      %v711 = vpow.pop %v710
      %v712 = vmul.f32 %v709, 1.442695
      %v713 = vpow.pop %v712
      %v714 = vsel %vm654, %v711, 0.0
      %715 = vadd.xlane.f32.xlu0 %v714
      %v716 = vpop.xlane.xlu0 %715
      %v717 = vsel %vm654, %v713, 0.0
      %718 = vadd.xlane.f32.xlu0 %v717
      %v719 = vpop.xlane.xlu0 %718
      %v720 = vpack.c.bf16 %v713, %v711
      %722 = vrot.lane.b32.xlu0 %v653, 96
      %v723 = vpop.permute.xlu0 %722
      %v725 = vsel %vm654, %v720, 0
      %vm727 = vcmask 1043456
      %v729 = vsel %vm727, %v723, 0
      %731 = vmatprep.subr.bf16.mxu0 0
      %732 = vmatpush1.bf16.msra.mxu0 0
      %733 = vmatprep.subr.bf16.mxu0 0
      %734 = vmatpush1.bf16.msra.mxu0 0
      %735 = vmatprep.subr.bf16.mxu0 0
      %736 = vmatpush1.bf16.msra.mxu0 0
      %737 = vmatprep.subr.bf16.mxu0 0
      %738 = vmatpush1.bf16.msra.mxu0 0
      %739 = vmatprep.subr.bf16.mxu0 0
      %740 = vmatpush1.bf16.msra.mxu0 0
      %741 = vmatprep.subr.bf16.mxu0 0
      %742 = vmatpush1.bf16.msra.mxu0 0
      %743 = vmatprep.subr.bf16.mxu0 0
      %744 = vmatpush1.bf16.msra.mxu0 0
      %745 = vmatprep.subr.bf16.mxu0 0
      %746 = vmatpush1.bf16.msra.mxu0 %v729
      %747 = vmatprep.subr.bf16.mxu0 0
      %748 = vmatpush2.bf16.msra.mxu0 0
      %749 = vmatprep.subr.bf16.mxu0 0
      %750 = vmatpush2.bf16.msra.mxu0 0
      %751 = vmatprep.subr.bf16.mxu0 0
      %752 = vmatpush2.bf16.msra.mxu0 0
      %753 = vmatprep.subr.bf16.mxu0 0
      %754 = vmatpush2.bf16.msra.mxu0 0
      %755 = vmatprep.subr.bf16.mxu0 0
      %756 = vmatpush2.bf16.msra.mxu0 0
      %757 = vmatprep.subr.bf16.mxu0 0
      %758 = vmatpush2.bf16.msra.mxu0 0
      %759 = vmatprep.subr.bf16.mxu0 0
      %760 = vmatpush2.bf16.msra.mxu0 0
      %761 = vmatprep.subr.bf16.mxu0 0
      %762 = vmatpush2.bf16.msra.mxu0 0
      %763 = vmatprep.mubr.bf16.mxu0 0
      %764 = vmatmul.mubr.bf16.gmra.mxu0 %v725
      %v765 = vpop.f32.mrf.mxu0
      %v766 = vadd.f32 0.0, %v765
      %v767 = vpop.f32.mrf.mxu0
      %v768 = vpop.f32.mrf.mxu0
      %v769 = vadd.f32 0.0, %v768
      %v770 = vpop.f32.mrf.mxu0
      %771 = vdwg.mxu0
      %v772 = vrcp.pop %v716
      %v773 = vrcp.pop %v719
      %v774 = vmul.f32 %v766, %v772
      %v775 = vmul.f32 %v769, %v773
      %777 = vrot.lane.b32.xlu0 %v652, 120
      %v778 = vpop.permute.xlu0 %777
      %779 = vrot.lane.b32.xlu0 %v653, 120
      %v780 = vpop.permute.xlu0 %779
      %v782 = vsel %vm654, %v778, 0
      %v785 = vsel %vm654, %v780, 0
      %787 = vmatprep.subr.bf16.mxu0 0
      %788 = vmatpush1.bf16.xpose.msra.mxu0 0
      %789 = vmatprep.subr.bf16.mxu0 0
      %790 = vmatpush1.bf16.xpose.msra.mxu0 0
      %791 = vmatprep.subr.bf16.mxu0 0
      %792 = vmatpush1.bf16.xpose.msra.mxu0 0
      %793 = vmatprep.subr.bf16.mxu0 0
      %794 = vmatpush1.bf16.xpose.msra.mxu0 0
      %795 = vmatprep.subr.bf16.mxu0 0
      %796 = vmatpush1.bf16.xpose.msra.mxu0 0
      %797 = vmatprep.subr.bf16.mxu0 0
      %798 = vmatpush1.bf16.xpose.msra.mxu0 0
      %799 = vmatprep.subr.bf16.mxu0 0
      %800 = vmatpush1.bf16.xpose.msra.mxu0 0
      %801 = vmatprep.subr.bf16.mxu0 0
      %802 = vmatpush1.bf16.xpose.msra.mxu0 %v785
      %803 = vmatprep.subr.bf16.mxu0 0
      %804 = vmatpush2.bf16.xpose.msra.mxu0 0
      %805 = vmatprep.subr.bf16.mxu0 0
      %806 = vmatpush2.bf16.xpose.msra.mxu0 0
      %807 = vmatprep.subr.bf16.mxu0 0
      %808 = vmatpush2.bf16.xpose.msra.mxu0 0
      %809 = vmatprep.subr.bf16.mxu0 0
      %810 = vmatpush2.bf16.xpose.msra.mxu0 0
      %811 = vmatprep.subr.bf16.mxu0 0
      %812 = vmatpush2.bf16.xpose.msra.mxu0 0
      %813 = vmatprep.subr.bf16.mxu0 0
      %814 = vmatpush2.bf16.xpose.msra.mxu0 0
      %815 = vmatprep.subr.bf16.mxu0 0
      %816 = vmatpush2.bf16.xpose.msra.mxu0 0
      %817 = vmatprep.subr.bf16.mxu0 0
      %818 = vmatpush2.bf16.xpose.msra.mxu0 0
      %819 = vmatprep.mubr.bf16.mxu0 0
      %820 = vmatmul.mubr.bf16.gmra.mxu0 %v782
      %v821 = vpop.f32.mrf.mxu0
      %v822 = vadd.f32 0.0, %v821
      %v823 = vpop.f32.mrf.mxu0
      %v824 = vpop.f32.mrf.mxu0
      %v825 = vadd.f32 0.0, %v824
      %v826 = vpop.f32.mrf.mxu0
      %827 = vdwg.mxu0
      %v828 = vsel %vm654, %v822, -inf
      %829 = vmax.xlane.f32.xlu0 %v828
      %v830 = vpop.xlane.xlu0 %829
      %v831 = vsel %vm654, %v825, -inf
      %832 = vmax.xlane.f32.xlu0 %v831
      %v833 = vpop.xlane.xlu0 %832
      %v834 = vsub.f32 %v822, %v830
      %v835 = vsub.f32 %v825, %v833
      %v836 = vmul.f32 %v834, 1.442695
      %v837 = vpow.pop %v836
      %v838 = vmul.f32 %v835, 1.442695
      %v839 = vpow.pop %v838
      %v840 = vsel %vm654, %v837, 0.0
      %841 = vadd.xlane.f32.xlu0 %v840
      %v842 = vpop.xlane.xlu0 %841
      %v843 = vsel %vm654, %v839, 0.0
      %844 = vadd.xlane.f32.xlu0 %v843
      %v845 = vpop.xlane.xlu0 %844
      %v846 = vpack.c.bf16 %v839, %v837
      %847 = vrot.lane.b32.xlu0 %v653, 88
      %v848 = vpop.permute.xlu0 %847
      %v850 = vsel %vm654, %v846, 0
      %v853 = vsel %vm727, %v848, 0
      %855 = vmatprep.subr.bf16.mxu0 0
      %856 = vmatpush1.bf16.msra.mxu0 0
      %857 = vmatprep.subr.bf16.mxu0 0
      %858 = vmatpush1.bf16.msra.mxu0 0
      %859 = vmatprep.subr.bf16.mxu0 0
      %860 = vmatpush1.bf16.msra.mxu0 0
      %861 = vmatprep.subr.bf16.mxu0 0
      %862 = vmatpush1.bf16.msra.mxu0 0
      %863 = vmatprep.subr.bf16.mxu0 0
      %864 = vmatpush1.bf16.msra.mxu0 0
      %865 = vmatprep.subr.bf16.mxu0 0
      %866 = vmatpush1.bf16.msra.mxu0 0
      %867 = vmatprep.subr.bf16.mxu0 0
      %868 = vmatpush1.bf16.msra.mxu0 0
      %869 = vmatprep.subr.bf16.mxu0 0
      %870 = vmatpush1.bf16.msra.mxu0 %v853
      %871 = vmatprep.subr.bf16.mxu0 0
      %872 = vmatpush2.bf16.msra.mxu0 0
      %873 = vmatprep.subr.bf16.mxu0 0
      %874 = vmatpush2.bf16.msra.mxu0 0
      %875 = vmatprep.subr.bf16.mxu0 0
      %876 = vmatpush2.bf16.msra.mxu0 0
      %877 = vmatprep.subr.bf16.mxu0 0
      %878 = vmatpush2.bf16.msra.mxu0 0
      %879 = vmatprep.subr.bf16.mxu0 0
      %880 = vmatpush2.bf16.msra.mxu0 0
      %881 = vmatprep.subr.bf16.mxu0 0
      %882 = vmatpush2.bf16.msra.mxu0 0
      %883 = vmatprep.subr.bf16.mxu0 0
      %884 = vmatpush2.bf16.msra.mxu0 0
      %885 = vmatprep.subr.bf16.mxu0 0
      %886 = vmatpush2.bf16.msra.mxu0 0
      %887 = vmatprep.mubr.bf16.mxu0 0
      %888 = vmatmul.mubr.bf16.gmra.mxu0 %v850
      %v889 = vpop.f32.mrf.mxu0
      %v890 = vadd.f32 0.0, %v889
      %v891 = vpop.f32.mrf.mxu0
      %v892 = vpop.f32.mrf.mxu0
      %v893 = vadd.f32 0.0, %v892
      %v894 = vpop.f32.mrf.mxu0
      %895 = vdwg.mxu0
      %v896 = vrcp.pop %v842
      %v897 = vrcp.pop %v845
      %v898 = vmul.f32 %v890, %v896
      %v899 = vmul.f32 %v893, %v897
      %900 = vrot.lane.b32.xlu0 %v652, 112
      %v901 = vpop.permute.xlu0 %900
      %902 = vrot.lane.b32.xlu0 %v653, 112
      %v903 = vpop.permute.xlu0 %902
      %v905 = vsel %vm654, %v901, 0
      %v908 = vsel %vm654, %v903, 0
      %910 = vmatprep.subr.bf16.mxu0 0
      %911 = vmatpush1.bf16.xpose.msra.mxu0 0
      %912 = vmatprep.subr.bf16.mxu0 0
      %913 = vmatpush1.bf16.xpose.msra.mxu0 0
      %914 = vmatprep.subr.bf16.mxu0 0
      %915 = vmatpush1.bf16.xpose.msra.mxu0 0
      %916 = vmatprep.subr.bf16.mxu0 0
      %917 = vmatpush1.bf16.xpose.msra.mxu0 0
      %918 = vmatprep.subr.bf16.mxu0 0
      %919 = vmatpush1.bf16.xpose.msra.mxu0 0
      %920 = vmatprep.subr.bf16.mxu0 0
      %921 = vmatpush1.bf16.xpose.msra.mxu0 0
      %922 = vmatprep.subr.bf16.mxu0 0
      %923 = vmatpush1.bf16.xpose.msra.mxu0 0
      %924 = vmatprep.subr.bf16.mxu0 0
      %925 = vmatpush1.bf16.xpose.msra.mxu0 %v908
      %926 = vmatprep.subr.bf16.mxu0 0
      %927 = vmatpush2.bf16.xpose.msra.mxu0 0
      %928 = vmatprep.subr.bf16.mxu0 0
      %929 = vmatpush2.bf16.xpose.msra.mxu0 0
      %930 = vmatprep.subr.bf16.mxu0 0
      %931 = vmatpush2.bf16.xpose.msra.mxu0 0
      %932 = vmatprep.subr.bf16.mxu0 0
      %933 = vmatpush2.bf16.xpose.msra.mxu0 0
      %934 = vmatprep.subr.bf16.mxu0 0
      %935 = vmatpush2.bf16.xpose.msra.mxu0 0
      %936 = vmatprep.subr.bf16.mxu0 0
      %937 = vmatpush2.bf16.xpose.msra.mxu0 0
      %938 = vmatprep.subr.bf16.mxu0 0
      %939 = vmatpush2.bf16.xpose.msra.mxu0 0
      %940 = vmatprep.subr.bf16.mxu0 0
      %941 = vmatpush2.bf16.xpose.msra.mxu0 0
      %942 = vmatprep.mubr.bf16.mxu0 0
      %943 = vmatmul.mubr.bf16.gmra.mxu0 %v905
      %v944 = vpop.f32.mrf.mxu0
      %v945 = vadd.f32 0.0, %v944
      %v946 = vpop.f32.mrf.mxu0
      %v947 = vpop.f32.mrf.mxu0
      %v948 = vadd.f32 0.0, %v947
      %v949 = vpop.f32.mrf.mxu0
      %950 = vdwg.mxu0
      %v951 = vsel %vm654, %v945, -inf
      %952 = vmax.xlane.f32.xlu0 %v951
      %v953 = vpop.xlane.xlu0 %952
      %v954 = vsel %vm654, %v948, -inf
      %955 = vmax.xlane.f32.xlu0 %v954
      %v956 = vpop.xlane.xlu0 %955
      %v957 = vsub.f32 %v945, %v953
      %v958 = vsub.f32 %v948, %v956
      %v959 = vmul.f32 %v957, 1.442695
      %v960 = vpow.pop %v959
      %v961 = vmul.f32 %v958, 1.442695
      %v962 = vpow.pop %v961
      %v963 = vsel %vm654, %v960, 0.0
      %964 = vadd.xlane.f32.xlu0 %v963
      %v965 = vpop.xlane.xlu0 %964
      %v966 = vsel %vm654, %v962, 0.0
      %967 = vadd.xlane.f32.xlu0 %v966
      %v968 = vpop.xlane.xlu0 %967
      %v969 = vpack.c.bf16 %v962, %v960
      %970 = vrot.lane.b32.xlu0 %v653, 80
      %v971 = vpop.permute.xlu0 %970
      %v973 = vsel %vm654, %v969, 0
      %v976 = vsel %vm727, %v971, 0
      %978 = vmatprep.subr.bf16.mxu0 0
      %979 = vmatpush1.bf16.msra.mxu0 0
      %980 = vmatprep.subr.bf16.mxu0 0
      %981 = vmatpush1.bf16.msra.mxu0 0
      %982 = vmatprep.subr.bf16.mxu0 0
      %983 = vmatpush1.bf16.msra.mxu0 0
      %984 = vmatprep.subr.bf16.mxu0 0
      %985 = vmatpush1.bf16.msra.mxu0 0
      %986 = vmatprep.subr.bf16.mxu0 0
      %987 = vmatpush1.bf16.msra.mxu0 0
      %988 = vmatprep.subr.bf16.mxu0 0
      %989 = vmatpush1.bf16.msra.mxu0 0
      %990 = vmatprep.subr.bf16.mxu0 0
      %991 = vmatpush1.bf16.msra.mxu0 0
      %992 = vmatprep.subr.bf16.mxu0 0
      %993 = vmatpush1.bf16.msra.mxu0 %v976
      %994 = vmatprep.subr.bf16.mxu0 0
      %995 = vmatpush2.bf16.msra.mxu0 0
      %996 = vmatprep.subr.bf16.mxu0 0
      %997 = vmatpush2.bf16.msra.mxu0 0
      %998 = vmatprep.subr.bf16.mxu0 0
      %999 = vmatpush2.bf16.msra.mxu0 0
      %1000 = vmatprep.subr.bf16.mxu0 0
      %1001 = vmatpush2.bf16.msra.mxu0 0
      %1002 = vmatprep.subr.bf16.mxu0 0
      %1003 = vmatpush2.bf16.msra.mxu0 0
      %1004 = vmatprep.subr.bf16.mxu0 0
      %1005 = vmatpush2.bf16.msra.mxu0 0
      %1006 = vmatprep.subr.bf16.mxu0 0
      %1007 = vmatpush2.bf16.msra.mxu0 0
      %1008 = vmatprep.subr.bf16.mxu0 0
      %1009 = vmatpush2.bf16.msra.mxu0 0
      %1010 = vmatprep.mubr.bf16.mxu0 0
      %1011 = vmatmul.mubr.bf16.gmra.mxu0 %v973
      %v1012 = vpop.f32.mrf.mxu0
      %v1013 = vadd.f32 0.0, %v1012
      %v1014 = vpop.f32.mrf.mxu0
      %v1015 = vpop.f32.mrf.mxu0
      %v1016 = vadd.f32 0.0, %v1015
      %v1017 = vpop.f32.mrf.mxu0
      %1018 = vdwg.mxu0
      %v1019 = vrcp.pop %v965
      %v1020 = vrcp.pop %v968
      %v1021 = vmul.f32 %v1013, %v1019
      %v1022 = vmul.f32 %v1016, %v1020
      %1023 = vrot.lane.b32.xlu0 %v652, 104
      %v1024 = vpop.permute.xlu0 %1023
      %1025 = vrot.lane.b32.xlu0 %v653, 104
      %v1026 = vpop.permute.xlu0 %1025
      %v1028 = vsel %vm654, %v1024, 0
      %v1031 = vsel %vm654, %v1026, 0
      %1033 = vmatprep.subr.bf16.mxu0 0
      %1034 = vmatpush1.bf16.xpose.msra.mxu0 0
      %1035 = vmatprep.subr.bf16.mxu0 0
      %1036 = vmatpush1.bf16.xpose.msra.mxu0 0
      %1037 = vmatprep.subr.bf16.mxu0 0
      %1038 = vmatpush1.bf16.xpose.msra.mxu0 0
      %1039 = vmatprep.subr.bf16.mxu0 0
      %1040 = vmatpush1.bf16.xpose.msra.mxu0 0
      %1041 = vmatprep.subr.bf16.mxu0 0
      %1042 = vmatpush1.bf16.xpose.msra.mxu0 0
      %1043 = vmatprep.subr.bf16.mxu0 0
      %1044 = vmatpush1.bf16.xpose.msra.mxu0 0
      %1045 = vmatprep.subr.bf16.mxu0 0
      %1046 = vmatpush1.bf16.xpose.msra.mxu0 0
      %1047 = vmatprep.subr.bf16.mxu0 0
      %1048 = vmatpush1.bf16.xpose.msra.mxu0 %v1031
      %1049 = vmatprep.subr.bf16.mxu0 0
      %1050 = vmatpush2.bf16.xpose.msra.mxu0 0
      %1051 = vmatprep.subr.bf16.mxu0 0
      %1052 = vmatpush2.bf16.xpose.msra.mxu0 0
      %1053 = vmatprep.subr.bf16.mxu0 0
      %1054 = vmatpush2.bf16.xpose.msra.mxu0 0
      %1055 = vmatprep.subr.bf16.mxu0 0
      %1056 = vmatpush2.bf16.xpose.msra.mxu0 0
      %1057 = vmatprep.subr.bf16.mxu0 0
      %1058 = vmatpush2.bf16.xpose.msra.mxu0 0
      %1059 = vmatprep.subr.bf16.mxu0 0
      %1060 = vmatpush2.bf16.xpose.msra.mxu0 0
      %1061 = vmatprep.subr.bf16.mxu0 0
      %1062 = vmatpush2.bf16.xpose.msra.mxu0 0
      %1063 = vmatprep.subr.bf16.mxu0 0
      %1064 = vmatpush2.bf16.xpose.msra.mxu0 0
      %1065 = vmatprep.mubr.bf16.mxu0 0
      %1066 = vmatmul.mubr.bf16.gmra.mxu0 %v1028
      %v1067 = vpop.f32.mrf.mxu0
      %v1068 = vadd.f32 0.0, %v1067
      %v1069 = vpop.f32.mrf.mxu0
      %v1070 = vpop.f32.mrf.mxu0
      %v1071 = vadd.f32 0.0, %v1070
      %v1072 = vpop.f32.mrf.mxu0
      %1073 = vdwg.mxu0
      %v1074 = vsel %vm654, %v1068, -inf
      %1075 = vmax.xlane.f32.xlu0 %v1074
      %v1076 = vpop.xlane.xlu0 %1075
      %v1077 = vsel %vm654, %v1071, -inf
      %1078 = vmax.xlane.f32.xlu0 %v1077
      %v1079 = vpop.xlane.xlu0 %1078
      %v1080 = vsub.f32 %v1068, %v1076
      %v1081 = vsub.f32 %v1071, %v1079
      %v1082 = vmul.f32 %v1080, 1.442695
      %v1083 = vpow.pop %v1082
      %v1084 = vmul.f32 %v1081, 1.442695
      %v1085 = vpow.pop %v1084
      %v1086 = vsel %vm654, %v1083, 0.0
      %1087 = vadd.xlane.f32.xlu0 %v1086
      %v1088 = vpop.xlane.xlu0 %1087
      %v1089 = vsel %vm654, %v1085, 0.0
      %1090 = vadd.xlane.f32.xlu0 %v1089
      %v1091 = vpop.xlane.xlu0 %1090
      %v1092 = vpack.c.bf16 %v1085, %v1083
      %1093 = vrot.lane.b32.xlu0 %v653, 72
      %v1094 = vpop.permute.xlu0 %1093
      %v1096 = vsel %vm654, %v1092, 0
      %v1099 = vsel %vm727, %v1094, 0
      %1101 = vmatprep.subr.bf16.mxu0 0
      %1102 = vmatpush1.bf16.msra.mxu0 0
      %1103 = vmatprep.subr.bf16.mxu0 0
      %1104 = vmatpush1.bf16.msra.mxu0 0
      %1105 = vmatprep.subr.bf16.mxu0 0
      %1106 = vmatpush1.bf16.msra.mxu0 0
      %1107 = vmatprep.subr.bf16.mxu0 0
      %1108 = vmatpush1.bf16.msra.mxu0 0
      %1109 = vmatprep.subr.bf16.mxu0 0
      %1110 = vmatpush1.bf16.msra.mxu0 0
      %1111 = vmatprep.subr.bf16.mxu0 0
      %1112 = vmatpush1.bf16.msra.mxu0 0
      %1113 = vmatprep.subr.bf16.mxu0 0
      %1114 = vmatpush1.bf16.msra.mxu0 0
      %1115 = vmatprep.subr.bf16.mxu0 0
      %1116 = vmatpush1.bf16.msra.mxu0 %v1099
      %1117 = vmatprep.subr.bf16.mxu0 0
      %1118 = vmatpush2.bf16.msra.mxu0 0
      %1119 = vmatprep.subr.bf16.mxu0 0
      %1120 = vmatpush2.bf16.msra.mxu0 0
      %1121 = vmatprep.subr.bf16.mxu0 0
      %1122 = vmatpush2.bf16.msra.mxu0 0
      %1123 = vmatprep.subr.bf16.mxu0 0
      %1124 = vmatpush2.bf16.msra.mxu0 0
      %1125 = vmatprep.subr.bf16.mxu0 0
      %1126 = vmatpush2.bf16.msra.mxu0 0
      %1127 = vmatprep.subr.bf16.mxu0 0
      %1128 = vmatpush2.bf16.msra.mxu0 0
      %1129 = vmatprep.subr.bf16.mxu0 0
      %1130 = vmatpush2.bf16.msra.mxu0 0
      %1131 = vmatprep.subr.bf16.mxu0 0
      %1132 = vmatpush2.bf16.msra.mxu0 0
      %1133 = vmatprep.mubr.bf16.mxu0 0
      %1134 = vmatmul.mubr.bf16.gmra.mxu0 %v1096
      %v1135 = vpop.f32.mrf.mxu0
      %v1136 = vadd.f32 0.0, %v1135
      %v1137 = vpop.f32.mrf.mxu0
      %v1138 = vpop.f32.mrf.mxu0
      %v1139 = vadd.f32 0.0, %v1138
      %v1140 = vpop.f32.mrf.mxu0
      %1141 = vdwg.mxu0
      %v1142 = vrcp.pop %v1088
      %v1143 = vrcp.pop %v1091
      %v1144 = vmul.f32 %v1136, %v1142
      %v1145 = vmul.f32 %v1139, %v1143
      %1148 = vrot.lane.b32.xlu0 %v898, 8
      %v1149 = vpop.permute.xlu0 %1148
      %1150 = vrot.lane.b32.xlu0 %v899, 8
      %v1151 = vpop.permute.xlu0 %1150
      %1156 = vrot.lane.b32.xlu0 %v1021, 16
      %v1157 = vpop.permute.xlu0 %1156
      %1158 = vrot.lane.b32.xlu0 %v1022, 16
      %v1159 = vpop.permute.xlu0 %1158
      %1164 = vrot.lane.b32.xlu0 %v1144, 24
      %v1165 = vpop.permute.xlu0 %1164
      %1166 = vrot.lane.b32.xlu0 %v1145, 24
      %v1167 = vpop.permute.xlu0 %1166
      %v1170 = vsel %vm654, %v774, %v1149
      %v1171 = vsel %vm654, %v775, %v1151
      %vm1172 = vcmask 130048
      %v1173 = vsel %vm1172, %v1170, %v1157
      %v1174 = vsel %vm1172, %v1171, %v1159
      %vm1175 = vcmask 195584
      %v1176 = vsel %vm1175, %v1173, %v1165
      %v1177 = vsel %vm1175, %v1174, %v1167
      %v1178 = vpack.c.bf16 %v1177, %v1176
      %v1180 = vlaneseq
      %v1181 = vshrl.u32 %v1180, 7
      %v1182 = vsub.s32 0, %v1181
      %v1183 = vrot.slane %v649, %v1182
      %v1189 = vunpack.c.l.b16 %v645
      %v1190 = vunpack.c.l.b16 %v646
      %v1191 = vunpack.c.l.b16 %v647
      %v1192 = vunpack.c.l.b16 %v648
      %v1193 = vpack.c.b16 %v1190, %v1189
      %v1194 = vpack.c.b16 %v1192, %v1191
      %v1198 = vsel %vm437, %v1178, 0
      %1200 = vmatprep.subr.bf16.mxu0 0
      %1201 = vmatpush1.bf16.msra.mxu0 0
      %1202 = vmatprep.subr.bf16.mxu0 0
      %1203 = vmatpush1.bf16.msra.mxu0 0
      %1204 = vmatprep.subr.bf16.mxu0 0
      %1205 = vmatpush1.bf16.msra.mxu0 0
      %1206 = vmatprep.subr.bf16.mxu0 0
      %1207 = vmatpush1.bf16.msra.mxu0 0
      %1208 = vmatprep.subr.bf16.mxu0 0
      %1209 = vmatpush1.bf16.msra.mxu0 0
      %1210 = vmatprep.subr.bf16.mxu0 0
      %1211 = vmatpush1.bf16.msra.mxu0 0
      %1212 = vmatprep.subr.bf16.mxu0 0
      %1213 = vmatpush1.bf16.msra.mxu0 %v1194
      %1214 = vmatprep.subr.bf16.mxu0 0
      %1215 = vmatpush1.bf16.msra.mxu0 %v1193
      %1216 = vmatprep.subr.bf16.mxu0 0
      %1217 = vmatpush2.bf16.msra.mxu0 0
      %1218 = vmatprep.subr.bf16.mxu0 0
      %1219 = vmatpush2.bf16.msra.mxu0 0
      %1220 = vmatprep.subr.bf16.mxu0 0
      %1221 = vmatpush2.bf16.msra.mxu0 0
      %1222 = vmatprep.subr.bf16.mxu0 0
      %1223 = vmatpush2.bf16.msra.mxu0 0
      %1224 = vmatprep.subr.bf16.mxu0 0
      %1225 = vmatpush2.bf16.msra.mxu0 0
      %1226 = vmatprep.subr.bf16.mxu0 0
      %1227 = vmatpush2.bf16.msra.mxu0 0
      %1228 = vmatprep.subr.bf16.mxu0 0
      %1229 = vmatpush2.bf16.msra.mxu0 0
      %1230 = vmatprep.subr.bf16.mxu0 0
      %1231 = vmatpush2.bf16.msra.mxu0 0
      %1232 = vmatprep.mubr.bf16.mxu0 0
      %1233 = vmatmul.mubr.bf16.gmra.mxu0 %v1198
      %v1234 = vpop.f32.mrf.mxu0
      %v1235 = vadd.f32 %v1183, %v1234
      %v1236 = vpop.f32.mrf.mxu0
      %v1237 = vpop.f32.mrf.mxu0
      %v1238 = vadd.f32 %v1183, %v1237
      %v1239 = vpop.f32.mrf.mxu0
      %1240 = vdwg.mxu0
      %v1241 = vadd.f32 %v432, %v1235
      %v1242 = vadd.f32 %v433, %v1238
      %1243 = vst.msk [vmem:[%s430] sm:$0xff] %vm437, %v1241
      %1244 = vst.msk [vmem:[%s430 + $0x8] sm:$0xff] %vm437, %v1242
      %p1245 = scmp.lt.s32.totalorder %s23, 1
      %s1246 = scalar_select %p1245, %s23, 1
      %s1247 = smul.addr %s1246, 2
      %s1248 = smul.addr %s1247, 8
      %s1249 = scalar_lea.vmem %s12, %s1248
      // Predicated region
      $region69: #{cross_modal_block.24} parent=67 // pred_check
        %p1250 = pneg %p303
      $region70: #{cross_modal_block.24} parent=67 // pred_check_branch
        %1252 = sbr.rel (%p1250) target = $region72
      $region71: #{cross_modal_block.24} parent=67 // pred_region
        _
      $region72: #{cross_modal_block.24} parent=67 // pred_fallthru
        _
    $region68: #{cross_modal_block.24} parent=5 // pred_fallthru
      _
    %p1253 = scmp.le.s32.totalorder 2, %s18
    // Predicated region
    $region73: #{cross_modal_block.24} parent=5 // pred_check
      %p1254 = pneg %p1253
    $region74: #{cross_modal_block.24} parent=5 // pred_check_branch
      %1256 = sbr.rel (%p1254) target = $region76
    $region75: #{cross_modal_block.24} parent=5 // pred_region
      %s1257 = ssub.s32 %s18, 2
      // Predicated region
      $region77: #{cross_modal_block.24} parent=75 // pred_check
        %p1258 = pneg %p309
      $region78: #{cross_modal_block.24} parent=75 // pred_check_branch
        %1260 = sbr.rel (%p1258) target = $region80
      $region79: #{cross_modal_block.24} parent=75 // pred_region
        %p1261 = scmp.lt.s32.totalorder %s24, 1
        %s1262 = scalar_select %p1261, %s24, 1
        %s1263 = smul.addr %s1262, 2
        %s1264 = smul.addr %s1263, 8
        %s1265 = scalar_lea.vmem %s12, %s1264
      $region80: #{cross_modal_block.24} parent=75 // pred_fallthru
        _
    $region76: #{cross_modal_block.24} parent=5 // pred_fallthru
      _
  $region6: #{cross_modal_block.24} parent=0 // loop_footer
    %s22 = sadd.s32 1, %s18
  $region7: #{cross_modal_block.24} parent=0 // loop_footer_branch
    %17 = sbr.rel target = $region3
  $region8: #{cross_modal_block.24} parent=0 // loop_exit
    _

// kernel: cross_modal_block.25
$region0: #{cross_modal_block.25}
  #allocation0 [shape = 'u32[]', space=smem, size = 0x4, offset = 0x4, fixed_abs, tag = 'smem constant byte address 0x4 - core index']
  #allocation1 [shape = 'u32[144,128]{1,0:T(1,128)}', space=vmem, size = 0x12000, scoped, tag = 'internal scratch']
  %s0 = inlined_call_operand.vmem [shape: f32[2,8,32], index: 0, kind: input, shape index: {}]
  %s1 = inlined_call_operand.vmem [shape: f32[2,8,32], index: 1, kind: input, shape index: {}]
  %s2 = inlined_call_operand.vmem [shape: f32[1,32], index: 2, kind: input, shape index: {}]
  %s3 = inlined_call_operand.vmem [shape: f32[1,32], index: 3, kind: input, shape index: {}]
  %s4 = inlined_call_operand.vmem [shape: f32[1,32], index: 4, kind: input, shape index: {}]
  %s5 = inlined_call_operand.vmem [shape: f32[1,32], index: 5, kind: input, shape index: {}]
  %s6 = inlined_call_operand.vmem [shape: bf16[32,32], index: 6, kind: input, shape index: {}]
  %s7 = inlined_call_operand.vmem [shape: f32[1,32], index: 7, kind: input, shape index: {}]
  %s8 = inlined_call_operand.vmem [shape: bf16[32,64], index: 8, kind: input, shape index: {}]
  %s9 = inlined_call_operand.vmem [shape: f32[1,64], index: 9, kind: input, shape index: {}]
  %s10 = inlined_call_operand.vmem [shape: bf16[32,32], index: 10, kind: input, shape index: {}]
  %s11 = inlined_call_operand.vmem [shape: f32[1,32], index: 11, kind: input, shape index: {}]
  %s12 = inlined_call_operand.vmem [shape: f32[2,8,32], index: 12, kind: output, shape index: {}]
  %s13 = sld [smem:[#allocation0]]
  $region81: #{cross_modal_block.25} parent=0
    _
  %s15 = ssub.s32 1, %s13
  %s16 = scalar_select 0, %s15, %s13
  loop: start=0, step=1, limit=4
  $region2: #{cross_modal_block.25} parent=0 // loop_pre_header
    _
  $region3: #{cross_modal_block.25} parent=0 // loop_header
    %s18 = sphi 0, %s22
    %p19 = scmp.ge.s32.totalorder %s18, 4
    %s28 = sphi 0, %s30
    %s31 = sphi 0, %s28
    %s32 = sphi 0, %s31
    %s48 = sphi 0, %s32
    %s54 = sphi 0, %s56
    %s57 = sphi 0, %s54
    %s58 = sphi 0, %s57
    %s74 = sphi 0, %s58
    %s78 = sphi 0, %s78
    %s80 = sphi 0, %s78
    %s81 = sphi 0, %s80
    %s95 = sphi 0, %s81
    %s99 = sphi 0, %s99
    %s101 = sphi 0, %s99
    %s102 = sphi 0, %s101
    %s116 = sphi 0, %s102
    %s120 = sphi 0, %s120
    %s122 = sphi 0, %s120
    %s123 = sphi 0, %s122
    %s137 = sphi 0, %s123
    %s141 = sphi 0, %s141
    %s143 = sphi 0, %s141
    %s144 = sphi 0, %s143
    %s158 = sphi 0, %s144
    %s162 = sphi 0, %s162
    %s164 = sphi 0, %s162
    %s165 = sphi 0, %s164
    %s179 = sphi 0, %s165
    %s183 = sphi 0, %s183
    %s185 = sphi 0, %s183
    %s186 = sphi 0, %s185
    %s200 = sphi 0, %s186
    %s204 = sphi 0, %s204
    %s206 = sphi 0, %s204
    %s207 = sphi 0, %s206
    %s221 = sphi 0, %s207
    %s225 = sphi 0, %s225
    %s227 = sphi 0, %s225
    %s228 = sphi 0, %s227
    %s242 = sphi 0, %s228
    %s246 = sphi 0, %s246
    %s248 = sphi 0, %s246
    %s249 = sphi 0, %s248
    %s263 = sphi 0, %s249
    %s267 = sphi 0, %s267
    %s269 = sphi 0, %s267
    %s270 = sphi 0, %s269
    %s284 = sphi 0, %s270
    %s290 = sphi 0, %s292
    %s293 = sphi 0, %s290
    %s294 = sphi 0, %s293
    %s310 = sphi 0, %s294
  $region4: #{cross_modal_block.25} parent=0 // loop_header_branch
    %21 = sbr.rel (%p19) target = $region8
  $region5: #{cross_modal_block.25} parent=0 // loop_body
    %s23 = ssub.s32 %s18, 1
    %s24 = ssub.s32 %s18, 2
    %s25 = sadd.s32 %s18, 1
    %s26 = ssub.s32 %s18, %s25
    %p27 = scmp.eq.s32.totalorder %s26, 0
    %s29 = sadd.s32 %s28, 1
    %s30 = scalar_select %p27, %s28, %s29
    %p33 = pneg %p27
    %p34 = scmp.eq.s32.totalorder %s18, 1
    %p35 = por %p33, %p34
    %p36 = scmp.ne.s32.totalorder %s28, %s31
    %p37 = scmp.eq.s32.totalorder %s18, 0
    %p38 = por %p36, %p37
    %p39 = scmp.ne.s32.totalorder %s28, %s31
    %p40 = scmp.eq.s32.totalorder %s23, 1
    %p41 = por %p39, %p40
    %p42 = scmp.ne.s32.totalorder %s31, %s32
    %p43 = scmp.eq.s32.totalorder %s23, 0
    %p44 = por %p42, %p43
    %p45 = scmp.ne.s32.totalorder %s31, %s32
    %p46 = scmp.eq.s32.totalorder %s24, 1
    %p47 = por %p45, %p46
    %p49 = scmp.ne.s32.totalorder %s32, %s48
    %p50 = scmp.eq.s32.totalorder %s24, 0
    %p51 = por %p49, %p50
    %s52 = ssub.s32 %s18, %s25
    %p53 = scmp.eq.s32.totalorder %s52, 0
    %s55 = sadd.s32 %s54, 1
    %s56 = scalar_select %p53, %s54, %s55
    %p59 = pneg %p53
    %p60 = scmp.eq.s32.totalorder %s18, 1
    %p61 = por %p59, %p60
    %p62 = scmp.ne.s32.totalorder %s54, %s57
    %p63 = scmp.eq.s32.totalorder %s18, 0
    %p64 = por %p62, %p63
    %p65 = scmp.ne.s32.totalorder %s54, %s57
    %p66 = scmp.eq.s32.totalorder %s23, 1
    %p67 = por %p65, %p66
    %p68 = scmp.ne.s32.totalorder %s57, %s58
    %p69 = scmp.eq.s32.totalorder %s23, 0
    %p70 = por %p68, %p69
    %p71 = scmp.ne.s32.totalorder %s57, %s58
    %p72 = scmp.eq.s32.totalorder %s24, 1
    %p73 = por %p71, %p72
    %p75 = scmp.ne.s32.totalorder %s58, %s74
    %p76 = scmp.eq.s32.totalorder %s24, 0
    %p77 = por %p75, %p76
    %s79 = sadd.s32 %s78, 1
    %p82 = scmp.eq.s32.totalorder %s18, 1
    %p83 = scmp.ne.s32.totalorder %s78, %s80
    %p84 = scmp.eq.s32.totalorder %s18, 0
    %p85 = por %p83, %p84
    %p86 = scmp.ne.s32.totalorder %s78, %s80
    %p87 = scmp.eq.s32.totalorder %s23, 1
    %p88 = por %p86, %p87
    %p89 = scmp.ne.s32.totalorder %s80, %s81
    %p90 = scmp.eq.s32.totalorder %s23, 0
    %p91 = por %p89, %p90
    %p92 = scmp.ne.s32.totalorder %s80, %s81
    %p93 = scmp.eq.s32.totalorder %s24, 1
    %p94 = por %p92, %p93
    %p96 = scmp.ne.s32.totalorder %s81, %s95
    %p97 = scmp.eq.s32.totalorder %s24, 0
    %p98 = por %p96, %p97
    %s100 = sadd.s32 %s99, 1
    %p103 = scmp.eq.s32.totalorder %s18, 1
    %p104 = scmp.ne.s32.totalorder %s99, %s101
    %p105 = scmp.eq.s32.totalorder %s18, 0
    %p106 = por %p104, %p105
    %p107 = scmp.ne.s32.totalorder %s99, %s101
    %p108 = scmp.eq.s32.totalorder %s23, 1
    %p109 = por %p107, %p108
    %p110 = scmp.ne.s32.totalorder %s101, %s102
    %p111 = scmp.eq.s32.totalorder %s23, 0
    %p112 = por %p110, %p111
    %p113 = scmp.ne.s32.totalorder %s101, %s102
    %p114 = scmp.eq.s32.totalorder %s24, 1
    %p115 = por %p113, %p114
    %p117 = scmp.ne.s32.totalorder %s102, %s116
    %p118 = scmp.eq.s32.totalorder %s24, 0
    %p119 = por %p117, %p118
    %s121 = sadd.s32 %s120, 1
    %p124 = scmp.eq.s32.totalorder %s18, 1
    %p125 = scmp.ne.s32.totalorder %s120, %s122
    %p126 = scmp.eq.s32.totalorder %s18, 0
    %p127 = por %p125, %p126
    %p128 = scmp.ne.s32.totalorder %s120, %s122
    %p129 = scmp.eq.s32.totalorder %s23, 1
    %p130 = por %p128, %p129
    %p131 = scmp.ne.s32.totalorder %s122, %s123
    %p132 = scmp.eq.s32.totalorder %s23, 0
    %p133 = por %p131, %p132
    %p134 = scmp.ne.s32.totalorder %s122, %s123
    %p135 = scmp.eq.s32.totalorder %s24, 1
    %p136 = por %p134, %p135
    %p138 = scmp.ne.s32.totalorder %s123, %s137
    %p139 = scmp.eq.s32.totalorder %s24, 0
    %p140 = por %p138, %p139
    %s142 = sadd.s32 %s141, 1
    %p145 = scmp.eq.s32.totalorder %s18, 1
    %p146 = scmp.ne.s32.totalorder %s141, %s143
    %p147 = scmp.eq.s32.totalorder %s18, 0
    %p148 = por %p146, %p147
    %p149 = scmp.ne.s32.totalorder %s141, %s143
    %p150 = scmp.eq.s32.totalorder %s23, 1
    %p151 = por %p149, %p150
    %p152 = scmp.ne.s32.totalorder %s143, %s144
    %p153 = scmp.eq.s32.totalorder %s23, 0
    %p154 = por %p152, %p153
    %p155 = scmp.ne.s32.totalorder %s143, %s144
    %p156 = scmp.eq.s32.totalorder %s24, 1
    %p157 = por %p155, %p156
    %p159 = scmp.ne.s32.totalorder %s144, %s158
    %p160 = scmp.eq.s32.totalorder %s24, 0
    %p161 = por %p159, %p160
    %s163 = sadd.s32 %s162, 1
    %p166 = scmp.eq.s32.totalorder %s18, 1
    %p167 = scmp.ne.s32.totalorder %s162, %s164
    %p168 = scmp.eq.s32.totalorder %s18, 0
    %p169 = por %p167, %p168
    %p170 = scmp.ne.s32.totalorder %s162, %s164
    %p171 = scmp.eq.s32.totalorder %s23, 1
    %p172 = por %p170, %p171
    %p173 = scmp.ne.s32.totalorder %s164, %s165
    %p174 = scmp.eq.s32.totalorder %s23, 0
    %p175 = por %p173, %p174
    %p176 = scmp.ne.s32.totalorder %s164, %s165
    %p177 = scmp.eq.s32.totalorder %s24, 1
    %p178 = por %p176, %p177
    %p180 = scmp.ne.s32.totalorder %s165, %s179
    %p181 = scmp.eq.s32.totalorder %s24, 0
    %p182 = por %p180, %p181
    %s184 = sadd.s32 %s183, 1
    %p187 = scmp.eq.s32.totalorder %s18, 1
    %p188 = scmp.ne.s32.totalorder %s183, %s185
    %p189 = scmp.eq.s32.totalorder %s18, 0
    %p190 = por %p188, %p189
    %p191 = scmp.ne.s32.totalorder %s183, %s185
    %p192 = scmp.eq.s32.totalorder %s23, 1
    %p193 = por %p191, %p192
    %p194 = scmp.ne.s32.totalorder %s185, %s186
    %p195 = scmp.eq.s32.totalorder %s23, 0
    %p196 = por %p194, %p195
    %p197 = scmp.ne.s32.totalorder %s185, %s186
    %p198 = scmp.eq.s32.totalorder %s24, 1
    %p199 = por %p197, %p198
    %p201 = scmp.ne.s32.totalorder %s186, %s200
    %p202 = scmp.eq.s32.totalorder %s24, 0
    %p203 = por %p201, %p202
    %s205 = sadd.s32 %s204, 1
    %p208 = scmp.eq.s32.totalorder %s18, 1
    %p209 = scmp.ne.s32.totalorder %s204, %s206
    %p210 = scmp.eq.s32.totalorder %s18, 0
    %p211 = por %p209, %p210
    %p212 = scmp.ne.s32.totalorder %s204, %s206
    %p213 = scmp.eq.s32.totalorder %s23, 1
    %p214 = por %p212, %p213
    %p215 = scmp.ne.s32.totalorder %s206, %s207
    %p216 = scmp.eq.s32.totalorder %s23, 0
    %p217 = por %p215, %p216
    %p218 = scmp.ne.s32.totalorder %s206, %s207
    %p219 = scmp.eq.s32.totalorder %s24, 1
    %p220 = por %p218, %p219
    %p222 = scmp.ne.s32.totalorder %s207, %s221
    %p223 = scmp.eq.s32.totalorder %s24, 0
    %p224 = por %p222, %p223
    %s226 = sadd.s32 %s225, 1
    %p229 = scmp.eq.s32.totalorder %s18, 1
    %p230 = scmp.ne.s32.totalorder %s225, %s227
    %p231 = scmp.eq.s32.totalorder %s18, 0
    %p232 = por %p230, %p231
    %p233 = scmp.ne.s32.totalorder %s225, %s227
    %p234 = scmp.eq.s32.totalorder %s23, 1
    %p235 = por %p233, %p234
    %p236 = scmp.ne.s32.totalorder %s227, %s228
    %p237 = scmp.eq.s32.totalorder %s23, 0
    %p238 = por %p236, %p237
    %p239 = scmp.ne.s32.totalorder %s227, %s228
    %p240 = scmp.eq.s32.totalorder %s24, 1
    %p241 = por %p239, %p240
    %p243 = scmp.ne.s32.totalorder %s228, %s242
    %p244 = scmp.eq.s32.totalorder %s24, 0
    %p245 = por %p243, %p244
    %s247 = sadd.s32 %s246, 1
    %p250 = scmp.eq.s32.totalorder %s18, 1
    %p251 = scmp.ne.s32.totalorder %s246, %s248
    %p252 = scmp.eq.s32.totalorder %s18, 0
    %p253 = por %p251, %p252
    %p254 = scmp.ne.s32.totalorder %s246, %s248
    %p255 = scmp.eq.s32.totalorder %s23, 1
    %p256 = por %p254, %p255
    %p257 = scmp.ne.s32.totalorder %s248, %s249
    %p258 = scmp.eq.s32.totalorder %s23, 0
    %p259 = por %p257, %p258
    %p260 = scmp.ne.s32.totalorder %s248, %s249
    %p261 = scmp.eq.s32.totalorder %s24, 1
    %p262 = por %p260, %p261
    %p264 = scmp.ne.s32.totalorder %s249, %s263
    %p265 = scmp.eq.s32.totalorder %s24, 0
    %p266 = por %p264, %p265
    %s268 = sadd.s32 %s267, 1
    %p271 = scmp.eq.s32.totalorder %s18, 1
    %p272 = scmp.ne.s32.totalorder %s267, %s269
    %p273 = scmp.eq.s32.totalorder %s18, 0
    %p274 = por %p272, %p273
    %p275 = scmp.ne.s32.totalorder %s267, %s269
    %p276 = scmp.eq.s32.totalorder %s23, 1
    %p277 = por %p275, %p276
    %p278 = scmp.ne.s32.totalorder %s269, %s270
    %p279 = scmp.eq.s32.totalorder %s23, 0
    %p280 = por %p278, %p279
    %p281 = scmp.ne.s32.totalorder %s269, %s270
    %p282 = scmp.eq.s32.totalorder %s24, 1
    %p283 = por %p281, %p282
    %p285 = scmp.ne.s32.totalorder %s270, %s284
    %p286 = scmp.eq.s32.totalorder %s24, 0
    %p287 = por %p285, %p286
    %s288 = ssub.s32 %s18, %s25
    %p289 = scmp.eq.s32.totalorder %s288, 0
    %s291 = sadd.s32 %s290, 1
    %s292 = scalar_select %p289, %s290, %s291
    %p295 = pneg %p289
    %p296 = scmp.eq.s32.totalorder %s18, 1
    %p297 = por %p295, %p296
    %p298 = scmp.ne.s32.totalorder %s290, %s293
    %p299 = scmp.eq.s32.totalorder %s18, 0
    %p300 = por %p298, %p299
    %p301 = scmp.ne.s32.totalorder %s290, %s293
    %p302 = scmp.eq.s32.totalorder %s23, 1
    %p303 = por %p301, %p302
    %p304 = scmp.ne.s32.totalorder %s293, %s294
    %p305 = scmp.eq.s32.totalorder %s23, 0
    %p306 = por %p304, %p305
    %p307 = scmp.ne.s32.totalorder %s293, %s294
    %p308 = scmp.eq.s32.totalorder %s24, 1
    %p309 = por %p307, %p308
    %p311 = scmp.ne.s32.totalorder %s294, %s310
    %p312 = scmp.eq.s32.totalorder %s24, 0
    %p313 = por %p311, %p312
    %p314 = scmp.le.s32.totalorder 1, %s18
    %p315 = scmp.lt.s32.totalorder %s18, 3
    %p316 = pnand %p314, %p315
    %p317 = pneg %p316
    // Predicated region
    $region9: #{cross_modal_block.25} parent=5 // pred_check
      _
    $region10: #{cross_modal_block.25} parent=5 // pred_check_branch
      %319 = sbr.rel (%p316) target = $region12
    $region11: #{cross_modal_block.25} parent=5 // pred_region
      %s320 = ssub.s32 %s18, 1
      // Predicated region
      $region13: #{cross_modal_block.25} parent=11 // pred_check
        %p321 = pneg %p91
      $region14: #{cross_modal_block.25} parent=11 // pred_check_branch
        %323 = sbr.rel (%p321) target = $region16
      $region15: #{cross_modal_block.25} parent=11 // pred_region
        _
      $region16: #{cross_modal_block.25} parent=11 // pred_fallthru
        _
      // Predicated region
      $region17: #{cross_modal_block.25} parent=11 // pred_check
        %p324 = pneg %p112
      $region18: #{cross_modal_block.25} parent=11 // pred_check_branch
        %326 = sbr.rel (%p324) target = $region20
      $region19: #{cross_modal_block.25} parent=11 // pred_region
        _
      $region20: #{cross_modal_block.25} parent=11 // pred_fallthru
        _
      // Predicated region
      $region21: #{cross_modal_block.25} parent=11 // pred_check
        %p327 = pneg %p133
      $region22: #{cross_modal_block.25} parent=11 // pred_check_branch
        %329 = sbr.rel (%p327) target = $region24
      $region23: #{cross_modal_block.25} parent=11 // pred_region
        _
      $region24: #{cross_modal_block.25} parent=11 // pred_fallthru
        _
      // Predicated region
      $region25: #{cross_modal_block.25} parent=11 // pred_check
        %p330 = pneg %p154
      $region26: #{cross_modal_block.25} parent=11 // pred_check_branch
        %332 = sbr.rel (%p330) target = $region28
      $region27: #{cross_modal_block.25} parent=11 // pred_region
        _
      $region28: #{cross_modal_block.25} parent=11 // pred_fallthru
        _
      // Predicated region
      $region29: #{cross_modal_block.25} parent=11 // pred_check
        %p333 = pneg %p175
      $region30: #{cross_modal_block.25} parent=11 // pred_check_branch
        %335 = sbr.rel (%p333) target = $region32
      $region31: #{cross_modal_block.25} parent=11 // pred_region
        _
      $region32: #{cross_modal_block.25} parent=11 // pred_fallthru
        _
      // Predicated region
      $region33: #{cross_modal_block.25} parent=11 // pred_check
        %p336 = pneg %p196
      $region34: #{cross_modal_block.25} parent=11 // pred_check_branch
        %338 = sbr.rel (%p336) target = $region36
      $region35: #{cross_modal_block.25} parent=11 // pred_region
        _
      $region36: #{cross_modal_block.25} parent=11 // pred_fallthru
        _
      // Predicated region
      $region37: #{cross_modal_block.25} parent=11 // pred_check
        %p339 = pneg %p217
      $region38: #{cross_modal_block.25} parent=11 // pred_check_branch
        %341 = sbr.rel (%p339) target = $region40
      $region39: #{cross_modal_block.25} parent=11 // pred_region
        _
      $region40: #{cross_modal_block.25} parent=11 // pred_fallthru
        _
      // Predicated region
      $region41: #{cross_modal_block.25} parent=11 // pred_check
        %p342 = pneg %p238
      $region42: #{cross_modal_block.25} parent=11 // pred_check_branch
        %344 = sbr.rel (%p342) target = $region44
      $region43: #{cross_modal_block.25} parent=11 // pred_region
        _
      $region44: #{cross_modal_block.25} parent=11 // pred_fallthru
        _
      // Predicated region
      $region45: #{cross_modal_block.25} parent=11 // pred_check
        %p345 = pneg %p259
      $region46: #{cross_modal_block.25} parent=11 // pred_check_branch
        %347 = sbr.rel (%p345) target = $region48
      $region47: #{cross_modal_block.25} parent=11 // pred_region
        _
      $region48: #{cross_modal_block.25} parent=11 // pred_fallthru
        _
      // Predicated region
      $region49: #{cross_modal_block.25} parent=11 // pred_check
        %p348 = pneg %p280
      $region50: #{cross_modal_block.25} parent=11 // pred_check_branch
        %350 = sbr.rel (%p348) target = $region52
      $region51: #{cross_modal_block.25} parent=11 // pred_region
        _
      $region52: #{cross_modal_block.25} parent=11 // pred_fallthru
        _
    $region12: #{cross_modal_block.25} parent=5 // pred_fallthru
      _
    %p351 = scmp.lt.s32.totalorder %s18, 2
    // Predicated region
    $region53: #{cross_modal_block.25} parent=5 // pred_check
      %p352 = pneg %p351
    $region54: #{cross_modal_block.25} parent=5 // pred_check_branch
      %354 = sbr.rel (%p352) target = $region56
    $region55: #{cross_modal_block.25} parent=5 // pred_region
      // Predicated region
      $region57: #{cross_modal_block.25} parent=55 // pred_check
        %p355 = pneg %p38
      $region58: #{cross_modal_block.25} parent=55 // pred_check_branch
        %357 = sbr.rel (%p355) target = $region60
      $region59: #{cross_modal_block.25} parent=55 // pred_region
        %p358 = scmp.lt.s32.totalorder %s18, 1
        %s359 = scalar_select %p358, %s18, 1
        %s360 = smul.addr %s359, 8
        %s361 = scalar_lea.vmem %s0, %s360
      $region60: #{cross_modal_block.25} parent=55 // pred_fallthru
        _
      // Predicated region
      $region61: #{cross_modal_block.25} parent=55 // pred_check
        %p362 = pneg %p64
      $region62: #{cross_modal_block.25} parent=55 // pred_check_branch
        %364 = sbr.rel (%p362) target = $region64
      $region63: #{cross_modal_block.25} parent=55 // pred_region
        %p365 = scmp.lt.s32.totalorder %s18, 1
        %s366 = scalar_select %p365, %s18, 1
        %s367 = smul.addr %s366, 8
        %s368 = scalar_lea.vmem %s1, %s367
      $region64: #{cross_modal_block.25} parent=55 // pred_fallthru
        _
    $region56: #{cross_modal_block.25} parent=5 // pred_fallthru
      _
    %p369 = scmp.le.s32.totalorder 1, %s18
    %p370 = scmp.lt.s32.totalorder %s18, 3
    %p371 = pnand %p369, %p370
    %p372 = pneg %p371
    // Predicated region
    $region65: #{cross_modal_block.25} parent=5 // pred_check
      _
    $region66: #{cross_modal_block.25} parent=5 // pred_check_branch
      %374 = sbr.rel (%p371) target = $region68
    $region67: #{cross_modal_block.25} parent=5 // pred_region
      %s375 = ssub.s32 %s18, 1
      %p376 = scmp.lt.s32.totalorder %s23, 1
      %s377 = scalar_select %p376, %s23, 1
      %s378 = smul.addr %s377, 8
      %s379 = scalar_lea.vmem %s0, %s378
      %p380 = pneg %p44
      %p381 = pneg %p41
      %p382 = scmp.lt.s32.totalorder %s23, 1
      %s383 = scalar_select %p382, %s23, 1
      %s384 = smul.addr %s383, 8
      %s385 = scalar_lea.vmem %s1, %s384
      %p386 = pneg %p70
      %p387 = pneg %p67
      %p388 = pneg %p91
      %p389 = pneg %p88
      %p390 = pneg %p112
      %p391 = pneg %p109
      %p392 = pneg %p133
      %p393 = pneg %p130
      %p394 = pneg %p154
      %p395 = pneg %p151
      %p396 = pneg %p175
      %p397 = pneg %p172
      %p398 = pneg %p196
      %p399 = pneg %p193
      %p400 = pneg %p217
      %p401 = pneg %p214
      %p402 = pneg %p238
      %p403 = pneg %p235
      %p404 = pneg %p259
      %p405 = pneg %p256
      %p406 = pneg %p280
      %p407 = pneg %p277
      %p408 = pneg %p306
      %p409 = pneg %p303
      %p410 = scmp.lt.s32.totalorder %s23, 1
      %s411 = scalar_select %p410, %s23, 1
      %s412 = smul.addr %s411, 8
      %s413 = scalar_lea.vmem %s12, %s412
      %p414 = scmp.lt.s32.totalorder %s23, 1
      %s415 = scalar_select %p414, %s23, 1
      %s416 = smul.addr %s415, 8
      %s417 = scalar_lea.vmem %s0, %s416
      %p418 = scmp.lt.s32.totalorder %s23, 1
      %s419 = scalar_select %p418, %s23, 1
      %s420 = smul.addr %s419, 8
      %s421 = scalar_lea.vmem %s1, %s420
      %p422 = scmp.lt.s32.totalorder %s23, 1
      %s423 = scalar_select %p422, %s23, 1
      %s424 = smul.addr %s423, 8
      %s425 = scalar_lea.vmem %s12, %s424
      %v427 = vld [vmem:[%s417] sm:$0xff]
      %v428 = vld [vmem:[%s421] sm:$0xff]
      %v429 = vld [vmem:[%s2] sm:$0x1]
      %v430 = vld [vmem:[%s3] sm:$0x1]
      %vm431 = vcmask 261120
      %v432 = vsel %vm431, %v427, 0.0
      %433 = vadd.xlane.f32.xlu0 %v432
      %v434 = vpop.xlane.xlu0 %433
      %v435 = vrcp.pop 32.0
      %v436 = vmul.f32 %v434, %v435
      %v437 = vsub.f32 %v427, %v436
      %v438 = vmul.f32 %v437, %v437
      %v439 = vsel %vm431, %v438, 0.0
      %440 = vadd.xlane.f32.xlu0 %v439
      %v441 = vpop.xlane.xlu0 %440
      %v442 = vmul.f32 %v441, %v435
      %v443 = vadd.f32 %v442, 1e-05
      %v444 = vrsqrt.pop %v443
      %v445 = vmul.f32 %v437, %v444
      %v447 = vlaneseq
      %v448 = vshrl.u32 %v447, 7
      %v449 = vsub.s32 0, %v448
      %v450 = vrot.slane %v429, %v449
      %v452 = vmul.f32 %v445, %v450
      %v454 = vlaneseq
      %v455 = vshrl.u32 %v454, 7
      %v456 = vsub.s32 0, %v455
      %v457 = vrot.slane %v430, %v456
      %v459 = vadd.f32 %v452, %v457
      %v460 = vld [vmem:[%s4] sm:$0x1]
      %v461 = vld [vmem:[%s5] sm:$0x1]
      %v462 = vsel %vm431, %v428, 0.0
      %463 = vadd.xlane.f32.xlu0 %v462
      %v464 = vpop.xlane.xlu0 %463
      %v465 = vmul.f32 %v464, %v435
      %v466 = vsub.f32 %v428, %v465
      %v467 = vmul.f32 %v466, %v466
      %v468 = vsel %vm431, %v467, 0.0
      %469 = vadd.xlane.f32.xlu0 %v468
      %v470 = vpop.xlane.xlu0 %469
      %v471 = vmul.f32 %v470, %v435
      %v472 = vadd.f32 %v471, 1e-05
      %v473 = vrsqrt.pop %v472
      %v474 = vmul.f32 %v466, %v473
      %v476 = vlaneseq
      %v477 = vshrl.u32 %v476, 7
      %v478 = vsub.s32 0, %v477
      %v479 = vrot.slane %v460, %v478
      %v481 = vmul.f32 %v474, %v479
      %v483 = vlaneseq
      %v484 = vshrl.u32 %v483, 7
      %v485 = vsub.s32 0, %v484
      %v486 = vrot.slane %v461, %v485
      %v488 = vadd.f32 %v481, %v486
      %v489 = vpack.c.bf16 %v459, %v459
      %v490 = vld [vmem:[%s6] sm:$0xf]
      %v491 = vld [vmem:[%s6 + $0x4] sm:$0xf]
      %v492 = vld [vmem:[%s6 + $0x8] sm:$0xf]
      %v493 = vld [vmem:[%s6 + $0xc] sm:$0xf]
      %v494 = vld [vmem:[%s7] sm:$0x1]
      %v496 = vlaneseq
      %v497 = vshrl.u32 %v496, 7
      %v498 = vsub.s32 0, %v497
      %v499 = vrot.slane %v494, %v498
      %v505 = vunpack.c.l.b16 %v490
      %v506 = vunpack.c.l.b16 %v491
      %v507 = vunpack.c.l.b16 %v492
      %v508 = vunpack.c.l.b16 %v493
      %v509 = vpack.c.b16 %v506, %v505
      %v510 = vpack.c.b16 %v508, %v507
      %v514 = vsel %vm431, %v489, 0
      %516 = vmatprep.subr.bf16.mxu0 0
      %517 = vmatpush1.bf16.msra.mxu0 0
      %518 = vmatprep.subr.bf16.mxu0 0
      %519 = vmatpush1.bf16.msra.mxu0 0
      %520 = vmatprep.subr.bf16.mxu0 0
      %521 = vmatpush1.bf16.msra.mxu0 0
      %522 = vmatprep.subr.bf16.mxu0 0
      %523 = vmatpush1.bf16.msra.mxu0 0
      %524 = vmatprep.subr.bf16.mxu0 0
      %525 = vmatpush1.bf16.msra.mxu0 0
      %526 = vmatprep.subr.bf16.mxu0 0
      %527 = vmatpush1.bf16.msra.mxu0 0
      %528 = vmatprep.subr.bf16.mxu0 0
      %529 = vmatpush1.bf16.msra.mxu0 %v510
      %530 = vmatprep.subr.bf16.mxu0 0
      %531 = vmatpush1.bf16.msra.mxu0 %v509
      %532 = vmatprep.subr.bf16.mxu0 0
      %533 = vmatpush2.bf16.msra.mxu0 0
      %534 = vmatprep.subr.bf16.mxu0 0
      %535 = vmatpush2.bf16.msra.mxu0 0
      %536 = vmatprep.subr.bf16.mxu0 0
      %537 = vmatpush2.bf16.msra.mxu0 0
      %538 = vmatprep.subr.bf16.mxu0 0
      %539 = vmatpush2.bf16.msra.mxu0 0
      %540 = vmatprep.subr.bf16.mxu0 0
      %541 = vmatpush2.bf16.msra.mxu0 0
      %542 = vmatprep.subr.bf16.mxu0 0
      %543 = vmatpush2.bf16.msra.mxu0 0
      %544 = vmatprep.subr.bf16.mxu0 0
      %545 = vmatpush2.bf16.msra.mxu0 0
      %546 = vmatprep.subr.bf16.mxu0 0
      %547 = vmatpush2.bf16.msra.mxu0 0
      %548 = vmatprep.mubr.bf16.mxu0 0
      %549 = vmatmul.mubr.bf16.gmra.mxu0 %v514
      %v550 = vpop.f32.mrf.mxu0
      %v551 = vadd.f32 %v499, %v550
      %v552 = vpop.f32.mrf.mxu0
      %v553 = vpop.f32.mrf.mxu0
      %v554 = vpop.f32.mrf.mxu0
      %555 = vdwg.mxu0
      %v556 = vpack.c.bf16 %v488, %v488
      %v557 = vld [vmem:[%s8] sm:$0xf]
      %v558 = vld [vmem:[%s8 + $0x4] sm:$0xf]
      %v559 = vld [vmem:[%s8 + $0x8] sm:$0xf]
      %v560 = vld [vmem:[%s8 + $0xc] sm:$0xf]
      %v561 = vld [vmem:[%s9] sm:$0x1]
      %v563 = vlaneseq
      %v564 = vshrl.u32 %v563, 7
      %v565 = vsub.s32 0, %v564
      %v566 = vrot.slane %v561, %v565
      %v572 = vunpack.c.l.b16 %v557
      %v573 = vunpack.c.l.b16 %v558
      %v574 = vunpack.c.l.b16 %v559
      %v575 = vunpack.c.l.b16 %v560
      %v576 = vpack.c.b16 %v573, %v572
      %v577 = vpack.c.b16 %v575, %v574
      %v581 = vsel %vm431, %v556, 0
      %583 = vmatprep.subr.bf16.mxu0 0
      %584 = vmatpush1.bf16.msra.mxu0 0
      %585 = vmatprep.subr.bf16.mxu0 0
      %586 = vmatpush1.bf16.msra.mxu0 0
      %587 = vmatprep.subr.bf16.mxu0 0
      %588 = vmatpush1.bf16.msra.mxu0 0
      %589 = vmatprep.subr.bf16.mxu0 0
      %590 = vmatpush1.bf16.msra.mxu0 0
      %591 = vmatprep.subr.bf16.mxu0 0
      %592 = vmatpush1.bf16.msra.mxu0 0
      %593 = vmatprep.subr.bf16.mxu0 0
      %594 = vmatpush1.bf16.msra.mxu0 0
      %595 = vmatprep.subr.bf16.mxu0 0
      %596 = vmatpush1.bf16.msra.mxu0 %v577
      %597 = vmatprep.subr.bf16.mxu0 0
      %598 = vmatpush1.bf16.msra.mxu0 %v576
      %599 = vmatprep.subr.bf16.mxu0 0
      %600 = vmatpush2.bf16.msra.mxu0 0
      %601 = vmatprep.subr.bf16.mxu0 0
      %602 = vmatpush2.bf16.msra.mxu0 0
      %603 = vmatprep.subr.bf16.mxu0 0
      %604 = vmatpush2.bf16.msra.mxu0 0
      %605 = vmatprep.subr.bf16.mxu0 0
      %606 = vmatpush2.bf16.msra.mxu0 0
      %607 = vmatprep.subr.bf16.mxu0 0
      %608 = vmatpush2.bf16.msra.mxu0 0
      %609 = vmatprep.subr.bf16.mxu0 0
      %610 = vmatpush2.bf16.msra.mxu0 0
      %611 = vmatprep.subr.bf16.mxu0 0
      %612 = vmatpush2.bf16.msra.mxu0 0
      %613 = vmatprep.subr.bf16.mxu0 0
      %614 = vmatpush2.bf16.msra.mxu0 0
      %615 = vmatprep.mubr.bf16.mxu0 0
      %616 = vmatmul.mubr.bf16.gmra.mxu0 %v581
      %v617 = vpop.f32.mrf.mxu0
      %v618 = vadd.f32 %v566, %v617
      %v619 = vpop.f32.mrf.mxu0
      %v620 = vpop.f32.mrf.mxu0
      %v621 = vpop.f32.mrf.mxu0
      %622 = vdwg.mxu0
      %v623 = vld [vmem:[%s10] sm:$0xf]
      %v624 = vld [vmem:[%s10 + $0x4] sm:$0xf]
      %v625 = vld [vmem:[%s10 + $0x8] sm:$0xf]
      %v626 = vld [vmem:[%s10 + $0xc] sm:$0xf]
      %v627 = vld [vmem:[%s11] sm:$0x1]
      %v628 = vmul.f32 %v551, 0.35355338
      %v629 = vpack.c.bf16 %v628, %v628
      %v630 = vpack.c.bf16 %v618, %v618
      %vm631 = vcmask 64512
      %v633 = vsel %vm631, %v629, 0
      %v636 = vsel %vm631, %v630, 0
      %638 = vmatprep.subr.bf16.mxu0 0
      %639 = vmatpush1.bf16.xpose.msra.mxu0 0
      %640 = vmatprep.subr.bf16.mxu0 0
      %641 = vmatpush1.bf16.xpose.msra.mxu0 0
      %642 = vmatprep.subr.bf16.mxu0 0
      %643 = vmatpush1.bf16.xpose.msra.mxu0 0
      %644 = vmatprep.subr.bf16.mxu0 0
      %645 = vmatpush1.bf16.xpose.msra.mxu0 0
      %646 = vmatprep.subr.bf16.mxu0 0
      %647 = vmatpush1.bf16.xpose.msra.mxu0 0
      %648 = vmatprep.subr.bf16.mxu0 0
      %649 = vmatpush1.bf16.xpose.msra.mxu0 0
      %650 = vmatprep.subr.bf16.mxu0 0
      %651 = vmatpush1.bf16.xpose.msra.mxu0 0
      %652 = vmatprep.subr.bf16.mxu0 0
      %653 = vmatpush1.bf16.xpose.msra.mxu0 %v636
      %654 = vmatprep.subr.bf16.mxu0 0
      %655 = vmatpush2.bf16.xpose.msra.mxu0 0
      %656 = vmatprep.subr.bf16.mxu0 0
      %657 = vmatpush2.bf16.xpose.msra.mxu0 0
      %658 = vmatprep.subr.bf16.mxu0 0
      %659 = vmatpush2.bf16.xpose.msra.mxu0 0
      %660 = vmatprep.subr.bf16.mxu0 0
      %661 = vmatpush2.bf16.xpose.msra.mxu0 0
      %662 = vmatprep.subr.bf16.mxu0 0
      %663 = vmatpush2.bf16.xpose.msra.mxu0 0
      %664 = vmatprep.subr.bf16.mxu0 0
      %665 = vmatpush2.bf16.xpose.msra.mxu0 0
      %666 = vmatprep.subr.bf16.mxu0 0
      %667 = vmatpush2.bf16.xpose.msra.mxu0 0
      %668 = vmatprep.subr.bf16.mxu0 0
      %669 = vmatpush2.bf16.xpose.msra.mxu0 0
      %670 = vmatprep.mubr.bf16.mxu0 0
      %671 = vmatmul.mubr.bf16.gmra.mxu0 %v633
      %v672 = vpop.f32.mrf.mxu0
      %v673 = vadd.f32 0.0, %v672
      %v674 = vpop.f32.mrf.mxu0
      %v675 = vpop.f32.mrf.mxu0
      %v676 = vpop.f32.mrf.mxu0
      %677 = vdwg.mxu0
      %v678 = vsel %vm631, %v673, -inf
      %679 = vmax.xlane.f32.xlu0 %v678
      %v680 = vpop.xlane.xlu0 %679
      %v681 = vsub.f32 %v673, %v680
      %v682 = vmul.f32 %v681, 1.442695
      %v683 = vpow.pop %v682
      %v684 = vsel %vm631, %v683, 0.0
      %685 = vadd.xlane.f32.xlu0 %v684
      %v686 = vpop.xlane.xlu0 %685
      %v687 = vpack.c.bf16 %v683, %v683
      %689 = vrot.lane.b32.xlu0 %v630, 96
      %v690 = vpop.permute.xlu0 %689
      %v692 = vsel %vm631, %v687, 0
      %vm694 = vcmask 1043456
      %v696 = vsel %vm694, %v690, 0
      %698 = vmatprep.subr.bf16.mxu0 0
      %699 = vmatpush1.bf16.msra.mxu0 0
      %700 = vmatprep.subr.bf16.mxu0 0
      %701 = vmatpush1.bf16.msra.mxu0 0
      %702 = vmatprep.subr.bf16.mxu0 0
      %703 = vmatpush1.bf16.msra.mxu0 0
      %704 = vmatprep.subr.bf16.mxu0 0
      %705 = vmatpush1.bf16.msra.mxu0 0
      %706 = vmatprep.subr.bf16.mxu0 0
      %707 = vmatpush1.bf16.msra.mxu0 0
      %708 = vmatprep.subr.bf16.mxu0 0
      %709 = vmatpush1.bf16.msra.mxu0 0
      %710 = vmatprep.subr.bf16.mxu0 0
      %711 = vmatpush1.bf16.msra.mxu0 0
      %712 = vmatprep.subr.bf16.mxu0 0
      %713 = vmatpush1.bf16.msra.mxu0 %v696
      %714 = vmatprep.subr.bf16.mxu0 0
      %715 = vmatpush2.bf16.msra.mxu0 0
      %716 = vmatprep.subr.bf16.mxu0 0
      %717 = vmatpush2.bf16.msra.mxu0 0
      %718 = vmatprep.subr.bf16.mxu0 0
      %719 = vmatpush2.bf16.msra.mxu0 0
      %720 = vmatprep.subr.bf16.mxu0 0
      %721 = vmatpush2.bf16.msra.mxu0 0
      %722 = vmatprep.subr.bf16.mxu0 0
      %723 = vmatpush2.bf16.msra.mxu0 0
      %724 = vmatprep.subr.bf16.mxu0 0
      %725 = vmatpush2.bf16.msra.mxu0 0
      %726 = vmatprep.subr.bf16.mxu0 0
      %727 = vmatpush2.bf16.msra.mxu0 0
      %728 = vmatprep.subr.bf16.mxu0 0
      %729 = vmatpush2.bf16.msra.mxu0 0
      %730 = vmatprep.mubr.bf16.mxu0 0
      %731 = vmatmul.mubr.bf16.gmra.mxu0 %v692
      %v732 = vpop.f32.mrf.mxu0
      %v733 = vadd.f32 0.0, %v732
      %v734 = vpop.f32.mrf.mxu0
      %v735 = vpop.f32.mrf.mxu0
      %v736 = vpop.f32.mrf.mxu0
      %737 = vdwg.mxu0
      %v738 = vrcp.pop %v686
      %v739 = vmul.f32 %v733, %v738
      %741 = vrot.lane.b32.xlu0 %v629, 120
      %v742 = vpop.permute.xlu0 %741
      %743 = vrot.lane.b32.xlu0 %v630, 120
      %v744 = vpop.permute.xlu0 %743
      %v746 = vsel %vm631, %v742, 0
      %v749 = vsel %vm631, %v744, 0
      %751 = vmatprep.subr.bf16.mxu0 0
      %752 = vmatpush1.bf16.xpose.msra.mxu0 0
      %753 = vmatprep.subr.bf16.mxu0 0
      %754 = vmatpush1.bf16.xpose.msra.mxu0 0
      %755 = vmatprep.subr.bf16.mxu0 0
      %756 = vmatpush1.bf16.xpose.msra.mxu0 0
      %757 = vmatprep.subr.bf16.mxu0 0
      %758 = vmatpush1.bf16.xpose.msra.mxu0 0
      %759 = vmatprep.subr.bf16.mxu0 0
      %760 = vmatpush1.bf16.xpose.msra.mxu0 0
      %761 = vmatprep.subr.bf16.mxu0 0
      %762 = vmatpush1.bf16.xpose.msra.mxu0 0
      %763 = vmatprep.subr.bf16.mxu0 0
      %764 = vmatpush1.bf16.xpose.msra.mxu0 0
      %765 = vmatprep.subr.bf16.mxu0 0
      %766 = vmatpush1.bf16.xpose.msra.mxu0 %v749
      %767 = vmatprep.subr.bf16.mxu0 0
      %768 = vmatpush2.bf16.xpose.msra.mxu0 0
      %769 = vmatprep.subr.bf16.mxu0 0
      %770 = vmatpush2.bf16.xpose.msra.mxu0 0
      %771 = vmatprep.subr.bf16.mxu0 0
      %772 = vmatpush2.bf16.xpose.msra.mxu0 0
      %773 = vmatprep.subr.bf16.mxu0 0
      %774 = vmatpush2.bf16.xpose.msra.mxu0 0
      %775 = vmatprep.subr.bf16.mxu0 0
      %776 = vmatpush2.bf16.xpose.msra.mxu0 0
      %777 = vmatprep.subr.bf16.mxu0 0
      %778 = vmatpush2.bf16.xpose.msra.mxu0 0
      %779 = vmatprep.subr.bf16.mxu0 0
      %780 = vmatpush2.bf16.xpose.msra.mxu0 0
      %781 = vmatprep.subr.bf16.mxu0 0
      %782 = vmatpush2.bf16.xpose.msra.mxu0 0
      %783 = vmatprep.mubr.bf16.mxu0 0
      %784 = vmatmul.mubr.bf16.gmra.mxu0 %v746
      %v785 = vpop.f32.mrf.mxu0
      %v786 = vadd.f32 0.0, %v785
      %v787 = vpop.f32.mrf.mxu0
      %v788 = vpop.f32.mrf.mxu0
      %v789 = vpop.f32.mrf.mxu0
      %790 = vdwg.mxu0
      %v791 = vsel %vm631, %v786, -inf
      %792 = vmax.xlane.f32.xlu0 %v791
      %v793 = vpop.xlane.xlu0 %792
      %v794 = vsub.f32 %v786, %v793
      %v795 = vmul.f32 %v794, 1.442695
      %v796 = vpow.pop %v795
      %v797 = vsel %vm631, %v796, 0.0
      %798 = vadd.xlane.f32.xlu0 %v797
      %v799 = vpop.xlane.xlu0 %798
      %v800 = vpack.c.bf16 %v796, %v796
      %801 = vrot.lane.b32.xlu0 %v630, 88
      %v802 = vpop.permute.xlu0 %801
      %v804 = vsel %vm631, %v800, 0
      %v807 = vsel %vm694, %v802, 0
      %809 = vmatprep.subr.bf16.mxu0 0
      %810 = vmatpush1.bf16.msra.mxu0 0
      %811 = vmatprep.subr.bf16.mxu0 0
      %812 = vmatpush1.bf16.msra.mxu0 0
      %813 = vmatprep.subr.bf16.mxu0 0
      %814 = vmatpush1.bf16.msra.mxu0 0
      %815 = vmatprep.subr.bf16.mxu0 0
      %816 = vmatpush1.bf16.msra.mxu0 0
      %817 = vmatprep.subr.bf16.mxu0 0
      %818 = vmatpush1.bf16.msra.mxu0 0
      %819 = vmatprep.subr.bf16.mxu0 0
      %820 = vmatpush1.bf16.msra.mxu0 0
      %821 = vmatprep.subr.bf16.mxu0 0
      %822 = vmatpush1.bf16.msra.mxu0 0
      %823 = vmatprep.subr.bf16.mxu0 0
      %824 = vmatpush1.bf16.msra.mxu0 %v807
      %825 = vmatprep.subr.bf16.mxu0 0
      %826 = vmatpush2.bf16.msra.mxu0 0
      %827 = vmatprep.subr.bf16.mxu0 0
      %828 = vmatpush2.bf16.msra.mxu0 0
      %829 = vmatprep.subr.bf16.mxu0 0
      %830 = vmatpush2.bf16.msra.mxu0 0
      %831 = vmatprep.subr.bf16.mxu0 0
      %832 = vmatpush2.bf16.msra.mxu0 0
      %833 = vmatprep.subr.bf16.mxu0 0
      %834 = vmatpush2.bf16.msra.mxu0 0
      %835 = vmatprep.subr.bf16.mxu0 0
      %836 = vmatpush2.bf16.msra.mxu0 0
      %837 = vmatprep.subr.bf16.mxu0 0
      %838 = vmatpush2.bf16.msra.mxu0 0
      %839 = vmatprep.subr.bf16.mxu0 0
      %840 = vmatpush2.bf16.msra.mxu0 0
      %841 = vmatprep.mubr.bf16.mxu0 0
      %842 = vmatmul.mubr.bf16.gmra.mxu0 %v804
      %v843 = vpop.f32.mrf.mxu0
      %v844 = vadd.f32 0.0, %v843
      %v845 = vpop.f32.mrf.mxu0
      %v846 = vpop.f32.mrf.mxu0
      %v847 = vpop.f32.mrf.mxu0
      %848 = vdwg.mxu0
      %v849 = vrcp.pop %v799
      %v850 = vmul.f32 %v844, %v849
      %851 = vrot.lane.b32.xlu0 %v629, 112
      %v852 = vpop.permute.xlu0 %851
      %853 = vrot.lane.b32.xlu0 %v630, 112
      %v854 = vpop.permute.xlu0 %853
      %v856 = vsel %vm631, %v852, 0
      %v859 = vsel %vm631, %v854, 0
      %861 = vmatprep.subr.bf16.mxu0 0
      %862 = vmatpush1.bf16.xpose.msra.mxu0 0
      %863 = vmatprep.subr.bf16.mxu0 0
      %864 = vmatpush1.bf16.xpose.msra.mxu0 0
      %865 = vmatprep.subr.bf16.mxu0 0
      %866 = vmatpush1.bf16.xpose.msra.mxu0 0
      %867 = vmatprep.subr.bf16.mxu0 0
      %868 = vmatpush1.bf16.xpose.msra.mxu0 0
      %869 = vmatprep.subr.bf16.mxu0 0
      %870 = vmatpush1.bf16.xpose.msra.mxu0 0
      %871 = vmatprep.subr.bf16.mxu0 0
      %872 = vmatpush1.bf16.xpose.msra.mxu0 0
      %873 = vmatprep.subr.bf16.mxu0 0
      %874 = vmatpush1.bf16.xpose.msra.mxu0 0
      %875 = vmatprep.subr.bf16.mxu0 0
      %876 = vmatpush1.bf16.xpose.msra.mxu0 %v859
      %877 = vmatprep.subr.bf16.mxu0 0
      %878 = vmatpush2.bf16.xpose.msra.mxu0 0
      %879 = vmatprep.subr.bf16.mxu0 0
      %880 = vmatpush2.bf16.xpose.msra.mxu0 0
      %881 = vmatprep.subr.bf16.mxu0 0
      %882 = vmatpush2.bf16.xpose.msra.mxu0 0
      %883 = vmatprep.subr.bf16.mxu0 0
      %884 = vmatpush2.bf16.xpose.msra.mxu0 0
      %885 = vmatprep.subr.bf16.mxu0 0
      %886 = vmatpush2.bf16.xpose.msra.mxu0 0
      %887 = vmatprep.subr.bf16.mxu0 0
      %888 = vmatpush2.bf16.xpose.msra.mxu0 0
      %889 = vmatprep.subr.bf16.mxu0 0
      %890 = vmatpush2.bf16.xpose.msra.mxu0 0
      %891 = vmatprep.subr.bf16.mxu0 0
      %892 = vmatpush2.bf16.xpose.msra.mxu0 0
      %893 = vmatprep.mubr.bf16.mxu0 0
      %894 = vmatmul.mubr.bf16.gmra.mxu0 %v856
      %v895 = vpop.f32.mrf.mxu0
      %v896 = vadd.f32 0.0, %v895
      %v897 = vpop.f32.mrf.mxu0
      %v898 = vpop.f32.mrf.mxu0
      %v899 = vpop.f32.mrf.mxu0
      %900 = vdwg.mxu0
      %v901 = vsel %vm631, %v896, -inf
      %902 = vmax.xlane.f32.xlu0 %v901
      %v903 = vpop.xlane.xlu0 %902
      %v904 = vsub.f32 %v896, %v903
      %v905 = vmul.f32 %v904, 1.442695
      %v906 = vpow.pop %v905
      %v907 = vsel %vm631, %v906, 0.0
      %908 = vadd.xlane.f32.xlu0 %v907
      %v909 = vpop.xlane.xlu0 %908
      %v910 = vpack.c.bf16 %v906, %v906
      %911 = vrot.lane.b32.xlu0 %v630, 80
      %v912 = vpop.permute.xlu0 %911
      %v914 = vsel %vm631, %v910, 0
      %v917 = vsel %vm694, %v912, 0
      %919 = vmatprep.subr.bf16.mxu0 0
      %920 = vmatpush1.bf16.msra.mxu0 0
      %921 = vmatprep.subr.bf16.mxu0 0
      %922 = vmatpush1.bf16.msra.mxu0 0
      %923 = vmatprep.subr.bf16.mxu0 0
      %924 = vmatpush1.bf16.msra.mxu0 0
      %925 = vmatprep.subr.bf16.mxu0 0
      %926 = vmatpush1.bf16.msra.mxu0 0
      %927 = vmatprep.subr.bf16.mxu0 0
      %928 = vmatpush1.bf16.msra.mxu0 0
      %929 = vmatprep.subr.bf16.mxu0 0
      %930 = vmatpush1.bf16.msra.mxu0 0
      %931 = vmatprep.subr.bf16.mxu0 0
      %932 = vmatpush1.bf16.msra.mxu0 0
      %933 = vmatprep.subr.bf16.mxu0 0
      %934 = vmatpush1.bf16.msra.mxu0 %v917
      %935 = vmatprep.subr.bf16.mxu0 0
      %936 = vmatpush2.bf16.msra.mxu0 0
      %937 = vmatprep.subr.bf16.mxu0 0
      %938 = vmatpush2.bf16.msra.mxu0 0
      %939 = vmatprep.subr.bf16.mxu0 0
      %940 = vmatpush2.bf16.msra.mxu0 0
      %941 = vmatprep.subr.bf16.mxu0 0
      %942 = vmatpush2.bf16.msra.mxu0 0
      %943 = vmatprep.subr.bf16.mxu0 0
      %944 = vmatpush2.bf16.msra.mxu0 0
      %945 = vmatprep.subr.bf16.mxu0 0
      %946 = vmatpush2.bf16.msra.mxu0 0
      %947 = vmatprep.subr.bf16.mxu0 0
      %948 = vmatpush2.bf16.msra.mxu0 0
      %949 = vmatprep.subr.bf16.mxu0 0
      %950 = vmatpush2.bf16.msra.mxu0 0
      %951 = vmatprep.mubr.bf16.mxu0 0
      %952 = vmatmul.mubr.bf16.gmra.mxu0 %v914
      %v953 = vpop.f32.mrf.mxu0
      %v954 = vadd.f32 0.0, %v953
      %v955 = vpop.f32.mrf.mxu0
      %v956 = vpop.f32.mrf.mxu0
      %v957 = vpop.f32.mrf.mxu0
      %958 = vdwg.mxu0
      %v959 = vrcp.pop %v909
      %v960 = vmul.f32 %v954, %v959
      %961 = vrot.lane.b32.xlu0 %v629, 104
      %v962 = vpop.permute.xlu0 %961
      %963 = vrot.lane.b32.xlu0 %v630, 104
      %v964 = vpop.permute.xlu0 %963
      %v966 = vsel %vm631, %v962, 0
      %v969 = vsel %vm631, %v964, 0
      %971 = vmatprep.subr.bf16.mxu0 0
      %972 = vmatpush1.bf16.xpose.msra.mxu0 0
      %973 = vmatprep.subr.bf16.mxu0 0
      %974 = vmatpush1.bf16.xpose.msra.mxu0 0
      %975 = vmatprep.subr.bf16.mxu0 0
      %976 = vmatpush1.bf16.xpose.msra.mxu0 0
      %977 = vmatprep.subr.bf16.mxu0 0
      %978 = vmatpush1.bf16.xpose.msra.mxu0 0
      %979 = vmatprep.subr.bf16.mxu0 0
      %980 = vmatpush1.bf16.xpose.msra.mxu0 0
      %981 = vmatprep.subr.bf16.mxu0 0
      %982 = vmatpush1.bf16.xpose.msra.mxu0 0
      %983 = vmatprep.subr.bf16.mxu0 0
      %984 = vmatpush1.bf16.xpose.msra.mxu0 0
      %985 = vmatprep.subr.bf16.mxu0 0
      %986 = vmatpush1.bf16.xpose.msra.mxu0 %v969
      %987 = vmatprep.subr.bf16.mxu0 0
      %988 = vmatpush2.bf16.xpose.msra.mxu0 0
      %989 = vmatprep.subr.bf16.mxu0 0
      %990 = vmatpush2.bf16.xpose.msra.mxu0 0
      %991 = vmatprep.subr.bf16.mxu0 0
      %992 = vmatpush2.bf16.xpose.msra.mxu0 0
      %993 = vmatprep.subr.bf16.mxu0 0
      %994 = vmatpush2.bf16.xpose.msra.mxu0 0
      %995 = vmatprep.subr.bf16.mxu0 0
      %996 = vmatpush2.bf16.xpose.msra.mxu0 0
      %997 = vmatprep.subr.bf16.mxu0 0
      %998 = vmatpush2.bf16.xpose.msra.mxu0 0
      %999 = vmatprep.subr.bf16.mxu0 0
      %1000 = vmatpush2.bf16.xpose.msra.mxu0 0
      %1001 = vmatprep.subr.bf16.mxu0 0
      %1002 = vmatpush2.bf16.xpose.msra.mxu0 0
      %1003 = vmatprep.mubr.bf16.mxu0 0
      %1004 = vmatmul.mubr.bf16.gmra.mxu0 %v966
      %v1005 = vpop.f32.mrf.mxu0
      %v1006 = vadd.f32 0.0, %v1005
      %v1007 = vpop.f32.mrf.mxu0
      %v1008 = vpop.f32.mrf.mxu0
      %v1009 = vpop.f32.mrf.mxu0
      %1010 = vdwg.mxu0
      %v1011 = vsel %vm631, %v1006, -inf
      %1012 = vmax.xlane.f32.xlu0 %v1011
      %v1013 = vpop.xlane.xlu0 %1012
      %v1014 = vsub.f32 %v1006, %v1013
      %v1015 = vmul.f32 %v1014, 1.442695
      %v1016 = vpow.pop %v1015
      %v1017 = vsel %vm631, %v1016, 0.0
      %1018 = vadd.xlane.f32.xlu0 %v1017
      %v1019 = vpop.xlane.xlu0 %1018
      %v1020 = vpack.c.bf16 %v1016, %v1016
      %1021 = vrot.lane.b32.xlu0 %v630, 72
      %v1022 = vpop.permute.xlu0 %1021
      %v1024 = vsel %vm631, %v1020, 0
      %v1027 = vsel %vm694, %v1022, 0
      %1029 = vmatprep.subr.bf16.mxu0 0
      %1030 = vmatpush1.bf16.msra.mxu0 0
      %1031 = vmatprep.subr.bf16.mxu0 0
      %1032 = vmatpush1.bf16.msra.mxu0 0
      %1033 = vmatprep.subr.bf16.mxu0 0
      %1034 = vmatpush1.bf16.msra.mxu0 0
      %1035 = vmatprep.subr.bf16.mxu0 0
      %1036 = vmatpush1.bf16.msra.mxu0 0
      %1037 = vmatprep.subr.bf16.mxu0 0
      %1038 = vmatpush1.bf16.msra.mxu0 0
      %1039 = vmatprep.subr.bf16.mxu0 0
      %1040 = vmatpush1.bf16.msra.mxu0 0
      %1041 = vmatprep.subr.bf16.mxu0 0
      %1042 = vmatpush1.bf16.msra.mxu0 0
      %1043 = vmatprep.subr.bf16.mxu0 0
      %1044 = vmatpush1.bf16.msra.mxu0 %v1027
      %1045 = vmatprep.subr.bf16.mxu0 0
      %1046 = vmatpush2.bf16.msra.mxu0 0
      %1047 = vmatprep.subr.bf16.mxu0 0
      %1048 = vmatpush2.bf16.msra.mxu0 0
      %1049 = vmatprep.subr.bf16.mxu0 0
      %1050 = vmatpush2.bf16.msra.mxu0 0
      %1051 = vmatprep.subr.bf16.mxu0 0
      %1052 = vmatpush2.bf16.msra.mxu0 0
      %1053 = vmatprep.subr.bf16.mxu0 0
      %1054 = vmatpush2.bf16.msra.mxu0 0
      %1055 = vmatprep.subr.bf16.mxu0 0
      %1056 = vmatpush2.bf16.msra.mxu0 0
      %1057 = vmatprep.subr.bf16.mxu0 0
      %1058 = vmatpush2.bf16.msra.mxu0 0
      %1059 = vmatprep.subr.bf16.mxu0 0
      %1060 = vmatpush2.bf16.msra.mxu0 0
      %1061 = vmatprep.mubr.bf16.mxu0 0
      %1062 = vmatmul.mubr.bf16.gmra.mxu0 %v1024
      %v1063 = vpop.f32.mrf.mxu0
      %v1064 = vadd.f32 0.0, %v1063
      %v1065 = vpop.f32.mrf.mxu0
      %v1066 = vpop.f32.mrf.mxu0
      %v1067 = vpop.f32.mrf.mxu0
      %1068 = vdwg.mxu0
      %v1069 = vrcp.pop %v1019
      %v1070 = vmul.f32 %v1064, %v1069
      %1072 = vrot.lane.b32.xlu0 %v850, 8
      %v1073 = vpop.permute.xlu0 %1072
      %1076 = vrot.lane.b32.xlu0 %v960, 16
      %v1077 = vpop.permute.xlu0 %1076
      %1080 = vrot.lane.b32.xlu0 %v1070, 24
      %v1081 = vpop.permute.xlu0 %1080
      %v1083 = vsel %vm631, %v739, %v1073
      %vm1084 = vcmask 130048
      %v1085 = vsel %vm1084, %v1083, %v1077
      %vm1086 = vcmask 195584
      %v1087 = vsel %vm1086, %v1085, %v1081
      %v1088 = vpack.c.bf16 %v1087, %v1087
      %v1090 = vlaneseq
      %v1091 = vshrl.u32 %v1090, 7
      %v1092 = vsub.s32 0, %v1091
      %v1093 = vrot.slane %v627, %v1092
      %v1099 = vunpack.c.l.b16 %v623
      %v1100 = vunpack.c.l.b16 %v624
      %v1101 = vunpack.c.l.b16 %v625
      %v1102 = vunpack.c.l.b16 %v626
      %v1103 = vpack.c.b16 %v1100, %v1099
      %v1104 = vpack.c.b16 %v1102, %v1101
      %v1108 = vsel %vm431, %v1088, 0
      %1110 = vmatprep.subr.bf16.mxu0 0
      %1111 = vmatpush1.bf16.msra.mxu0 0
      %1112 = vmatprep.subr.bf16.mxu0 0
      %1113 = vmatpush1.bf16.msra.mxu0 0
      %1114 = vmatprep.subr.bf16.mxu0 0
      %1115 = vmatpush1.bf16.msra.mxu0 0
      %1116 = vmatprep.subr.bf16.mxu0 0
      %1117 = vmatpush1.bf16.msra.mxu0 0
      %1118 = vmatprep.subr.bf16.mxu0 0
      %1119 = vmatpush1.bf16.msra.mxu0 0
      %1120 = vmatprep.subr.bf16.mxu0 0
      %1121 = vmatpush1.bf16.msra.mxu0 0
      %1122 = vmatprep.subr.bf16.mxu0 0
      %1123 = vmatpush1.bf16.msra.mxu0 %v1104
      %1124 = vmatprep.subr.bf16.mxu0 0
      %1125 = vmatpush1.bf16.msra.mxu0 %v1103
      %1126 = vmatprep.subr.bf16.mxu0 0
      %1127 = vmatpush2.bf16.msra.mxu0 0
      %1128 = vmatprep.subr.bf16.mxu0 0
      %1129 = vmatpush2.bf16.msra.mxu0 0
      %1130 = vmatprep.subr.bf16.mxu0 0
      %1131 = vmatpush2.bf16.msra.mxu0 0
      %1132 = vmatprep.subr.bf16.mxu0 0
      %1133 = vmatpush2.bf16.msra.mxu0 0
      %1134 = vmatprep.subr.bf16.mxu0 0
      %1135 = vmatpush2.bf16.msra.mxu0 0
      %1136 = vmatprep.subr.bf16.mxu0 0
      %1137 = vmatpush2.bf16.msra.mxu0 0
      %1138 = vmatprep.subr.bf16.mxu0 0
      %1139 = vmatpush2.bf16.msra.mxu0 0
      %1140 = vmatprep.subr.bf16.mxu0 0
      %1141 = vmatpush2.bf16.msra.mxu0 0
      %1142 = vmatprep.mubr.bf16.mxu0 0
      %1143 = vmatmul.mubr.bf16.gmra.mxu0 %v1108
      %v1144 = vpop.f32.mrf.mxu0
      %v1145 = vadd.f32 %v1093, %v1144
      %v1146 = vpop.f32.mrf.mxu0
      %v1147 = vpop.f32.mrf.mxu0
      %v1148 = vpop.f32.mrf.mxu0
      %1149 = vdwg.mxu0
      %v1150 = vadd.f32 %v427, %v1145
      %1151 = vst.msk [vmem:[%s425] sm:$0xff] %vm431, %v1150
      %p1152 = scmp.lt.s32.totalorder %s23, 1
      %s1153 = scalar_select %p1152, %s23, 1
      %s1154 = smul.addr %s1153, 8
      %s1155 = scalar_lea.vmem %s12, %s1154
      // Predicated region
      $region69: #{cross_modal_block.25} parent=67 // pred_check
        %p1156 = pneg %p303
      $region70: #{cross_modal_block.25} parent=67 // pred_check_branch
        %1158 = sbr.rel (%p1156) target = $region72
      $region71: #{cross_modal_block.25} parent=67 // pred_region
        _
      $region72: #{cross_modal_block.25} parent=67 // pred_fallthru
        _
    $region68: #{cross_modal_block.25} parent=5 // pred_fallthru
      _
    %p1159 = scmp.le.s32.totalorder 2, %s18
    // Predicated region
    $region73: #{cross_modal_block.25} parent=5 // pred_check
      %p1160 = pneg %p1159
    $region74: #{cross_modal_block.25} parent=5 // pred_check_branch
      %1162 = sbr.rel (%p1160) target = $region76
    $region75: #{cross_modal_block.25} parent=5 // pred_region
      %s1163 = ssub.s32 %s18, 2
      // Predicated region
      $region77: #{cross_modal_block.25} parent=75 // pred_check
        %p1164 = pneg %p309
      $region78: #{cross_modal_block.25} parent=75 // pred_check_branch
        %1166 = sbr.rel (%p1164) target = $region80
      $region79: #{cross_modal_block.25} parent=75 // pred_region
        %p1167 = scmp.lt.s32.totalorder %s24, 1
        %s1168 = scalar_select %p1167, %s24, 1
        %s1169 = smul.addr %s1168, 8
        %s1170 = scalar_lea.vmem %s12, %s1169
      $region80: #{cross_modal_block.25} parent=75 // pred_fallthru
        _
    $region76: #{cross_modal_block.25} parent=5 // pred_fallthru
      _
  $region6: #{cross_modal_block.25} parent=0 // loop_footer
    %s22 = sadd.s32 1, %s18
  $region7: #{cross_modal_block.25} parent=0 // loop_footer_branch
    %17 = sbr.rel target = $region3
  $region8: #{cross_modal_block.25} parent=0 // loop_exit
    _

// kernel: cross_modal_block.26
$region0: #{cross_modal_block.26}
  #allocation0 [shape = 'u32[]', space=smem, size = 0x4, offset = 0x4, fixed_abs, tag = 'smem constant byte address 0x4 - core index']
  #allocation1 [shape = 'u32[144,128]{1,0:T(1,128)}', space=vmem, size = 0x12000, scoped, tag = 'internal scratch']
  %s0 = inlined_call_operand.vmem [shape: f32[2,8,32], index: 0, kind: input, shape index: {}]
  %s1 = inlined_call_operand.vmem [shape: f32[2,16,32], index: 1, kind: input, shape index: {}]
  %s2 = inlined_call_operand.vmem [shape: f32[1,32], index: 2, kind: input, shape index: {}]
  %s3 = inlined_call_operand.vmem [shape: f32[1,32], index: 3, kind: input, shape index: {}]
  %s4 = inlined_call_operand.vmem [shape: f32[1,32], index: 4, kind: input, shape index: {}]
  %s5 = inlined_call_operand.vmem [shape: f32[1,32], index: 5, kind: input, shape index: {}]
  %s6 = inlined_call_operand.vmem [shape: bf16[32,32], index: 6, kind: input, shape index: {}]
  %s7 = inlined_call_operand.vmem [shape: f32[1,32], index: 7, kind: input, shape index: {}]
  %s8 = inlined_call_operand.vmem [shape: bf16[32,64], index: 8, kind: input, shape index: {}]
  %s9 = inlined_call_operand.vmem [shape: f32[1,64], index: 9, kind: input, shape index: {}]
  %s10 = inlined_call_operand.vmem [shape: bf16[32,32], index: 10, kind: input, shape index: {}]
  %s11 = inlined_call_operand.vmem [shape: f32[1,32], index: 11, kind: input, shape index: {}]
  %s12 = inlined_call_operand.vmem [shape: f32[2,8,32], index: 12, kind: output, shape index: {}]
  %s13 = sld [smem:[#allocation0]]
  $region81: #{cross_modal_block.26} parent=0
    _
  %s15 = ssub.s32 1, %s13
  %s16 = scalar_select 0, %s15, %s13
  loop: start=0, step=1, limit=4
  $region2: #{cross_modal_block.26} parent=0 // loop_pre_header
    _
  $region3: #{cross_modal_block.26} parent=0 // loop_header
    %s18 = sphi 0, %s22
    %p19 = scmp.ge.s32.totalorder %s18, 4
    %s28 = sphi 0, %s30
    %s31 = sphi 0, %s28
    %s32 = sphi 0, %s31
    %s48 = sphi 0, %s32
    %s54 = sphi 0, %s56
    %s57 = sphi 0, %s54
    %s58 = sphi 0, %s57
    %s74 = sphi 0, %s58
    %s78 = sphi 0, %s78
    %s80 = sphi 0, %s78
    %s81 = sphi 0, %s80
    %s95 = sphi 0, %s81
    %s99 = sphi 0, %s99
    %s101 = sphi 0, %s99
    %s102 = sphi 0, %s101
    %s116 = sphi 0, %s102
    %s120 = sphi 0, %s120
    %s122 = sphi 0, %s120
    %s123 = sphi 0, %s122
    %s137 = sphi 0, %s123
    %s141 = sphi 0, %s141
    %s143 = sphi 0, %s141
    %s144 = sphi 0, %s143
    %s158 = sphi 0, %s144
    %s162 = sphi 0, %s162
    %s164 = sphi 0, %s162
    %s165 = sphi 0, %s164
    %s179 = sphi 0, %s165
    %s183 = sphi 0, %s183
    %s185 = sphi 0, %s183
    %s186 = sphi 0, %s185
    %s200 = sphi 0, %s186
    %s204 = sphi 0, %s204
    %s206 = sphi 0, %s204
    %s207 = sphi 0, %s206
    %s221 = sphi 0, %s207
    %s225 = sphi 0, %s225
    %s227 = sphi 0, %s225
    %s228 = sphi 0, %s227
    %s242 = sphi 0, %s228
    %s246 = sphi 0, %s246
    %s248 = sphi 0, %s246
    %s249 = sphi 0, %s248
    %s263 = sphi 0, %s249
    %s267 = sphi 0, %s267
    %s269 = sphi 0, %s267
    %s270 = sphi 0, %s269
    %s284 = sphi 0, %s270
    %s290 = sphi 0, %s292
    %s293 = sphi 0, %s290
    %s294 = sphi 0, %s293
    %s310 = sphi 0, %s294
  $region4: #{cross_modal_block.26} parent=0 // loop_header_branch
    %21 = sbr.rel (%p19) target = $region8
  $region5: #{cross_modal_block.26} parent=0 // loop_body
    %s23 = ssub.s32 %s18, 1
    %s24 = ssub.s32 %s18, 2
    %s25 = sadd.s32 %s18, 1
    %s26 = ssub.s32 %s18, %s25
    %p27 = scmp.eq.s32.totalorder %s26, 0
    %s29 = sadd.s32 %s28, 1
    %s30 = scalar_select %p27, %s28, %s29
    %p33 = pneg %p27
    %p34 = scmp.eq.s32.totalorder %s18, 1
    %p35 = por %p33, %p34
    %p36 = scmp.ne.s32.totalorder %s28, %s31
    %p37 = scmp.eq.s32.totalorder %s18, 0
    %p38 = por %p36, %p37
    %p39 = scmp.ne.s32.totalorder %s28, %s31
    %p40 = scmp.eq.s32.totalorder %s23, 1
    %p41 = por %p39, %p40
    %p42 = scmp.ne.s32.totalorder %s31, %s32
    %p43 = scmp.eq.s32.totalorder %s23, 0
    %p44 = por %p42, %p43
    %p45 = scmp.ne.s32.totalorder %s31, %s32
    %p46 = scmp.eq.s32.totalorder %s24, 1
    %p47 = por %p45, %p46
    %p49 = scmp.ne.s32.totalorder %s32, %s48
    %p50 = scmp.eq.s32.totalorder %s24, 0
    %p51 = por %p49, %p50
    %s52 = ssub.s32 %s18, %s25
    %p53 = scmp.eq.s32.totalorder %s52, 0
    %s55 = sadd.s32 %s54, 1
    %s56 = scalar_select %p53, %s54, %s55
    %p59 = pneg %p53
    %p60 = scmp.eq.s32.totalorder %s18, 1
    %p61 = por %p59, %p60
    %p62 = scmp.ne.s32.totalorder %s54, %s57
    %p63 = scmp.eq.s32.totalorder %s18, 0
    %p64 = por %p62, %p63
    %p65 = scmp.ne.s32.totalorder %s54, %s57
    %p66 = scmp.eq.s32.totalorder %s23, 1
    %p67 = por %p65, %p66
    %p68 = scmp.ne.s32.totalorder %s57, %s58
    %p69 = scmp.eq.s32.totalorder %s23, 0
    %p70 = por %p68, %p69
    %p71 = scmp.ne.s32.totalorder %s57, %s58
    %p72 = scmp.eq.s32.totalorder %s24, 1
    %p73 = por %p71, %p72
    %p75 = scmp.ne.s32.totalorder %s58, %s74
    %p76 = scmp.eq.s32.totalorder %s24, 0
    %p77 = por %p75, %p76
    %s79 = sadd.s32 %s78, 1
    %p82 = scmp.eq.s32.totalorder %s18, 1
    %p83 = scmp.ne.s32.totalorder %s78, %s80
    %p84 = scmp.eq.s32.totalorder %s18, 0
    %p85 = por %p83, %p84
    %p86 = scmp.ne.s32.totalorder %s78, %s80
    %p87 = scmp.eq.s32.totalorder %s23, 1
    %p88 = por %p86, %p87
    %p89 = scmp.ne.s32.totalorder %s80, %s81
    %p90 = scmp.eq.s32.totalorder %s23, 0
    %p91 = por %p89, %p90
    %p92 = scmp.ne.s32.totalorder %s80, %s81
    %p93 = scmp.eq.s32.totalorder %s24, 1
    %p94 = por %p92, %p93
    %p96 = scmp.ne.s32.totalorder %s81, %s95
    %p97 = scmp.eq.s32.totalorder %s24, 0
    %p98 = por %p96, %p97
    %s100 = sadd.s32 %s99, 1
    %p103 = scmp.eq.s32.totalorder %s18, 1
    %p104 = scmp.ne.s32.totalorder %s99, %s101
    %p105 = scmp.eq.s32.totalorder %s18, 0
    %p106 = por %p104, %p105
    %p107 = scmp.ne.s32.totalorder %s99, %s101
    %p108 = scmp.eq.s32.totalorder %s23, 1
    %p109 = por %p107, %p108
    %p110 = scmp.ne.s32.totalorder %s101, %s102
    %p111 = scmp.eq.s32.totalorder %s23, 0
    %p112 = por %p110, %p111
    %p113 = scmp.ne.s32.totalorder %s101, %s102
    %p114 = scmp.eq.s32.totalorder %s24, 1
    %p115 = por %p113, %p114
    %p117 = scmp.ne.s32.totalorder %s102, %s116
    %p118 = scmp.eq.s32.totalorder %s24, 0
    %p119 = por %p117, %p118
    %s121 = sadd.s32 %s120, 1
    %p124 = scmp.eq.s32.totalorder %s18, 1
    %p125 = scmp.ne.s32.totalorder %s120, %s122
    %p126 = scmp.eq.s32.totalorder %s18, 0
    %p127 = por %p125, %p126
    %p128 = scmp.ne.s32.totalorder %s120, %s122
    %p129 = scmp.eq.s32.totalorder %s23, 1
    %p130 = por %p128, %p129
    %p131 = scmp.ne.s32.totalorder %s122, %s123
    %p132 = scmp.eq.s32.totalorder %s23, 0
    %p133 = por %p131, %p132
    %p134 = scmp.ne.s32.totalorder %s122, %s123
    %p135 = scmp.eq.s32.totalorder %s24, 1
    %p136 = por %p134, %p135
    %p138 = scmp.ne.s32.totalorder %s123, %s137
    %p139 = scmp.eq.s32.totalorder %s24, 0
    %p140 = por %p138, %p139
    %s142 = sadd.s32 %s141, 1
    %p145 = scmp.eq.s32.totalorder %s18, 1
    %p146 = scmp.ne.s32.totalorder %s141, %s143
    %p147 = scmp.eq.s32.totalorder %s18, 0
    %p148 = por %p146, %p147
    %p149 = scmp.ne.s32.totalorder %s141, %s143
    %p150 = scmp.eq.s32.totalorder %s23, 1
    %p151 = por %p149, %p150
    %p152 = scmp.ne.s32.totalorder %s143, %s144
    %p153 = scmp.eq.s32.totalorder %s23, 0
    %p154 = por %p152, %p153
    %p155 = scmp.ne.s32.totalorder %s143, %s144
    %p156 = scmp.eq.s32.totalorder %s24, 1
    %p157 = por %p155, %p156
    %p159 = scmp.ne.s32.totalorder %s144, %s158
    %p160 = scmp.eq.s32.totalorder %s24, 0
    %p161 = por %p159, %p160
    %s163 = sadd.s32 %s162, 1
    %p166 = scmp.eq.s32.totalorder %s18, 1
    %p167 = scmp.ne.s32.totalorder %s162, %s164
    %p168 = scmp.eq.s32.totalorder %s18, 0
    %p169 = por %p167, %p168
    %p170 = scmp.ne.s32.totalorder %s162, %s164
    %p171 = scmp.eq.s32.totalorder %s23, 1
    %p172 = por %p170, %p171
    %p173 = scmp.ne.s32.totalorder %s164, %s165
    %p174 = scmp.eq.s32.totalorder %s23, 0
    %p175 = por %p173, %p174
    %p176 = scmp.ne.s32.totalorder %s164, %s165
    %p177 = scmp.eq.s32.totalorder %s24, 1
    %p178 = por %p176, %p177
    %p180 = scmp.ne.s32.totalorder %s165, %s179
    %p181 = scmp.eq.s32.totalorder %s24, 0
    %p182 = por %p180, %p181
    %s184 = sadd.s32 %s183, 1
    %p187 = scmp.eq.s32.totalorder %s18, 1
    %p188 = scmp.ne.s32.totalorder %s183, %s185
    %p189 = scmp.eq.s32.totalorder %s18, 0
    %p190 = por %p188, %p189
    %p191 = scmp.ne.s32.totalorder %s183, %s185
    %p192 = scmp.eq.s32.totalorder %s23, 1
    %p193 = por %p191, %p192
    %p194 = scmp.ne.s32.totalorder %s185, %s186
    %p195 = scmp.eq.s32.totalorder %s23, 0
    %p196 = por %p194, %p195
    %p197 = scmp.ne.s32.totalorder %s185, %s186
    %p198 = scmp.eq.s32.totalorder %s24, 1
    %p199 = por %p197, %p198
    %p201 = scmp.ne.s32.totalorder %s186, %s200
    %p202 = scmp.eq.s32.totalorder %s24, 0
    %p203 = por %p201, %p202
    %s205 = sadd.s32 %s204, 1
    %p208 = scmp.eq.s32.totalorder %s18, 1
    %p209 = scmp.ne.s32.totalorder %s204, %s206
    %p210 = scmp.eq.s32.totalorder %s18, 0
    %p211 = por %p209, %p210
    %p212 = scmp.ne.s32.totalorder %s204, %s206
    %p213 = scmp.eq.s32.totalorder %s23, 1
    %p214 = por %p212, %p213
    %p215 = scmp.ne.s32.totalorder %s206, %s207
    %p216 = scmp.eq.s32.totalorder %s23, 0
    %p217 = por %p215, %p216
    %p218 = scmp.ne.s32.totalorder %s206, %s207
    %p219 = scmp.eq.s32.totalorder %s24, 1
    %p220 = por %p218, %p219
    %p222 = scmp.ne.s32.totalorder %s207, %s221
    %p223 = scmp.eq.s32.totalorder %s24, 0
    %p224 = por %p222, %p223
    %s226 = sadd.s32 %s225, 1
    %p229 = scmp.eq.s32.totalorder %s18, 1
    %p230 = scmp.ne.s32.totalorder %s225, %s227
    %p231 = scmp.eq.s32.totalorder %s18, 0
    %p232 = por %p230, %p231
    %p233 = scmp.ne.s32.totalorder %s225, %s227
    %p234 = scmp.eq.s32.totalorder %s23, 1
    %p235 = por %p233, %p234
    %p236 = scmp.ne.s32.totalorder %s227, %s228
    %p237 = scmp.eq.s32.totalorder %s23, 0
    %p238 = por %p236, %p237
    %p239 = scmp.ne.s32.totalorder %s227, %s228
    %p240 = scmp.eq.s32.totalorder %s24, 1
    %p241 = por %p239, %p240
    %p243 = scmp.ne.s32.totalorder %s228, %s242
    %p244 = scmp.eq.s32.totalorder %s24, 0
    %p245 = por %p243, %p244
    %s247 = sadd.s32 %s246, 1
    %p250 = scmp.eq.s32.totalorder %s18, 1
    %p251 = scmp.ne.s32.totalorder %s246, %s248
    %p252 = scmp.eq.s32.totalorder %s18, 0
    %p253 = por %p251, %p252
    %p254 = scmp.ne.s32.totalorder %s246, %s248
    %p255 = scmp.eq.s32.totalorder %s23, 1
    %p256 = por %p254, %p255
    %p257 = scmp.ne.s32.totalorder %s248, %s249
    %p258 = scmp.eq.s32.totalorder %s23, 0
    %p259 = por %p257, %p258
    %p260 = scmp.ne.s32.totalorder %s248, %s249
    %p261 = scmp.eq.s32.totalorder %s24, 1
    %p262 = por %p260, %p261
    %p264 = scmp.ne.s32.totalorder %s249, %s263
    %p265 = scmp.eq.s32.totalorder %s24, 0
    %p266 = por %p264, %p265
    %s268 = sadd.s32 %s267, 1
    %p271 = scmp.eq.s32.totalorder %s18, 1
    %p272 = scmp.ne.s32.totalorder %s267, %s269
    %p273 = scmp.eq.s32.totalorder %s18, 0
    %p274 = por %p272, %p273
    %p275 = scmp.ne.s32.totalorder %s267, %s269
    %p276 = scmp.eq.s32.totalorder %s23, 1
    %p277 = por %p275, %p276
    %p278 = scmp.ne.s32.totalorder %s269, %s270
    %p279 = scmp.eq.s32.totalorder %s23, 0
    %p280 = por %p278, %p279
    %p281 = scmp.ne.s32.totalorder %s269, %s270
    %p282 = scmp.eq.s32.totalorder %s24, 1
    %p283 = por %p281, %p282
    %p285 = scmp.ne.s32.totalorder %s270, %s284
    %p286 = scmp.eq.s32.totalorder %s24, 0
    %p287 = por %p285, %p286
    %s288 = ssub.s32 %s18, %s25
    %p289 = scmp.eq.s32.totalorder %s288, 0
    %s291 = sadd.s32 %s290, 1
    %s292 = scalar_select %p289, %s290, %s291
    %p295 = pneg %p289
    %p296 = scmp.eq.s32.totalorder %s18, 1
    %p297 = por %p295, %p296
    %p298 = scmp.ne.s32.totalorder %s290, %s293
    %p299 = scmp.eq.s32.totalorder %s18, 0
    %p300 = por %p298, %p299
    %p301 = scmp.ne.s32.totalorder %s290, %s293
    %p302 = scmp.eq.s32.totalorder %s23, 1
    %p303 = por %p301, %p302
    %p304 = scmp.ne.s32.totalorder %s293, %s294
    %p305 = scmp.eq.s32.totalorder %s23, 0
    %p306 = por %p304, %p305
    %p307 = scmp.ne.s32.totalorder %s293, %s294
    %p308 = scmp.eq.s32.totalorder %s24, 1
    %p309 = por %p307, %p308
    %p311 = scmp.ne.s32.totalorder %s294, %s310
    %p312 = scmp.eq.s32.totalorder %s24, 0
    %p313 = por %p311, %p312
    %p314 = scmp.le.s32.totalorder 1, %s18
    %p315 = scmp.lt.s32.totalorder %s18, 3
    %p316 = pnand %p314, %p315
    %p317 = pneg %p316
    // Predicated region
    $region9: #{cross_modal_block.26} parent=5 // pred_check
      _
    $region10: #{cross_modal_block.26} parent=5 // pred_check_branch
      %319 = sbr.rel (%p316) target = $region12
    $region11: #{cross_modal_block.26} parent=5 // pred_region
      %s320 = ssub.s32 %s18, 1
      // Predicated region
      $region13: #{cross_modal_block.26} parent=11 // pred_check
        %p321 = pneg %p91
      $region14: #{cross_modal_block.26} parent=11 // pred_check_branch
        %323 = sbr.rel (%p321) target = $region16
      $region15: #{cross_modal_block.26} parent=11 // pred_region
        _
      $region16: #{cross_modal_block.26} parent=11 // pred_fallthru
        _
      // Predicated region
      $region17: #{cross_modal_block.26} parent=11 // pred_check
        %p324 = pneg %p112
      $region18: #{cross_modal_block.26} parent=11 // pred_check_branch
        %326 = sbr.rel (%p324) target = $region20
      $region19: #{cross_modal_block.26} parent=11 // pred_region
        _
      $region20: #{cross_modal_block.26} parent=11 // pred_fallthru
        _
      // Predicated region
      $region21: #{cross_modal_block.26} parent=11 // pred_check
        %p327 = pneg %p133
      $region22: #{cross_modal_block.26} parent=11 // pred_check_branch
        %329 = sbr.rel (%p327) target = $region24
      $region23: #{cross_modal_block.26} parent=11 // pred_region
        _
      $region24: #{cross_modal_block.26} parent=11 // pred_fallthru
        _
      // Predicated region
      $region25: #{cross_modal_block.26} parent=11 // pred_check
        %p330 = pneg %p154
      $region26: #{cross_modal_block.26} parent=11 // pred_check_branch
        %332 = sbr.rel (%p330) target = $region28
      $region27: #{cross_modal_block.26} parent=11 // pred_region
        _
      $region28: #{cross_modal_block.26} parent=11 // pred_fallthru
        _
      // Predicated region
      $region29: #{cross_modal_block.26} parent=11 // pred_check
        %p333 = pneg %p175
      $region30: #{cross_modal_block.26} parent=11 // pred_check_branch
        %335 = sbr.rel (%p333) target = $region32
      $region31: #{cross_modal_block.26} parent=11 // pred_region
        _
      $region32: #{cross_modal_block.26} parent=11 // pred_fallthru
        _
      // Predicated region
      $region33: #{cross_modal_block.26} parent=11 // pred_check
        %p336 = pneg %p196
      $region34: #{cross_modal_block.26} parent=11 // pred_check_branch
        %338 = sbr.rel (%p336) target = $region36
      $region35: #{cross_modal_block.26} parent=11 // pred_region
        _
      $region36: #{cross_modal_block.26} parent=11 // pred_fallthru
        _
      // Predicated region
      $region37: #{cross_modal_block.26} parent=11 // pred_check
        %p339 = pneg %p217
      $region38: #{cross_modal_block.26} parent=11 // pred_check_branch
        %341 = sbr.rel (%p339) target = $region40
      $region39: #{cross_modal_block.26} parent=11 // pred_region
        _
      $region40: #{cross_modal_block.26} parent=11 // pred_fallthru
        _
      // Predicated region
      $region41: #{cross_modal_block.26} parent=11 // pred_check
        %p342 = pneg %p238
      $region42: #{cross_modal_block.26} parent=11 // pred_check_branch
        %344 = sbr.rel (%p342) target = $region44
      $region43: #{cross_modal_block.26} parent=11 // pred_region
        _
      $region44: #{cross_modal_block.26} parent=11 // pred_fallthru
        _
      // Predicated region
      $region45: #{cross_modal_block.26} parent=11 // pred_check
        %p345 = pneg %p259
      $region46: #{cross_modal_block.26} parent=11 // pred_check_branch
        %347 = sbr.rel (%p345) target = $region48
      $region47: #{cross_modal_block.26} parent=11 // pred_region
        _
      $region48: #{cross_modal_block.26} parent=11 // pred_fallthru
        _
      // Predicated region
      $region49: #{cross_modal_block.26} parent=11 // pred_check
        %p348 = pneg %p280
      $region50: #{cross_modal_block.26} parent=11 // pred_check_branch
        %350 = sbr.rel (%p348) target = $region52
      $region51: #{cross_modal_block.26} parent=11 // pred_region
        _
      $region52: #{cross_modal_block.26} parent=11 // pred_fallthru
        _
    $region12: #{cross_modal_block.26} parent=5 // pred_fallthru
      _
    %p351 = scmp.lt.s32.totalorder %s18, 2
    // Predicated region
    $region53: #{cross_modal_block.26} parent=5 // pred_check
      %p352 = pneg %p351
    $region54: #{cross_modal_block.26} parent=5 // pred_check_branch
      %354 = sbr.rel (%p352) target = $region56
    $region55: #{cross_modal_block.26} parent=5 // pred_region
      // Predicated region
      $region57: #{cross_modal_block.26} parent=55 // pred_check
        %p355 = pneg %p38
      $region58: #{cross_modal_block.26} parent=55 // pred_check_branch
        %357 = sbr.rel (%p355) target = $region60
      $region59: #{cross_modal_block.26} parent=55 // pred_region
        %p358 = scmp.lt.s32.totalorder %s18, 1
        %s359 = scalar_select %p358, %s18, 1
        %s360 = smul.addr %s359, 8
        %s361 = scalar_lea.vmem %s0, %s360
      $region60: #{cross_modal_block.26} parent=55 // pred_fallthru
        _
      // Predicated region
      $region61: #{cross_modal_block.26} parent=55 // pred_check
        %p362 = pneg %p64
      $region62: #{cross_modal_block.26} parent=55 // pred_check_branch
        %364 = sbr.rel (%p362) target = $region64
      $region63: #{cross_modal_block.26} parent=55 // pred_region
        %p365 = scmp.lt.s32.totalorder %s18, 1
        %s366 = scalar_select %p365, %s18, 1
        %s367 = smul.addr %s366, 2
        %s368 = smul.addr %s367, 8
        %s369 = scalar_lea.vmem %s1, %s368
      $region64: #{cross_modal_block.26} parent=55 // pred_fallthru
        _
    $region56: #{cross_modal_block.26} parent=5 // pred_fallthru
      _
    %p370 = scmp.le.s32.totalorder 1, %s18
    %p371 = scmp.lt.s32.totalorder %s18, 3
    %p372 = pnand %p370, %p371
    %p373 = pneg %p372
    // Predicated region
    $region65: #{cross_modal_block.26} parent=5 // pred_check
      _
    $region66: #{cross_modal_block.26} parent=5 // pred_check_branch
      %375 = sbr.rel (%p372) target = $region68
    $region67: #{cross_modal_block.26} parent=5 // pred_region
      %s376 = ssub.s32 %s18, 1
      %p377 = scmp.lt.s32.totalorder %s23, 1
      %s378 = scalar_select %p377, %s23, 1
      %s379 = smul.addr %s378, 8
      %s380 = scalar_lea.vmem %s0, %s379
      %p381 = pneg %p44
      %p382 = pneg %p41
      %p383 = scmp.lt.s32.totalorder %s23, 1
      %s384 = scalar_select %p383, %s23, 1
      %s385 = smul.addr %s384, 2
      %s386 = smul.addr %s385, 8
      %s387 = scalar_lea.vmem %s1, %s386
      %p388 = pneg %p70
      %p389 = pneg %p67
      %p390 = pneg %p91
      %p391 = pneg %p88
      %p392 = pneg %p112
      %p393 = pneg %p109
      %p394 = pneg %p133
      %p395 = pneg %p130
      %p396 = pneg %p154
      %p397 = pneg %p151
      %p398 = pneg %p175
      %p399 = pneg %p172
      %p400 = pneg %p196
      %p401 = pneg %p193
      %p402 = pneg %p217
      %p403 = pneg %p214
      %p404 = pneg %p238
      %p405 = pneg %p235
      %p406 = pneg %p259
      %p407 = pneg %p256
      %p408 = pneg %p280
      %p409 = pneg %p277
      %p410 = pneg %p306
      %p411 = pneg %p303
      %p412 = scmp.lt.s32.totalorder %s23, 1
      %s413 = scalar_select %p412, %s23, 1
      %s414 = smul.addr %s413, 8
      %s415 = scalar_lea.vmem %s12, %s414
      %p416 = scmp.lt.s32.totalorder %s23, 1
      %s417 = scalar_select %p416, %s23, 1
      %s418 = smul.addr %s417, 8
      %s419 = scalar_lea.vmem %s0, %s418
      %p420 = scmp.lt.s32.totalorder %s23, 1
      %s421 = scalar_select %p420, %s23, 1
      %s422 = smul.addr %s421, 2
      %s423 = smul.addr %s422, 8
      %s424 = scalar_lea.vmem %s1, %s423
      %p425 = scmp.lt.s32.totalorder %s23, 1
      %s426 = scalar_select %p425, %s23, 1
      %s427 = smul.addr %s426, 8
      %s428 = scalar_lea.vmem %s12, %s427
      %v430 = vld [vmem:[%s419] sm:$0xff]
      %v431 = vld [vmem:[%s424] sm:$0xff]
      %v432 = vld [vmem:[%s424 + $0x8] sm:$0xff]
      %v433 = vld [vmem:[%s2] sm:$0x1]
      %v434 = vld [vmem:[%s3] sm:$0x1]
      %vm435 = vcmask 261120
      %v436 = vsel %vm435, %v430, 0.0
      %437 = vadd.xlane.f32.xlu0 %v436
      %v438 = vpop.xlane.xlu0 %437
      %v439 = vrcp.pop 32.0
      %v440 = vmul.f32 %v438, %v439
      %v441 = vsub.f32 %v430, %v440
      %v442 = vmul.f32 %v441, %v441
      %v443 = vsel %vm435, %v442, 0.0
      %444 = vadd.xlane.f32.xlu0 %v443
      %v445 = vpop.xlane.xlu0 %444
      %v446 = vmul.f32 %v445, %v439
      %v447 = vadd.f32 %v446, 1e-05
      %v448 = vrsqrt.pop %v447
      %v449 = vmul.f32 %v441, %v448
      %v451 = vlaneseq
      %v452 = vshrl.u32 %v451, 7
      %v453 = vsub.s32 0, %v452
      %v454 = vrot.slane %v433, %v453
      %v456 = vmul.f32 %v449, %v454
      %v458 = vlaneseq
      %v459 = vshrl.u32 %v458, 7
      %v460 = vsub.s32 0, %v459
      %v461 = vrot.slane %v434, %v460
      %v463 = vadd.f32 %v456, %v461
      %v464 = vld [vmem:[%s4] sm:$0x1]
      %v465 = vld [vmem:[%s5] sm:$0x1]
      %v466 = vsel %vm435, %v431, 0.0
      %467 = vadd.xlane.f32.xlu0 %v466
      %v468 = vpop.xlane.xlu0 %467
      %v469 = vsel %vm435, %v432, 0.0
      %470 = vadd.xlane.f32.xlu0 %v469
      %v471 = vpop.xlane.xlu0 %470
      %v472 = vmul.f32 %v468, %v439
      %v473 = vmul.f32 %v471, %v439
      %v474 = vsub.f32 %v431, %v472
      %v475 = vsub.f32 %v432, %v473
      %v476 = vmul.f32 %v474, %v474
      %v477 = vmul.f32 %v475, %v475
      %v478 = vsel %vm435, %v476, 0.0
      %479 = vadd.xlane.f32.xlu0 %v478
      %v480 = vpop.xlane.xlu0 %479
      %v481 = vsel %vm435, %v477, 0.0
      %482 = vadd.xlane.f32.xlu0 %v481
      %v483 = vpop.xlane.xlu0 %482
      %v484 = vmul.f32 %v480, %v439
      %v485 = vmul.f32 %v483, %v439
      %v486 = vadd.f32 %v484, 1e-05
      %v487 = vadd.f32 %v485, 1e-05
      %v488 = vrsqrt.pop %v486
      %v489 = vrsqrt.pop %v487
      %v490 = vmul.f32 %v474, %v488
      %v491 = vmul.f32 %v475, %v489
      %v493 = vlaneseq
      %v494 = vshrl.u32 %v493, 7
      %v495 = vsub.s32 0, %v494
      %v496 = vrot.slane %v464, %v495
      %v498 = vmul.f32 %v490, %v496
      %v499 = vmul.f32 %v491, %v496
      %v501 = vlaneseq
      %v502 = vshrl.u32 %v501, 7
      %v503 = vsub.s32 0, %v502
      %v504 = vrot.slane %v465, %v503
      %v506 = vadd.f32 %v498, %v504
      %v507 = vadd.f32 %v499, %v504
      %v508 = vpack.c.bf16 %v463, %v463
      %v509 = vld [vmem:[%s6] sm:$0xf]
      %v510 = vld [vmem:[%s6 + $0x4] sm:$0xf]
      %v511 = vld [vmem:[%s6 + $0x8] sm:$0xf]
      %v512 = vld [vmem:[%s6 + $0xc] sm:$0xf]
      %v513 = vld [vmem:[%s7] sm:$0x1]
      %v515 = vlaneseq
      %v516 = vshrl.u32 %v515, 7
      %v517 = vsub.s32 0, %v516
      %v518 = vrot.slane %v513, %v517
      %v524 = vunpack.c.l.b16 %v509
      %v525 = vunpack.c.l.b16 %v510
      %v526 = vunpack.c.l.b16 %v511
      %v527 = vunpack.c.l.b16 %v512
      %v528 = vpack.c.b16 %v525, %v524
      %v529 = vpack.c.b16 %v527, %v526
      %v533 = vsel %vm435, %v508, 0
      %535 = vmatprep.subr.bf16.mxu0 0
      %536 = vmatpush1.bf16.msra.mxu0 0
      %537 = vmatprep.subr.bf16.mxu0 0
      %538 = vmatpush1.bf16.msra.mxu0 0
      %539 = vmatprep.subr.bf16.mxu0 0
      %540 = vmatpush1.bf16.msra.mxu0 0
      %541 = vmatprep.subr.bf16.mxu0 0
      %542 = vmatpush1.bf16.msra.mxu0 0
      %543 = vmatprep.subr.bf16.mxu0 0
      %544 = vmatpush1.bf16.msra.mxu0 0
      %545 = vmatprep.subr.bf16.mxu0 0
      %546 = vmatpush1.bf16.msra.mxu0 0
      %547 = vmatprep.subr.bf16.mxu0 0
      %548 = vmatpush1.bf16.msra.mxu0 %v529
      %549 = vmatprep.subr.bf16.mxu0 0
      %550 = vmatpush1.bf16.msra.mxu0 %v528
      %551 = vmatprep.subr.bf16.mxu0 0
      %552 = vmatpush2.bf16.msra.mxu0 0
      %553 = vmatprep.subr.bf16.mxu0 0
      %554 = vmatpush2.bf16.msra.mxu0 0
      %555 = vmatprep.subr.bf16.mxu0 0
      %556 = vmatpush2.bf16.msra.mxu0 0
      %557 = vmatprep.subr.bf16.mxu0 0
      %558 = vmatpush2.bf16.msra.mxu0 0
      %559 = vmatprep.subr.bf16.mxu0 0
      %560 = vmatpush2.bf16.msra.mxu0 0
      %561 = vmatprep.subr.bf16.mxu0 0
      %562 = vmatpush2.bf16.msra.mxu0 0
      %563 = vmatprep.subr.bf16.mxu0 0
      %564 = vmatpush2.bf16.msra.mxu0 0
      %565 = vmatprep.subr.bf16.mxu0 0
      %566 = vmatpush2.bf16.msra.mxu0 0
      %567 = vmatprep.mubr.bf16.mxu0 0
      %568 = vmatmul.mubr.bf16.gmra.mxu0 %v533
      %v569 = vpop.f32.mrf.mxu0
      %v570 = vadd.f32 %v518, %v569
      %v571 = vpop.f32.mrf.mxu0
      %v572 = vpop.f32.mrf.mxu0
      %v573 = vpop.f32.mrf.mxu0
      %574 = vdwg.mxu0
      %v575 = vpack.c.bf16 %v507, %v506
      %v576 = vld [vmem:[%s8] sm:$0xf]
      %v577 = vld [vmem:[%s8 + $0x4] sm:$0xf]
      %v578 = vld [vmem:[%s8 + $0x8] sm:$0xf]
      %v579 = vld [vmem:[%s8 + $0xc] sm:$0xf]
      %v580 = vld [vmem:[%s9] sm:$0x1]
      %v582 = vlaneseq
      %v583 = vshrl.u32 %v582, 7
      %v584 = vsub.s32 0, %v583
      %v585 = vrot.slane %v580, %v584
      %v591 = vunpack.c.l.b16 %v576
      %v592 = vunpack.c.l.b16 %v577
      %v593 = vunpack.c.l.b16 %v578
      %v594 = vunpack.c.l.b16 %v579
      %v595 = vpack.c.b16 %v592, %v591
      %v596 = vpack.c.b16 %v594, %v593
      %v600 = vsel %vm435, %v575, 0
      %602 = vmatprep.subr.bf16.mxu0 0
      %603 = vmatpush1.bf16.msra.mxu0 0
      %604 = vmatprep.subr.bf16.mxu0 0
      %605 = vmatpush1.bf16.msra.mxu0 0
      %606 = vmatprep.subr.bf16.mxu0 0
      %607 = vmatpush1.bf16.msra.mxu0 0
      %608 = vmatprep.subr.bf16.mxu0 0
      %609 = vmatpush1.bf16.msra.mxu0 0
      %610 = vmatprep.subr.bf16.mxu0 0
      %611 = vmatpush1.bf16.msra.mxu0 0
      %612 = vmatprep.subr.bf16.mxu0 0
      %613 = vmatpush1.bf16.msra.mxu0 0
      %614 = vmatprep.subr.bf16.mxu0 0
      %615 = vmatpush1.bf16.msra.mxu0 %v596
      %616 = vmatprep.subr.bf16.mxu0 0
      %617 = vmatpush1.bf16.msra.mxu0 %v595
      %618 = vmatprep.subr.bf16.mxu0 0
      %619 = vmatpush2.bf16.msra.mxu0 0
      %620 = vmatprep.subr.bf16.mxu0 0
      %621 = vmatpush2.bf16.msra.mxu0 0
      %622 = vmatprep.subr.bf16.mxu0 0
      %623 = vmatpush2.bf16.msra.mxu0 0
      %624 = vmatprep.subr.bf16.mxu0 0
      %625 = vmatpush2.bf16.msra.mxu0 0
      %626 = vmatprep.subr.bf16.mxu0 0
      %627 = vmatpush2.bf16.msra.mxu0 0
      %628 = vmatprep.subr.bf16.mxu0 0
      %629 = vmatpush2.bf16.msra.mxu0 0
      %630 = vmatprep.subr.bf16.mxu0 0
      %631 = vmatpush2.bf16.msra.mxu0 0
      %632 = vmatprep.subr.bf16.mxu0 0
      %633 = vmatpush2.bf16.msra.mxu0 0
      %634 = vmatprep.mubr.bf16.mxu0 0
      %635 = vmatmul.mubr.bf16.gmra.mxu0 %v600
      %v636 = vpop.f32.mrf.mxu0
      %v637 = vadd.f32 %v585, %v636
      %v638 = vpop.f32.mrf.mxu0
      %v639 = vpop.f32.mrf.mxu0
      %v640 = vadd.f32 %v585, %v639
      %v641 = vpop.f32.mrf.mxu0
      %642 = vdwg.mxu0
      %v643 = vld [vmem:[%s10] sm:$0xf]
      %v644 = vld [vmem:[%s10 + $0x4] sm:$0xf]
      %v645 = vld [vmem:[%s10 + $0x8] sm:$0xf]
      %v646 = vld [vmem:[%s10 + $0xc] sm:$0xf]
      %v647 = vld [vmem:[%s11] sm:$0x1]
      %v648 = vmul.f32 %v570, 0.35355338
      %v649 = vpack.c.bf16 %v648, %v648
      %v650 = vpack.c.bf16 %v640, %v637
      %vm651 = vcmask 64512
      %v653 = vsel %vm651, %v649, 0
      %v656 = vsel %vm651, %v650, 0
      %658 = vmatprep.subr.bf16.mxu0 0
      %659 = vmatpush1.bf16.xpose.msra.mxu0 0
      %660 = vmatprep.subr.bf16.mxu0 0
      %661 = vmatpush1.bf16.xpose.msra.mxu0 0
      %662 = vmatprep.subr.bf16.mxu0 0
      %663 = vmatpush1.bf16.xpose.msra.mxu0 0
      %664 = vmatprep.subr.bf16.mxu0 0
      %665 = vmatpush1.bf16.xpose.msra.mxu0 0
      %666 = vmatprep.subr.bf16.mxu0 0
      %667 = vmatpush1.bf16.xpose.msra.mxu0 0
      %668 = vmatprep.subr.bf16.mxu0 0
      %669 = vmatpush1.bf16.xpose.msra.mxu0 0
      %670 = vmatprep.subr.bf16.mxu0 0
      %671 = vmatpush1.bf16.xpose.msra.mxu0 0
      %672 = vmatprep.subr.bf16.mxu0 0
      %673 = vmatpush1.bf16.xpose.msra.mxu0 %v656
      %674 = vmatprep.subr.bf16.mxu0 0
      %675 = vmatpush2.bf16.xpose.msra.mxu0 0
      %676 = vmatprep.subr.bf16.mxu0 0
      %677 = vmatpush2.bf16.xpose.msra.mxu0 0
      %678 = vmatprep.subr.bf16.mxu0 0
      %679 = vmatpush2.bf16.xpose.msra.mxu0 0
      %680 = vmatprep.subr.bf16.mxu0 0
      %681 = vmatpush2.bf16.xpose.msra.mxu0 0
      %682 = vmatprep.subr.bf16.mxu0 0
      %683 = vmatpush2.bf16.xpose.msra.mxu0 0
      %684 = vmatprep.subr.bf16.mxu0 0
      %685 = vmatpush2.bf16.xpose.msra.mxu0 0
      %686 = vmatprep.subr.bf16.mxu0 0
      %687 = vmatpush2.bf16.xpose.msra.mxu0 0
      %688 = vmatprep.subr.bf16.mxu0 0
      %689 = vmatpush2.bf16.xpose.msra.mxu0 0
      %690 = vmatprep.mubr.bf16.mxu0 0
      %691 = vmatmul.mubr.bf16.gmra.mxu0 %v653
      %v692 = vpop.f32.mrf.mxu0
      %v693 = vadd.f32 0.0, %v692
      %v694 = vpop.f32.mrf.mxu0
      %v695 = vpop.f32.mrf.mxu0
      %v696 = vpop.f32.mrf.mxu0
      %697 = vdwg.mxu0
      %vm698 = vcmask 130048
      %v699 = vsel %vm698, %v693, -inf
      %700 = vmax.xlane.f32.xlu0 %v699
      %v701 = vpop.xlane.xlu0 %700
      %v702 = vsub.f32 %v693, %v701
      %v703 = vmul.f32 %v702, 1.442695
      %v704 = vpow.pop %v703
      %v705 = vsel %vm698, %v704, 0.0
      %706 = vadd.xlane.f32.xlu0 %v705
      %v707 = vpop.xlane.xlu0 %706
      %v708 = vpack.c.bf16 %v704, %v704
      %710 = vrot.lane.b32.xlu0 %v650, 96
      %v711 = vpop.permute.xlu0 %710
      %v714 = vsel %vm698, %v708, 0
      %716 = vmatprep.subr.bf16.mxu0 0
      %717 = vmatpush1.bf16.msra.mxu0 0
      %718 = vmatprep.subr.bf16.mxu0 0
      %719 = vmatpush1.bf16.msra.mxu0 0
      %720 = vmatprep.subr.bf16.mxu0 0
      %721 = vmatpush1.bf16.msra.mxu0 0
      %722 = vmatprep.subr.bf16.mxu0 0
      %723 = vmatpush1.bf16.msra.mxu0 0
      %724 = vmatprep.subr.bf16.mxu0 0
      %725 = vmatpush1.bf16.msra.mxu0 0
      %726 = vmatprep.subr.bf16.mxu0 0
      %727 = vmatpush1.bf16.msra.mxu0 0
      %728 = vmatprep.subr.bf16.mxu0 0
      %729 = vmatpush1.bf16.msra.mxu0 0
      %730 = vmatprep.subr.bf16.mxu0 0
      %731 = vmatpush1.bf16.msra.mxu0 %v711
      %732 = vmatprep.subr.bf16.mxu0 0
      %733 = vmatpush2.bf16.msra.mxu0 0
      %734 = vmatprep.subr.bf16.mxu0 0
      %735 = vmatpush2.bf16.msra.mxu0 0
      %736 = vmatprep.subr.bf16.mxu0 0
      %737 = vmatpush2.bf16.msra.mxu0 0
      %738 = vmatprep.subr.bf16.mxu0 0
      %739 = vmatpush2.bf16.msra.mxu0 0
      %740 = vmatprep.subr.bf16.mxu0 0
      %741 = vmatpush2.bf16.msra.mxu0 0
      %742 = vmatprep.subr.bf16.mxu0 0
      %743 = vmatpush2.bf16.msra.mxu0 0
      %744 = vmatprep.subr.bf16.mxu0 0
      %745 = vmatpush2.bf16.msra.mxu0 0
      %746 = vmatprep.subr.bf16.mxu0 0
      %747 = vmatpush2.bf16.msra.mxu0 0
      %748 = vmatprep.mubr.bf16.mxu0 0
      %749 = vmatmul.mubr.bf16.gmra.mxu0 %v714
      %v750 = vpop.f32.mrf.mxu0
      %v751 = vadd.f32 0.0, %v750
      %v752 = vpop.f32.mrf.mxu0
      %v753 = vpop.f32.mrf.mxu0
      %v754 = vpop.f32.mrf.mxu0
      %755 = vdwg.mxu0
      %v756 = vrcp.pop %v707
      %v757 = vmul.f32 %v751, %v756
      %759 = vrot.lane.b32.xlu0 %v649, 120
      %v760 = vpop.permute.xlu0 %759
      %761 = vrot.lane.b32.xlu0 %v650, 120
      %v762 = vpop.permute.xlu0 %761
      %v764 = vsel %vm651, %v760, 0
      %v767 = vsel %vm651, %v762, 0
      %769 = vmatprep.subr.bf16.mxu0 0
      %770 = vmatpush1.bf16.xpose.msra.mxu0 0
      %771 = vmatprep.subr.bf16.mxu0 0
      %772 = vmatpush1.bf16.xpose.msra.mxu0 0
      %773 = vmatprep.subr.bf16.mxu0 0
      %774 = vmatpush1.bf16.xpose.msra.mxu0 0
      %775 = vmatprep.subr.bf16.mxu0 0
      %776 = vmatpush1.bf16.xpose.msra.mxu0 0
      %777 = vmatprep.subr.bf16.mxu0 0
      %778 = vmatpush1.bf16.xpose.msra.mxu0 0
      %779 = vmatprep.subr.bf16.mxu0 0
      %780 = vmatpush1.bf16.xpose.msra.mxu0 0
      %781 = vmatprep.subr.bf16.mxu0 0
      %782 = vmatpush1.bf16.xpose.msra.mxu0 0
      %783 = vmatprep.subr.bf16.mxu0 0
      %784 = vmatpush1.bf16.xpose.msra.mxu0 %v767
      %785 = vmatprep.subr.bf16.mxu0 0
      %786 = vmatpush2.bf16.xpose.msra.mxu0 0
      %787 = vmatprep.subr.bf16.mxu0 0
      %788 = vmatpush2.bf16.xpose.msra.mxu0 0
      %789 = vmatprep.subr.bf16.mxu0 0
      %790 = vmatpush2.bf16.xpose.msra.mxu0 0
      %791 = vmatprep.subr.bf16.mxu0 0
      %792 = vmatpush2.bf16.xpose.msra.mxu0 0
      %793 = vmatprep.subr.bf16.mxu0 0
      %794 = vmatpush2.bf16.xpose.msra.mxu0 0
      %795 = vmatprep.subr.bf16.mxu0 0
      %796 = vmatpush2.bf16.xpose.msra.mxu0 0
      %797 = vmatprep.subr.bf16.mxu0 0
      %798 = vmatpush2.bf16.xpose.msra.mxu0 0
      %799 = vmatprep.subr.bf16.mxu0 0
      %800 = vmatpush2.bf16.xpose.msra.mxu0 0
      %801 = vmatprep.mubr.bf16.mxu0 0
      %802 = vmatmul.mubr.bf16.gmra.mxu0 %v764
      %v803 = vpop.f32.mrf.mxu0
      %v804 = vadd.f32 0.0, %v803
      %v805 = vpop.f32.mrf.mxu0
      %v806 = vpop.f32.mrf.mxu0
      %v807 = vpop.f32.mrf.mxu0
      %808 = vdwg.mxu0
      %v809 = vsel %vm698, %v804, -inf
      %810 = vmax.xlane.f32.xlu0 %v809
      %v811 = vpop.xlane.xlu0 %810
      %v812 = vsub.f32 %v804, %v811
      %v813 = vmul.f32 %v812, 1.442695
      %v814 = vpow.pop %v813
      %v815 = vsel %vm698, %v814, 0.0
      %816 = vadd.xlane.f32.xlu0 %v815
      %v817 = vpop.xlane.xlu0 %816
      %v818 = vpack.c.bf16 %v814, %v814
      %819 = vrot.lane.b32.xlu0 %v650, 88
      %v820 = vpop.permute.xlu0 %819
      %v823 = vsel %vm698, %v818, 0
      %825 = vmatprep.subr.bf16.mxu0 0
      %826 = vmatpush1.bf16.msra.mxu0 0
      %827 = vmatprep.subr.bf16.mxu0 0
      %828 = vmatpush1.bf16.msra.mxu0 0
      %829 = vmatprep.subr.bf16.mxu0 0
      %830 = vmatpush1.bf16.msra.mxu0 0
      %831 = vmatprep.subr.bf16.mxu0 0
      %832 = vmatpush1.bf16.msra.mxu0 0
      %833 = vmatprep.subr.bf16.mxu0 0
      %834 = vmatpush1.bf16.msra.mxu0 0
      %835 = vmatprep.subr.bf16.mxu0 0
      %836 = vmatpush1.bf16.msra.mxu0 0
      %837 = vmatprep.subr.bf16.mxu0 0
      %838 = vmatpush1.bf16.msra.mxu0 0
      %839 = vmatprep.subr.bf16.mxu0 0
      %840 = vmatpush1.bf16.msra.mxu0 %v820
      %841 = vmatprep.subr.bf16.mxu0 0
      %842 = vmatpush2.bf16.msra.mxu0 0
      %843 = vmatprep.subr.bf16.mxu0 0
      %844 = vmatpush2.bf16.msra.mxu0 0
      %845 = vmatprep.subr.bf16.mxu0 0
      %846 = vmatpush2.bf16.msra.mxu0 0
      %847 = vmatprep.subr.bf16.mxu0 0
      %848 = vmatpush2.bf16.msra.mxu0 0
      %849 = vmatprep.subr.bf16.mxu0 0
      %850 = vmatpush2.bf16.msra.mxu0 0
      %851 = vmatprep.subr.bf16.mxu0 0
      %852 = vmatpush2.bf16.msra.mxu0 0
      %853 = vmatprep.subr.bf16.mxu0 0
      %854 = vmatpush2.bf16.msra.mxu0 0
      %855 = vmatprep.subr.bf16.mxu0 0
      %856 = vmatpush2.bf16.msra.mxu0 0
      %857 = vmatprep.mubr.bf16.mxu0 0
      %858 = vmatmul.mubr.bf16.gmra.mxu0 %v823
      %v859 = vpop.f32.mrf.mxu0
      %v860 = vadd.f32 0.0, %v859
      %v861 = vpop.f32.mrf.mxu0
      %v862 = vpop.f32.mrf.mxu0
      %v863 = vpop.f32.mrf.mxu0
      %864 = vdwg.mxu0
      %v865 = vrcp.pop %v817
      %v866 = vmul.f32 %v860, %v865
      %867 = vrot.lane.b32.xlu0 %v649, 112
      %v868 = vpop.permute.xlu0 %867
      %869 = vrot.lane.b32.xlu0 %v650, 112
      %v870 = vpop.permute.xlu0 %869
      %v872 = vsel %vm651, %v868, 0
      %v875 = vsel %vm651, %v870, 0
      %877 = vmatprep.subr.bf16.mxu0 0
      %878 = vmatpush1.bf16.xpose.msra.mxu0 0
      %879 = vmatprep.subr.bf16.mxu0 0
      %880 = vmatpush1.bf16.xpose.msra.mxu0 0
      %881 = vmatprep.subr.bf16.mxu0 0
      %882 = vmatpush1.bf16.xpose.msra.mxu0 0
      %883 = vmatprep.subr.bf16.mxu0 0
      %884 = vmatpush1.bf16.xpose.msra.mxu0 0
      %885 = vmatprep.subr.bf16.mxu0 0
      %886 = vmatpush1.bf16.xpose.msra.mxu0 0
      %887 = vmatprep.subr.bf16.mxu0 0
      %888 = vmatpush1.bf16.xpose.msra.mxu0 0
      %889 = vmatprep.subr.bf16.mxu0 0
      %890 = vmatpush1.bf16.xpose.msra.mxu0 0
      %891 = vmatprep.subr.bf16.mxu0 0
      %892 = vmatpush1.bf16.xpose.msra.mxu0 %v875
      %893 = vmatprep.subr.bf16.mxu0 0
      %894 = vmatpush2.bf16.xpose.msra.mxu0 0
      %895 = vmatprep.subr.bf16.mxu0 0
      %896 = vmatpush2.bf16.xpose.msra.mxu0 0
      %897 = vmatprep.subr.bf16.mxu0 0
      %898 = vmatpush2.bf16.xpose.msra.mxu0 0
      %899 = vmatprep.subr.bf16.mxu0 0
      %900 = vmatpush2.bf16.xpose.msra.mxu0 0
      %901 = vmatprep.subr.bf16.mxu0 0
      %902 = vmatpush2.bf16.xpose.msra.mxu0 0
      %903 = vmatprep.subr.bf16.mxu0 0
      %904 = vmatpush2.bf16.xpose.msra.mxu0 0
      %905 = vmatprep.subr.bf16.mxu0 0
      %906 = vmatpush2.bf16.xpose.msra.mxu0 0
      %907 = vmatprep.subr.bf16.mxu0 0
      %908 = vmatpush2.bf16.xpose.msra.mxu0 0
      %909 = vmatprep.mubr.bf16.mxu0 0
      %910 = vmatmul.mubr.bf16.gmra.mxu0 %v872
      %v911 = vpop.f32.mrf.mxu0
      %v912 = vadd.f32 0.0, %v911
      %v913 = vpop.f32.mrf.mxu0
      %v914 = vpop.f32.mrf.mxu0
      %v915 = vpop.f32.mrf.mxu0
      %916 = vdwg.mxu0
      %v917 = vsel %vm698, %v912, -inf
      %918 = vmax.xlane.f32.xlu0 %v917
      %v919 = vpop.xlane.xlu0 %918
      %v920 = vsub.f32 %v912, %v919
      %v921 = vmul.f32 %v920, 1.442695
      %v922 = vpow.pop %v921
      %v923 = vsel %vm698, %v922, 0.0
      %924 = vadd.xlane.f32.xlu0 %v923
      %v925 = vpop.xlane.xlu0 %924
      %v926 = vpack.c.bf16 %v922, %v922
      %927 = vrot.lane.b32.xlu0 %v650, 80
      %v928 = vpop.permute.xlu0 %927
      %v931 = vsel %vm698, %v926, 0
      %933 = vmatprep.subr.bf16.mxu0 0
      %934 = vmatpush1.bf16.msra.mxu0 0
      %935 = vmatprep.subr.bf16.mxu0 0
      %936 = vmatpush1.bf16.msra.mxu0 0
      %937 = vmatprep.subr.bf16.mxu0 0
      %938 = vmatpush1.bf16.msra.mxu0 0
      %939 = vmatprep.subr.bf16.mxu0 0
      %940 = vmatpush1.bf16.msra.mxu0 0
      %941 = vmatprep.subr.bf16.mxu0 0
      %942 = vmatpush1.bf16.msra.mxu0 0
      %943 = vmatprep.subr.bf16.mxu0 0
      %944 = vmatpush1.bf16.msra.mxu0 0
      %945 = vmatprep.subr.bf16.mxu0 0
      %946 = vmatpush1.bf16.msra.mxu0 0
      %947 = vmatprep.subr.bf16.mxu0 0
      %948 = vmatpush1.bf16.msra.mxu0 %v928
      %949 = vmatprep.subr.bf16.mxu0 0
      %950 = vmatpush2.bf16.msra.mxu0 0
      %951 = vmatprep.subr.bf16.mxu0 0
      %952 = vmatpush2.bf16.msra.mxu0 0
      %953 = vmatprep.subr.bf16.mxu0 0
      %954 = vmatpush2.bf16.msra.mxu0 0
      %955 = vmatprep.subr.bf16.mxu0 0
      %956 = vmatpush2.bf16.msra.mxu0 0
      %957 = vmatprep.subr.bf16.mxu0 0
      %958 = vmatpush2.bf16.msra.mxu0 0
      %959 = vmatprep.subr.bf16.mxu0 0
      %960 = vmatpush2.bf16.msra.mxu0 0
      %961 = vmatprep.subr.bf16.mxu0 0
      %962 = vmatpush2.bf16.msra.mxu0 0
      %963 = vmatprep.subr.bf16.mxu0 0
      %964 = vmatpush2.bf16.msra.mxu0 0
      %965 = vmatprep.mubr.bf16.mxu0 0
      %966 = vmatmul.mubr.bf16.gmra.mxu0 %v931
      %v967 = vpop.f32.mrf.mxu0
      %v968 = vadd.f32 0.0, %v967
      %v969 = vpop.f32.mrf.mxu0
      %v970 = vpop.f32.mrf.mxu0
      %v971 = vpop.f32.mrf.mxu0
      %972 = vdwg.mxu0
      %v973 = vrcp.pop %v925
      %v974 = vmul.f32 %v968, %v973
      %975 = vrot.lane.b32.xlu0 %v649, 104
      %v976 = vpop.permute.xlu0 %975
      %977 = vrot.lane.b32.xlu0 %v650, 104
      %v978 = vpop.permute.xlu0 %977
      %v980 = vsel %vm651, %v976, 0
      %v983 = vsel %vm651, %v978, 0
      %985 = vmatprep.subr.bf16.mxu0 0
      %986 = vmatpush1.bf16.xpose.msra.mxu0 0
      %987 = vmatprep.subr.bf16.mxu0 0
      %988 = vmatpush1.bf16.xpose.msra.mxu0 0
      %989 = vmatprep.subr.bf16.mxu0 0
      %990 = vmatpush1.bf16.xpose.msra.mxu0 0
      %991 = vmatprep.subr.bf16.mxu0 0
      %992 = vmatpush1.bf16.xpose.msra.mxu0 0
      %993 = vmatprep.subr.bf16.mxu0 0
      %994 = vmatpush1.bf16.xpose.msra.mxu0 0
      %995 = vmatprep.subr.bf16.mxu0 0
      %996 = vmatpush1.bf16.xpose.msra.mxu0 0
      %997 = vmatprep.subr.bf16.mxu0 0
      %998 = vmatpush1.bf16.xpose.msra.mxu0 0
      %999 = vmatprep.subr.bf16.mxu0 0
      %1000 = vmatpush1.bf16.xpose.msra.mxu0 %v983
      %1001 = vmatprep.subr.bf16.mxu0 0
      %1002 = vmatpush2.bf16.xpose.msra.mxu0 0
      %1003 = vmatprep.subr.bf16.mxu0 0
      %1004 = vmatpush2.bf16.xpose.msra.mxu0 0
      %1005 = vmatprep.subr.bf16.mxu0 0
      %1006 = vmatpush2.bf16.xpose.msra.mxu0 0
      %1007 = vmatprep.subr.bf16.mxu0 0
      %1008 = vmatpush2.bf16.xpose.msra.mxu0 0
      %1009 = vmatprep.subr.bf16.mxu0 0
      %1010 = vmatpush2.bf16.xpose.msra.mxu0 0
      %1011 = vmatprep.subr.bf16.mxu0 0
      %1012 = vmatpush2.bf16.xpose.msra.mxu0 0
      %1013 = vmatprep.subr.bf16.mxu0 0
      %1014 = vmatpush2.bf16.xpose.msra.mxu0 0
      %1015 = vmatprep.subr.bf16.mxu0 0
      %1016 = vmatpush2.bf16.xpose.msra.mxu0 0
      %1017 = vmatprep.mubr.bf16.mxu0 0
      %1018 = vmatmul.mubr.bf16.gmra.mxu0 %v980
      %v1019 = vpop.f32.mrf.mxu0
      %v1020 = vadd.f32 0.0, %v1019
      %v1021 = vpop.f32.mrf.mxu0
      %v1022 = vpop.f32.mrf.mxu0
      %v1023 = vpop.f32.mrf.mxu0
      %1024 = vdwg.mxu0
      %v1025 = vsel %vm698, %v1020, -inf
      %1026 = vmax.xlane.f32.xlu0 %v1025
      %v1027 = vpop.xlane.xlu0 %1026
      %v1028 = vsub.f32 %v1020, %v1027
      %v1029 = vmul.f32 %v1028, 1.442695
      %v1030 = vpow.pop %v1029
      %v1031 = vsel %vm698, %v1030, 0.0
      %1032 = vadd.xlane.f32.xlu0 %v1031
      %v1033 = vpop.xlane.xlu0 %1032
      %v1034 = vpack.c.bf16 %v1030, %v1030
      %1035 = vrot.lane.b32.xlu0 %v650, 72
      %v1036 = vpop.permute.xlu0 %1035
      %v1039 = vsel %vm698, %v1034, 0
      %1041 = vmatprep.subr.bf16.mxu0 0
      %1042 = vmatpush1.bf16.msra.mxu0 0
      %1043 = vmatprep.subr.bf16.mxu0 0
      %1044 = vmatpush1.bf16.msra.mxu0 0
      %1045 = vmatprep.subr.bf16.mxu0 0
      %1046 = vmatpush1.bf16.msra.mxu0 0
      %1047 = vmatprep.subr.bf16.mxu0 0
      %1048 = vmatpush1.bf16.msra.mxu0 0
      %1049 = vmatprep.subr.bf16.mxu0 0
      %1050 = vmatpush1.bf16.msra.mxu0 0
      %1051 = vmatprep.subr.bf16.mxu0 0
      %1052 = vmatpush1.bf16.msra.mxu0 0
      %1053 = vmatprep.subr.bf16.mxu0 0
      %1054 = vmatpush1.bf16.msra.mxu0 0
      %1055 = vmatprep.subr.bf16.mxu0 0
      %1056 = vmatpush1.bf16.msra.mxu0 %v1036
      %1057 = vmatprep.subr.bf16.mxu0 0
      %1058 = vmatpush2.bf16.msra.mxu0 0
      %1059 = vmatprep.subr.bf16.mxu0 0
      %1060 = vmatpush2.bf16.msra.mxu0 0
      %1061 = vmatprep.subr.bf16.mxu0 0
      %1062 = vmatpush2.bf16.msra.mxu0 0
      %1063 = vmatprep.subr.bf16.mxu0 0
      %1064 = vmatpush2.bf16.msra.mxu0 0
      %1065 = vmatprep.subr.bf16.mxu0 0
      %1066 = vmatpush2.bf16.msra.mxu0 0
      %1067 = vmatprep.subr.bf16.mxu0 0
      %1068 = vmatpush2.bf16.msra.mxu0 0
      %1069 = vmatprep.subr.bf16.mxu0 0
      %1070 = vmatpush2.bf16.msra.mxu0 0
      %1071 = vmatprep.subr.bf16.mxu0 0
      %1072 = vmatpush2.bf16.msra.mxu0 0
      %1073 = vmatprep.mubr.bf16.mxu0 0
      %1074 = vmatmul.mubr.bf16.gmra.mxu0 %v1039
      %v1075 = vpop.f32.mrf.mxu0
      %v1076 = vadd.f32 0.0, %v1075
      %v1077 = vpop.f32.mrf.mxu0
      %v1078 = vpop.f32.mrf.mxu0
      %v1079 = vpop.f32.mrf.mxu0
      %1080 = vdwg.mxu0
      %v1081 = vrcp.pop %v1033
      %v1082 = vmul.f32 %v1076, %v1081
      %1084 = vrot.lane.b32.xlu0 %v866, 8
      %v1085 = vpop.permute.xlu0 %1084
      %1088 = vrot.lane.b32.xlu0 %v974, 16
      %v1089 = vpop.permute.xlu0 %1088
      %1092 = vrot.lane.b32.xlu0 %v1082, 24
      %v1093 = vpop.permute.xlu0 %1092
      %v1095 = vsel %vm651, %v757, %v1085
      %v1096 = vsel %vm698, %v1095, %v1089
      %vm1097 = vcmask 195584
      %v1098 = vsel %vm1097, %v1096, %v1093
      %v1099 = vpack.c.bf16 %v1098, %v1098
      %v1101 = vlaneseq
      %v1102 = vshrl.u32 %v1101, 7
      %v1103 = vsub.s32 0, %v1102
      %v1104 = vrot.slane %v647, %v1103
      %v1110 = vunpack.c.l.b16 %v643
      %v1111 = vunpack.c.l.b16 %v644
      %v1112 = vunpack.c.l.b16 %v645
      %v1113 = vunpack.c.l.b16 %v646
      %v1114 = vpack.c.b16 %v1111, %v1110
      %v1115 = vpack.c.b16 %v1113, %v1112
      %v1119 = vsel %vm435, %v1099, 0
      %1121 = vmatprep.subr.bf16.mxu0 0
      %1122 = vmatpush1.bf16.msra.mxu0 0
      %1123 = vmatprep.subr.bf16.mxu0 0
      %1124 = vmatpush1.bf16.msra.mxu0 0
      %1125 = vmatprep.subr.bf16.mxu0 0
      %1126 = vmatpush1.bf16.msra.mxu0 0
      %1127 = vmatprep.subr.bf16.mxu0 0
      %1128 = vmatpush1.bf16.msra.mxu0 0
      %1129 = vmatprep.subr.bf16.mxu0 0
      %1130 = vmatpush1.bf16.msra.mxu0 0
      %1131 = vmatprep.subr.bf16.mxu0 0
      %1132 = vmatpush1.bf16.msra.mxu0 0
      %1133 = vmatprep.subr.bf16.mxu0 0
      %1134 = vmatpush1.bf16.msra.mxu0 %v1115
      %1135 = vmatprep.subr.bf16.mxu0 0
      %1136 = vmatpush1.bf16.msra.mxu0 %v1114
      %1137 = vmatprep.subr.bf16.mxu0 0
      %1138 = vmatpush2.bf16.msra.mxu0 0
      %1139 = vmatprep.subr.bf16.mxu0 0
      %1140 = vmatpush2.bf16.msra.mxu0 0
      %1141 = vmatprep.subr.bf16.mxu0 0
      %1142 = vmatpush2.bf16.msra.mxu0 0
      %1143 = vmatprep.subr.bf16.mxu0 0
      %1144 = vmatpush2.bf16.msra.mxu0 0
      %1145 = vmatprep.subr.bf16.mxu0 0
      %1146 = vmatpush2.bf16.msra.mxu0 0
      %1147 = vmatprep.subr.bf16.mxu0 0
      %1148 = vmatpush2.bf16.msra.mxu0 0
      %1149 = vmatprep.subr.bf16.mxu0 0
      %1150 = vmatpush2.bf16.msra.mxu0 0
      %1151 = vmatprep.subr.bf16.mxu0 0
      %1152 = vmatpush2.bf16.msra.mxu0 0
      %1153 = vmatprep.mubr.bf16.mxu0 0
      %1154 = vmatmul.mubr.bf16.gmra.mxu0 %v1119
      %v1155 = vpop.f32.mrf.mxu0
      %v1156 = vadd.f32 %v1104, %v1155
      %v1157 = vpop.f32.mrf.mxu0
      %v1158 = vpop.f32.mrf.mxu0
      %v1159 = vpop.f32.mrf.mxu0
      %1160 = vdwg.mxu0
      %v1161 = vadd.f32 %v430, %v1156
      %1162 = vst.msk [vmem:[%s428] sm:$0xff] %vm435, %v1161
      %p1163 = scmp.lt.s32.totalorder %s23, 1
      %s1164 = scalar_select %p1163, %s23, 1
      %s1165 = smul.addr %s1164, 8
      %s1166 = scalar_lea.vmem %s12, %s1165
      // Predicated region
      $region69: #{cross_modal_block.26} parent=67 // pred_check
        %p1167 = pneg %p303
      $region70: #{cross_modal_block.26} parent=67 // pred_check_branch
        %1169 = sbr.rel (%p1167) target = $region72
      $region71: #{cross_modal_block.26} parent=67 // pred_region
        _
      $region72: #{cross_modal_block.26} parent=67 // pred_fallthru
        _
    $region68: #{cross_modal_block.26} parent=5 // pred_fallthru
      _
    %p1170 = scmp.le.s32.totalorder 2, %s18
    // Predicated region
    $region73: #{cross_modal_block.26} parent=5 // pred_check
      %p1171 = pneg %p1170
    $region74: #{cross_modal_block.26} parent=5 // pred_check_branch
      %1173 = sbr.rel (%p1171) target = $region76
    $region75: #{cross_modal_block.26} parent=5 // pred_region
      %s1174 = ssub.s32 %s18, 2
      // Predicated region
      $region77: #{cross_modal_block.26} parent=75 // pred_check
        %p1175 = pneg %p309
      $region78: #{cross_modal_block.26} parent=75 // pred_check_branch
        %1177 = sbr.rel (%p1175) target = $region80
      $region79: #{cross_modal_block.26} parent=75 // pred_region
        %p1178 = scmp.lt.s32.totalorder %s24, 1
        %s1179 = scalar_select %p1178, %s24, 1
        %s1180 = smul.addr %s1179, 8
        %s1181 = scalar_lea.vmem %s12, %s1180
      $region80: #{cross_modal_block.26} parent=75 // pred_fallthru
        _
    $region76: #{cross_modal_block.26} parent=5 // pred_fallthru
      _
  $region6: #{cross_modal_block.26} parent=0 // loop_footer
    %s22 = sadd.s32 1, %s18
  $region7: #{cross_modal_block.26} parent=0 // loop_footer_branch
    %17 = sbr.rel target = $region3
  $region8: #{cross_modal_block.26} parent=0 // loop_exit
    _

// kernel: cross_modal_block.29
$region0: #{cross_modal_block.29}
  #allocation0 [shape = 'u32[]', space=smem, size = 0x4, offset = 0x4, fixed_abs, tag = 'smem constant byte address 0x4 - core index']
  #allocation1 [shape = 'u32[144,128]{1,0:T(1,128)}', space=vmem, size = 0x12000, scoped, tag = 'internal scratch']
  %s0 = inlined_call_operand.vmem [shape: f32[16,32], index: 0, kind: input, shape index: {}]
  %s1 = inlined_call_operand.vmem [shape: f32[16,32], index: 1, kind: input, shape index: {}]
  %s2 = inlined_call_operand.vmem [shape: f32[16,32], index: 2, kind: input, shape index: {}]
  %s3 = inlined_call_operand.vmem [shape: f32[1,32], index: 3, kind: input, shape index: {}]
  %s4 = inlined_call_operand.vmem [shape: f32[1,32], index: 4, kind: input, shape index: {}]
  %s5 = inlined_call_operand.vmem [shape: bf16[32,64], index: 5, kind: input, shape index: {}]
  %s6 = inlined_call_operand.vmem [shape: f32[1,64], index: 6, kind: input, shape index: {}]
  %s7 = inlined_call_operand.vmem [shape: bf16[64,32], index: 7, kind: input, shape index: {}]
  %s8 = inlined_call_operand.vmem [shape: f32[1,32], index: 8, kind: input, shape index: {}]
  %s9 = inlined_call_operand.hbm [shape: f32[16,32], index: 9, kind: output, shape index: {}]
  %s10 = sld [smem:[#allocation0]]
  $region46: #{cross_modal_block.29} parent=0
    _
  %s12 = ssub.s32 1, %s10
  %s13 = scalar_select 0, %s12, %s10
  $region1: #{cross_modal_block.29} parent=0
    #allocation2 [shape = 'u8[8192]{0}', space=vmem, size = 0x2000, scoped, tag = 'output window, operand 0, single buffered']
    #allocation3 [shape = 's32[1]{0}', space=sflag, size = 0x4, scoped, tag = 'scoped memory for cross_modal_block.29']
    %14 = vsyncpa [#allocation3], 0
    // Predicated region
    $region2: #{cross_modal_block.29} parent=1 // pred_check
      _
    $region3: #{cross_modal_block.29} parent=1 // pred_check_branch
      %16 = sbr.rel (0) target = $region5
    $region4: #{cross_modal_block.29} parent=1 // pred_region
      _
    $region5: #{cross_modal_block.29} parent=1 // pred_fallthru
      _
    // Predicated region
    $region6: #{cross_modal_block.29} parent=1 // pred_check
      _
    $region7: #{cross_modal_block.29} parent=1 // pred_check_branch
      %18 = sbr.rel (0) target = $region9
    $region8: #{cross_modal_block.29} parent=1 // pred_region
      _
    $region9: #{cross_modal_block.29} parent=1 // pred_fallthru
      _
    // Predicated region
    $region10: #{cross_modal_block.29} parent=1 // pred_check
      _
    $region11: #{cross_modal_block.29} parent=1 // pred_check_branch
      %20 = sbr.rel (0) target = $region13
    $region12: #{cross_modal_block.29} parent=1 // pred_region
      _
    $region13: #{cross_modal_block.29} parent=1 // pred_fallthru
      _
    // Predicated region
    $region14: #{cross_modal_block.29} parent=1 // pred_check
      _
    $region15: #{cross_modal_block.29} parent=1 // pred_check_branch
      %22 = sbr.rel (0) target = $region17
    $region16: #{cross_modal_block.29} parent=1 // pred_region
      _
    $region17: #{cross_modal_block.29} parent=1 // pred_fallthru
      _
    // Predicated region
    $region18: #{cross_modal_block.29} parent=1 // pred_check
      _
    $region19: #{cross_modal_block.29} parent=1 // pred_check_branch
      %24 = sbr.rel (0) target = $region21
    $region20: #{cross_modal_block.29} parent=1 // pred_region
      _
    $region21: #{cross_modal_block.29} parent=1 // pred_fallthru
      _
    // Predicated region
    $region22: #{cross_modal_block.29} parent=1 // pred_check
      _
    $region23: #{cross_modal_block.29} parent=1 // pred_check_branch
      %26 = sbr.rel (0) target = $region25
    $region24: #{cross_modal_block.29} parent=1 // pred_region
      _
    $region25: #{cross_modal_block.29} parent=1 // pred_fallthru
      _
    // Predicated region
    $region26: #{cross_modal_block.29} parent=1 // pred_check
      _
    $region27: #{cross_modal_block.29} parent=1 // pred_check_branch
      %28 = sbr.rel (0) target = $region29
    $region28: #{cross_modal_block.29} parent=1 // pred_region
      _
    $region29: #{cross_modal_block.29} parent=1 // pred_fallthru
      _
    // Predicated region
    $region30: #{cross_modal_block.29} parent=1 // pred_check
      _
    $region31: #{cross_modal_block.29} parent=1 // pred_check_branch
      %30 = sbr.rel (0) target = $region33
    $region32: #{cross_modal_block.29} parent=1 // pred_region
      _
    $region33: #{cross_modal_block.29} parent=1 // pred_fallthru
      _
    // Predicated region
    $region34: #{cross_modal_block.29} parent=1 // pred_check
      _
    $region35: #{cross_modal_block.29} parent=1 // pred_check_branch
      %32 = sbr.rel (0) target = $region37
    $region36: #{cross_modal_block.29} parent=1 // pred_region
      _
    $region37: #{cross_modal_block.29} parent=1 // pred_fallthru
      _
    %v34 = vld [vmem:[%s0] sm:$0xff]
    %v35 = vld [vmem:[%s0 + $0x8] sm:$0xff]
    %v36 = vld [vmem:[%s1] sm:$0xff]
    %v37 = vld [vmem:[%s1 + $0x8] sm:$0xff]
    %v38 = vadd.f32 %v34, %v36
    %v39 = vadd.f32 %v35, %v37
    %v40 = vld [vmem:[%s2] sm:$0xff]
    %v41 = vld [vmem:[%s2 + $0x8] sm:$0xff]
    %v42 = vadd.f32 %v38, %v40
    %v43 = vadd.f32 %v39, %v41
    %v44 = vrcp.pop 3.0
    %v45 = vmul.f32 %v42, %v44
    %v46 = vmul.f32 %v43, %v44
    %v47 = vld [vmem:[%s3] sm:$0x1]
    %v48 = vld [vmem:[%s4] sm:$0x1]
    %vm49 = vcmask 261120
    %v50 = vsel %vm49, %v45, 0.0
    %51 = vadd.xlane.f32.xlu0 %v50
    %v52 = vpop.xlane.xlu0 %51
    %v53 = vsel %vm49, %v46, 0.0
    %54 = vadd.xlane.f32.xlu0 %v53
    %v55 = vpop.xlane.xlu0 %54
    %v56 = vrcp.pop 32.0
    %v57 = vmul.f32 %v52, %v56
    %v58 = vmul.f32 %v55, %v56
    %v59 = vsub.f32 %v45, %v57
    %v60 = vsub.f32 %v46, %v58
    %v61 = vmul.f32 %v59, %v59
    %v62 = vmul.f32 %v60, %v60
    %v63 = vsel %vm49, %v61, 0.0
    %64 = vadd.xlane.f32.xlu0 %v63
    %v65 = vpop.xlane.xlu0 %64
    %v66 = vsel %vm49, %v62, 0.0
    %67 = vadd.xlane.f32.xlu0 %v66
    %v68 = vpop.xlane.xlu0 %67
    %v69 = vmul.f32 %v65, %v56
    %v70 = vmul.f32 %v68, %v56
    %v71 = vadd.f32 %v69, 1e-05
    %v72 = vadd.f32 %v70, 1e-05
    %v73 = vrsqrt.pop %v71
    %v74 = vrsqrt.pop %v72
    %v75 = vmul.f32 %v59, %v73
    %v76 = vmul.f32 %v60, %v74
    %v78 = vlaneseq
    %v79 = vshrl.u32 %v78, 7
    %v80 = vsub.s32 0, %v79
    %v81 = vrot.slane %v47, %v80
    %v83 = vmul.f32 %v75, %v81
    %v84 = vmul.f32 %v76, %v81
    %v86 = vlaneseq
    %v87 = vshrl.u32 %v86, 7
    %v88 = vsub.s32 0, %v87
    %v89 = vrot.slane %v48, %v88
    %v91 = vadd.f32 %v83, %v89
    %v92 = vadd.f32 %v84, %v89
    %v93 = vpack.c.bf16 %v92, %v91
    %v94 = vld [vmem:[%s5] sm:$0xf]
    %v95 = vld [vmem:[%s5 + $0x4] sm:$0xf]
    %v96 = vld [vmem:[%s5 + $0x8] sm:$0xf]
    %v97 = vld [vmem:[%s5 + $0xc] sm:$0xf]
    %v98 = vld [vmem:[%s6] sm:$0x1]
    %v100 = vlaneseq
    %v101 = vshrl.u32 %v100, 7
    %v102 = vsub.s32 0, %v101
    %v103 = vrot.slane %v98, %v102
    %v109 = vunpack.c.l.b16 %v94
    %v110 = vunpack.c.l.b16 %v95
    %v111 = vunpack.c.l.b16 %v96
    %v112 = vunpack.c.l.b16 %v97
    %v113 = vpack.c.b16 %v110, %v109
    %v114 = vpack.c.b16 %v112, %v111
    %v118 = vsel %vm49, %v93, 0
    %120 = vmatprep.subr.bf16.mxu0 0
    %121 = vmatpush1.bf16.msra.mxu0 0
    %122 = vmatprep.subr.bf16.mxu0 0
    %123 = vmatpush1.bf16.msra.mxu0 0
    %124 = vmatprep.subr.bf16.mxu0 0
    %125 = vmatpush1.bf16.msra.mxu0 0
    %126 = vmatprep.subr.bf16.mxu0 0
    %127 = vmatpush1.bf16.msra.mxu0 0
    %128 = vmatprep.subr.bf16.mxu0 0
    %129 = vmatpush1.bf16.msra.mxu0 0
    %130 = vmatprep.subr.bf16.mxu0 0
    %131 = vmatpush1.bf16.msra.mxu0 0
    %132 = vmatprep.subr.bf16.mxu0 0
    %133 = vmatpush1.bf16.msra.mxu0 %v114
    %134 = vmatprep.subr.bf16.mxu0 0
    %135 = vmatpush1.bf16.msra.mxu0 %v113
    %136 = vmatprep.subr.bf16.mxu0 0
    %137 = vmatpush2.bf16.msra.mxu0 0
    %138 = vmatprep.subr.bf16.mxu0 0
    %139 = vmatpush2.bf16.msra.mxu0 0
    %140 = vmatprep.subr.bf16.mxu0 0
    %141 = vmatpush2.bf16.msra.mxu0 0
    %142 = vmatprep.subr.bf16.mxu0 0
    %143 = vmatpush2.bf16.msra.mxu0 0
    %144 = vmatprep.subr.bf16.mxu0 0
    %145 = vmatpush2.bf16.msra.mxu0 0
    %146 = vmatprep.subr.bf16.mxu0 0
    %147 = vmatpush2.bf16.msra.mxu0 0
    %148 = vmatprep.subr.bf16.mxu0 0
    %149 = vmatpush2.bf16.msra.mxu0 0
    %150 = vmatprep.subr.bf16.mxu0 0
    %151 = vmatpush2.bf16.msra.mxu0 0
    %152 = vmatprep.mubr.bf16.mxu0 0
    %153 = vmatmul.mubr.bf16.gmra.mxu0 %v118
    %v154 = vpop.f32.mrf.mxu0
    %v155 = vadd.f32 %v103, %v154
    %v156 = vpop.f32.mrf.mxu0
    %v157 = vpop.f32.mrf.mxu0
    %v158 = vadd.f32 %v103, %v157
    %v159 = vpop.f32.mrf.mxu0
    %160 = vdwg.mxu0
    %v161 = vmul.f32 %v155, 0.5
    %v162 = vmul.f32 %v158, 0.5
    %v163 = vmul.f32 %v155, 0.70710677
    %v164 = vmul.f32 %v158, 0.70710677
    %v165 = vand.u32 2147483647, %v163
    %v166 = vand.u32 2147483647, %v164
    %v167 = vmul.f32 %v165, 0.3275911
    %v168 = vmul.f32 %v166, 0.3275911
    %v169 = vadd.f32 %v167, 1.0
    %v170 = vadd.f32 %v168, 1.0
    %v171 = vrcp.pop %v169
    %v172 = vrcp.pop %v170
    %v173 = vmul.f32 %v171, 1.0614054
    %v174 = vmul.f32 %v172, 1.0614054
    %v175 = vadd.f32 %v173, -1.4531521
    %v176 = vadd.f32 %v174, -1.4531521
    %v177 = vmul.f32 %v175, %v171
    %v178 = vmul.f32 %v176, %v172
    %v179 = vadd.f32 %v177, 1.4214138
    %v180 = vadd.f32 %v178, 1.4214138
    %v181 = vmul.f32 %v179, %v171
    %v182 = vmul.f32 %v180, %v172
    %v183 = vadd.f32 %v181, -0.28449672
    %v184 = vadd.f32 %v182, -0.28449672
    %v185 = vmul.f32 %v183, %v171
    %v186 = vmul.f32 %v184, %v172
    %v187 = vadd.f32 %v185, 0.2548296
    %v188 = vadd.f32 %v186, 0.2548296
    %v189 = vmul.f32 %v187, %v171
    %v190 = vmul.f32 %v188, %v172
    %v191 = vsub.f32 0.0, %v165
    %v192 = vsub.f32 0.0, %v166
    %v193 = vmul.f32 %v191, %v165
    %v194 = vmul.f32 %v192, %v166
    %v195 = vmul.f32 %v193, 1.442695
    %v196 = vpow.pop %v195
    %v197 = vmul.f32 %v194, 1.442695
    %v198 = vpow.pop %v197
    %v199 = vmul.f32 %v189, %v196
    %v200 = vmul.f32 %v190, %v198
    %v201 = vsub.f32 1.0, %v199
    %v202 = vsub.f32 1.0, %v200
    %vm203 = vcmp.ge.f32.partialorder %v163, 0.0
    %vm204 = vcmp.ge.f32.partialorder %v164, 0.0
    %v205 = vsub.f32 0.0, %v201
    %v206 = vsub.f32 0.0, %v202
    %v207 = vsel %vm203, %v201, %v205
    %v208 = vsel %vm204, %v202, %v206
    %v209 = vadd.f32 %v207, 1.0
    %v210 = vadd.f32 %v208, 1.0
    %v211 = vmul.f32 %v161, %v209
    %v212 = vmul.f32 %v162, %v210
    %v213 = vpack.c.bf16 %v212, %v211
    %v214 = vld [vmem:[%s7] sm:$0xf]
    %v215 = vld [vmem:[%s7 + $0x4] sm:$0xf]
    %v216 = vld [vmem:[%s7 + $0x8] sm:$0xf]
    %v217 = vld [vmem:[%s7 + $0xc] sm:$0xf]
    %v218 = vld [vmem:[%s7 + $0x10] sm:$0xf]
    %v219 = vld [vmem:[%s7 + $0x14] sm:$0xf]
    %v220 = vld [vmem:[%s7 + $0x18] sm:$0xf]
    %v221 = vld [vmem:[%s7 + $0x1c] sm:$0xf]
    %v222 = vld [vmem:[%s8] sm:$0x1]
    %v224 = vlaneseq
    %v225 = vshrl.u32 %v224, 7
    %v226 = vsub.s32 0, %v225
    %v227 = vrot.slane %v222, %v226
    %v237 = vunpack.c.l.b16 %v214
    %v238 = vunpack.c.l.b16 %v215
    %v239 = vunpack.c.l.b16 %v216
    %v240 = vunpack.c.l.b16 %v217
    %v241 = vunpack.c.l.b16 %v218
    %v242 = vunpack.c.l.b16 %v219
    %v243 = vunpack.c.l.b16 %v220
    %v244 = vunpack.c.l.b16 %v221
    %v245 = vpack.c.b16 %v238, %v237
    %v246 = vpack.c.b16 %v240, %v239
    %v247 = vpack.c.b16 %v242, %v241
    %v248 = vpack.c.b16 %v244, %v243
    %vm253 = vcmask 523264
    %v255 = vsel %vm253, %v213, 0
    %257 = vmatprep.subr.bf16.mxu0 0
    %258 = vmatpush1.bf16.msra.mxu0 0
    %259 = vmatprep.subr.bf16.mxu0 0
    %260 = vmatpush1.bf16.msra.mxu0 0
    %261 = vmatprep.subr.bf16.mxu0 0
    %262 = vmatpush1.bf16.msra.mxu0 0
    %263 = vmatprep.subr.bf16.mxu0 0
    %264 = vmatpush1.bf16.msra.mxu0 0
    %265 = vmatprep.subr.bf16.mxu0 0
    %266 = vmatpush1.bf16.msra.mxu0 %v248
    %267 = vmatprep.subr.bf16.mxu0 0
    %268 = vmatpush1.bf16.msra.mxu0 %v247
    %269 = vmatprep.subr.bf16.mxu0 0
    %270 = vmatpush1.bf16.msra.mxu0 %v246
    %271 = vmatprep.subr.bf16.mxu0 0
    %272 = vmatpush1.bf16.msra.mxu0 %v245
    %273 = vmatprep.subr.bf16.mxu0 0
    %274 = vmatpush2.bf16.msra.mxu0 0
    %275 = vmatprep.subr.bf16.mxu0 0
    %276 = vmatpush2.bf16.msra.mxu0 0
    %277 = vmatprep.subr.bf16.mxu0 0
    %278 = vmatpush2.bf16.msra.mxu0 0
    %279 = vmatprep.subr.bf16.mxu0 0
    %280 = vmatpush2.bf16.msra.mxu0 0
    %281 = vmatprep.subr.bf16.mxu0 0
    %282 = vmatpush2.bf16.msra.mxu0 0
    %283 = vmatprep.subr.bf16.mxu0 0
    %284 = vmatpush2.bf16.msra.mxu0 0
    %285 = vmatprep.subr.bf16.mxu0 0
    %286 = vmatpush2.bf16.msra.mxu0 0
    %287 = vmatprep.subr.bf16.mxu0 0
    %288 = vmatpush2.bf16.msra.mxu0 0
    %289 = vmatprep.mubr.bf16.mxu0 0
    %290 = vmatmul.mubr.bf16.gmra.mxu0 %v255
    %v291 = vpop.f32.mrf.mxu0
    %v292 = vadd.f32 %v227, %v291
    %v293 = vpop.f32.mrf.mxu0
    %v294 = vpop.f32.mrf.mxu0
    %v295 = vadd.f32 %v227, %v294
    %v296 = vpop.f32.mrf.mxu0
    %297 = vdwg.mxu0
    %v298 = vadd.f32 %v45, %v292
    %v299 = vadd.f32 %v46, %v295
    %300 = vst.msk [vmem:[#allocation2] sm:$0xff] %vm49, %v298
    %301 = vst.msk [vmem:[#allocation2 + $0x8] sm:$0xff] %vm49, %v299
    // Predicated region
    $region38: #{cross_modal_block.29} parent=1 // pred_check
      _
    $region39: #{cross_modal_block.29} parent=1 // pred_check_branch
      %303 = sbr.rel (0) target = $region41
    $region40: #{cross_modal_block.29} parent=1 // pred_region
      %s305 = ssub.s32 256, 256
      %306 = vsyncadd [#allocation3], %s305
      %s307 = sshll.u32 [#allocation2], 4
      %s308 = int_to_ptr.vmem [resolvable:$true] %s307
      %313 = dma.vmem_to_hbm [thread:$0]  %s308, 256, %s9, [#allocation3], 128, 128, 8
    $region41: #{cross_modal_block.29} parent=1 // pred_fallthru
      _
    // Predicated region
    $region42: #{cross_modal_block.29} parent=1 // pred_check
      _
    $region43: #{cross_modal_block.29} parent=1 // pred_check_branch
      %315 = sbr.rel (0) target = $region45
    $region44: #{cross_modal_block.29} parent=1 // pred_region
      %316 = dma.done [#allocation3], 256
    $region45: #{cross_modal_block.29} parent=1 // pred_fallthru
      _
    %317 = vsyncpa [#allocation3], 1

</llo_original>
